<compile_context>
chip_gen: v6e
topology: v6e:2x2x1
jax: 0.10.0
libtpu: 0.0.40
codegen_flags: <defaults>
</compile_context>

<pallas_src>
import numpy as np
import jax
import jax.numpy as jnp
from jax.experimental import pallas as pl
from jax.experimental.pallas import tpu as pltpu


# ---------------------------------------------------------------------------
# Fused kernel: whole StemBlock forward for one batch element
# ---------------------------------------------------------------------------
def stem_fused_kernel(xs_ref, w1_ref, wb1_ref, w2_ref, wc1_ref, wc2_ref,
                      pv_ref, out_ref):
    cout, cin = w1_ref.shape
    _, _, h2, w2 = xs_ref.shape
    xs = xs_ref[0]                                        # (cin, H2, W2)

    def mac(w_ref, x, o):
        """sum_c w[o, c] * x[c]  -> (1, H2, W2).  Scalar weights from SMEM, VPU MACs."""
        acc = w_ref[o, 0] * x[0:1]
        for c in range(1, x.shape[0]):
            acc = acc + w_ref[o, c] * x[c:c + 1]
        return acc

    def acon(v, p1, p2, beta):
        """AconC with per-channel scalars: dpx*sigmoid(beta*dpx) + p2*x (sigmoid -> EUP)."""
        d = (p1 - p2) * v
        return d * jax.nn.sigmoid(beta * d) + p2 * v

    # ---- dsc1: depthwise(k=1,s=2) + pointwise + BN1 folded into w1/col0, then AconC1
    ch = []
    for o in range(cout):
        v = mac(w1_ref, xs, o) + pv_ref[o, 0]
        v = acon(v, pv_ref[o, 1], pv_ref[o, 2], pv_ref[o, 3])
        ch.append(v)
    x1 = jnp.concatenate(ch, axis=0)                      # (cout, H2, W2)

    # ---- branch1_first_block: 1x1 conv + bias
    ch = []
    for o in range(cout):
        ch.append(mac(wb1_ref, x1, o) + pv_ref[o, 4])
    t1 = jnp.concatenate(ch, axis=0)

    # ---- branch1_second_block (DSConv, dw+pw+BN2 folded) + AconC2, then BN3 + AconC3
    ch = []
    for o in range(cout):
        t = mac(w2_ref, t1, o) + pv_ref[o, 5]
        t = acon(t, pv_ref[o, 6], pv_ref[o, 7], pv_ref[o, 8])
        t = t * pv_ref[o, 9] + pv_ref[o, 10]
        t = acon(t, pv_ref[o, 11], pv_ref[o, 12], pv_ref[o, 13])
        ch.append(t)
    b12 = jnp.concatenate(ch, axis=0)                     # (cout, H2, W2)

    # ---- branch2: 2x2 maxpool + bilinear 2x upsample (align_corners=False),
    #      expressed with shifted views; wrapped roll entries are masked/unused.
    A = jnp.maximum(x1, jnp.roll(x1, -1, axis=2))
    B = jnp.maximum(A, jnp.roll(A, -1, axis=1))           # B[2i,2j] = pooled[i,j]
    hi = jax.lax.broadcasted_iota(jnp.int32, (h2, w2), 0)  # 2-D masks, broadcast over C
    wi = jax.lax.broadcasted_iota(jnp.int32, (h2, w2), 1)
    h_even = (hi & 1) == 0
    w_even = (wi & 1) == 0
    Cv = jnp.where(w_even, B, jnp.roll(B, 1, axis=2))
    Q = jnp.where(h_even, Cv, jnp.roll(Cv, 1, axis=1))    # Q[h,w] = pooled[h//2, w//2]
    # W-direction interpolation (0.25/0.75 taps with edge clamping)
    Qm = jnp.where(wi >= 2, jnp.roll(Q, 2, axis=2), Q)
    Qp = jnp.where(wi <= (w2 - 3), jnp.roll(Q, -2, axis=2), Q)
    S = jnp.where(w_even, 0.25 * Qm + 0.75 * Q, 0.75 * Q + 0.25 * Qp)
    # H-direction interpolation
    Sm = jnp.where(hi >= 2, jnp.roll(S, 2, axis=1), S)
    Sp = jnp.where(hi <= (h2 - 3), jnp.roll(S, -2, axis=1), S)
    br2 = jnp.where(h_even, 0.25 * Sm + 0.75 * S, 0.75 * S + 0.25 * Sp)

    # ---- concat + 1x1 conv (split over the two channel halves) + bias
    ch = []
    for o in range(cout):
        ch.append(mac(wc1_ref, b12, o) + mac(wc2_ref, br2, o) + pv_ref[o, 14])
    out_ref[0] = jnp.concatenate(ch, axis=0)


# ---------------------------------------------------------------------------
# Wrapper: parameter folding + pallas_call
# ---------------------------------------------------------------------------
def stem_block_forward(x_nchw, params):
    N, Cin, H, W = x_nchw.shape
    Cout = params['pw1_w'].shape[0]
    H2, W2 = H // 2, W // 2
    assert H2 % 2 == 0 and W2 % 2 == 0, "StemBlock expects H, W multiples of 4"
    x = x_nchw.astype(jnp.float32)

    # depthwise conv (k=1, s=2, p=0) == stride-2 subsample + per-channel scale.
    # The scale is folded into the pointwise weight below; the subsample is done here.
    xs = x[:, :, ::2, ::2]                                        # (N, Cin, H2, W2)

    # Fold depthwise scales and (inference-mode) BN into the pointwise conv weights.
    w1 = params['bn1_s'][:, None] * params['pw1_w'] * params['dw1'][None, :]
    b1 = params['bn1_s'] * params['pw1_b'] + params['bn1_t']
    w2 = params['bn2_s'][:, None] * params['pw2_w'] * params['dw2'][None, :]
    b2 = params['bn2_s'] * params['pw2_b'] + params['bn2_t']
    pvec = jnp.stack([
        b1, params['a1_p1'], params['a1_p2'], params['a1_beta'],
        params['b1_b'], b2,
        params['a2_p1'], params['a2_p2'], params['a2_beta'],
        params['bn3_s'], params['bn3_t'],
        params['a3_p1'], params['a3_p2'], params['a3_beta'],
        params['cat_b']], axis=1)                                 # (Cout, 15)

    smem = pl.BlockSpec(memory_space=pltpu.MemorySpace.SMEM)
    out = pl.pallas_call(
        stem_fused_kernel,
        out_shape=jax.ShapeDtypeStruct((N, Cout, H2, W2), jnp.float32),
        grid=(N,),
        in_specs=[pl.BlockSpec((1, Cin, H2, W2), lambda n: (n, 0, 0, 0)),
                  smem, smem, smem, smem, smem, smem],
        out_specs=pl.BlockSpec((1, Cout, H2, W2), lambda n: (n, 0, 0, 0)),
        compiler_params=pltpu.CompilerParams(
            dimension_semantics=("parallel",)),
    )(xs, w1, params['b1_w'], w2, params['cat_w1'], params['cat_w2'], pvec)
    return out


# ---------------------------------------------------------------------------
# Parameter init (PyTorch-like shapes, BN pre-folded to inference scale/shift)
# ---------------------------------------------------------------------------
def init_params(key, c_in, c_out):
    keys = iter(jax.random.split(key, 32))

    def nrm(shape, scale=1.0):
        return scale * jax.random.normal(next(keys), shape, dtype=jnp.float32)

    def bn_folded():
        gamma = 1.0 + 0.1 * nrm((c_out,))
        beta = 0.1 * nrm((c_out,))
        mean = 0.1 * nrm((c_out,))
        var = 1.0 + 0.1 * jnp.abs(nrm((c_out,)))
        scale = gamma / jnp.sqrt(var + 1e-5)
        shift = beta - mean * scale
        return scale, shift

    p = {}
    p['dw1'] = nrm((c_in,), 0.5)                              # depthwise 1x1 (groups=c_in)
    p['pw1_w'] = nrm((c_out, c_in), 1.0 / np.sqrt(c_in))
    p['pw1_b'] = nrm((c_out,), 0.1)
    p['bn1_s'], p['bn1_t'] = bn_folded()
    p['a1_p1'], p['a1_p2'] = nrm((c_out,)), nrm((c_out,))
    p['a1_beta'] = jnp.ones((c_out,), jnp.float32)
    p['b1_w'] = nrm((c_out, c_out), 1.0 / np.sqrt(c_out))
    p['b1_b'] = nrm((c_out,), 0.1)
    p['dw2'] = nrm((c_out,), 0.5)
    p['pw2_w'] = nrm((c_out, c_out), 1.0 / np.sqrt(c_out))
    p['pw2_b'] = nrm((c_out,), 0.1)
    p['bn2_s'], p['bn2_t'] = bn_folded()
    p['a2_p1'], p['a2_p2'] = nrm((c_out,)), nrm((c_out,))
    p['a2_beta'] = jnp.ones((c_out,), jnp.float32)
    p['bn3_s'], p['bn3_t'] = bn_folded()
    p['a3_p1'], p['a3_p2'] = nrm((c_out,)), nrm((c_out,))
    p['a3_beta'] = jnp.ones((c_out,), jnp.float32)
    p['cat_w1'] = nrm((c_out, c_out), 1.0 / np.sqrt(2 * c_out))   # multiplies branch1_2
    p['cat_w2'] = nrm((c_out, c_out), 1.0 / np.sqrt(2 * c_out))   # multiplies branch2
    p['cat_b'] = nrm((c_out,), 0.1)
    return p


# ---------------------------------------------------------------------------
# Pure-JAX reference (PyTorch semantics) for a correctness check
# ---------------------------------------------------------------------------
def _interp_matrix(out_size, in_size):
    """PyTorch bilinear (align_corners=False, half-pixel centers, edge clamp)."""
    U = np.zeros((out_size, in_size), dtype=np.float32)
    scale = in_size / out_size
    for o in range(out_size):
        src = max((o + 0.5) * scale - 0.5, 0.0)
        x0 = min(int(np.floor(src)), in_size - 1)
        x1 = min(x0 + 1, in_size - 1)
        w1 = src - x0
        U[o, x0] += 1.0 - w1
        U[o, x1] += w1
    return jnp.asarray(U)


def reference_forward(x, p):
    def cvec(v):
        return v[None, :, None, None]

    def acon(v, p1, p2, beta):
        d = (cvec(p1) - cvec(p2)) * v
        return d * jax.nn.sigmoid(cvec(beta) * d) + cvec(p2) * v

    xs = x.astype(jnp.float32)[:, :, ::2, ::2]
    h = jnp.einsum('oc,nchw->nohw', p['pw1_w'], xs * cvec(p['dw1'])) + cvec(p['pw1_b'])
    h = h * cvec(p['bn1_s']) + cvec(p['bn1_t'])
    x1 = acon(h, p['a1_p1'], p['a1_p2'], p['a1_beta'])

    t = jnp.einsum('oc,nchw->nohw', p['b1_w'], x1) + cvec(p['b1_b'])
    t = jnp.einsum('oc,nchw->nohw', p['pw2_w'], t * cvec(p['dw2'])) + cvec(p['pw2_b'])
    t = t * cvec(p['bn2_s']) + cvec(p['bn2_t'])
    t = acon(t, p['a2_p1'], p['a2_p2'], p['a2_beta'])
    t = t * cvec(p['bn3_s']) + cvec(p['bn3_t'])
    b12 = acon(t, p['a3_p1'], p['a3_p2'], p['a3_beta'])

    N, C, H2, W2 = x1.shape
    pooled = jnp.max(x1.reshape(N, C, H2 // 2, 2, W2 // 2, 2), axis=(3, 5))
    UH = _interp_matrix(H2, H2 // 2)
    UW = _interp_matrix(W2, W2 // 2)
    br2 = jnp.einsum('hH,wW,ncHW->nchw', UH, UW, pooled)

    out = (jnp.einsum('oc,nchw->nohw', p['cat_w1'], b12)
           + jnp.einsum('oc,nchw->nohw', p['cat_w2'], br2) + cvec(p['cat_b']))
    return out


if __name__ == "__main__":
    key = jax.random.PRNGKey(0)
    kp, kx = jax.random.split(key)
    c_in, c_out = 4, 8
    params = init_params(kp, c_in, c_out)
    x = jax.random.normal(kx, (2, c_in, 16, 16), dtype=jnp.float32)

    out = stem_block_forward(x, params)
    out = jax.block_until_ready(out)
    assert out.shape == (2, c_out, 8, 8), out.shape

    ref = reference_forward(x, params)
    np.testing.assert_allclose(np.asarray(out), np.asarray(ref),
                               rtol=2e-2, atol=2e-2)
    print("KERNEL_OK")
</pallas_src>

<mosaic_0001>
module attributes {stable_mosaic.version = 11 : i64} {
  func.func @stem_fused_kernel(%arg0: i32, %arg1: memref<1x4x8x8xf32, #tpu.memory_space<vmem>>, %arg2: memref<8x4xf32, #tpu.memory_space<smem>>, %arg3: memref<8x8xf32, #tpu.memory_space<smem>>, %arg4: memref<8x8xf32, #tpu.memory_space<smem>>, %arg5: memref<8x8xf32, #tpu.memory_space<smem>>, %arg6: memref<8x8xf32, #tpu.memory_space<smem>>, %arg7: memref<8x15xf32, #tpu.memory_space<smem>>, %arg8: memref<1x8x8x8xf32, #tpu.memory_space<vmem>>) attributes {dimension_semantics = [#tpu.dimension_semantics<parallel>], iteration_bounds = array<i64: 2>, scalar_prefetch = 0 : i64, scratch_operands = 0 : i64, tpu.core_type = #tpu.core_type<tc>, window_params = [{transform_indices = @transform_0, window_bounds = array<i64: 1, 4, 8, 8>}, {transform_indices = @transform_1, window_bounds = array<i64: 8, 4>}, {transform_indices = @transform_2, window_bounds = array<i64: 8, 8>}, {transform_indices = @transform_3, window_bounds = array<i64: 8, 8>}, {transform_indices = @transform_4, window_bounds = array<i64: 8, 8>}, {transform_indices = @transform_5, window_bounds = array<i64: 8, 8>}, {transform_indices = @transform_6, window_bounds = array<i64: 8, 15>}, {transform_indices = @transform_7, window_bounds = array<i64: 1, 8, 8, 8>}]} {
    %c0 = arith.constant 0 : index
    %c0_0 = arith.constant 0 : index
    %c0_1 = arith.constant 0 : index
    %c0_2 = arith.constant 0 : index
    %0 = vector.load %arg1[%c0, %c0_0, %c0_1, %c0_2] : memref<1x4x8x8xf32, #tpu.memory_space<vmem>>, vector<1x4x8x8xf32>
    %1 = vector.shape_cast %0 : vector<1x4x8x8xf32> to vector<4x8x8xf32>
    %c0_3 = arith.constant 0 : index
    %c0_4 = arith.constant 0 : index
    %2 = memref.load %arg2[%c0_3, %c0_4] : memref<8x4xf32, #tpu.memory_space<smem>>
    %3 = vector.extract_strided_slice %1 {offsets = [0, 0, 0], sizes = [1, 8, 8], strides = [1, 1, 1]} : vector<4x8x8xf32> to vector<1x8x8xf32>
    %4 = vector.broadcast %2 : f32 to vector<1x8x8xf32>
    %5 = arith.mulf %4, %3 : vector<1x8x8xf32>
    %c0_5 = arith.constant 0 : index
    %c1 = arith.constant 1 : index
    %6 = memref.load %arg2[%c0_5, %c1] : memref<8x4xf32, #tpu.memory_space<smem>>
    %7 = vector.extract_strided_slice %1 {offsets = [1, 0, 0], sizes = [1, 8, 8], strides = [1, 1, 1]} : vector<4x8x8xf32> to vector<1x8x8xf32>
    %8 = vector.broadcast %6 : f32 to vector<1x8x8xf32>
    %9 = arith.mulf %8, %7 : vector<1x8x8xf32>
    %10 = arith.addf %5, %9 : vector<1x8x8xf32>
    %c0_6 = arith.constant 0 : index
    %c2 = arith.constant 2 : index
    %11 = memref.load %arg2[%c0_6, %c2] : memref<8x4xf32, #tpu.memory_space<smem>>
    %12 = vector.extract_strided_slice %1 {offsets = [2, 0, 0], sizes = [1, 8, 8], strides = [1, 1, 1]} : vector<4x8x8xf32> to vector<1x8x8xf32>
    %13 = vector.broadcast %11 : f32 to vector<1x8x8xf32>
    %14 = arith.mulf %13, %12 : vector<1x8x8xf32>
    %15 = arith.addf %10, %14 : vector<1x8x8xf32>
    %c0_7 = arith.constant 0 : index
    %c3 = arith.constant 3 : index
    %16 = memref.load %arg2[%c0_7, %c3] : memref<8x4xf32, #tpu.memory_space<smem>>
    %17 = vector.extract_strided_slice %1 {offsets = [3, 0, 0], sizes = [1, 8, 8], strides = [1, 1, 1]} : vector<4x8x8xf32> to vector<1x8x8xf32>
    %18 = vector.broadcast %16 : f32 to vector<1x8x8xf32>
    %19 = arith.mulf %18, %17 : vector<1x8x8xf32>
    %20 = arith.addf %15, %19 : vector<1x8x8xf32>
    %c0_8 = arith.constant 0 : index
    %c0_9 = arith.constant 0 : index
    %21 = memref.load %arg7[%c0_8, %c0_9] : memref<8x15xf32, #tpu.memory_space<smem>>
    %22 = vector.broadcast %21 : f32 to vector<1x8x8xf32>
    %23 = arith.addf %20, %22 : vector<1x8x8xf32>
    %c0_10 = arith.constant 0 : index
    %c1_11 = arith.constant 1 : index
    %24 = memref.load %arg7[%c0_10, %c1_11] : memref<8x15xf32, #tpu.memory_space<smem>>
    %c0_12 = arith.constant 0 : index
    %c2_13 = arith.constant 2 : index
    %25 = memref.load %arg7[%c0_12, %c2_13] : memref<8x15xf32, #tpu.memory_space<smem>>
    %c0_14 = arith.constant 0 : index
    %c3_15 = arith.constant 3 : index
    %26 = memref.load %arg7[%c0_14, %c3_15] : memref<8x15xf32, #tpu.memory_space<smem>>
    %27 = arith.subf %24, %25 : f32
    %28 = vector.broadcast %27 : f32 to vector<1x8x8xf32>
    %29 = arith.mulf %28, %23 : vector<1x8x8xf32>
    %30 = vector.broadcast %26 : f32 to vector<1x8x8xf32>
    %31 = arith.mulf %30, %29 : vector<1x8x8xf32>
    %32 = arith.negf %31 : vector<1x8x8xf32>
    %33 = math.exp %32 : vector<1x8x8xf32>
    %cst = arith.constant 1.000000e+00 : f32
    %34 = vector.broadcast %cst : f32 to vector<1x8x8xf32>
    %35 = arith.addf %34, %33 : vector<1x8x8xf32>
    %36 = arith.divf %34, %35 : vector<1x8x8xf32>
    %37 = arith.mulf %29, %36 : vector<1x8x8xf32>
    %38 = vector.broadcast %25 : f32 to vector<1x8x8xf32>
    %39 = arith.mulf %38, %23 : vector<1x8x8xf32>
    %40 = arith.addf %37, %39 : vector<1x8x8xf32>
    %c1_16 = arith.constant 1 : index
    %c0_17 = arith.constant 0 : index
    %41 = memref.load %arg2[%c1_16, %c0_17] : memref<8x4xf32, #tpu.memory_space<smem>>
    %42 = vector.extract_strided_slice %1 {offsets = [0, 0, 0], sizes = [1, 8, 8], strides = [1, 1, 1]} : vector<4x8x8xf32> to vector<1x8x8xf32>
    %43 = vector.broadcast %41 : f32 to vector<1x8x8xf32>
    %44 = arith.mulf %43, %42 : vector<1x8x8xf32>
    %c1_18 = arith.constant 1 : index
    %c1_19 = arith.constant 1 : index
    %45 = memref.load %arg2[%c1_18, %c1_19] : memref<8x4xf32, #tpu.memory_space<smem>>
    %46 = vector.extract_strided_slice %1 {offsets = [1, 0, 0], sizes = [1, 8, 8], strides = [1, 1, 1]} : vector<4x8x8xf32> to vector<1x8x8xf32>
    %47 = vector.broadcast %45 : f32 to vector<1x8x8xf32>
    %48 = arith.mulf %47, %46 : vector<1x8x8xf32>
    %49 = arith.addf %44, %48 : vector<1x8x8xf32>
    %c1_20 = arith.constant 1 : index
    %c2_21 = arith.constant 2 : index
    %50 = memref.load %arg2[%c1_20, %c2_21] : memref<8x4xf32, #tpu.memory_space<smem>>
    %51 = vector.extract_strided_slice %1 {offsets = [2, 0, 0], sizes = [1, 8, 8], strides = [1, 1, 1]} : vector<4x8x8xf32> to vector<1x8x8xf32>
    %52 = vector.broadcast %50 : f32 to vector<1x8x8xf32>
    %53 = arith.mulf %52, %51 : vector<1x8x8xf32>
    %54 = arith.addf %49, %53 : vector<1x8x8xf32>
    %c1_22 = arith.constant 1 : index
    %c3_23 = arith.constant 3 : index
    %55 = memref.load %arg2[%c1_22, %c3_23] : memref<8x4xf32, #tpu.memory_space<smem>>
    %56 = vector.extract_strided_slice %1 {offsets = [3, 0, 0], sizes = [1, 8, 8], strides = [1, 1, 1]} : vector<4x8x8xf32> to vector<1x8x8xf32>
    %57 = vector.broadcast %55 : f32 to vector<1x8x8xf32>
    %58 = arith.mulf %57, %56 : vector<1x8x8xf32>
    %59 = arith.addf %54, %58 : vector<1x8x8xf32>
    %c1_24 = arith.constant 1 : index
    %c0_25 = arith.constant 0 : index
    %60 = memref.load %arg7[%c1_24, %c0_25] : memref<8x15xf32, #tpu.memory_space<smem>>
    %61 = vector.broadcast %60 : f32 to vector<1x8x8xf32>
    %62 = arith.addf %59, %61 : vector<1x8x8xf32>
    %c1_26 = arith.constant 1 : index
    %c1_27 = arith.constant 1 : index
    %63 = memref.load %arg7[%c1_26, %c1_27] : memref<8x15xf32, #tpu.memory_space<smem>>
    %c1_28 = arith.constant 1 : index
    %c2_29 = arith.constant 2 : index
    %64 = memref.load %arg7[%c1_28, %c2_29] : memref<8x15xf32, #tpu.memory_space<smem>>
    %c1_30 = arith.constant 1 : index
    %c3_31 = arith.constant 3 : index
    %65 = memref.load %arg7[%c1_30, %c3_31] : memref<8x15xf32, #tpu.memory_space<smem>>
    %66 = arith.subf %63, %64 : f32
    %67 = vector.broadcast %66 : f32 to vector<1x8x8xf32>
    %68 = arith.mulf %67, %62 : vector<1x8x8xf32>
    %69 = vector.broadcast %65 : f32 to vector<1x8x8xf32>
    %70 = arith.mulf %69, %68 : vector<1x8x8xf32>
    %71 = arith.negf %70 : vector<1x8x8xf32>
    %72 = math.exp %71 : vector<1x8x8xf32>
    %cst_32 = arith.constant 1.000000e+00 : f32
    %73 = vector.broadcast %cst_32 : f32 to vector<1x8x8xf32>
    %74 = arith.addf %73, %72 : vector<1x8x8xf32>
    %75 = arith.divf %73, %74 : vector<1x8x8xf32>
    %76 = arith.mulf %68, %75 : vector<1x8x8xf32>
    %77 = vector.broadcast %64 : f32 to vector<1x8x8xf32>
    %78 = arith.mulf %77, %62 : vector<1x8x8xf32>
    %79 = arith.addf %76, %78 : vector<1x8x8xf32>
    %c2_33 = arith.constant 2 : index
    %c0_34 = arith.constant 0 : index
    %80 = memref.load %arg2[%c2_33, %c0_34] : memref<8x4xf32, #tpu.memory_space<smem>>
    %81 = vector.extract_strided_slice %1 {offsets = [0, 0, 0], sizes = [1, 8, 8], strides = [1, 1, 1]} : vector<4x8x8xf32> to vector<1x8x8xf32>
    %82 = vector.broadcast %80 : f32 to vector<1x8x8xf32>
    %83 = arith.mulf %82, %81 : vector<1x8x8xf32>
    %c2_35 = arith.constant 2 : index
    %c1_36 = arith.constant 1 : index
    %84 = memref.load %arg2[%c2_35, %c1_36] : memref<8x4xf32, #tpu.memory_space<smem>>
    %85 = vector.extract_strided_slice %1 {offsets = [1, 0, 0], sizes = [1, 8, 8], strides = [1, 1, 1]} : vector<4x8x8xf32> to vector<1x8x8xf32>
    %86 = vector.broadcast %84 : f32 to vector<1x8x8xf32>
    %87 = arith.mulf %86, %85 : vector<1x8x8xf32>
    %88 = arith.addf %83, %87 : vector<1x8x8xf32>
    %c2_37 = arith.constant 2 : index
    %c2_38 = arith.constant 2 : index
    %89 = memref.load %arg2[%c2_37, %c2_38] : memref<8x4xf32, #tpu.memory_space<smem>>
    %90 = vector.extract_strided_slice %1 {offsets = [2, 0, 0], sizes = [1, 8, 8], strides = [1, 1, 1]} : vector<4x8x8xf32> to vector<1x8x8xf32>
    %91 = vector.broadcast %89 : f32 to vector<1x8x8xf32>
    %92 = arith.mulf %91, %90 : vector<1x8x8xf32>
    %93 = arith.addf %88, %92 : vector<1x8x8xf32>
    %c2_39 = arith.constant 2 : index
    %c3_40 = arith.constant 3 : index
    %94 = memref.load %arg2[%c2_39, %c3_40] : memref<8x4xf32, #tpu.memory_space<smem>>
    %95 = vector.extract_strided_slice %1 {offsets = [3, 0, 0], sizes = [1, 8, 8], strides = [1, 1, 1]} : vector<4x8x8xf32> to vector<1x8x8xf32>
    %96 = vector.broadcast %94 : f32 to vector<1x8x8xf32>
    %97 = arith.mulf %96, %95 : vector<1x8x8xf32>
    %98 = arith.addf %93, %97 : vector<1x8x8xf32>
    %c2_41 = arith.constant 2 : index
    %c0_42 = arith.constant 0 : index
    %99 = memref.load %arg7[%c2_41, %c0_42] : memref<8x15xf32, #tpu.memory_space<smem>>
    %100 = vector.broadcast %99 : f32 to vector<1x8x8xf32>
    %101 = arith.addf %98, %100 : vector<1x8x8xf32>
    %c2_43 = arith.constant 2 : index
    %c1_44 = arith.constant 1 : index
    %102 = memref.load %arg7[%c2_43, %c1_44] : memref<8x15xf32, #tpu.memory_space<smem>>
    %c2_45 = arith.constant 2 : index
    %c2_46 = arith.constant 2 : index
    %103 = memref.load %arg7[%c2_45, %c2_46] : memref<8x15xf32, #tpu.memory_space<smem>>
    %c2_47 = arith.constant 2 : index
    %c3_48 = arith.constant 3 : index
    %104 = memref.load %arg7[%c2_47, %c3_48] : memref<8x15xf32, #tpu.memory_space<smem>>
    %105 = arith.subf %102, %103 : f32
    %106 = vector.broadcast %105 : f32 to vector<1x8x8xf32>
    %107 = arith.mulf %106, %101 : vector<1x8x8xf32>
    %108 = vector.broadcast %104 : f32 to vector<1x8x8xf32>
    %109 = arith.mulf %108, %107 : vector<1x8x8xf32>
    %110 = arith.negf %109 : vector<1x8x8xf32>
    %111 = math.exp %110 : vector<1x8x8xf32>
    %cst_49 = arith.constant 1.000000e+00 : f32
    %112 = vector.broadcast %cst_49 : f32 to vector<1x8x8xf32>
    %113 = arith.addf %112, %111 : vector<1x8x8xf32>
    %114 = arith.divf %112, %113 : vector<1x8x8xf32>
    %115 = arith.mulf %107, %114 : vector<1x8x8xf32>
    %116 = vector.broadcast %103 : f32 to vector<1x8x8xf32>
    %117 = arith.mulf %116, %101 : vector<1x8x8xf32>
    %118 = arith.addf %115, %117 : vector<1x8x8xf32>
    %c3_50 = arith.constant 3 : index
    %c0_51 = arith.constant 0 : index
    %119 = memref.load %arg2[%c3_50, %c0_51] : memref<8x4xf32, #tpu.memory_space<smem>>
    %120 = vector.extract_strided_slice %1 {offsets = [0, 0, 0], sizes = [1, 8, 8], strides = [1, 1, 1]} : vector<4x8x8xf32> to vector<1x8x8xf32>
    %121 = vector.broadcast %119 : f32 to vector<1x8x8xf32>
    %122 = arith.mulf %121, %120 : vector<1x8x8xf32>
    %c3_52 = arith.constant 3 : index
    %c1_53 = arith.constant 1 : index
    %123 = memref.load %arg2[%c3_52, %c1_53] : memref<8x4xf32, #tpu.memory_space<smem>>
    %124 = vector.extract_strided_slice %1 {offsets = [1, 0, 0], sizes = [1, 8, 8], strides = [1, 1, 1]} : vector<4x8x8xf32> to vector<1x8x8xf32>
    %125 = vector.broadcast %123 : f32 to vector<1x8x8xf32>
    %126 = arith.mulf %125, %124 : vector<1x8x8xf32>
    %127 = arith.addf %122, %126 : vector<1x8x8xf32>
    %c3_54 = arith.constant 3 : index
    %c2_55 = arith.constant 2 : index
    %128 = memref.load %arg2[%c3_54, %c2_55] : memref<8x4xf32, #tpu.memory_space<smem>>
    %129 = vector.extract_strided_slice %1 {offsets = [2, 0, 0], sizes = [1, 8, 8], strides = [1, 1, 1]} : vector<4x8x8xf32> to vector<1x8x8xf32>
    %130 = vector.broadcast %128 : f32 to vector<1x8x8xf32>
    %131 = arith.mulf %130, %129 : vector<1x8x8xf32>
    %132 = arith.addf %127, %131 : vector<1x8x8xf32>
    %c3_56 = arith.constant 3 : index
    %c3_57 = arith.constant 3 : index
    %133 = memref.load %arg2[%c3_56, %c3_57] : memref<8x4xf32, #tpu.memory_space<smem>>
    %134 = vector.extract_strided_slice %1 {offsets = [3, 0, 0], sizes = [1, 8, 8], strides = [1, 1, 1]} : vector<4x8x8xf32> to vector<1x8x8xf32>
    %135 = vector.broadcast %133 : f32 to vector<1x8x8xf32>
    %136 = arith.mulf %135, %134 : vector<1x8x8xf32>
    %137 = arith.addf %132, %136 : vector<1x8x8xf32>
    %c3_58 = arith.constant 3 : index
    %c0_59 = arith.constant 0 : index
    %138 = memref.load %arg7[%c3_58, %c0_59] : memref<8x15xf32, #tpu.memory_space<smem>>
    %139 = vector.broadcast %138 : f32 to vector<1x8x8xf32>
    %140 = arith.addf %137, %139 : vector<1x8x8xf32>
    %c3_60 = arith.constant 3 : index
    %c1_61 = arith.constant 1 : index
    %141 = memref.load %arg7[%c3_60, %c1_61] : memref<8x15xf32, #tpu.memory_space<smem>>
    %c3_62 = arith.constant 3 : index
    %c2_63 = arith.constant 2 : index
    %142 = memref.load %arg7[%c3_62, %c2_63] : memref<8x15xf32, #tpu.memory_space<smem>>
    %c3_64 = arith.constant 3 : index
    %c3_65 = arith.constant 3 : index
    %143 = memref.load %arg7[%c3_64, %c3_65] : memref<8x15xf32, #tpu.memory_space<smem>>
    %144 = arith.subf %141, %142 : f32
    %145 = vector.broadcast %144 : f32 to vector<1x8x8xf32>
    %146 = arith.mulf %145, %140 : vector<1x8x8xf32>
    %147 = vector.broadcast %143 : f32 to vector<1x8x8xf32>
    %148 = arith.mulf %147, %146 : vector<1x8x8xf32>
    %149 = arith.negf %148 : vector<1x8x8xf32>
    %150 = math.exp %149 : vector<1x8x8xf32>
    %cst_66 = arith.constant 1.000000e+00 : f32
    %151 = vector.broadcast %cst_66 : f32 to vector<1x8x8xf32>
    %152 = arith.addf %151, %150 : vector<1x8x8xf32>
    %153 = arith.divf %151, %152 : vector<1x8x8xf32>
    %154 = arith.mulf %146, %153 : vector<1x8x8xf32>
    %155 = vector.broadcast %142 : f32 to vector<1x8x8xf32>
    %156 = arith.mulf %155, %140 : vector<1x8x8xf32>
    %157 = arith.addf %154, %156 : vector<1x8x8xf32>
    %c4 = arith.constant 4 : index
    %c0_67 = arith.constant 0 : index
    %158 = memref.load %arg2[%c4, %c0_67] : memref<8x4xf32, #tpu.memory_space<smem>>
    %159 = vector.extract_strided_slice %1 {offsets = [0, 0, 0], sizes = [1, 8, 8], strides = [1, 1, 1]} : vector<4x8x8xf32> to vector<1x8x8xf32>
    %160 = vector.broadcast %158 : f32 to vector<1x8x8xf32>
    %161 = arith.mulf %160, %159 : vector<1x8x8xf32>
    %c4_68 = arith.constant 4 : index
    %c1_69 = arith.constant 1 : index
    %162 = memref.load %arg2[%c4_68, %c1_69] : memref<8x4xf32, #tpu.memory_space<smem>>
    %163 = vector.extract_strided_slice %1 {offsets = [1, 0, 0], sizes = [1, 8, 8], strides = [1, 1, 1]} : vector<4x8x8xf32> to vector<1x8x8xf32>
    %164 = vector.broadcast %162 : f32 to vector<1x8x8xf32>
    %165 = arith.mulf %164, %163 : vector<1x8x8xf32>
    %166 = arith.addf %161, %165 : vector<1x8x8xf32>
    %c4_70 = arith.constant 4 : index
    %c2_71 = arith.constant 2 : index
    %167 = memref.load %arg2[%c4_70, %c2_71] : memref<8x4xf32, #tpu.memory_space<smem>>
    %168 = vector.extract_strided_slice %1 {offsets = [2, 0, 0], sizes = [1, 8, 8], strides = [1, 1, 1]} : vector<4x8x8xf32> to vector<1x8x8xf32>
    %169 = vector.broadcast %167 : f32 to vector<1x8x8xf32>
    %170 = arith.mulf %169, %168 : vector<1x8x8xf32>
    %171 = arith.addf %166, %170 : vector<1x8x8xf32>
    %c4_72 = arith.constant 4 : index
    %c3_73 = arith.constant 3 : index
    %172 = memref.load %arg2[%c4_72, %c3_73] : memref<8x4xf32, #tpu.memory_space<smem>>
    %173 = vector.extract_strided_slice %1 {offsets = [3, 0, 0], sizes = [1, 8, 8], strides = [1, 1, 1]} : vector<4x8x8xf32> to vector<1x8x8xf32>
    %174 = vector.broadcast %172 : f32 to vector<1x8x8xf32>
    %175 = arith.mulf %174, %173 : vector<1x8x8xf32>
    %176 = arith.addf %171, %175 : vector<1x8x8xf32>
    %c4_74 = arith.constant 4 : index
    %c0_75 = arith.constant 0 : index
    %177 = memref.load %arg7[%c4_74, %c0_75] : memref<8x15xf32, #tpu.memory_space<smem>>
    %178 = vector.broadcast %177 : f32 to vector<1x8x8xf32>
    %179 = arith.addf %176, %178 : vector<1x8x8xf32>
    %c4_76 = arith.constant 4 : index
    %c1_77 = arith.constant 1 : index
    %180 = memref.load %arg7[%c4_76, %c1_77] : memref<8x15xf32, #tpu.memory_space<smem>>
    %c4_78 = arith.constant 4 : index
    %c2_79 = arith.constant 2 : index
    %181 = memref.load %arg7[%c4_78, %c2_79] : memref<8x15xf32, #tpu.memory_space<smem>>
    %c4_80 = arith.constant 4 : index
    %c3_81 = arith.constant 3 : index
    %182 = memref.load %arg7[%c4_80, %c3_81] : memref<8x15xf32, #tpu.memory_space<smem>>
    %183 = arith.subf %180, %181 : f32
    %184 = vector.broadcast %183 : f32 to vector<1x8x8xf32>
    %185 = arith.mulf %184, %179 : vector<1x8x8xf32>
    %186 = vector.broadcast %182 : f32 to vector<1x8x8xf32>
    %187 = arith.mulf %186, %185 : vector<1x8x8xf32>
    %188 = arith.negf %187 : vector<1x8x8xf32>
    %189 = math.exp %188 : vector<1x8x8xf32>
    %cst_82 = arith.constant 1.000000e+00 : f32
    %190 = vector.broadcast %cst_82 : f32 to vector<1x8x8xf32>
    %191 = arith.addf %190, %189 : vector<1x8x8xf32>
    %192 = arith.divf %190, %191 : vector<1x8x8xf32>
    %193 = arith.mulf %185, %192 : vector<1x8x8xf32>
    %194 = vector.broadcast %181 : f32 to vector<1x8x8xf32>
    %195 = arith.mulf %194, %179 : vector<1x8x8xf32>
    %196 = arith.addf %193, %195 : vector<1x8x8xf32>
    %c5 = arith.constant 5 : index
    %c0_83 = arith.constant 0 : index
    %197 = memref.load %arg2[%c5, %c0_83] : memref<8x4xf32, #tpu.memory_space<smem>>
    %198 = vector.extract_strided_slice %1 {offsets = [0, 0, 0], sizes = [1, 8, 8], strides = [1, 1, 1]} : vector<4x8x8xf32> to vector<1x8x8xf32>
    %199 = vector.broadcast %197 : f32 to vector<1x8x8xf32>
    %200 = arith.mulf %199, %198 : vector<1x8x8xf32>
    %c5_84 = arith.constant 5 : index
    %c1_85 = arith.constant 1 : index
    %201 = memref.load %arg2[%c5_84, %c1_85] : memref<8x4xf32, #tpu.memory_space<smem>>
    %202 = vector.extract_strided_slice %1 {offsets = [1, 0, 0], sizes = [1, 8, 8], strides = [1, 1, 1]} : vector<4x8x8xf32> to vector<1x8x8xf32>
    %203 = vector.broadcast %201 : f32 to vector<1x8x8xf32>
    %204 = arith.mulf %203, %202 : vector<1x8x8xf32>
    %205 = arith.addf %200, %204 : vector<1x8x8xf32>
    %c5_86 = arith.constant 5 : index
    %c2_87 = arith.constant 2 : index
    %206 = memref.load %arg2[%c5_86, %c2_87] : memref<8x4xf32, #tpu.memory_space<smem>>
    %207 = vector.extract_strided_slice %1 {offsets = [2, 0, 0], sizes = [1, 8, 8], strides = [1, 1, 1]} : vector<4x8x8xf32> to vector<1x8x8xf32>
    %208 = vector.broadcast %206 : f32 to vector<1x8x8xf32>
    %209 = arith.mulf %208, %207 : vector<1x8x8xf32>
    %210 = arith.addf %205, %209 : vector<1x8x8xf32>
    %c5_88 = arith.constant 5 : index
    %c3_89 = arith.constant 3 : index
    %211 = memref.load %arg2[%c5_88, %c3_89] : memref<8x4xf32, #tpu.memory_space<smem>>
    %212 = vector.extract_strided_slice %1 {offsets = [3, 0, 0], sizes = [1, 8, 8], strides = [1, 1, 1]} : vector<4x8x8xf32> to vector<1x8x8xf32>
    %213 = vector.broadcast %211 : f32 to vector<1x8x8xf32>
    %214 = arith.mulf %213, %212 : vector<1x8x8xf32>
    %215 = arith.addf %210, %214 : vector<1x8x8xf32>
    %c5_90 = arith.constant 5 : index
    %c0_91 = arith.constant 0 : index
    %216 = memref.load %arg7[%c5_90, %c0_91] : memref<8x15xf32, #tpu.memory_space<smem>>
    %217 = vector.broadcast %216 : f32 to vector<1x8x8xf32>
    %218 = arith.addf %215, %217 : vector<1x8x8xf32>
    %c5_92 = arith.constant 5 : index
    %c1_93 = arith.constant 1 : index
    %219 = memref.load %arg7[%c5_92, %c1_93] : memref<8x15xf32, #tpu.memory_space<smem>>
    %c5_94 = arith.constant 5 : index
    %c2_95 = arith.constant 2 : index
    %220 = memref.load %arg7[%c5_94, %c2_95] : memref<8x15xf32, #tpu.memory_space<smem>>
    %c5_96 = arith.constant 5 : index
    %c3_97 = arith.constant 3 : index
    %221 = memref.load %arg7[%c5_96, %c3_97] : memref<8x15xf32, #tpu.memory_space<smem>>
    %222 = arith.subf %219, %220 : f32
    %223 = vector.broadcast %222 : f32 to vector<1x8x8xf32>
    %224 = arith.mulf %223, %218 : vector<1x8x8xf32>
    %225 = vector.broadcast %221 : f32 to vector<1x8x8xf32>
    %226 = arith.mulf %225, %224 : vector<1x8x8xf32>
    %227 = arith.negf %226 : vector<1x8x8xf32>
    %228 = math.exp %227 : vector<1x8x8xf32>
    %cst_98 = arith.constant 1.000000e+00 : f32
    %229 = vector.broadcast %cst_98 : f32 to vector<1x8x8xf32>
    %230 = arith.addf %229, %228 : vector<1x8x8xf32>
    %231 = arith.divf %229, %230 : vector<1x8x8xf32>
    %232 = arith.mulf %224, %231 : vector<1x8x8xf32>
    %233 = vector.broadcast %220 : f32 to vector<1x8x8xf32>
    %234 = arith.mulf %233, %218 : vector<1x8x8xf32>
    %235 = arith.addf %232, %234 : vector<1x8x8xf32>
    %c6 = arith.constant 6 : index
    %c0_99 = arith.constant 0 : index
    %236 = memref.load %arg2[%c6, %c0_99] : memref<8x4xf32, #tpu.memory_space<smem>>
    %237 = vector.extract_strided_slice %1 {offsets = [0, 0, 0], sizes = [1, 8, 8], strides = [1, 1, 1]} : vector<4x8x8xf32> to vector<1x8x8xf32>
    %238 = vector.broadcast %236 : f32 to vector<1x8x8xf32>
    %239 = arith.mulf %238, %237 : vector<1x8x8xf32>
    %c6_100 = arith.constant 6 : index
    %c1_101 = arith.constant 1 : index
    %240 = memref.load %arg2[%c6_100, %c1_101] : memref<8x4xf32, #tpu.memory_space<smem>>
    %241 = vector.extract_strided_slice %1 {offsets = [1, 0, 0], sizes = [1, 8, 8], strides = [1, 1, 1]} : vector<4x8x8xf32> to vector<1x8x8xf32>
    %242 = vector.broadcast %240 : f32 to vector<1x8x8xf32>
    %243 = arith.mulf %242, %241 : vector<1x8x8xf32>
    %244 = arith.addf %239, %243 : vector<1x8x8xf32>
    %c6_102 = arith.constant 6 : index
    %c2_103 = arith.constant 2 : index
    %245 = memref.load %arg2[%c6_102, %c2_103] : memref<8x4xf32, #tpu.memory_space<smem>>
    %246 = vector.extract_strided_slice %1 {offsets = [2, 0, 0], sizes = [1, 8, 8], strides = [1, 1, 1]} : vector<4x8x8xf32> to vector<1x8x8xf32>
    %247 = vector.broadcast %245 : f32 to vector<1x8x8xf32>
    %248 = arith.mulf %247, %246 : vector<1x8x8xf32>
    %249 = arith.addf %244, %248 : vector<1x8x8xf32>
    %c6_104 = arith.constant 6 : index
    %c3_105 = arith.constant 3 : index
    %250 = memref.load %arg2[%c6_104, %c3_105] : memref<8x4xf32, #tpu.memory_space<smem>>
    %251 = vector.extract_strided_slice %1 {offsets = [3, 0, 0], sizes = [1, 8, 8], strides = [1, 1, 1]} : vector<4x8x8xf32> to vector<1x8x8xf32>
    %252 = vector.broadcast %250 : f32 to vector<1x8x8xf32>
    %253 = arith.mulf %252, %251 : vector<1x8x8xf32>
    %254 = arith.addf %249, %253 : vector<1x8x8xf32>
    %c6_106 = arith.constant 6 : index
    %c0_107 = arith.constant 0 : index
    %255 = memref.load %arg7[%c6_106, %c0_107] : memref<8x15xf32, #tpu.memory_space<smem>>
    %256 = vector.broadcast %255 : f32 to vector<1x8x8xf32>
    %257 = arith.addf %254, %256 : vector<1x8x8xf32>
    %c6_108 = arith.constant 6 : index
    %c1_109 = arith.constant 1 : index
    %258 = memref.load %arg7[%c6_108, %c1_109] : memref<8x15xf32, #tpu.memory_space<smem>>
    %c6_110 = arith.constant 6 : index
    %c2_111 = arith.constant 2 : index
    %259 = memref.load %arg7[%c6_110, %c2_111] : memref<8x15xf32, #tpu.memory_space<smem>>
    %c6_112 = arith.constant 6 : index
    %c3_113 = arith.constant 3 : index
    %260 = memref.load %arg7[%c6_112, %c3_113] : memref<8x15xf32, #tpu.memory_space<smem>>
    %261 = arith.subf %258, %259 : f32
    %262 = vector.broadcast %261 : f32 to vector<1x8x8xf32>
    %263 = arith.mulf %262, %257 : vector<1x8x8xf32>
    %264 = vector.broadcast %260 : f32 to vector<1x8x8xf32>
    %265 = arith.mulf %264, %263 : vector<1x8x8xf32>
    %266 = arith.negf %265 : vector<1x8x8xf32>
    %267 = math.exp %266 : vector<1x8x8xf32>
    %cst_114 = arith.constant 1.000000e+00 : f32
    %268 = vector.broadcast %cst_114 : f32 to vector<1x8x8xf32>
    %269 = arith.addf %268, %267 : vector<1x8x8xf32>
    %270 = arith.divf %268, %269 : vector<1x8x8xf32>
    %271 = arith.mulf %263, %270 : vector<1x8x8xf32>
    %272 = vector.broadcast %259 : f32 to vector<1x8x8xf32>
    %273 = arith.mulf %272, %257 : vector<1x8x8xf32>
    %274 = arith.addf %271, %273 : vector<1x8x8xf32>
    %c7 = arith.constant 7 : index
    %c0_115 = arith.constant 0 : index
    %275 = memref.load %arg2[%c7, %c0_115] : memref<8x4xf32, #tpu.memory_space<smem>>
    %276 = vector.extract_strided_slice %1 {offsets = [0, 0, 0], sizes = [1, 8, 8], strides = [1, 1, 1]} : vector<4x8x8xf32> to vector<1x8x8xf32>
    %277 = vector.broadcast %275 : f32 to vector<1x8x8xf32>
    %278 = arith.mulf %277, %276 : vector<1x8x8xf32>
    %c7_116 = arith.constant 7 : index
    %c1_117 = arith.constant 1 : index
    %279 = memref.load %arg2[%c7_116, %c1_117] : memref<8x4xf32, #tpu.memory_space<smem>>
    %280 = vector.extract_strided_slice %1 {offsets = [1, 0, 0], sizes = [1, 8, 8], strides = [1, 1, 1]} : vector<4x8x8xf32> to vector<1x8x8xf32>
    %281 = vector.broadcast %279 : f32 to vector<1x8x8xf32>
    %282 = arith.mulf %281, %280 : vector<1x8x8xf32>
    %283 = arith.addf %278, %282 : vector<1x8x8xf32>
    %c7_118 = arith.constant 7 : index
    %c2_119 = arith.constant 2 : index
    %284 = memref.load %arg2[%c7_118, %c2_119] : memref<8x4xf32, #tpu.memory_space<smem>>
    %285 = vector.extract_strided_slice %1 {offsets = [2, 0, 0], sizes = [1, 8, 8], strides = [1, 1, 1]} : vector<4x8x8xf32> to vector<1x8x8xf32>
    %286 = vector.broadcast %284 : f32 to vector<1x8x8xf32>
    %287 = arith.mulf %286, %285 : vector<1x8x8xf32>
    %288 = arith.addf %283, %287 : vector<1x8x8xf32>
    %c7_120 = arith.constant 7 : index
    %c3_121 = arith.constant 3 : index
    %289 = memref.load %arg2[%c7_120, %c3_121] : memref<8x4xf32, #tpu.memory_space<smem>>
    %290 = vector.extract_strided_slice %1 {offsets = [3, 0, 0], sizes = [1, 8, 8], strides = [1, 1, 1]} : vector<4x8x8xf32> to vector<1x8x8xf32>
    %291 = vector.broadcast %289 : f32 to vector<1x8x8xf32>
    %292 = arith.mulf %291, %290 : vector<1x8x8xf32>
    %293 = arith.addf %288, %292 : vector<1x8x8xf32>
    %c7_122 = arith.constant 7 : index
    %c0_123 = arith.constant 0 : index
    %294 = memref.load %arg7[%c7_122, %c0_123] : memref<8x15xf32, #tpu.memory_space<smem>>
    %295 = vector.broadcast %294 : f32 to vector<1x8x8xf32>
    %296 = arith.addf %293, %295 : vector<1x8x8xf32>
    %c7_124 = arith.constant 7 : index
    %c1_125 = arith.constant 1 : index
    %297 = memref.load %arg7[%c7_124, %c1_125] : memref<8x15xf32, #tpu.memory_space<smem>>
    %c7_126 = arith.constant 7 : index
    %c2_127 = arith.constant 2 : index
    %298 = memref.load %arg7[%c7_126, %c2_127] : memref<8x15xf32, #tpu.memory_space<smem>>
    %c7_128 = arith.constant 7 : index
    %c3_129 = arith.constant 3 : index
    %299 = memref.load %arg7[%c7_128, %c3_129] : memref<8x15xf32, #tpu.memory_space<smem>>
    %300 = arith.subf %297, %298 : f32
    %301 = vector.broadcast %300 : f32 to vector<1x8x8xf32>
    %302 = arith.mulf %301, %296 : vector<1x8x8xf32>
    %303 = vector.broadcast %299 : f32 to vector<1x8x8xf32>
    %304 = arith.mulf %303, %302 : vector<1x8x8xf32>
    %305 = arith.negf %304 : vector<1x8x8xf32>
    %306 = math.exp %305 : vector<1x8x8xf32>
    %cst_130 = arith.constant 1.000000e+00 : f32
    %307 = vector.broadcast %cst_130 : f32 to vector<1x8x8xf32>
    %308 = arith.addf %307, %306 : vector<1x8x8xf32>
    %309 = arith.divf %307, %308 : vector<1x8x8xf32>
    %310 = arith.mulf %302, %309 : vector<1x8x8xf32>
    %311 = vector.broadcast %298 : f32 to vector<1x8x8xf32>
    %312 = arith.mulf %311, %296 : vector<1x8x8xf32>
    %313 = arith.addf %310, %312 : vector<1x8x8xf32>
    %314 = tpu.concatenate %40, %79, %118, %157, %196, %235, %274, %313 in 0 : vector<1x8x8xf32>, vector<1x8x8xf32>, vector<1x8x8xf32>, vector<1x8x8xf32>, vector<1x8x8xf32>, vector<1x8x8xf32>, vector<1x8x8xf32>, vector<1x8x8xf32> -> vector<8x8x8xf32>
    %c0_131 = arith.constant 0 : index
    %c0_132 = arith.constant 0 : index
    %315 = memref.load %arg3[%c0_131, %c0_132] : memref<8x8xf32, #tpu.memory_space<smem>>
    %316 = vector.extract_strided_slice %314 {offsets = [0, 0, 0], sizes = [1, 8, 8], strides = [1, 1, 1]} : vector<8x8x8xf32> to vector<1x8x8xf32>
    %317 = vector.broadcast %315 : f32 to vector<1x8x8xf32>
    %318 = arith.mulf %317, %316 : vector<1x8x8xf32>
    %c0_133 = arith.constant 0 : index
    %c1_134 = arith.constant 1 : index
    %319 = memref.load %arg3[%c0_133, %c1_134] : memref<8x8xf32, #tpu.memory_space<smem>>
    %320 = vector.extract_strided_slice %314 {offsets = [1, 0, 0], sizes = [1, 8, 8], strides = [1, 1, 1]} : vector<8x8x8xf32> to vector<1x8x8xf32>
    %321 = vector.broadcast %319 : f32 to vector<1x8x8xf32>
    %322 = arith.mulf %321, %320 : vector<1x8x8xf32>
    %323 = arith.addf %318, %322 : vector<1x8x8xf32>
    %c0_135 = arith.constant 0 : index
    %c2_136 = arith.constant 2 : index
    %324 = memref.load %arg3[%c0_135, %c2_136] : memref<8x8xf32, #tpu.memory_space<smem>>
    %325 = vector.extract_strided_slice %314 {offsets = [2, 0, 0], sizes = [1, 8, 8], strides = [1, 1, 1]} : vector<8x8x8xf32> to vector<1x8x8xf32>
    %326 = vector.broadcast %324 : f32 to vector<1x8x8xf32>
    %327 = arith.mulf %326, %325 : vector<1x8x8xf32>
    %328 = arith.addf %323, %327 : vector<1x8x8xf32>
    %c0_137 = arith.constant 0 : index
    %c3_138 = arith.constant 3 : index
    %329 = memref.load %arg3[%c0_137, %c3_138] : memref<8x8xf32, #tpu.memory_space<smem>>
    %330 = vector.extract_strided_slice %314 {offsets = [3, 0, 0], sizes = [1, 8, 8], strides = [1, 1, 1]} : vector<8x8x8xf32> to vector<1x8x8xf32>
    %331 = vector.broadcast %329 : f32 to vector<1x8x8xf32>
    %332 = arith.mulf %331, %330 : vector<1x8x8xf32>
    %333 = arith.addf %328, %332 : vector<1x8x8xf32>
    %c0_139 = arith.constant 0 : index
    %c4_140 = arith.constant 4 : index
    %334 = memref.load %arg3[%c0_139, %c4_140] : memref<8x8xf32, #tpu.memory_space<smem>>
    %335 = vector.extract_strided_slice %314 {offsets = [4, 0, 0], sizes = [1, 8, 8], strides = [1, 1, 1]} : vector<8x8x8xf32> to vector<1x8x8xf32>
    %336 = vector.broadcast %334 : f32 to vector<1x8x8xf32>
    %337 = arith.mulf %336, %335 : vector<1x8x8xf32>
    %338 = arith.addf %333, %337 : vector<1x8x8xf32>
    %c0_141 = arith.constant 0 : index
    %c5_142 = arith.constant 5 : index
    %339 = memref.load %arg3[%c0_141, %c5_142] : memref<8x8xf32, #tpu.memory_space<smem>>
    %340 = vector.extract_strided_slice %314 {offsets = [5, 0, 0], sizes = [1, 8, 8], strides = [1, 1, 1]} : vector<8x8x8xf32> to vector<1x8x8xf32>
    %341 = vector.broadcast %339 : f32 to vector<1x8x8xf32>
    %342 = arith.mulf %341, %340 : vector<1x8x8xf32>
    %343 = arith.addf %338, %342 : vector<1x8x8xf32>
    %c0_143 = arith.constant 0 : index
    %c6_144 = arith.constant 6 : index
    %344 = memref.load %arg3[%c0_143, %c6_144] : memref<8x8xf32, #tpu.memory_space<smem>>
    %345 = vector.extract_strided_slice %314 {offsets = [6, 0, 0], sizes = [1, 8, 8], strides = [1, 1, 1]} : vector<8x8x8xf32> to vector<1x8x8xf32>
    %346 = vector.broadcast %344 : f32 to vector<1x8x8xf32>
    %347 = arith.mulf %346, %345 : vector<1x8x8xf32>
    %348 = arith.addf %343, %347 : vector<1x8x8xf32>
    %c0_145 = arith.constant 0 : index
    %c7_146 = arith.constant 7 : index
    %349 = memref.load %arg3[%c0_145, %c7_146] : memref<8x8xf32, #tpu.memory_space<smem>>
    %350 = vector.extract_strided_slice %314 {offsets = [7, 0, 0], sizes = [1, 8, 8], strides = [1, 1, 1]} : vector<8x8x8xf32> to vector<1x8x8xf32>
    %351 = vector.broadcast %349 : f32 to vector<1x8x8xf32>
    %352 = arith.mulf %351, %350 : vector<1x8x8xf32>
    %353 = arith.addf %348, %352 : vector<1x8x8xf32>
    %c0_147 = arith.constant 0 : index
    %c4_148 = arith.constant 4 : index
    %354 = memref.load %arg7[%c0_147, %c4_148] : memref<8x15xf32, #tpu.memory_space<smem>>
    %355 = vector.broadcast %354 : f32 to vector<1x8x8xf32>
    %356 = arith.addf %353, %355 : vector<1x8x8xf32>
    %c1_149 = arith.constant 1 : index
    %c0_150 = arith.constant 0 : index
    %357 = memref.load %arg3[%c1_149, %c0_150] : memref<8x8xf32, #tpu.memory_space<smem>>
    %358 = vector.extract_strided_slice %314 {offsets = [0, 0, 0], sizes = [1, 8, 8], strides = [1, 1, 1]} : vector<8x8x8xf32> to vector<1x8x8xf32>
    %359 = vector.broadcast %357 : f32 to vector<1x8x8xf32>
    %360 = arith.mulf %359, %358 : vector<1x8x8xf32>
    %c1_151 = arith.constant 1 : index
    %c1_152 = arith.constant 1 : index
    %361 = memref.load %arg3[%c1_151, %c1_152] : memref<8x8xf32, #tpu.memory_space<smem>>
    %362 = vector.extract_strided_slice %314 {offsets = [1, 0, 0], sizes = [1, 8, 8], strides = [1, 1, 1]} : vector<8x8x8xf32> to vector<1x8x8xf32>
    %363 = vector.broadcast %361 : f32 to vector<1x8x8xf32>
    %364 = arith.mulf %363, %362 : vector<1x8x8xf32>
    %365 = arith.addf %360, %364 : vector<1x8x8xf32>
    %c1_153 = arith.constant 1 : index
    %c2_154 = arith.constant 2 : index
    %366 = memref.load %arg3[%c1_153, %c2_154] : memref<8x8xf32, #tpu.memory_space<smem>>
    %367 = vector.extract_strided_slice %314 {offsets = [2, 0, 0], sizes = [1, 8, 8], strides = [1, 1, 1]} : vector<8x8x8xf32> to vector<1x8x8xf32>
    %368 = vector.broadcast %366 : f32 to vector<1x8x8xf32>
    %369 = arith.mulf %368, %367 : vector<1x8x8xf32>
    %370 = arith.addf %365, %369 : vector<1x8x8xf32>
    %c1_155 = arith.constant 1 : index
    %c3_156 = arith.constant 3 : index
    %371 = memref.load %arg3[%c1_155, %c3_156] : memref<8x8xf32, #tpu.memory_space<smem>>
    %372 = vector.extract_strided_slice %314 {offsets = [3, 0, 0], sizes = [1, 8, 8], strides = [1, 1, 1]} : vector<8x8x8xf32> to vector<1x8x8xf32>
    %373 = vector.broadcast %371 : f32 to vector<1x8x8xf32>
    %374 = arith.mulf %373, %372 : vector<1x8x8xf32>
    %375 = arith.addf %370, %374 : vector<1x8x8xf32>
    %c1_157 = arith.constant 1 : index
    %c4_158 = arith.constant 4 : index
    %376 = memref.load %arg3[%c1_157, %c4_158] : memref<8x8xf32, #tpu.memory_space<smem>>
    %377 = vector.extract_strided_slice %314 {offsets = [4, 0, 0], sizes = [1, 8, 8], strides = [1, 1, 1]} : vector<8x8x8xf32> to vector<1x8x8xf32>
    %378 = vector.broadcast %376 : f32 to vector<1x8x8xf32>
    %379 = arith.mulf %378, %377 : vector<1x8x8xf32>
    %380 = arith.addf %375, %379 : vector<1x8x8xf32>
    %c1_159 = arith.constant 1 : index
    %c5_160 = arith.constant 5 : index
    %381 = memref.load %arg3[%c1_159, %c5_160] : memref<8x8xf32, #tpu.memory_space<smem>>
    %382 = vector.extract_strided_slice %314 {offsets = [5, 0, 0], sizes = [1, 8, 8], strides = [1, 1, 1]} : vector<8x8x8xf32> to vector<1x8x8xf32>
    %383 = vector.broadcast %381 : f32 to vector<1x8x8xf32>
    %384 = arith.mulf %383, %382 : vector<1x8x8xf32>
    %385 = arith.addf %380, %384 : vector<1x8x8xf32>
    %c1_161 = arith.constant 1 : index
    %c6_162 = arith.constant 6 : index
    %386 = memref.load %arg3[%c1_161, %c6_162] : memref<8x8xf32, #tpu.memory_space<smem>>
    %387 = vector.extract_strided_slice %314 {offsets = [6, 0, 0], sizes = [1, 8, 8], strides = [1, 1, 1]} : vector<8x8x8xf32> to vector<1x8x8xf32>
    %388 = vector.broadcast %386 : f32 to vector<1x8x8xf32>
    %389 = arith.mulf %388, %387 : vector<1x8x8xf32>
    %390 = arith.addf %385, %389 : vector<1x8x8xf32>
    %c1_163 = arith.constant 1 : index
    %c7_164 = arith.constant 7 : index
    %391 = memref.load %arg3[%c1_163, %c7_164] : memref<8x8xf32, #tpu.memory_space<smem>>
    %392 = vector.extract_strided_slice %314 {offsets = [7, 0, 0], sizes = [1, 8, 8], strides = [1, 1, 1]} : vector<8x8x8xf32> to vector<1x8x8xf32>
    %393 = vector.broadcast %391 : f32 to vector<1x8x8xf32>
    %394 = arith.mulf %393, %392 : vector<1x8x8xf32>
    %395 = arith.addf %390, %394 : vector<1x8x8xf32>
    %c1_165 = arith.constant 1 : index
    %c4_166 = arith.constant 4 : index
    %396 = memref.load %arg7[%c1_165, %c4_166] : memref<8x15xf32, #tpu.memory_space<smem>>
    %397 = vector.broadcast %396 : f32 to vector<1x8x8xf32>
    %398 = arith.addf %395, %397 : vector<1x8x8xf32>
    %c2_167 = arith.constant 2 : index
    %c0_168 = arith.constant 0 : index
    %399 = memref.load %arg3[%c2_167, %c0_168] : memref<8x8xf32, #tpu.memory_space<smem>>
    %400 = vector.extract_strided_slice %314 {offsets = [0, 0, 0], sizes = [1, 8, 8], strides = [1, 1, 1]} : vector<8x8x8xf32> to vector<1x8x8xf32>
    %401 = vector.broadcast %399 : f32 to vector<1x8x8xf32>
    %402 = arith.mulf %401, %400 : vector<1x8x8xf32>
    %c2_169 = arith.constant 2 : index
    %c1_170 = arith.constant 1 : index
    %403 = memref.load %arg3[%c2_169, %c1_170] : memref<8x8xf32, #tpu.memory_space<smem>>
    %404 = vector.extract_strided_slice %314 {offsets = [1, 0, 0], sizes = [1, 8, 8], strides = [1, 1, 1]} : vector<8x8x8xf32> to vector<1x8x8xf32>
    %405 = vector.broadcast %403 : f32 to vector<1x8x8xf32>
    %406 = arith.mulf %405, %404 : vector<1x8x8xf32>
    %407 = arith.addf %402, %406 : vector<1x8x8xf32>
    %c2_171 = arith.constant 2 : index
    %c2_172 = arith.constant 2 : index
    %408 = memref.load %arg3[%c2_171, %c2_172] : memref<8x8xf32, #tpu.memory_space<smem>>
    %409 = vector.extract_strided_slice %314 {offsets = [2, 0, 0], sizes = [1, 8, 8], strides = [1, 1, 1]} : vector<8x8x8xf32> to vector<1x8x8xf32>
    %410 = vector.broadcast %408 : f32 to vector<1x8x8xf32>
    %411 = arith.mulf %410, %409 : vector<1x8x8xf32>
    %412 = arith.addf %407, %411 : vector<1x8x8xf32>
    %c2_173 = arith.constant 2 : index
    %c3_174 = arith.constant 3 : index
    %413 = memref.load %arg3[%c2_173, %c3_174] : memref<8x8xf32, #tpu.memory_space<smem>>
    %414 = vector.extract_strided_slice %314 {offsets = [3, 0, 0], sizes = [1, 8, 8], strides = [1, 1, 1]} : vector<8x8x8xf32> to vector<1x8x8xf32>
    %415 = vector.broadcast %413 : f32 to vector<1x8x8xf32>
    %416 = arith.mulf %415, %414 : vector<1x8x8xf32>
    %417 = arith.addf %412, %416 : vector<1x8x8xf32>
    %c2_175 = arith.constant 2 : index
    %c4_176 = arith.constant 4 : index
    %418 = memref.load %arg3[%c2_175, %c4_176] : memref<8x8xf32, #tpu.memory_space<smem>>
    %419 = vector.extract_strided_slice %314 {offsets = [4, 0, 0], sizes = [1, 8, 8], strides = [1, 1, 1]} : vector<8x8x8xf32> to vector<1x8x8xf32>
    %420 = vector.broadcast %418 : f32 to vector<1x8x8xf32>
    %421 = arith.mulf %420, %419 : vector<1x8x8xf32>
    %422 = arith.addf %417, %421 : vector<1x8x8xf32>
    %c2_177 = arith.constant 2 : index
    %c5_178 = arith.constant 5 : index
    %423 = memref.load %arg3[%c2_177, %c5_178] : memref<8x8xf32, #tpu.memory_space<smem>>
    %424 = vector.extract_strided_slice %314 {offsets = [5, 0, 0], sizes = [1, 8, 8], strides = [1, 1, 1]} : vector<8x8x8xf32> to vector<1x8x8xf32>
    %425 = vector.broadcast %423 : f32 to vector<1x8x8xf32>
    %426 = arith.mulf %425, %424 : vector<1x8x8xf32>
    %427 = arith.addf %422, %426 : vector<1x8x8xf32>
    %c2_179 = arith.constant 2 : index
    %c6_180 = arith.constant 6 : index
    %428 = memref.load %arg3[%c2_179, %c6_180] : memref<8x8xf32, #tpu.memory_space<smem>>
    %429 = vector.extract_strided_slice %314 {offsets = [6, 0, 0], sizes = [1, 8, 8], strides = [1, 1, 1]} : vector<8x8x8xf32> to vector<1x8x8xf32>
    %430 = vector.broadcast %428 : f32 to vector<1x8x8xf32>
    %431 = arith.mulf %430, %429 : vector<1x8x8xf32>
    %432 = arith.addf %427, %431 : vector<1x8x8xf32>
    %c2_181 = arith.constant 2 : index
    %c7_182 = arith.constant 7 : index
    %433 = memref.load %arg3[%c2_181, %c7_182] : memref<8x8xf32, #tpu.memory_space<smem>>
    %434 = vector.extract_strided_slice %314 {offsets = [7, 0, 0], sizes = [1, 8, 8], strides = [1, 1, 1]} : vector<8x8x8xf32> to vector<1x8x8xf32>
    %435 = vector.broadcast %433 : f32 to vector<1x8x8xf32>
    %436 = arith.mulf %435, %434 : vector<1x8x8xf32>
    %437 = arith.addf %432, %436 : vector<1x8x8xf32>
    %c2_183 = arith.constant 2 : index
    %c4_184 = arith.constant 4 : index
    %438 = memref.load %arg7[%c2_183, %c4_184] : memref<8x15xf32, #tpu.memory_space<smem>>
    %439 = vector.broadcast %438 : f32 to vector<1x8x8xf32>
    %440 = arith.addf %437, %439 : vector<1x8x8xf32>
    %c3_185 = arith.constant 3 : index
    %c0_186 = arith.constant 0 : index
    %441 = memref.load %arg3[%c3_185, %c0_186] : memref<8x8xf32, #tpu.memory_space<smem>>
    %442 = vector.extract_strided_slice %314 {offsets = [0, 0, 0], sizes = [1, 8, 8], strides = [1, 1, 1]} : vector<8x8x8xf32> to vector<1x8x8xf32>
    %443 = vector.broadcast %441 : f32 to vector<1x8x8xf32>
    %444 = arith.mulf %443, %442 : vector<1x8x8xf32>
    %c3_187 = arith.constant 3 : index
    %c1_188 = arith.constant 1 : index
    %445 = memref.load %arg3[%c3_187, %c1_188] : memref<8x8xf32, #tpu.memory_space<smem>>
    %446 = vector.extract_strided_slice %314 {offsets = [1, 0, 0], sizes = [1, 8, 8], strides = [1, 1, 1]} : vector<8x8x8xf32> to vector<1x8x8xf32>
    %447 = vector.broadcast %445 : f32 to vector<1x8x8xf32>
    %448 = arith.mulf %447, %446 : vector<1x8x8xf32>
    %449 = arith.addf %444, %448 : vector<1x8x8xf32>
    %c3_189 = arith.constant 3 : index
    %c2_190 = arith.constant 2 : index
    %450 = memref.load %arg3[%c3_189, %c2_190] : memref<8x8xf32, #tpu.memory_space<smem>>
    %451 = vector.extract_strided_slice %314 {offsets = [2, 0, 0], sizes = [1, 8, 8], strides = [1, 1, 1]} : vector<8x8x8xf32> to vector<1x8x8xf32>
    %452 = vector.broadcast %450 : f32 to vector<1x8x8xf32>
    %453 = arith.mulf %452, %451 : vector<1x8x8xf32>
    %454 = arith.addf %449, %453 : vector<1x8x8xf32>
    %c3_191 = arith.constant 3 : index
    %c3_192 = arith.constant 3 : index
    %455 = memref.load %arg3[%c3_191, %c3_192] : memref<8x8xf32, #tpu.memory_space<smem>>
    %456 = vector.extract_strided_slice %314 {offsets = [3, 0, 0], sizes = [1, 8, 8], strides = [1, 1, 1]} : vector<8x8x8xf32> to vector<1x8x8xf32>
    %457 = vector.broadcast %455 : f32 to vector<1x8x8xf32>
    %458 = arith.mulf %457, %456 : vector<1x8x8xf32>
    %459 = arith.addf %454, %458 : vector<1x8x8xf32>
    %c3_193 = arith.constant 3 : index
    %c4_194 = arith.constant 4 : index
    %460 = memref.load %arg3[%c3_193, %c4_194] : memref<8x8xf32, #tpu.memory_space<smem>>
    %461 = vector.extract_strided_slice %314 {offsets = [4, 0, 0], sizes = [1, 8, 8], strides = [1, 1, 1]} : vector<8x8x8xf32> to vector<1x8x8xf32>
    %462 = vector.broadcast %460 : f32 to vector<1x8x8xf32>
    %463 = arith.mulf %462, %461 : vector<1x8x8xf32>
    %464 = arith.addf %459, %463 : vector<1x8x8xf32>
    %c3_195 = arith.constant 3 : index
    %c5_196 = arith.constant 5 : index
    %465 = memref.load %arg3[%c3_195, %c5_196] : memref<8x8xf32, #tpu.memory_space<smem>>
    %466 = vector.extract_strided_slice %314 {offsets = [5, 0, 0], sizes = [1, 8, 8], strides = [1, 1, 1]} : vector<8x8x8xf32> to vector<1x8x8xf32>
    %467 = vector.broadcast %465 : f32 to vector<1x8x8xf32>
    %468 = arith.mulf %467, %466 : vector<1x8x8xf32>
    %469 = arith.addf %464, %468 : vector<1x8x8xf32>
    %c3_197 = arith.constant 3 : index
    %c6_198 = arith.constant 6 : index
    %470 = memref.load %arg3[%c3_197, %c6_198] : memref<8x8xf32, #tpu.memory_space<smem>>
    %471 = vector.extract_strided_slice %314 {offsets = [6, 0, 0], sizes = [1, 8, 8], strides = [1, 1, 1]} : vector<8x8x8xf32> to vector<1x8x8xf32>
    %472 = vector.broadcast %470 : f32 to vector<1x8x8xf32>
    %473 = arith.mulf %472, %471 : vector<1x8x8xf32>
    %474 = arith.addf %469, %473 : vector<1x8x8xf32>
    %c3_199 = arith.constant 3 : index
    %c7_200 = arith.constant 7 : index
    %475 = memref.load %arg3[%c3_199, %c7_200] : memref<8x8xf32, #tpu.memory_space<smem>>
    %476 = vector.extract_strided_slice %314 {offsets = [7, 0, 0], sizes = [1, 8, 8], strides = [1, 1, 1]} : vector<8x8x8xf32> to vector<1x8x8xf32>
    %477 = vector.broadcast %475 : f32 to vector<1x8x8xf32>
    %478 = arith.mulf %477, %476 : vector<1x8x8xf32>
    %479 = arith.addf %474, %478 : vector<1x8x8xf32>
    %c3_201 = arith.constant 3 : index
    %c4_202 = arith.constant 4 : index
    %480 = memref.load %arg7[%c3_201, %c4_202] : memref<8x15xf32, #tpu.memory_space<smem>>
    %481 = vector.broadcast %480 : f32 to vector<1x8x8xf32>
    %482 = arith.addf %479, %481 : vector<1x8x8xf32>
    %c4_203 = arith.constant 4 : index
    %c0_204 = arith.constant 0 : index
    %483 = memref.load %arg3[%c4_203, %c0_204] : memref<8x8xf32, #tpu.memory_space<smem>>
    %484 = vector.extract_strided_slice %314 {offsets = [0, 0, 0], sizes = [1, 8, 8], strides = [1, 1, 1]} : vector<8x8x8xf32> to vector<1x8x8xf32>
    %485 = vector.broadcast %483 : f32 to vector<1x8x8xf32>
    %486 = arith.mulf %485, %484 : vector<1x8x8xf32>
    %c4_205 = arith.constant 4 : index
    %c1_206 = arith.constant 1 : index
    %487 = memref.load %arg3[%c4_205, %c1_206] : memref<8x8xf32, #tpu.memory_space<smem>>
    %488 = vector.extract_strided_slice %314 {offsets = [1, 0, 0], sizes = [1, 8, 8], strides = [1, 1, 1]} : vector<8x8x8xf32> to vector<1x8x8xf32>
    %489 = vector.broadcast %487 : f32 to vector<1x8x8xf32>
    %490 = arith.mulf %489, %488 : vector<1x8x8xf32>
    %491 = arith.addf %486, %490 : vector<1x8x8xf32>
    %c4_207 = arith.constant 4 : index
    %c2_208 = arith.constant 2 : index
    %492 = memref.load %arg3[%c4_207, %c2_208] : memref<8x8xf32, #tpu.memory_space<smem>>
    %493 = vector.extract_strided_slice %314 {offsets = [2, 0, 0], sizes = [1, 8, 8], strides = [1, 1, 1]} : vector<8x8x8xf32> to vector<1x8x8xf32>
    %494 = vector.broadcast %492 : f32 to vector<1x8x8xf32>
    %495 = arith.mulf %494, %493 : vector<1x8x8xf32>
    %496 = arith.addf %491, %495 : vector<1x8x8xf32>
    %c4_209 = arith.constant 4 : index
    %c3_210 = arith.constant 3 : index
    %497 = memref.load %arg3[%c4_209, %c3_210] : memref<8x8xf32, #tpu.memory_space<smem>>
    %498 = vector.extract_strided_slice %314 {offsets = [3, 0, 0], sizes = [1, 8, 8], strides = [1, 1, 1]} : vector<8x8x8xf32> to vector<1x8x8xf32>
    %499 = vector.broadcast %497 : f32 to vector<1x8x8xf32>
    %500 = arith.mulf %499, %498 : vector<1x8x8xf32>
    %501 = arith.addf %496, %500 : vector<1x8x8xf32>
    %c4_211 = arith.constant 4 : index
    %c4_212 = arith.constant 4 : index
    %502 = memref.load %arg3[%c4_211, %c4_212] : memref<8x8xf32, #tpu.memory_space<smem>>
    %503 = vector.extract_strided_slice %314 {offsets = [4, 0, 0], sizes = [1, 8, 8], strides = [1, 1, 1]} : vector<8x8x8xf32> to vector<1x8x8xf32>
    %504 = vector.broadcast %502 : f32 to vector<1x8x8xf32>
    %505 = arith.mulf %504, %503 : vector<1x8x8xf32>
    %506 = arith.addf %501, %505 : vector<1x8x8xf32>
    %c4_213 = arith.constant 4 : index
    %c5_214 = arith.constant 5 : index
    %507 = memref.load %arg3[%c4_213, %c5_214] : memref<8x8xf32, #tpu.memory_space<smem>>
    %508 = vector.extract_strided_slice %314 {offsets = [5, 0, 0], sizes = [1, 8, 8], strides = [1, 1, 1]} : vector<8x8x8xf32> to vector<1x8x8xf32>
    %509 = vector.broadcast %507 : f32 to vector<1x8x8xf32>
    %510 = arith.mulf %509, %508 : vector<1x8x8xf32>
    %511 = arith.addf %506, %510 : vector<1x8x8xf32>
    %c4_215 = arith.constant 4 : index
    %c6_216 = arith.constant 6 : index
    %512 = memref.load %arg3[%c4_215, %c6_216] : memref<8x8xf32, #tpu.memory_space<smem>>
    %513 = vector.extract_strided_slice %314 {offsets = [6, 0, 0], sizes = [1, 8, 8], strides = [1, 1, 1]} : vector<8x8x8xf32> to vector<1x8x8xf32>
    %514 = vector.broadcast %512 : f32 to vector<1x8x8xf32>
    %515 = arith.mulf %514, %513 : vector<1x8x8xf32>
    %516 = arith.addf %511, %515 : vector<1x8x8xf32>
    %c4_217 = arith.constant 4 : index
    %c7_218 = arith.constant 7 : index
    %517 = memref.load %arg3[%c4_217, %c7_218] : memref<8x8xf32, #tpu.memory_space<smem>>
    %518 = vector.extract_strided_slice %314 {offsets = [7, 0, 0], sizes = [1, 8, 8], strides = [1, 1, 1]} : vector<8x8x8xf32> to vector<1x8x8xf32>
    %519 = vector.broadcast %517 : f32 to vector<1x8x8xf32>
    %520 = arith.mulf %519, %518 : vector<1x8x8xf32>
    %521 = arith.addf %516, %520 : vector<1x8x8xf32>
    %c4_219 = arith.constant 4 : index
    %c4_220 = arith.constant 4 : index
    %522 = memref.load %arg7[%c4_219, %c4_220] : memref<8x15xf32, #tpu.memory_space<smem>>
    %523 = vector.broadcast %522 : f32 to vector<1x8x8xf32>
    %524 = arith.addf %521, %523 : vector<1x8x8xf32>
    %c5_221 = arith.constant 5 : index
    %c0_222 = arith.constant 0 : index
    %525 = memref.load %arg3[%c5_221, %c0_222] : memref<8x8xf32, #tpu.memory_space<smem>>
    %526 = vector.extract_strided_slice %314 {offsets = [0, 0, 0], sizes = [1, 8, 8], strides = [1, 1, 1]} : vector<8x8x8xf32> to vector<1x8x8xf32>
    %527 = vector.broadcast %525 : f32 to vector<1x8x8xf32>
    %528 = arith.mulf %527, %526 : vector<1x8x8xf32>
    %c5_223 = arith.constant 5 : index
    %c1_224 = arith.constant 1 : index
    %529 = memref.load %arg3[%c5_223, %c1_224] : memref<8x8xf32, #tpu.memory_space<smem>>
    %530 = vector.extract_strided_slice %314 {offsets = [1, 0, 0], sizes = [1, 8, 8], strides = [1, 1, 1]} : vector<8x8x8xf32> to vector<1x8x8xf32>
    %531 = vector.broadcast %529 : f32 to vector<1x8x8xf32>
    %532 = arith.mulf %531, %530 : vector<1x8x8xf32>
    %533 = arith.addf %528, %532 : vector<1x8x8xf32>
    %c5_225 = arith.constant 5 : index
    %c2_226 = arith.constant 2 : index
    %534 = memref.load %arg3[%c5_225, %c2_226] : memref<8x8xf32, #tpu.memory_space<smem>>
    %535 = vector.extract_strided_slice %314 {offsets = [2, 0, 0], sizes = [1, 8, 8], strides = [1, 1, 1]} : vector<8x8x8xf32> to vector<1x8x8xf32>
    %536 = vector.broadcast %534 : f32 to vector<1x8x8xf32>
    %537 = arith.mulf %536, %535 : vector<1x8x8xf32>
    %538 = arith.addf %533, %537 : vector<1x8x8xf32>
    %c5_227 = arith.constant 5 : index
    %c3_228 = arith.constant 3 : index
    %539 = memref.load %arg3[%c5_227, %c3_228] : memref<8x8xf32, #tpu.memory_space<smem>>
    %540 = vector.extract_strided_slice %314 {offsets = [3, 0, 0], sizes = [1, 8, 8], strides = [1, 1, 1]} : vector<8x8x8xf32> to vector<1x8x8xf32>
    %541 = vector.broadcast %539 : f32 to vector<1x8x8xf32>
    %542 = arith.mulf %541, %540 : vector<1x8x8xf32>
    %543 = arith.addf %538, %542 : vector<1x8x8xf32>
    %c5_229 = arith.constant 5 : index
    %c4_230 = arith.constant 4 : index
    %544 = memref.load %arg3[%c5_229, %c4_230] : memref<8x8xf32, #tpu.memory_space<smem>>
    %545 = vector.extract_strided_slice %314 {offsets = [4, 0, 0], sizes = [1, 8, 8], strides = [1, 1, 1]} : vector<8x8x8xf32> to vector<1x8x8xf32>
    %546 = vector.broadcast %544 : f32 to vector<1x8x8xf32>
    %547 = arith.mulf %546, %545 : vector<1x8x8xf32>
    %548 = arith.addf %543, %547 : vector<1x8x8xf32>
    %c5_231 = arith.constant 5 : index
    %c5_232 = arith.constant 5 : index
    %549 = memref.load %arg3[%c5_231, %c5_232] : memref<8x8xf32, #tpu.memory_space<smem>>
    %550 = vector.extract_strided_slice %314 {offsets = [5, 0, 0], sizes = [1, 8, 8], strides = [1, 1, 1]} : vector<8x8x8xf32> to vector<1x8x8xf32>
    %551 = vector.broadcast %549 : f32 to vector<1x8x8xf32>
    %552 = arith.mulf %551, %550 : vector<1x8x8xf32>
    %553 = arith.addf %548, %552 : vector<1x8x8xf32>
    %c5_233 = arith.constant 5 : index
    %c6_234 = arith.constant 6 : index
    %554 = memref.load %arg3[%c5_233, %c6_234] : memref<8x8xf32, #tpu.memory_space<smem>>
    %555 = vector.extract_strided_slice %314 {offsets = [6, 0, 0], sizes = [1, 8, 8], strides = [1, 1, 1]} : vector<8x8x8xf32> to vector<1x8x8xf32>
    %556 = vector.broadcast %554 : f32 to vector<1x8x8xf32>
    %557 = arith.mulf %556, %555 : vector<1x8x8xf32>
    %558 = arith.addf %553, %557 : vector<1x8x8xf32>
    %c5_235 = arith.constant 5 : index
    %c7_236 = arith.constant 7 : index
    %559 = memref.load %arg3[%c5_235, %c7_236] : memref<8x8xf32, #tpu.memory_space<smem>>
    %560 = vector.extract_strided_slice %314 {offsets = [7, 0, 0], sizes = [1, 8, 8], strides = [1, 1, 1]} : vector<8x8x8xf32> to vector<1x8x8xf32>
    %561 = vector.broadcast %559 : f32 to vector<1x8x8xf32>
    %562 = arith.mulf %561, %560 : vector<1x8x8xf32>
    %563 = arith.addf %558, %562 : vector<1x8x8xf32>
    %c5_237 = arith.constant 5 : index
    %c4_238 = arith.constant 4 : index
    %564 = memref.load %arg7[%c5_237, %c4_238] : memref<8x15xf32, #tpu.memory_space<smem>>
    %565 = vector.broadcast %564 : f32 to vector<1x8x8xf32>
    %566 = arith.addf %563, %565 : vector<1x8x8xf32>
    %c6_239 = arith.constant 6 : index
    %c0_240 = arith.constant 0 : index
    %567 = memref.load %arg3[%c6_239, %c0_240] : memref<8x8xf32, #tpu.memory_space<smem>>
    %568 = vector.extract_strided_slice %314 {offsets = [0, 0, 0], sizes = [1, 8, 8], strides = [1, 1, 1]} : vector<8x8x8xf32> to vector<1x8x8xf32>
    %569 = vector.broadcast %567 : f32 to vector<1x8x8xf32>
    %570 = arith.mulf %569, %568 : vector<1x8x8xf32>
    %c6_241 = arith.constant 6 : index
    %c1_242 = arith.constant 1 : index
    %571 = memref.load %arg3[%c6_241, %c1_242] : memref<8x8xf32, #tpu.memory_space<smem>>
    %572 = vector.extract_strided_slice %314 {offsets = [1, 0, 0], sizes = [1, 8, 8], strides = [1, 1, 1]} : vector<8x8x8xf32> to vector<1x8x8xf32>
    %573 = vector.broadcast %571 : f32 to vector<1x8x8xf32>
    %574 = arith.mulf %573, %572 : vector<1x8x8xf32>
    %575 = arith.addf %570, %574 : vector<1x8x8xf32>
    %c6_243 = arith.constant 6 : index
    %c2_244 = arith.constant 2 : index
    %576 = memref.load %arg3[%c6_243, %c2_244] : memref<8x8xf32, #tpu.memory_space<smem>>
    %577 = vector.extract_strided_slice %314 {offsets = [2, 0, 0], sizes = [1, 8, 8], strides = [1, 1, 1]} : vector<8x8x8xf32> to vector<1x8x8xf32>
    %578 = vector.broadcast %576 : f32 to vector<1x8x8xf32>
    %579 = arith.mulf %578, %577 : vector<1x8x8xf32>
    %580 = arith.addf %575, %579 : vector<1x8x8xf32>
    %c6_245 = arith.constant 6 : index
    %c3_246 = arith.constant 3 : index
    %581 = memref.load %arg3[%c6_245, %c3_246] : memref<8x8xf32, #tpu.memory_space<smem>>
    %582 = vector.extract_strided_slice %314 {offsets = [3, 0, 0], sizes = [1, 8, 8], strides = [1, 1, 1]} : vector<8x8x8xf32> to vector<1x8x8xf32>
    %583 = vector.broadcast %581 : f32 to vector<1x8x8xf32>
    %584 = arith.mulf %583, %582 : vector<1x8x8xf32>
    %585 = arith.addf %580, %584 : vector<1x8x8xf32>
    %c6_247 = arith.constant 6 : index
    %c4_248 = arith.constant 4 : index
    %586 = memref.load %arg3[%c6_247, %c4_248] : memref<8x8xf32, #tpu.memory_space<smem>>
    %587 = vector.extract_strided_slice %314 {offsets = [4, 0, 0], sizes = [1, 8, 8], strides = [1, 1, 1]} : vector<8x8x8xf32> to vector<1x8x8xf32>
    %588 = vector.broadcast %586 : f32 to vector<1x8x8xf32>
    %589 = arith.mulf %588, %587 : vector<1x8x8xf32>
    %590 = arith.addf %585, %589 : vector<1x8x8xf32>
    %c6_249 = arith.constant 6 : index
    %c5_250 = arith.constant 5 : index
    %591 = memref.load %arg3[%c6_249, %c5_250] : memref<8x8xf32, #tpu.memory_space<smem>>
    %592 = vector.extract_strided_slice %314 {offsets = [5, 0, 0], sizes = [1, 8, 8], strides = [1, 1, 1]} : vector<8x8x8xf32> to vector<1x8x8xf32>
    %593 = vector.broadcast %591 : f32 to vector<1x8x8xf32>
    %594 = arith.mulf %593, %592 : vector<1x8x8xf32>
    %595 = arith.addf %590, %594 : vector<1x8x8xf32>
    %c6_251 = arith.constant 6 : index
    %c6_252 = arith.constant 6 : index
    %596 = memref.load %arg3[%c6_251, %c6_252] : memref<8x8xf32, #tpu.memory_space<smem>>
    %597 = vector.extract_strided_slice %314 {offsets = [6, 0, 0], sizes = [1, 8, 8], strides = [1, 1, 1]} : vector<8x8x8xf32> to vector<1x8x8xf32>
    %598 = vector.broadcast %596 : f32 to vector<1x8x8xf32>
    %599 = arith.mulf %598, %597 : vector<1x8x8xf32>
    %600 = arith.addf %595, %599 : vector<1x8x8xf32>
    %c6_253 = arith.constant 6 : index
    %c7_254 = arith.constant 7 : index
    %601 = memref.load %arg3[%c6_253, %c7_254] : memref<8x8xf32, #tpu.memory_space<smem>>
    %602 = vector.extract_strided_slice %314 {offsets = [7, 0, 0], sizes = [1, 8, 8], strides = [1, 1, 1]} : vector<8x8x8xf32> to vector<1x8x8xf32>
    %603 = vector.broadcast %601 : f32 to vector<1x8x8xf32>
    %604 = arith.mulf %603, %602 : vector<1x8x8xf32>
    %605 = arith.addf %600, %604 : vector<1x8x8xf32>
    %c6_255 = arith.constant 6 : index
    %c4_256 = arith.constant 4 : index
    %606 = memref.load %arg7[%c6_255, %c4_256] : memref<8x15xf32, #tpu.memory_space<smem>>
    %607 = vector.broadcast %606 : f32 to vector<1x8x8xf32>
    %608 = arith.addf %605, %607 : vector<1x8x8xf32>
    %c7_257 = arith.constant 7 : index
    %c0_258 = arith.constant 0 : index
    %609 = memref.load %arg3[%c7_257, %c0_258] : memref<8x8xf32, #tpu.memory_space<smem>>
    %610 = vector.extract_strided_slice %314 {offsets = [0, 0, 0], sizes = [1, 8, 8], strides = [1, 1, 1]} : vector<8x8x8xf32> to vector<1x8x8xf32>
    %611 = vector.broadcast %609 : f32 to vector<1x8x8xf32>
    %612 = arith.mulf %611, %610 : vector<1x8x8xf32>
    %c7_259 = arith.constant 7 : index
    %c1_260 = arith.constant 1 : index
    %613 = memref.load %arg3[%c7_259, %c1_260] : memref<8x8xf32, #tpu.memory_space<smem>>
    %614 = vector.extract_strided_slice %314 {offsets = [1, 0, 0], sizes = [1, 8, 8], strides = [1, 1, 1]} : vector<8x8x8xf32> to vector<1x8x8xf32>
    %615 = vector.broadcast %613 : f32 to vector<1x8x8xf32>
    %616 = arith.mulf %615, %614 : vector<1x8x8xf32>
    %617 = arith.addf %612, %616 : vector<1x8x8xf32>
    %c7_261 = arith.constant 7 : index
    %c2_262 = arith.constant 2 : index
    %618 = memref.load %arg3[%c7_261, %c2_262] : memref<8x8xf32, #tpu.memory_space<smem>>
    %619 = vector.extract_strided_slice %314 {offsets = [2, 0, 0], sizes = [1, 8, 8], strides = [1, 1, 1]} : vector<8x8x8xf32> to vector<1x8x8xf32>
    %620 = vector.broadcast %618 : f32 to vector<1x8x8xf32>
    %621 = arith.mulf %620, %619 : vector<1x8x8xf32>
    %622 = arith.addf %617, %621 : vector<1x8x8xf32>
    %c7_263 = arith.constant 7 : index
    %c3_264 = arith.constant 3 : index
    %623 = memref.load %arg3[%c7_263, %c3_264] : memref<8x8xf32, #tpu.memory_space<smem>>
    %624 = vector.extract_strided_slice %314 {offsets = [3, 0, 0], sizes = [1, 8, 8], strides = [1, 1, 1]} : vector<8x8x8xf32> to vector<1x8x8xf32>
    %625 = vector.broadcast %623 : f32 to vector<1x8x8xf32>
    %626 = arith.mulf %625, %624 : vector<1x8x8xf32>
    %627 = arith.addf %622, %626 : vector<1x8x8xf32>
    %c7_265 = arith.constant 7 : index
    %c4_266 = arith.constant 4 : index
    %628 = memref.load %arg3[%c7_265, %c4_266] : memref<8x8xf32, #tpu.memory_space<smem>>
    %629 = vector.extract_strided_slice %314 {offsets = [4, 0, 0], sizes = [1, 8, 8], strides = [1, 1, 1]} : vector<8x8x8xf32> to vector<1x8x8xf32>
    %630 = vector.broadcast %628 : f32 to vector<1x8x8xf32>
    %631 = arith.mulf %630, %629 : vector<1x8x8xf32>
    %632 = arith.addf %627, %631 : vector<1x8x8xf32>
    %c7_267 = arith.constant 7 : index
    %c5_268 = arith.constant 5 : index
    %633 = memref.load %arg3[%c7_267, %c5_268] : memref<8x8xf32, #tpu.memory_space<smem>>
    %634 = vector.extract_strided_slice %314 {offsets = [5, 0, 0], sizes = [1, 8, 8], strides = [1, 1, 1]} : vector<8x8x8xf32> to vector<1x8x8xf32>
    %635 = vector.broadcast %633 : f32 to vector<1x8x8xf32>
    %636 = arith.mulf %635, %634 : vector<1x8x8xf32>
    %637 = arith.addf %632, %636 : vector<1x8x8xf32>
    %c7_269 = arith.constant 7 : index
    %c6_270 = arith.constant 6 : index
    %638 = memref.load %arg3[%c7_269, %c6_270] : memref<8x8xf32, #tpu.memory_space<smem>>
    %639 = vector.extract_strided_slice %314 {offsets = [6, 0, 0], sizes = [1, 8, 8], strides = [1, 1, 1]} : vector<8x8x8xf32> to vector<1x8x8xf32>
    %640 = vector.broadcast %638 : f32 to vector<1x8x8xf32>
    %641 = arith.mulf %640, %639 : vector<1x8x8xf32>
    %642 = arith.addf %637, %641 : vector<1x8x8xf32>
    %c7_271 = arith.constant 7 : index
    %c7_272 = arith.constant 7 : index
    %643 = memref.load %arg3[%c7_271, %c7_272] : memref<8x8xf32, #tpu.memory_space<smem>>
    %644 = vector.extract_strided_slice %314 {offsets = [7, 0, 0], sizes = [1, 8, 8], strides = [1, 1, 1]} : vector<8x8x8xf32> to vector<1x8x8xf32>
    %645 = vector.broadcast %643 : f32 to vector<1x8x8xf32>
    %646 = arith.mulf %645, %644 : vector<1x8x8xf32>
    %647 = arith.addf %642, %646 : vector<1x8x8xf32>
    %c7_273 = arith.constant 7 : index
    %c4_274 = arith.constant 4 : index
    %648 = memref.load %arg7[%c7_273, %c4_274] : memref<8x15xf32, #tpu.memory_space<smem>>
    %649 = vector.broadcast %648 : f32 to vector<1x8x8xf32>
    %650 = arith.addf %647, %649 : vector<1x8x8xf32>
    %651 = tpu.concatenate %356, %398, %440, %482, %524, %566, %608, %650 in 0 : vector<1x8x8xf32>, vector<1x8x8xf32>, vector<1x8x8xf32>, vector<1x8x8xf32>, vector<1x8x8xf32>, vector<1x8x8xf32>, vector<1x8x8xf32>, vector<1x8x8xf32> -> vector<8x8x8xf32>
    %c0_275 = arith.constant 0 : index
    %c0_276 = arith.constant 0 : index
    %652 = memref.load %arg4[%c0_275, %c0_276] : memref<8x8xf32, #tpu.memory_space<smem>>
    %653 = vector.extract_strided_slice %651 {offsets = [0, 0, 0], sizes = [1, 8, 8], strides = [1, 1, 1]} : vector<8x8x8xf32> to vector<1x8x8xf32>
    %654 = vector.broadcast %652 : f32 to vector<1x8x8xf32>
    %655 = arith.mulf %654, %653 : vector<1x8x8xf32>
    %c0_277 = arith.constant 0 : index
    %c1_278 = arith.constant 1 : index
    %656 = memref.load %arg4[%c0_277, %c1_278] : memref<8x8xf32, #tpu.memory_space<smem>>
    %657 = vector.extract_strided_slice %651 {offsets = [1, 0, 0], sizes = [1, 8, 8], strides = [1, 1, 1]} : vector<8x8x8xf32> to vector<1x8x8xf32>
    %658 = vector.broadcast %656 : f32 to vector<1x8x8xf32>
    %659 = arith.mulf %658, %657 : vector<1x8x8xf32>
    %660 = arith.addf %655, %659 : vector<1x8x8xf32>
    %c0_279 = arith.constant 0 : index
    %c2_280 = arith.constant 2 : index
    %661 = memref.load %arg4[%c0_279, %c2_280] : memref<8x8xf32, #tpu.memory_space<smem>>
    %662 = vector.extract_strided_slice %651 {offsets = [2, 0, 0], sizes = [1, 8, 8], strides = [1, 1, 1]} : vector<8x8x8xf32> to vector<1x8x8xf32>
    %663 = vector.broadcast %661 : f32 to vector<1x8x8xf32>
    %664 = arith.mulf %663, %662 : vector<1x8x8xf32>
    %665 = arith.addf %660, %664 : vector<1x8x8xf32>
    %c0_281 = arith.constant 0 : index
    %c3_282 = arith.constant 3 : index
    %666 = memref.load %arg4[%c0_281, %c3_282] : memref<8x8xf32, #tpu.memory_space<smem>>
    %667 = vector.extract_strided_slice %651 {offsets = [3, 0, 0], sizes = [1, 8, 8], strides = [1, 1, 1]} : vector<8x8x8xf32> to vector<1x8x8xf32>
    %668 = vector.broadcast %666 : f32 to vector<1x8x8xf32>
    %669 = arith.mulf %668, %667 : vector<1x8x8xf32>
    %670 = arith.addf %665, %669 : vector<1x8x8xf32>
    %c0_283 = arith.constant 0 : index
    %c4_284 = arith.constant 4 : index
    %671 = memref.load %arg4[%c0_283, %c4_284] : memref<8x8xf32, #tpu.memory_space<smem>>
    %672 = vector.extract_strided_slice %651 {offsets = [4, 0, 0], sizes = [1, 8, 8], strides = [1, 1, 1]} : vector<8x8x8xf32> to vector<1x8x8xf32>
    %673 = vector.broadcast %671 : f32 to vector<1x8x8xf32>
    %674 = arith.mulf %673, %672 : vector<1x8x8xf32>
    %675 = arith.addf %670, %674 : vector<1x8x8xf32>
    %c0_285 = arith.constant 0 : index
    %c5_286 = arith.constant 5 : index
    %676 = memref.load %arg4[%c0_285, %c5_286] : memref<8x8xf32, #tpu.memory_space<smem>>
    %677 = vector.extract_strided_slice %651 {offsets = [5, 0, 0], sizes = [1, 8, 8], strides = [1, 1, 1]} : vector<8x8x8xf32> to vector<1x8x8xf32>
    %678 = vector.broadcast %676 : f32 to vector<1x8x8xf32>
    %679 = arith.mulf %678, %677 : vector<1x8x8xf32>
    %680 = arith.addf %675, %679 : vector<1x8x8xf32>
    %c0_287 = arith.constant 0 : index
    %c6_288 = arith.constant 6 : index
    %681 = memref.load %arg4[%c0_287, %c6_288] : memref<8x8xf32, #tpu.memory_space<smem>>
    %682 = vector.extract_strided_slice %651 {offsets = [6, 0, 0], sizes = [1, 8, 8], strides = [1, 1, 1]} : vector<8x8x8xf32> to vector<1x8x8xf32>
    %683 = vector.broadcast %681 : f32 to vector<1x8x8xf32>
    %684 = arith.mulf %683, %682 : vector<1x8x8xf32>
    %685 = arith.addf %680, %684 : vector<1x8x8xf32>
    %c0_289 = arith.constant 0 : index
    %c7_290 = arith.constant 7 : index
    %686 = memref.load %arg4[%c0_289, %c7_290] : memref<8x8xf32, #tpu.memory_space<smem>>
    %687 = vector.extract_strided_slice %651 {offsets = [7, 0, 0], sizes = [1, 8, 8], strides = [1, 1, 1]} : vector<8x8x8xf32> to vector<1x8x8xf32>
    %688 = vector.broadcast %686 : f32 to vector<1x8x8xf32>
    %689 = arith.mulf %688, %687 : vector<1x8x8xf32>
    %690 = arith.addf %685, %689 : vector<1x8x8xf32>
    %c0_291 = arith.constant 0 : index
    %c5_292 = arith.constant 5 : index
    %691 = memref.load %arg7[%c0_291, %c5_292] : memref<8x15xf32, #tpu.memory_space<smem>>
    %692 = vector.broadcast %691 : f32 to vector<1x8x8xf32>
    %693 = arith.addf %690, %692 : vector<1x8x8xf32>
    %c0_293 = arith.constant 0 : index
    %c6_294 = arith.constant 6 : index
    %694 = memref.load %arg7[%c0_293, %c6_294] : memref<8x15xf32, #tpu.memory_space<smem>>
    %c0_295 = arith.constant 0 : index
    %c7_296 = arith.constant 7 : index
    %695 = memref.load %arg7[%c0_295, %c7_296] : memref<8x15xf32, #tpu.memory_space<smem>>
    %c0_297 = arith.constant 0 : index
    %c8 = arith.constant 8 : index
    %696 = memref.load %arg7[%c0_297, %c8] : memref<8x15xf32, #tpu.memory_space<smem>>
    %697 = arith.subf %694, %695 : f32
    %698 = vector.broadcast %697 : f32 to vector<1x8x8xf32>
    %699 = arith.mulf %698, %693 : vector<1x8x8xf32>
    %700 = vector.broadcast %696 : f32 to vector<1x8x8xf32>
    %701 = arith.mulf %700, %699 : vector<1x8x8xf32>
    %702 = arith.negf %701 : vector<1x8x8xf32>
    %703 = math.exp %702 : vector<1x8x8xf32>
    %cst_298 = arith.constant 1.000000e+00 : f32
    %704 = vector.broadcast %cst_298 : f32 to vector<1x8x8xf32>
    %705 = arith.addf %704, %703 : vector<1x8x8xf32>
    %706 = arith.divf %704, %705 : vector<1x8x8xf32>
    %707 = arith.mulf %699, %706 : vector<1x8x8xf32>
    %708 = vector.broadcast %695 : f32 to vector<1x8x8xf32>
    %709 = arith.mulf %708, %693 : vector<1x8x8xf32>
    %710 = arith.addf %707, %709 : vector<1x8x8xf32>
    %c0_299 = arith.constant 0 : index
    %c9 = arith.constant 9 : index
    %711 = memref.load %arg7[%c0_299, %c9] : memref<8x15xf32, #tpu.memory_space<smem>>
    %712 = vector.broadcast %711 : f32 to vector<1x8x8xf32>
    %713 = arith.mulf %710, %712 : vector<1x8x8xf32>
    %c0_300 = arith.constant 0 : index
    %c10 = arith.constant 10 : index
    %714 = memref.load %arg7[%c0_300, %c10] : memref<8x15xf32, #tpu.memory_space<smem>>
    %715 = vector.broadcast %714 : f32 to vector<1x8x8xf32>
    %716 = arith.addf %713, %715 : vector<1x8x8xf32>
    %c0_301 = arith.constant 0 : index
    %c11 = arith.constant 11 : index
    %717 = memref.load %arg7[%c0_301, %c11] : memref<8x15xf32, #tpu.memory_space<smem>>
    %c0_302 = arith.constant 0 : index
    %c12 = arith.constant 12 : index
    %718 = memref.load %arg7[%c0_302, %c12] : memref<8x15xf32, #tpu.memory_space<smem>>
    %c0_303 = arith.constant 0 : index
    %c13 = arith.constant 13 : index
    %719 = memref.load %arg7[%c0_303, %c13] : memref<8x15xf32, #tpu.memory_space<smem>>
    %720 = arith.subf %717, %718 : f32
    %721 = vector.broadcast %720 : f32 to vector<1x8x8xf32>
    %722 = arith.mulf %721, %716 : vector<1x8x8xf32>
    %723 = vector.broadcast %719 : f32 to vector<1x8x8xf32>
    %724 = arith.mulf %723, %722 : vector<1x8x8xf32>
    %725 = arith.negf %724 : vector<1x8x8xf32>
    %726 = math.exp %725 : vector<1x8x8xf32>
    %cst_304 = arith.constant 1.000000e+00 : f32
    %727 = vector.broadcast %cst_304 : f32 to vector<1x8x8xf32>
    %728 = arith.addf %727, %726 : vector<1x8x8xf32>
    %729 = arith.divf %727, %728 : vector<1x8x8xf32>
    %730 = arith.mulf %722, %729 : vector<1x8x8xf32>
    %731 = vector.broadcast %718 : f32 to vector<1x8x8xf32>
    %732 = arith.mulf %731, %716 : vector<1x8x8xf32>
    %733 = arith.addf %730, %732 : vector<1x8x8xf32>
    %c1_305 = arith.constant 1 : index
    %c0_306 = arith.constant 0 : index
    %734 = memref.load %arg4[%c1_305, %c0_306] : memref<8x8xf32, #tpu.memory_space<smem>>
    %735 = vector.extract_strided_slice %651 {offsets = [0, 0, 0], sizes = [1, 8, 8], strides = [1, 1, 1]} : vector<8x8x8xf32> to vector<1x8x8xf32>
    %736 = vector.broadcast %734 : f32 to vector<1x8x8xf32>
    %737 = arith.mulf %736, %735 : vector<1x8x8xf32>
    %c1_307 = arith.constant 1 : index
    %c1_308 = arith.constant 1 : index
    %738 = memref.load %arg4[%c1_307, %c1_308] : memref<8x8xf32, #tpu.memory_space<smem>>
    %739 = vector.extract_strided_slice %651 {offsets = [1, 0, 0], sizes = [1, 8, 8], strides = [1, 1, 1]} : vector<8x8x8xf32> to vector<1x8x8xf32>
    %740 = vector.broadcast %738 : f32 to vector<1x8x8xf32>
    %741 = arith.mulf %740, %739 : vector<1x8x8xf32>
    %742 = arith.addf %737, %741 : vector<1x8x8xf32>
    %c1_309 = arith.constant 1 : index
    %c2_310 = arith.constant 2 : index
    %743 = memref.load %arg4[%c1_309, %c2_310] : memref<8x8xf32, #tpu.memory_space<smem>>
    %744 = vector.extract_strided_slice %651 {offsets = [2, 0, 0], sizes = [1, 8, 8], strides = [1, 1, 1]} : vector<8x8x8xf32> to vector<1x8x8xf32>
    %745 = vector.broadcast %743 : f32 to vector<1x8x8xf32>
    %746 = arith.mulf %745, %744 : vector<1x8x8xf32>
    %747 = arith.addf %742, %746 : vector<1x8x8xf32>
    %c1_311 = arith.constant 1 : index
    %c3_312 = arith.constant 3 : index
    %748 = memref.load %arg4[%c1_311, %c3_312] : memref<8x8xf32, #tpu.memory_space<smem>>
    %749 = vector.extract_strided_slice %651 {offsets = [3, 0, 0], sizes = [1, 8, 8], strides = [1, 1, 1]} : vector<8x8x8xf32> to vector<1x8x8xf32>
    %750 = vector.broadcast %748 : f32 to vector<1x8x8xf32>
    %751 = arith.mulf %750, %749 : vector<1x8x8xf32>
    %752 = arith.addf %747, %751 : vector<1x8x8xf32>
    %c1_313 = arith.constant 1 : index
    %c4_314 = arith.constant 4 : index
    %753 = memref.load %arg4[%c1_313, %c4_314] : memref<8x8xf32, #tpu.memory_space<smem>>
    %754 = vector.extract_strided_slice %651 {offsets = [4, 0, 0], sizes = [1, 8, 8], strides = [1, 1, 1]} : vector<8x8x8xf32> to vector<1x8x8xf32>
    %755 = vector.broadcast %753 : f32 to vector<1x8x8xf32>
    %756 = arith.mulf %755, %754 : vector<1x8x8xf32>
    %757 = arith.addf %752, %756 : vector<1x8x8xf32>
    %c1_315 = arith.constant 1 : index
    %c5_316 = arith.constant 5 : index
    %758 = memref.load %arg4[%c1_315, %c5_316] : memref<8x8xf32, #tpu.memory_space<smem>>
    %759 = vector.extract_strided_slice %651 {offsets = [5, 0, 0], sizes = [1, 8, 8], strides = [1, 1, 1]} : vector<8x8x8xf32> to vector<1x8x8xf32>
    %760 = vector.broadcast %758 : f32 to vector<1x8x8xf32>
    %761 = arith.mulf %760, %759 : vector<1x8x8xf32>
    %762 = arith.addf %757, %761 : vector<1x8x8xf32>
    %c1_317 = arith.constant 1 : index
    %c6_318 = arith.constant 6 : index
    %763 = memref.load %arg4[%c1_317, %c6_318] : memref<8x8xf32, #tpu.memory_space<smem>>
    %764 = vector.extract_strided_slice %651 {offsets = [6, 0, 0], sizes = [1, 8, 8], strides = [1, 1, 1]} : vector<8x8x8xf32> to vector<1x8x8xf32>
    %765 = vector.broadcast %763 : f32 to vector<1x8x8xf32>
    %766 = arith.mulf %765, %764 : vector<1x8x8xf32>
    %767 = arith.addf %762, %766 : vector<1x8x8xf32>
    %c1_319 = arith.constant 1 : index
    %c7_320 = arith.constant 7 : index
    %768 = memref.load %arg4[%c1_319, %c7_320] : memref<8x8xf32, #tpu.memory_space<smem>>
    %769 = vector.extract_strided_slice %651 {offsets = [7, 0, 0], sizes = [1, 8, 8], strides = [1, 1, 1]} : vector<8x8x8xf32> to vector<1x8x8xf32>
    %770 = vector.broadcast %768 : f32 to vector<1x8x8xf32>
    %771 = arith.mulf %770, %769 : vector<1x8x8xf32>
    %772 = arith.addf %767, %771 : vector<1x8x8xf32>
    %c1_321 = arith.constant 1 : index
    %c5_322 = arith.constant 5 : index
    %773 = memref.load %arg7[%c1_321, %c5_322] : memref<8x15xf32, #tpu.memory_space<smem>>
    %774 = vector.broadcast %773 : f32 to vector<1x8x8xf32>
    %775 = arith.addf %772, %774 : vector<1x8x8xf32>
    %c1_323 = arith.constant 1 : index
    %c6_324 = arith.constant 6 : index
    %776 = memref.load %arg7[%c1_323, %c6_324] : memref<8x15xf32, #tpu.memory_space<smem>>
    %c1_325 = arith.constant 1 : index
    %c7_326 = arith.constant 7 : index
    %777 = memref.load %arg7[%c1_325, %c7_326] : memref<8x15xf32, #tpu.memory_space<smem>>
    %c1_327 = arith.constant 1 : index
    %c8_328 = arith.constant 8 : index
    %778 = memref.load %arg7[%c1_327, %c8_328] : memref<8x15xf32, #tpu.memory_space<smem>>
    %779 = arith.subf %776, %777 : f32
    %780 = vector.broadcast %779 : f32 to vector<1x8x8xf32>
    %781 = arith.mulf %780, %775 : vector<1x8x8xf32>
    %782 = vector.broadcast %778 : f32 to vector<1x8x8xf32>
    %783 = arith.mulf %782, %781 : vector<1x8x8xf32>
    %784 = arith.negf %783 : vector<1x8x8xf32>
    %785 = math.exp %784 : vector<1x8x8xf32>
    %cst_329 = arith.constant 1.000000e+00 : f32
    %786 = vector.broadcast %cst_329 : f32 to vector<1x8x8xf32>
    %787 = arith.addf %786, %785 : vector<1x8x8xf32>
    %788 = arith.divf %786, %787 : vector<1x8x8xf32>
    %789 = arith.mulf %781, %788 : vector<1x8x8xf32>
    %790 = vector.broadcast %777 : f32 to vector<1x8x8xf32>
    %791 = arith.mulf %790, %775 : vector<1x8x8xf32>
    %792 = arith.addf %789, %791 : vector<1x8x8xf32>
    %c1_330 = arith.constant 1 : index
    %c9_331 = arith.constant 9 : index
    %793 = memref.load %arg7[%c1_330, %c9_331] : memref<8x15xf32, #tpu.memory_space<smem>>
    %794 = vector.broadcast %793 : f32 to vector<1x8x8xf32>
    %795 = arith.mulf %792, %794 : vector<1x8x8xf32>
    %c1_332 = arith.constant 1 : index
    %c10_333 = arith.constant 10 : index
    %796 = memref.load %arg7[%c1_332, %c10_333] : memref<8x15xf32, #tpu.memory_space<smem>>
    %797 = vector.broadcast %796 : f32 to vector<1x8x8xf32>
    %798 = arith.addf %795, %797 : vector<1x8x8xf32>
    %c1_334 = arith.constant 1 : index
    %c11_335 = arith.constant 11 : index
    %799 = memref.load %arg7[%c1_334, %c11_335] : memref<8x15xf32, #tpu.memory_space<smem>>
    %c1_336 = arith.constant 1 : index
    %c12_337 = arith.constant 12 : index
    %800 = memref.load %arg7[%c1_336, %c12_337] : memref<8x15xf32, #tpu.memory_space<smem>>
    %c1_338 = arith.constant 1 : index
    %c13_339 = arith.constant 13 : index
    %801 = memref.load %arg7[%c1_338, %c13_339] : memref<8x15xf32, #tpu.memory_space<smem>>
    %802 = arith.subf %799, %800 : f32
    %803 = vector.broadcast %802 : f32 to vector<1x8x8xf32>
    %804 = arith.mulf %803, %798 : vector<1x8x8xf32>
    %805 = vector.broadcast %801 : f32 to vector<1x8x8xf32>
    %806 = arith.mulf %805, %804 : vector<1x8x8xf32>
    %807 = arith.negf %806 : vector<1x8x8xf32>
    %808 = math.exp %807 : vector<1x8x8xf32>
    %cst_340 = arith.constant 1.000000e+00 : f32
    %809 = vector.broadcast %cst_340 : f32 to vector<1x8x8xf32>
    %810 = arith.addf %809, %808 : vector<1x8x8xf32>
    %811 = arith.divf %809, %810 : vector<1x8x8xf32>
    %812 = arith.mulf %804, %811 : vector<1x8x8xf32>
    %813 = vector.broadcast %800 : f32 to vector<1x8x8xf32>
    %814 = arith.mulf %813, %798 : vector<1x8x8xf32>
    %815 = arith.addf %812, %814 : vector<1x8x8xf32>
    %c2_341 = arith.constant 2 : index
    %c0_342 = arith.constant 0 : index
    %816 = memref.load %arg4[%c2_341, %c0_342] : memref<8x8xf32, #tpu.memory_space<smem>>
    %817 = vector.extract_strided_slice %651 {offsets = [0, 0, 0], sizes = [1, 8, 8], strides = [1, 1, 1]} : vector<8x8x8xf32> to vector<1x8x8xf32>
    %818 = vector.broadcast %816 : f32 to vector<1x8x8xf32>
    %819 = arith.mulf %818, %817 : vector<1x8x8xf32>
    %c2_343 = arith.constant 2 : index
    %c1_344 = arith.constant 1 : index
    %820 = memref.load %arg4[%c2_343, %c1_344] : memref<8x8xf32, #tpu.memory_space<smem>>
    %821 = vector.extract_strided_slice %651 {offsets = [1, 0, 0], sizes = [1, 8, 8], strides = [1, 1, 1]} : vector<8x8x8xf32> to vector<1x8x8xf32>
    %822 = vector.broadcast %820 : f32 to vector<1x8x8xf32>
    %823 = arith.mulf %822, %821 : vector<1x8x8xf32>
    %824 = arith.addf %819, %823 : vector<1x8x8xf32>
    %c2_345 = arith.constant 2 : index
    %c2_346 = arith.constant 2 : index
    %825 = memref.load %arg4[%c2_345, %c2_346] : memref<8x8xf32, #tpu.memory_space<smem>>
    %826 = vector.extract_strided_slice %651 {offsets = [2, 0, 0], sizes = [1, 8, 8], strides = [1, 1, 1]} : vector<8x8x8xf32> to vector<1x8x8xf32>
    %827 = vector.broadcast %825 : f32 to vector<1x8x8xf32>
    %828 = arith.mulf %827, %826 : vector<1x8x8xf32>
    %829 = arith.addf %824, %828 : vector<1x8x8xf32>
    %c2_347 = arith.constant 2 : index
    %c3_348 = arith.constant 3 : index
    %830 = memref.load %arg4[%c2_347, %c3_348] : memref<8x8xf32, #tpu.memory_space<smem>>
    %831 = vector.extract_strided_slice %651 {offsets = [3, 0, 0], sizes = [1, 8, 8], strides = [1, 1, 1]} : vector<8x8x8xf32> to vector<1x8x8xf32>
    %832 = vector.broadcast %830 : f32 to vector<1x8x8xf32>
    %833 = arith.mulf %832, %831 : vector<1x8x8xf32>
    %834 = arith.addf %829, %833 : vector<1x8x8xf32>
    %c2_349 = arith.constant 2 : index
    %c4_350 = arith.constant 4 : index
    %835 = memref.load %arg4[%c2_349, %c4_350] : memref<8x8xf32, #tpu.memory_space<smem>>
    %836 = vector.extract_strided_slice %651 {offsets = [4, 0, 0], sizes = [1, 8, 8], strides = [1, 1, 1]} : vector<8x8x8xf32> to vector<1x8x8xf32>
    %837 = vector.broadcast %835 : f32 to vector<1x8x8xf32>
    %838 = arith.mulf %837, %836 : vector<1x8x8xf32>
    %839 = arith.addf %834, %838 : vector<1x8x8xf32>
    %c2_351 = arith.constant 2 : index
    %c5_352 = arith.constant 5 : index
    %840 = memref.load %arg4[%c2_351, %c5_352] : memref<8x8xf32, #tpu.memory_space<smem>>
    %841 = vector.extract_strided_slice %651 {offsets = [5, 0, 0], sizes = [1, 8, 8], strides = [1, 1, 1]} : vector<8x8x8xf32> to vector<1x8x8xf32>
    %842 = vector.broadcast %840 : f32 to vector<1x8x8xf32>
    %843 = arith.mulf %842, %841 : vector<1x8x8xf32>
    %844 = arith.addf %839, %843 : vector<1x8x8xf32>
    %c2_353 = arith.constant 2 : index
    %c6_354 = arith.constant 6 : index
    %845 = memref.load %arg4[%c2_353, %c6_354] : memref<8x8xf32, #tpu.memory_space<smem>>
    %846 = vector.extract_strided_slice %651 {offsets = [6, 0, 0], sizes = [1, 8, 8], strides = [1, 1, 1]} : vector<8x8x8xf32> to vector<1x8x8xf32>
    %847 = vector.broadcast %845 : f32 to vector<1x8x8xf32>
    %848 = arith.mulf %847, %846 : vector<1x8x8xf32>
    %849 = arith.addf %844, %848 : vector<1x8x8xf32>
    %c2_355 = arith.constant 2 : index
    %c7_356 = arith.constant 7 : index
    %850 = memref.load %arg4[%c2_355, %c7_356] : memref<8x8xf32, #tpu.memory_space<smem>>
    %851 = vector.extract_strided_slice %651 {offsets = [7, 0, 0], sizes = [1, 8, 8], strides = [1, 1, 1]} : vector<8x8x8xf32> to vector<1x8x8xf32>
    %852 = vector.broadcast %850 : f32 to vector<1x8x8xf32>
    %853 = arith.mulf %852, %851 : vector<1x8x8xf32>
    %854 = arith.addf %849, %853 : vector<1x8x8xf32>
    %c2_357 = arith.constant 2 : index
    %c5_358 = arith.constant 5 : index
    %855 = memref.load %arg7[%c2_357, %c5_358] : memref<8x15xf32, #tpu.memory_space<smem>>
    %856 = vector.broadcast %855 : f32 to vector<1x8x8xf32>
    %857 = arith.addf %854, %856 : vector<1x8x8xf32>
    %c2_359 = arith.constant 2 : index
    %c6_360 = arith.constant 6 : index
    %858 = memref.load %arg7[%c2_359, %c6_360] : memref<8x15xf32, #tpu.memory_space<smem>>
    %c2_361 = arith.constant 2 : index
    %c7_362 = arith.constant 7 : index
    %859 = memref.load %arg7[%c2_361, %c7_362] : memref<8x15xf32, #tpu.memory_space<smem>>
    %c2_363 = arith.constant 2 : index
    %c8_364 = arith.constant 8 : index
    %860 = memref.load %arg7[%c2_363, %c8_364] : memref<8x15xf32, #tpu.memory_space<smem>>
    %861 = arith.subf %858, %859 : f32
    %862 = vector.broadcast %861 : f32 to vector<1x8x8xf32>
    %863 = arith.mulf %862, %857 : vector<1x8x8xf32>
    %864 = vector.broadcast %860 : f32 to vector<1x8x8xf32>
    %865 = arith.mulf %864, %863 : vector<1x8x8xf32>
    %866 = arith.negf %865 : vector<1x8x8xf32>
    %867 = math.exp %866 : vector<1x8x8xf32>
    %cst_365 = arith.constant 1.000000e+00 : f32
    %868 = vector.broadcast %cst_365 : f32 to vector<1x8x8xf32>
    %869 = arith.addf %868, %867 : vector<1x8x8xf32>
    %870 = arith.divf %868, %869 : vector<1x8x8xf32>
    %871 = arith.mulf %863, %870 : vector<1x8x8xf32>
    %872 = vector.broadcast %859 : f32 to vector<1x8x8xf32>
    %873 = arith.mulf %872, %857 : vector<1x8x8xf32>
    %874 = arith.addf %871, %873 : vector<1x8x8xf32>
    %c2_366 = arith.constant 2 : index
    %c9_367 = arith.constant 9 : index
    %875 = memref.load %arg7[%c2_366, %c9_367] : memref<8x15xf32, #tpu.memory_space<smem>>
    %876 = vector.broadcast %875 : f32 to vector<1x8x8xf32>
    %877 = arith.mulf %874, %876 : vector<1x8x8xf32>
    %c2_368 = arith.constant 2 : index
    %c10_369 = arith.constant 10 : index
    %878 = memref.load %arg7[%c2_368, %c10_369] : memref<8x15xf32, #tpu.memory_space<smem>>
    %879 = vector.broadcast %878 : f32 to vector<1x8x8xf32>
    %880 = arith.addf %877, %879 : vector<1x8x8xf32>
    %c2_370 = arith.constant 2 : index
    %c11_371 = arith.constant 11 : index
    %881 = memref.load %arg7[%c2_370, %c11_371] : memref<8x15xf32, #tpu.memory_space<smem>>
    %c2_372 = arith.constant 2 : index
    %c12_373 = arith.constant 12 : index
    %882 = memref.load %arg7[%c2_372, %c12_373] : memref<8x15xf32, #tpu.memory_space<smem>>
    %c2_374 = arith.constant 2 : index
    %c13_375 = arith.constant 13 : index
    %883 = memref.load %arg7[%c2_374, %c13_375] : memref<8x15xf32, #tpu.memory_space<smem>>
    %884 = arith.subf %881, %882 : f32
    %885 = vector.broadcast %884 : f32 to vector<1x8x8xf32>
    %886 = arith.mulf %885, %880 : vector<1x8x8xf32>
    %887 = vector.broadcast %883 : f32 to vector<1x8x8xf32>
    %888 = arith.mulf %887, %886 : vector<1x8x8xf32>
    %889 = arith.negf %888 : vector<1x8x8xf32>
    %890 = math.exp %889 : vector<1x8x8xf32>
    %cst_376 = arith.constant 1.000000e+00 : f32
    %891 = vector.broadcast %cst_376 : f32 to vector<1x8x8xf32>
    %892 = arith.addf %891, %890 : vector<1x8x8xf32>
    %893 = arith.divf %891, %892 : vector<1x8x8xf32>
    %894 = arith.mulf %886, %893 : vector<1x8x8xf32>
    %895 = vector.broadcast %882 : f32 to vector<1x8x8xf32>
    %896 = arith.mulf %895, %880 : vector<1x8x8xf32>
    %897 = arith.addf %894, %896 : vector<1x8x8xf32>
    %c3_377 = arith.constant 3 : index
    %c0_378 = arith.constant 0 : index
    %898 = memref.load %arg4[%c3_377, %c0_378] : memref<8x8xf32, #tpu.memory_space<smem>>
    %899 = vector.extract_strided_slice %651 {offsets = [0, 0, 0], sizes = [1, 8, 8], strides = [1, 1, 1]} : vector<8x8x8xf32> to vector<1x8x8xf32>
    %900 = vector.broadcast %898 : f32 to vector<1x8x8xf32>
    %901 = arith.mulf %900, %899 : vector<1x8x8xf32>
    %c3_379 = arith.constant 3 : index
    %c1_380 = arith.constant 1 : index
    %902 = memref.load %arg4[%c3_379, %c1_380] : memref<8x8xf32, #tpu.memory_space<smem>>
    %903 = vector.extract_strided_slice %651 {offsets = [1, 0, 0], sizes = [1, 8, 8], strides = [1, 1, 1]} : vector<8x8x8xf32> to vector<1x8x8xf32>
    %904 = vector.broadcast %902 : f32 to vector<1x8x8xf32>
    %905 = arith.mulf %904, %903 : vector<1x8x8xf32>
    %906 = arith.addf %901, %905 : vector<1x8x8xf32>
    %c3_381 = arith.constant 3 : index
    %c2_382 = arith.constant 2 : index
    %907 = memref.load %arg4[%c3_381, %c2_382] : memref<8x8xf32, #tpu.memory_space<smem>>
    %908 = vector.extract_strided_slice %651 {offsets = [2, 0, 0], sizes = [1, 8, 8], strides = [1, 1, 1]} : vector<8x8x8xf32> to vector<1x8x8xf32>
    %909 = vector.broadcast %907 : f32 to vector<1x8x8xf32>
    %910 = arith.mulf %909, %908 : vector<1x8x8xf32>
    %911 = arith.addf %906, %910 : vector<1x8x8xf32>
    %c3_383 = arith.constant 3 : index
    %c3_384 = arith.constant 3 : index
    %912 = memref.load %arg4[%c3_383, %c3_384] : memref<8x8xf32, #tpu.memory_space<smem>>
    %913 = vector.extract_strided_slice %651 {offsets = [3, 0, 0], sizes = [1, 8, 8], strides = [1, 1, 1]} : vector<8x8x8xf32> to vector<1x8x8xf32>
    %914 = vector.broadcast %912 : f32 to vector<1x8x8xf32>
    %915 = arith.mulf %914, %913 : vector<1x8x8xf32>
    %916 = arith.addf %911, %915 : vector<1x8x8xf32>
    %c3_385 = arith.constant 3 : index
    %c4_386 = arith.constant 4 : index
    %917 = memref.load %arg4[%c3_385, %c4_386] : memref<8x8xf32, #tpu.memory_space<smem>>
    %918 = vector.extract_strided_slice %651 {offsets = [4, 0, 0], sizes = [1, 8, 8], strides = [1, 1, 1]} : vector<8x8x8xf32> to vector<1x8x8xf32>
    %919 = vector.broadcast %917 : f32 to vector<1x8x8xf32>
    %920 = arith.mulf %919, %918 : vector<1x8x8xf32>
    %921 = arith.addf %916, %920 : vector<1x8x8xf32>
    %c3_387 = arith.constant 3 : index
    %c5_388 = arith.constant 5 : index
    %922 = memref.load %arg4[%c3_387, %c5_388] : memref<8x8xf32, #tpu.memory_space<smem>>
    %923 = vector.extract_strided_slice %651 {offsets = [5, 0, 0], sizes = [1, 8, 8], strides = [1, 1, 1]} : vector<8x8x8xf32> to vector<1x8x8xf32>
    %924 = vector.broadcast %922 : f32 to vector<1x8x8xf32>
    %925 = arith.mulf %924, %923 : vector<1x8x8xf32>
    %926 = arith.addf %921, %925 : vector<1x8x8xf32>
    %c3_389 = arith.constant 3 : index
    %c6_390 = arith.constant 6 : index
    %927 = memref.load %arg4[%c3_389, %c6_390] : memref<8x8xf32, #tpu.memory_space<smem>>
    %928 = vector.extract_strided_slice %651 {offsets = [6, 0, 0], sizes = [1, 8, 8], strides = [1, 1, 1]} : vector<8x8x8xf32> to vector<1x8x8xf32>
    %929 = vector.broadcast %927 : f32 to vector<1x8x8xf32>
    %930 = arith.mulf %929, %928 : vector<1x8x8xf32>
    %931 = arith.addf %926, %930 : vector<1x8x8xf32>
    %c3_391 = arith.constant 3 : index
    %c7_392 = arith.constant 7 : index
    %932 = memref.load %arg4[%c3_391, %c7_392] : memref<8x8xf32, #tpu.memory_space<smem>>
    %933 = vector.extract_strided_slice %651 {offsets = [7, 0, 0], sizes = [1, 8, 8], strides = [1, 1, 1]} : vector<8x8x8xf32> to vector<1x8x8xf32>
    %934 = vector.broadcast %932 : f32 to vector<1x8x8xf32>
    %935 = arith.mulf %934, %933 : vector<1x8x8xf32>
    %936 = arith.addf %931, %935 : vector<1x8x8xf32>
    %c3_393 = arith.constant 3 : index
    %c5_394 = arith.constant 5 : index
    %937 = memref.load %arg7[%c3_393, %c5_394] : memref<8x15xf32, #tpu.memory_space<smem>>
    %938 = vector.broadcast %937 : f32 to vector<1x8x8xf32>
    %939 = arith.addf %936, %938 : vector<1x8x8xf32>
    %c3_395 = arith.constant 3 : index
    %c6_396 = arith.constant 6 : index
    %940 = memref.load %arg7[%c3_395, %c6_396] : memref<8x15xf32, #tpu.memory_space<smem>>
    %c3_397 = arith.constant 3 : index
    %c7_398 = arith.constant 7 : index
    %941 = memref.load %arg7[%c3_397, %c7_398] : memref<8x15xf32, #tpu.memory_space<smem>>
    %c3_399 = arith.constant 3 : index
    %c8_400 = arith.constant 8 : index
    %942 = memref.load %arg7[%c3_399, %c8_400] : memref<8x15xf32, #tpu.memory_space<smem>>
    %943 = arith.subf %940, %941 : f32
    %944 = vector.broadcast %943 : f32 to vector<1x8x8xf32>
    %945 = arith.mulf %944, %939 : vector<1x8x8xf32>
    %946 = vector.broadcast %942 : f32 to vector<1x8x8xf32>
    %947 = arith.mulf %946, %945 : vector<1x8x8xf32>
    %948 = arith.negf %947 : vector<1x8x8xf32>
    %949 = math.exp %948 : vector<1x8x8xf32>
    %cst_401 = arith.constant 1.000000e+00 : f32
    %950 = vector.broadcast %cst_401 : f32 to vector<1x8x8xf32>
    %951 = arith.addf %950, %949 : vector<1x8x8xf32>
    %952 = arith.divf %950, %951 : vector<1x8x8xf32>
    %953 = arith.mulf %945, %952 : vector<1x8x8xf32>
    %954 = vector.broadcast %941 : f32 to vector<1x8x8xf32>
    %955 = arith.mulf %954, %939 : vector<1x8x8xf32>
    %956 = arith.addf %953, %955 : vector<1x8x8xf32>
    %c3_402 = arith.constant 3 : index
    %c9_403 = arith.constant 9 : index
    %957 = memref.load %arg7[%c3_402, %c9_403] : memref<8x15xf32, #tpu.memory_space<smem>>
    %958 = vector.broadcast %957 : f32 to vector<1x8x8xf32>
    %959 = arith.mulf %956, %958 : vector<1x8x8xf32>
    %c3_404 = arith.constant 3 : index
    %c10_405 = arith.constant 10 : index
    %960 = memref.load %arg7[%c3_404, %c10_405] : memref<8x15xf32, #tpu.memory_space<smem>>
    %961 = vector.broadcast %960 : f32 to vector<1x8x8xf32>
    %962 = arith.addf %959, %961 : vector<1x8x8xf32>
    %c3_406 = arith.constant 3 : index
    %c11_407 = arith.constant 11 : index
    %963 = memref.load %arg7[%c3_406, %c11_407] : memref<8x15xf32, #tpu.memory_space<smem>>
    %c3_408 = arith.constant 3 : index
    %c12_409 = arith.constant 12 : index
    %964 = memref.load %arg7[%c3_408, %c12_409] : memref<8x15xf32, #tpu.memory_space<smem>>
    %c3_410 = arith.constant 3 : index
    %c13_411 = arith.constant 13 : index
    %965 = memref.load %arg7[%c3_410, %c13_411] : memref<8x15xf32, #tpu.memory_space<smem>>
    %966 = arith.subf %963, %964 : f32
    %967 = vector.broadcast %966 : f32 to vector<1x8x8xf32>
    %968 = arith.mulf %967, %962 : vector<1x8x8xf32>
    %969 = vector.broadcast %965 : f32 to vector<1x8x8xf32>
    %970 = arith.mulf %969, %968 : vector<1x8x8xf32>
    %971 = arith.negf %970 : vector<1x8x8xf32>
    %972 = math.exp %971 : vector<1x8x8xf32>
    %cst_412 = arith.constant 1.000000e+00 : f32
    %973 = vector.broadcast %cst_412 : f32 to vector<1x8x8xf32>
    %974 = arith.addf %973, %972 : vector<1x8x8xf32>
    %975 = arith.divf %973, %974 : vector<1x8x8xf32>
    %976 = arith.mulf %968, %975 : vector<1x8x8xf32>
    %977 = vector.broadcast %964 : f32 to vector<1x8x8xf32>
    %978 = arith.mulf %977, %962 : vector<1x8x8xf32>
    %979 = arith.addf %976, %978 : vector<1x8x8xf32>
    %c4_413 = arith.constant 4 : index
    %c0_414 = arith.constant 0 : index
    %980 = memref.load %arg4[%c4_413, %c0_414] : memref<8x8xf32, #tpu.memory_space<smem>>
    %981 = vector.extract_strided_slice %651 {offsets = [0, 0, 0], sizes = [1, 8, 8], strides = [1, 1, 1]} : vector<8x8x8xf32> to vector<1x8x8xf32>
    %982 = vector.broadcast %980 : f32 to vector<1x8x8xf32>
    %983 = arith.mulf %982, %981 : vector<1x8x8xf32>
    %c4_415 = arith.constant 4 : index
    %c1_416 = arith.constant 1 : index
    %984 = memref.load %arg4[%c4_415, %c1_416] : memref<8x8xf32, #tpu.memory_space<smem>>
    %985 = vector.extract_strided_slice %651 {offsets = [1, 0, 0], sizes = [1, 8, 8], strides = [1, 1, 1]} : vector<8x8x8xf32> to vector<1x8x8xf32>
    %986 = vector.broadcast %984 : f32 to vector<1x8x8xf32>
    %987 = arith.mulf %986, %985 : vector<1x8x8xf32>
    %988 = arith.addf %983, %987 : vector<1x8x8xf32>
    %c4_417 = arith.constant 4 : index
    %c2_418 = arith.constant 2 : index
    %989 = memref.load %arg4[%c4_417, %c2_418] : memref<8x8xf32, #tpu.memory_space<smem>>
    %990 = vector.extract_strided_slice %651 {offsets = [2, 0, 0], sizes = [1, 8, 8], strides = [1, 1, 1]} : vector<8x8x8xf32> to vector<1x8x8xf32>
    %991 = vector.broadcast %989 : f32 to vector<1x8x8xf32>
    %992 = arith.mulf %991, %990 : vector<1x8x8xf32>
    %993 = arith.addf %988, %992 : vector<1x8x8xf32>
    %c4_419 = arith.constant 4 : index
    %c3_420 = arith.constant 3 : index
    %994 = memref.load %arg4[%c4_419, %c3_420] : memref<8x8xf32, #tpu.memory_space<smem>>
    %995 = vector.extract_strided_slice %651 {offsets = [3, 0, 0], sizes = [1, 8, 8], strides = [1, 1, 1]} : vector<8x8x8xf32> to vector<1x8x8xf32>
    %996 = vector.broadcast %994 : f32 to vector<1x8x8xf32>
    %997 = arith.mulf %996, %995 : vector<1x8x8xf32>
    %998 = arith.addf %993, %997 : vector<1x8x8xf32>
    %c4_421 = arith.constant 4 : index
    %c4_422 = arith.constant 4 : index
    %999 = memref.load %arg4[%c4_421, %c4_422] : memref<8x8xf32, #tpu.memory_space<smem>>
    %1000 = vector.extract_strided_slice %651 {offsets = [4, 0, 0], sizes = [1, 8, 8], strides = [1, 1, 1]} : vector<8x8x8xf32> to vector<1x8x8xf32>
    %1001 = vector.broadcast %999 : f32 to vector<1x8x8xf32>
    %1002 = arith.mulf %1001, %1000 : vector<1x8x8xf32>
    %1003 = arith.addf %998, %1002 : vector<1x8x8xf32>
    %c4_423 = arith.constant 4 : index
    %c5_424 = arith.constant 5 : index
    %1004 = memref.load %arg4[%c4_423, %c5_424] : memref<8x8xf32, #tpu.memory_space<smem>>
    %1005 = vector.extract_strided_slice %651 {offsets = [5, 0, 0], sizes = [1, 8, 8], strides = [1, 1, 1]} : vector<8x8x8xf32> to vector<1x8x8xf32>
    %1006 = vector.broadcast %1004 : f32 to vector<1x8x8xf32>
    %1007 = arith.mulf %1006, %1005 : vector<1x8x8xf32>
    %1008 = arith.addf %1003, %1007 : vector<1x8x8xf32>
    %c4_425 = arith.constant 4 : index
    %c6_426 = arith.constant 6 : index
    %1009 = memref.load %arg4[%c4_425, %c6_426] : memref<8x8xf32, #tpu.memory_space<smem>>
    %1010 = vector.extract_strided_slice %651 {offsets = [6, 0, 0], sizes = [1, 8, 8], strides = [1, 1, 1]} : vector<8x8x8xf32> to vector<1x8x8xf32>
    %1011 = vector.broadcast %1009 : f32 to vector<1x8x8xf32>
    %1012 = arith.mulf %1011, %1010 : vector<1x8x8xf32>
    %1013 = arith.addf %1008, %1012 : vector<1x8x8xf32>
    %c4_427 = arith.constant 4 : index
    %c7_428 = arith.constant 7 : index
    %1014 = memref.load %arg4[%c4_427, %c7_428] : memref<8x8xf32, #tpu.memory_space<smem>>
    %1015 = vector.extract_strided_slice %651 {offsets = [7, 0, 0], sizes = [1, 8, 8], strides = [1, 1, 1]} : vector<8x8x8xf32> to vector<1x8x8xf32>
    %1016 = vector.broadcast %1014 : f32 to vector<1x8x8xf32>
    %1017 = arith.mulf %1016, %1015 : vector<1x8x8xf32>
    %1018 = arith.addf %1013, %1017 : vector<1x8x8xf32>
    %c4_429 = arith.constant 4 : index
    %c5_430 = arith.constant 5 : index
    %1019 = memref.load %arg7[%c4_429, %c5_430] : memref<8x15xf32, #tpu.memory_space<smem>>
    %1020 = vector.broadcast %1019 : f32 to vector<1x8x8xf32>
    %1021 = arith.addf %1018, %1020 : vector<1x8x8xf32>
    %c4_431 = arith.constant 4 : index
    %c6_432 = arith.constant 6 : index
    %1022 = memref.load %arg7[%c4_431, %c6_432] : memref<8x15xf32, #tpu.memory_space<smem>>
    %c4_433 = arith.constant 4 : index
    %c7_434 = arith.constant 7 : index
    %1023 = memref.load %arg7[%c4_433, %c7_434] : memref<8x15xf32, #tpu.memory_space<smem>>
    %c4_435 = arith.constant 4 : index
    %c8_436 = arith.constant 8 : index
    %1024 = memref.load %arg7[%c4_435, %c8_436] : memref<8x15xf32, #tpu.memory_space<smem>>
    %1025 = arith.subf %1022, %1023 : f32
    %1026 = vector.broadcast %1025 : f32 to vector<1x8x8xf32>
    %1027 = arith.mulf %1026, %1021 : vector<1x8x8xf32>
    %1028 = vector.broadcast %1024 : f32 to vector<1x8x8xf32>
    %1029 = arith.mulf %1028, %1027 : vector<1x8x8xf32>
    %1030 = arith.negf %1029 : vector<1x8x8xf32>
    %1031 = math.exp %1030 : vector<1x8x8xf32>
    %cst_437 = arith.constant 1.000000e+00 : f32
    %1032 = vector.broadcast %cst_437 : f32 to vector<1x8x8xf32>
    %1033 = arith.addf %1032, %1031 : vector<1x8x8xf32>
    %1034 = arith.divf %1032, %1033 : vector<1x8x8xf32>
    %1035 = arith.mulf %1027, %1034 : vector<1x8x8xf32>
    %1036 = vector.broadcast %1023 : f32 to vector<1x8x8xf32>
    %1037 = arith.mulf %1036, %1021 : vector<1x8x8xf32>
    %1038 = arith.addf %1035, %1037 : vector<1x8x8xf32>
    %c4_438 = arith.constant 4 : index
    %c9_439 = arith.constant 9 : index
    %1039 = memref.load %arg7[%c4_438, %c9_439] : memref<8x15xf32, #tpu.memory_space<smem>>
    %1040 = vector.broadcast %1039 : f32 to vector<1x8x8xf32>
    %1041 = arith.mulf %1038, %1040 : vector<1x8x8xf32>
    %c4_440 = arith.constant 4 : index
    %c10_441 = arith.constant 10 : index
    %1042 = memref.load %arg7[%c4_440, %c10_441] : memref<8x15xf32, #tpu.memory_space<smem>>
    %1043 = vector.broadcast %1042 : f32 to vector<1x8x8xf32>
    %1044 = arith.addf %1041, %1043 : vector<1x8x8xf32>
    %c4_442 = arith.constant 4 : index
    %c11_443 = arith.constant 11 : index
    %1045 = memref.load %arg7[%c4_442, %c11_443] : memref<8x15xf32, #tpu.memory_space<smem>>
    %c4_444 = arith.constant 4 : index
    %c12_445 = arith.constant 12 : index
    %1046 = memref.load %arg7[%c4_444, %c12_445] : memref<8x15xf32, #tpu.memory_space<smem>>
    %c4_446 = arith.constant 4 : index
    %c13_447 = arith.constant 13 : index
    %1047 = memref.load %arg7[%c4_446, %c13_447] : memref<8x15xf32, #tpu.memory_space<smem>>
    %1048 = arith.subf %1045, %1046 : f32
    %1049 = vector.broadcast %1048 : f32 to vector<1x8x8xf32>
    %1050 = arith.mulf %1049, %1044 : vector<1x8x8xf32>
    %1051 = vector.broadcast %1047 : f32 to vector<1x8x8xf32>
    %1052 = arith.mulf %1051, %1050 : vector<1x8x8xf32>
    %1053 = arith.negf %1052 : vector<1x8x8xf32>
    %1054 = math.exp %1053 : vector<1x8x8xf32>
    %cst_448 = arith.constant 1.000000e+00 : f32
    %1055 = vector.broadcast %cst_448 : f32 to vector<1x8x8xf32>
    %1056 = arith.addf %1055, %1054 : vector<1x8x8xf32>
    %1057 = arith.divf %1055, %1056 : vector<1x8x8xf32>
    %1058 = arith.mulf %1050, %1057 : vector<1x8x8xf32>
    %1059 = vector.broadcast %1046 : f32 to vector<1x8x8xf32>
    %1060 = arith.mulf %1059, %1044 : vector<1x8x8xf32>
    %1061 = arith.addf %1058, %1060 : vector<1x8x8xf32>
    %c5_449 = arith.constant 5 : index
    %c0_450 = arith.constant 0 : index
    %1062 = memref.load %arg4[%c5_449, %c0_450] : memref<8x8xf32, #tpu.memory_space<smem>>
    %1063 = vector.extract_strided_slice %651 {offsets = [0, 0, 0], sizes = [1, 8, 8], strides = [1, 1, 1]} : vector<8x8x8xf32> to vector<1x8x8xf32>
    %1064 = vector.broadcast %1062 : f32 to vector<1x8x8xf32>
    %1065 = arith.mulf %1064, %1063 : vector<1x8x8xf32>
    %c5_451 = arith.constant 5 : index
    %c1_452 = arith.constant 1 : index
    %1066 = memref.load %arg4[%c5_451, %c1_452] : memref<8x8xf32, #tpu.memory_space<smem>>
    %1067 = vector.extract_strided_slice %651 {offsets = [1, 0, 0], sizes = [1, 8, 8], strides = [1, 1, 1]} : vector<8x8x8xf32> to vector<1x8x8xf32>
    %1068 = vector.broadcast %1066 : f32 to vector<1x8x8xf32>
    %1069 = arith.mulf %1068, %1067 : vector<1x8x8xf32>
    %1070 = arith.addf %1065, %1069 : vector<1x8x8xf32>
    %c5_453 = arith.constant 5 : index
    %c2_454 = arith.constant 2 : index
    %1071 = memref.load %arg4[%c5_453, %c2_454] : memref<8x8xf32, #tpu.memory_space<smem>>
    %1072 = vector.extract_strided_slice %651 {offsets = [2, 0, 0], sizes = [1, 8, 8], strides = [1, 1, 1]} : vector<8x8x8xf32> to vector<1x8x8xf32>
    %1073 = vector.broadcast %1071 : f32 to vector<1x8x8xf32>
    %1074 = arith.mulf %1073, %1072 : vector<1x8x8xf32>
    %1075 = arith.addf %1070, %1074 : vector<1x8x8xf32>
    %c5_455 = arith.constant 5 : index
    %c3_456 = arith.constant 3 : index
    %1076 = memref.load %arg4[%c5_455, %c3_456] : memref<8x8xf32, #tpu.memory_space<smem>>
    %1077 = vector.extract_strided_slice %651 {offsets = [3, 0, 0], sizes = [1, 8, 8], strides = [1, 1, 1]} : vector<8x8x8xf32> to vector<1x8x8xf32>
    %1078 = vector.broadcast %1076 : f32 to vector<1x8x8xf32>
    %1079 = arith.mulf %1078, %1077 : vector<1x8x8xf32>
    %1080 = arith.addf %1075, %1079 : vector<1x8x8xf32>
    %c5_457 = arith.constant 5 : index
    %c4_458 = arith.constant 4 : index
    %1081 = memref.load %arg4[%c5_457, %c4_458] : memref<8x8xf32, #tpu.memory_space<smem>>
    %1082 = vector.extract_strided_slice %651 {offsets = [4, 0, 0], sizes = [1, 8, 8], strides = [1, 1, 1]} : vector<8x8x8xf32> to vector<1x8x8xf32>
    %1083 = vector.broadcast %1081 : f32 to vector<1x8x8xf32>
    %1084 = arith.mulf %1083, %1082 : vector<1x8x8xf32>
    %1085 = arith.addf %1080, %1084 : vector<1x8x8xf32>
    %c5_459 = arith.constant 5 : index
    %c5_460 = arith.constant 5 : index
    %1086 = memref.load %arg4[%c5_459, %c5_460] : memref<8x8xf32, #tpu.memory_space<smem>>
    %1087 = vector.extract_strided_slice %651 {offsets = [5, 0, 0], sizes = [1, 8, 8], strides = [1, 1, 1]} : vector<8x8x8xf32> to vector<1x8x8xf32>
    %1088 = vector.broadcast %1086 : f32 to vector<1x8x8xf32>
    %1089 = arith.mulf %1088, %1087 : vector<1x8x8xf32>
    %1090 = arith.addf %1085, %1089 : vector<1x8x8xf32>
    %c5_461 = arith.constant 5 : index
    %c6_462 = arith.constant 6 : index
    %1091 = memref.load %arg4[%c5_461, %c6_462] : memref<8x8xf32, #tpu.memory_space<smem>>
    %1092 = vector.extract_strided_slice %651 {offsets = [6, 0, 0], sizes = [1, 8, 8], strides = [1, 1, 1]} : vector<8x8x8xf32> to vector<1x8x8xf32>
    %1093 = vector.broadcast %1091 : f32 to vector<1x8x8xf32>
    %1094 = arith.mulf %1093, %1092 : vector<1x8x8xf32>
    %1095 = arith.addf %1090, %1094 : vector<1x8x8xf32>
    %c5_463 = arith.constant 5 : index
    %c7_464 = arith.constant 7 : index
    %1096 = memref.load %arg4[%c5_463, %c7_464] : memref<8x8xf32, #tpu.memory_space<smem>>
    %1097 = vector.extract_strided_slice %651 {offsets = [7, 0, 0], sizes = [1, 8, 8], strides = [1, 1, 1]} : vector<8x8x8xf32> to vector<1x8x8xf32>
    %1098 = vector.broadcast %1096 : f32 to vector<1x8x8xf32>
    %1099 = arith.mulf %1098, %1097 : vector<1x8x8xf32>
    %1100 = arith.addf %1095, %1099 : vector<1x8x8xf32>
    %c5_465 = arith.constant 5 : index
    %c5_466 = arith.constant 5 : index
    %1101 = memref.load %arg7[%c5_465, %c5_466] : memref<8x15xf32, #tpu.memory_space<smem>>
    %1102 = vector.broadcast %1101 : f32 to vector<1x8x8xf32>
    %1103 = arith.addf %1100, %1102 : vector<1x8x8xf32>
    %c5_467 = arith.constant 5 : index
    %c6_468 = arith.constant 6 : index
    %1104 = memref.load %arg7[%c5_467, %c6_468] : memref<8x15xf32, #tpu.memory_space<smem>>
    %c5_469 = arith.constant 5 : index
    %c7_470 = arith.constant 7 : index
    %1105 = memref.load %arg7[%c5_469, %c7_470] : memref<8x15xf32, #tpu.memory_space<smem>>
    %c5_471 = arith.constant 5 : index
    %c8_472 = arith.constant 8 : index
    %1106 = memref.load %arg7[%c5_471, %c8_472] : memref<8x15xf32, #tpu.memory_space<smem>>
    %1107 = arith.subf %1104, %1105 : f32
    %1108 = vector.broadcast %1107 : f32 to vector<1x8x8xf32>
    %1109 = arith.mulf %1108, %1103 : vector<1x8x8xf32>
    %1110 = vector.broadcast %1106 : f32 to vector<1x8x8xf32>
    %1111 = arith.mulf %1110, %1109 : vector<1x8x8xf32>
    %1112 = arith.negf %1111 : vector<1x8x8xf32>
    %1113 = math.exp %1112 : vector<1x8x8xf32>
    %cst_473 = arith.constant 1.000000e+00 : f32
    %1114 = vector.broadcast %cst_473 : f32 to vector<1x8x8xf32>
    %1115 = arith.addf %1114, %1113 : vector<1x8x8xf32>
    %1116 = arith.divf %1114, %1115 : vector<1x8x8xf32>
    %1117 = arith.mulf %1109, %1116 : vector<1x8x8xf32>
    %1118 = vector.broadcast %1105 : f32 to vector<1x8x8xf32>
    %1119 = arith.mulf %1118, %1103 : vector<1x8x8xf32>
    %1120 = arith.addf %1117, %1119 : vector<1x8x8xf32>
    %c5_474 = arith.constant 5 : index
    %c9_475 = arith.constant 9 : index
    %1121 = memref.load %arg7[%c5_474, %c9_475] : memref<8x15xf32, #tpu.memory_space<smem>>
    %1122 = vector.broadcast %1121 : f32 to vector<1x8x8xf32>
    %1123 = arith.mulf %1120, %1122 : vector<1x8x8xf32>
    %c5_476 = arith.constant 5 : index
    %c10_477 = arith.constant 10 : index
    %1124 = memref.load %arg7[%c5_476, %c10_477] : memref<8x15xf32, #tpu.memory_space<smem>>
    %1125 = vector.broadcast %1124 : f32 to vector<1x8x8xf32>
    %1126 = arith.addf %1123, %1125 : vector<1x8x8xf32>
    %c5_478 = arith.constant 5 : index
    %c11_479 = arith.constant 11 : index
    %1127 = memref.load %arg7[%c5_478, %c11_479] : memref<8x15xf32, #tpu.memory_space<smem>>
    %c5_480 = arith.constant 5 : index
    %c12_481 = arith.constant 12 : index
    %1128 = memref.load %arg7[%c5_480, %c12_481] : memref<8x15xf32, #tpu.memory_space<smem>>
    %c5_482 = arith.constant 5 : index
    %c13_483 = arith.constant 13 : index
    %1129 = memref.load %arg7[%c5_482, %c13_483] : memref<8x15xf32, #tpu.memory_space<smem>>
    %1130 = arith.subf %1127, %1128 : f32
    %1131 = vector.broadcast %1130 : f32 to vector<1x8x8xf32>
    %1132 = arith.mulf %1131, %1126 : vector<1x8x8xf32>
    %1133 = vector.broadcast %1129 : f32 to vector<1x8x8xf32>
    %1134 = arith.mulf %1133, %1132 : vector<1x8x8xf32>
    %1135 = arith.negf %1134 : vector<1x8x8xf32>
    %1136 = math.exp %1135 : vector<1x8x8xf32>
    %cst_484 = arith.constant 1.000000e+00 : f32
    %1137 = vector.broadcast %cst_484 : f32 to vector<1x8x8xf32>
    %1138 = arith.addf %1137, %1136 : vector<1x8x8xf32>
    %1139 = arith.divf %1137, %1138 : vector<1x8x8xf32>
    %1140 = arith.mulf %1132, %1139 : vector<1x8x8xf32>
    %1141 = vector.broadcast %1128 : f32 to vector<1x8x8xf32>
    %1142 = arith.mulf %1141, %1126 : vector<1x8x8xf32>
    %1143 = arith.addf %1140, %1142 : vector<1x8x8xf32>
    %c6_485 = arith.constant 6 : index
    %c0_486 = arith.constant 0 : index
    %1144 = memref.load %arg4[%c6_485, %c0_486] : memref<8x8xf32, #tpu.memory_space<smem>>
    %1145 = vector.extract_strided_slice %651 {offsets = [0, 0, 0], sizes = [1, 8, 8], strides = [1, 1, 1]} : vector<8x8x8xf32> to vector<1x8x8xf32>
    %1146 = vector.broadcast %1144 : f32 to vector<1x8x8xf32>
    %1147 = arith.mulf %1146, %1145 : vector<1x8x8xf32>
    %c6_487 = arith.constant 6 : index
    %c1_488 = arith.constant 1 : index
    %1148 = memref.load %arg4[%c6_487, %c1_488] : memref<8x8xf32, #tpu.memory_space<smem>>
    %1149 = vector.extract_strided_slice %651 {offsets = [1, 0, 0], sizes = [1, 8, 8], strides = [1, 1, 1]} : vector<8x8x8xf32> to vector<1x8x8xf32>
    %1150 = vector.broadcast %1148 : f32 to vector<1x8x8xf32>
    %1151 = arith.mulf %1150, %1149 : vector<1x8x8xf32>
    %1152 = arith.addf %1147, %1151 : vector<1x8x8xf32>
    %c6_489 = arith.constant 6 : index
    %c2_490 = arith.constant 2 : index
    %1153 = memref.load %arg4[%c6_489, %c2_490] : memref<8x8xf32, #tpu.memory_space<smem>>
    %1154 = vector.extract_strided_slice %651 {offsets = [2, 0, 0], sizes = [1, 8, 8], strides = [1, 1, 1]} : vector<8x8x8xf32> to vector<1x8x8xf32>
    %1155 = vector.broadcast %1153 : f32 to vector<1x8x8xf32>
    %1156 = arith.mulf %1155, %1154 : vector<1x8x8xf32>
    %1157 = arith.addf %1152, %1156 : vector<1x8x8xf32>
    %c6_491 = arith.constant 6 : index
    %c3_492 = arith.constant 3 : index
    %1158 = memref.load %arg4[%c6_491, %c3_492] : memref<8x8xf32, #tpu.memory_space<smem>>
    %1159 = vector.extract_strided_slice %651 {offsets = [3, 0, 0], sizes = [1, 8, 8], strides = [1, 1, 1]} : vector<8x8x8xf32> to vector<1x8x8xf32>
    %1160 = vector.broadcast %1158 : f32 to vector<1x8x8xf32>
    %1161 = arith.mulf %1160, %1159 : vector<1x8x8xf32>
    %1162 = arith.addf %1157, %1161 : vector<1x8x8xf32>
    %c6_493 = arith.constant 6 : index
    %c4_494 = arith.constant 4 : index
    %1163 = memref.load %arg4[%c6_493, %c4_494] : memref<8x8xf32, #tpu.memory_space<smem>>
    %1164 = vector.extract_strided_slice %651 {offsets = [4, 0, 0], sizes = [1, 8, 8], strides = [1, 1, 1]} : vector<8x8x8xf32> to vector<1x8x8xf32>
    %1165 = vector.broadcast %1163 : f32 to vector<1x8x8xf32>
    %1166 = arith.mulf %1165, %1164 : vector<1x8x8xf32>
    %1167 = arith.addf %1162, %1166 : vector<1x8x8xf32>
    %c6_495 = arith.constant 6 : index
    %c5_496 = arith.constant 5 : index
    %1168 = memref.load %arg4[%c6_495, %c5_496] : memref<8x8xf32, #tpu.memory_space<smem>>
    %1169 = vector.extract_strided_slice %651 {offsets = [5, 0, 0], sizes = [1, 8, 8], strides = [1, 1, 1]} : vector<8x8x8xf32> to vector<1x8x8xf32>
    %1170 = vector.broadcast %1168 : f32 to vector<1x8x8xf32>
    %1171 = arith.mulf %1170, %1169 : vector<1x8x8xf32>
    %1172 = arith.addf %1167, %1171 : vector<1x8x8xf32>
    %c6_497 = arith.constant 6 : index
    %c6_498 = arith.constant 6 : index
    %1173 = memref.load %arg4[%c6_497, %c6_498] : memref<8x8xf32, #tpu.memory_space<smem>>
    %1174 = vector.extract_strided_slice %651 {offsets = [6, 0, 0], sizes = [1, 8, 8], strides = [1, 1, 1]} : vector<8x8x8xf32> to vector<1x8x8xf32>
    %1175 = vector.broadcast %1173 : f32 to vector<1x8x8xf32>
    %1176 = arith.mulf %1175, %1174 : vector<1x8x8xf32>
    %1177 = arith.addf %1172, %1176 : vector<1x8x8xf32>
    %c6_499 = arith.constant 6 : index
    %c7_500 = arith.constant 7 : index
    %1178 = memref.load %arg4[%c6_499, %c7_500] : memref<8x8xf32, #tpu.memory_space<smem>>
    %1179 = vector.extract_strided_slice %651 {offsets = [7, 0, 0], sizes = [1, 8, 8], strides = [1, 1, 1]} : vector<8x8x8xf32> to vector<1x8x8xf32>
    %1180 = vector.broadcast %1178 : f32 to vector<1x8x8xf32>
    %1181 = arith.mulf %1180, %1179 : vector<1x8x8xf32>
    %1182 = arith.addf %1177, %1181 : vector<1x8x8xf32>
    %c6_501 = arith.constant 6 : index
    %c5_502 = arith.constant 5 : index
    %1183 = memref.load %arg7[%c6_501, %c5_502] : memref<8x15xf32, #tpu.memory_space<smem>>
    %1184 = vector.broadcast %1183 : f32 to vector<1x8x8xf32>
    %1185 = arith.addf %1182, %1184 : vector<1x8x8xf32>
    %c6_503 = arith.constant 6 : index
    %c6_504 = arith.constant 6 : index
    %1186 = memref.load %arg7[%c6_503, %c6_504] : memref<8x15xf32, #tpu.memory_space<smem>>
    %c6_505 = arith.constant 6 : index
    %c7_506 = arith.constant 7 : index
    %1187 = memref.load %arg7[%c6_505, %c7_506] : memref<8x15xf32, #tpu.memory_space<smem>>
    %c6_507 = arith.constant 6 : index
    %c8_508 = arith.constant 8 : index
    %1188 = memref.load %arg7[%c6_507, %c8_508] : memref<8x15xf32, #tpu.memory_space<smem>>
    %1189 = arith.subf %1186, %1187 : f32
    %1190 = vector.broadcast %1189 : f32 to vector<1x8x8xf32>
    %1191 = arith.mulf %1190, %1185 : vector<1x8x8xf32>
    %1192 = vector.broadcast %1188 : f32 to vector<1x8x8xf32>
    %1193 = arith.mulf %1192, %1191 : vector<1x8x8xf32>
    %1194 = arith.negf %1193 : vector<1x8x8xf32>
    %1195 = math.exp %1194 : vector<1x8x8xf32>
    %cst_509 = arith.constant 1.000000e+00 : f32
    %1196 = vector.broadcast %cst_509 : f32 to vector<1x8x8xf32>
    %1197 = arith.addf %1196, %1195 : vector<1x8x8xf32>
    %1198 = arith.divf %1196, %1197 : vector<1x8x8xf32>
    %1199 = arith.mulf %1191, %1198 : vector<1x8x8xf32>
    %1200 = vector.broadcast %1187 : f32 to vector<1x8x8xf32>
    %1201 = arith.mulf %1200, %1185 : vector<1x8x8xf32>
    %1202 = arith.addf %1199, %1201 : vector<1x8x8xf32>
    %c6_510 = arith.constant 6 : index
    %c9_511 = arith.constant 9 : index
    %1203 = memref.load %arg7[%c6_510, %c9_511] : memref<8x15xf32, #tpu.memory_space<smem>>
    %1204 = vector.broadcast %1203 : f32 to vector<1x8x8xf32>
    %1205 = arith.mulf %1202, %1204 : vector<1x8x8xf32>
    %c6_512 = arith.constant 6 : index
    %c10_513 = arith.constant 10 : index
    %1206 = memref.load %arg7[%c6_512, %c10_513] : memref<8x15xf32, #tpu.memory_space<smem>>
    %1207 = vector.broadcast %1206 : f32 to vector<1x8x8xf32>
    %1208 = arith.addf %1205, %1207 : vector<1x8x8xf32>
    %c6_514 = arith.constant 6 : index
    %c11_515 = arith.constant 11 : index
    %1209 = memref.load %arg7[%c6_514, %c11_515] : memref<8x15xf32, #tpu.memory_space<smem>>
    %c6_516 = arith.constant 6 : index
    %c12_517 = arith.constant 12 : index
    %1210 = memref.load %arg7[%c6_516, %c12_517] : memref<8x15xf32, #tpu.memory_space<smem>>
    %c6_518 = arith.constant 6 : index
    %c13_519 = arith.constant 13 : index
    %1211 = memref.load %arg7[%c6_518, %c13_519] : memref<8x15xf32, #tpu.memory_space<smem>>
    %1212 = arith.subf %1209, %1210 : f32
    %1213 = vector.broadcast %1212 : f32 to vector<1x8x8xf32>
    %1214 = arith.mulf %1213, %1208 : vector<1x8x8xf32>
    %1215 = vector.broadcast %1211 : f32 to vector<1x8x8xf32>
    %1216 = arith.mulf %1215, %1214 : vector<1x8x8xf32>
    %1217 = arith.negf %1216 : vector<1x8x8xf32>
    %1218 = math.exp %1217 : vector<1x8x8xf32>
    %cst_520 = arith.constant 1.000000e+00 : f32
    %1219 = vector.broadcast %cst_520 : f32 to vector<1x8x8xf32>
    %1220 = arith.addf %1219, %1218 : vector<1x8x8xf32>
    %1221 = arith.divf %1219, %1220 : vector<1x8x8xf32>
    %1222 = arith.mulf %1214, %1221 : vector<1x8x8xf32>
    %1223 = vector.broadcast %1210 : f32 to vector<1x8x8xf32>
    %1224 = arith.mulf %1223, %1208 : vector<1x8x8xf32>
    %1225 = arith.addf %1222, %1224 : vector<1x8x8xf32>
    %c7_521 = arith.constant 7 : index
    %c0_522 = arith.constant 0 : index
    %1226 = memref.load %arg4[%c7_521, %c0_522] : memref<8x8xf32, #tpu.memory_space<smem>>
    %1227 = vector.extract_strided_slice %651 {offsets = [0, 0, 0], sizes = [1, 8, 8], strides = [1, 1, 1]} : vector<8x8x8xf32> to vector<1x8x8xf32>
    %1228 = vector.broadcast %1226 : f32 to vector<1x8x8xf32>
    %1229 = arith.mulf %1228, %1227 : vector<1x8x8xf32>
    %c7_523 = arith.constant 7 : index
    %c1_524 = arith.constant 1 : index
    %1230 = memref.load %arg4[%c7_523, %c1_524] : memref<8x8xf32, #tpu.memory_space<smem>>
    %1231 = vector.extract_strided_slice %651 {offsets = [1, 0, 0], sizes = [1, 8, 8], strides = [1, 1, 1]} : vector<8x8x8xf32> to vector<1x8x8xf32>
    %1232 = vector.broadcast %1230 : f32 to vector<1x8x8xf32>
    %1233 = arith.mulf %1232, %1231 : vector<1x8x8xf32>
    %1234 = arith.addf %1229, %1233 : vector<1x8x8xf32>
    %c7_525 = arith.constant 7 : index
    %c2_526 = arith.constant 2 : index
    %1235 = memref.load %arg4[%c7_525, %c2_526] : memref<8x8xf32, #tpu.memory_space<smem>>
    %1236 = vector.extract_strided_slice %651 {offsets = [2, 0, 0], sizes = [1, 8, 8], strides = [1, 1, 1]} : vector<8x8x8xf32> to vector<1x8x8xf32>
    %1237 = vector.broadcast %1235 : f32 to vector<1x8x8xf32>
    %1238 = arith.mulf %1237, %1236 : vector<1x8x8xf32>
    %1239 = arith.addf %1234, %1238 : vector<1x8x8xf32>
    %c7_527 = arith.constant 7 : index
    %c3_528 = arith.constant 3 : index
    %1240 = memref.load %arg4[%c7_527, %c3_528] : memref<8x8xf32, #tpu.memory_space<smem>>
    %1241 = vector.extract_strided_slice %651 {offsets = [3, 0, 0], sizes = [1, 8, 8], strides = [1, 1, 1]} : vector<8x8x8xf32> to vector<1x8x8xf32>
    %1242 = vector.broadcast %1240 : f32 to vector<1x8x8xf32>
    %1243 = arith.mulf %1242, %1241 : vector<1x8x8xf32>
    %1244 = arith.addf %1239, %1243 : vector<1x8x8xf32>
    %c7_529 = arith.constant 7 : index
    %c4_530 = arith.constant 4 : index
    %1245 = memref.load %arg4[%c7_529, %c4_530] : memref<8x8xf32, #tpu.memory_space<smem>>
    %1246 = vector.extract_strided_slice %651 {offsets = [4, 0, 0], sizes = [1, 8, 8], strides = [1, 1, 1]} : vector<8x8x8xf32> to vector<1x8x8xf32>
    %1247 = vector.broadcast %1245 : f32 to vector<1x8x8xf32>
    %1248 = arith.mulf %1247, %1246 : vector<1x8x8xf32>
    %1249 = arith.addf %1244, %1248 : vector<1x8x8xf32>
    %c7_531 = arith.constant 7 : index
    %c5_532 = arith.constant 5 : index
    %1250 = memref.load %arg4[%c7_531, %c5_532] : memref<8x8xf32, #tpu.memory_space<smem>>
    %1251 = vector.extract_strided_slice %651 {offsets = [5, 0, 0], sizes = [1, 8, 8], strides = [1, 1, 1]} : vector<8x8x8xf32> to vector<1x8x8xf32>
    %1252 = vector.broadcast %1250 : f32 to vector<1x8x8xf32>
    %1253 = arith.mulf %1252, %1251 : vector<1x8x8xf32>
    %1254 = arith.addf %1249, %1253 : vector<1x8x8xf32>
    %c7_533 = arith.constant 7 : index
    %c6_534 = arith.constant 6 : index
    %1255 = memref.load %arg4[%c7_533, %c6_534] : memref<8x8xf32, #tpu.memory_space<smem>>
    %1256 = vector.extract_strided_slice %651 {offsets = [6, 0, 0], sizes = [1, 8, 8], strides = [1, 1, 1]} : vector<8x8x8xf32> to vector<1x8x8xf32>
    %1257 = vector.broadcast %1255 : f32 to vector<1x8x8xf32>
    %1258 = arith.mulf %1257, %1256 : vector<1x8x8xf32>
    %1259 = arith.addf %1254, %1258 : vector<1x8x8xf32>
    %c7_535 = arith.constant 7 : index
    %c7_536 = arith.constant 7 : index
    %1260 = memref.load %arg4[%c7_535, %c7_536] : memref<8x8xf32, #tpu.memory_space<smem>>
    %1261 = vector.extract_strided_slice %651 {offsets = [7, 0, 0], sizes = [1, 8, 8], strides = [1, 1, 1]} : vector<8x8x8xf32> to vector<1x8x8xf32>
    %1262 = vector.broadcast %1260 : f32 to vector<1x8x8xf32>
    %1263 = arith.mulf %1262, %1261 : vector<1x8x8xf32>
    %1264 = arith.addf %1259, %1263 : vector<1x8x8xf32>
    %c7_537 = arith.constant 7 : index
    %c5_538 = arith.constant 5 : index
    %1265 = memref.load %arg7[%c7_537, %c5_538] : memref<8x15xf32, #tpu.memory_space<smem>>
    %1266 = vector.broadcast %1265 : f32 to vector<1x8x8xf32>
    %1267 = arith.addf %1264, %1266 : vector<1x8x8xf32>
    %c7_539 = arith.constant 7 : index
    %c6_540 = arith.constant 6 : index
    %1268 = memref.load %arg7[%c7_539, %c6_540] : memref<8x15xf32, #tpu.memory_space<smem>>
    %c7_541 = arith.constant 7 : index
    %c7_542 = arith.constant 7 : index
    %1269 = memref.load %arg7[%c7_541, %c7_542] : memref<8x15xf32, #tpu.memory_space<smem>>
    %c7_543 = arith.constant 7 : index
    %c8_544 = arith.constant 8 : index
    %1270 = memref.load %arg7[%c7_543, %c8_544] : memref<8x15xf32, #tpu.memory_space<smem>>
    %1271 = arith.subf %1268, %1269 : f32
    %1272 = vector.broadcast %1271 : f32 to vector<1x8x8xf32>
    %1273 = arith.mulf %1272, %1267 : vector<1x8x8xf32>
    %1274 = vector.broadcast %1270 : f32 to vector<1x8x8xf32>
    %1275 = arith.mulf %1274, %1273 : vector<1x8x8xf32>
    %1276 = arith.negf %1275 : vector<1x8x8xf32>
    %1277 = math.exp %1276 : vector<1x8x8xf32>
    %cst_545 = arith.constant 1.000000e+00 : f32
    %1278 = vector.broadcast %cst_545 : f32 to vector<1x8x8xf32>
    %1279 = arith.addf %1278, %1277 : vector<1x8x8xf32>
    %1280 = arith.divf %1278, %1279 : vector<1x8x8xf32>
    %1281 = arith.mulf %1273, %1280 : vector<1x8x8xf32>
    %1282 = vector.broadcast %1269 : f32 to vector<1x8x8xf32>
    %1283 = arith.mulf %1282, %1267 : vector<1x8x8xf32>
    %1284 = arith.addf %1281, %1283 : vector<1x8x8xf32>
    %c7_546 = arith.constant 7 : index
    %c9_547 = arith.constant 9 : index
    %1285 = memref.load %arg7[%c7_546, %c9_547] : memref<8x15xf32, #tpu.memory_space<smem>>
    %1286 = vector.broadcast %1285 : f32 to vector<1x8x8xf32>
    %1287 = arith.mulf %1284, %1286 : vector<1x8x8xf32>
    %c7_548 = arith.constant 7 : index
    %c10_549 = arith.constant 10 : index
    %1288 = memref.load %arg7[%c7_548, %c10_549] : memref<8x15xf32, #tpu.memory_space<smem>>
    %1289 = vector.broadcast %1288 : f32 to vector<1x8x8xf32>
    %1290 = arith.addf %1287, %1289 : vector<1x8x8xf32>
    %c7_550 = arith.constant 7 : index
    %c11_551 = arith.constant 11 : index
    %1291 = memref.load %arg7[%c7_550, %c11_551] : memref<8x15xf32, #tpu.memory_space<smem>>
    %c7_552 = arith.constant 7 : index
    %c12_553 = arith.constant 12 : index
    %1292 = memref.load %arg7[%c7_552, %c12_553] : memref<8x15xf32, #tpu.memory_space<smem>>
    %c7_554 = arith.constant 7 : index
    %c13_555 = arith.constant 13 : index
    %1293 = memref.load %arg7[%c7_554, %c13_555] : memref<8x15xf32, #tpu.memory_space<smem>>
    %1294 = arith.subf %1291, %1292 : f32
    %1295 = vector.broadcast %1294 : f32 to vector<1x8x8xf32>
    %1296 = arith.mulf %1295, %1290 : vector<1x8x8xf32>
    %1297 = vector.broadcast %1293 : f32 to vector<1x8x8xf32>
    %1298 = arith.mulf %1297, %1296 : vector<1x8x8xf32>
    %1299 = arith.negf %1298 : vector<1x8x8xf32>
    %1300 = math.exp %1299 : vector<1x8x8xf32>
    %cst_556 = arith.constant 1.000000e+00 : f32
    %1301 = vector.broadcast %cst_556 : f32 to vector<1x8x8xf32>
    %1302 = arith.addf %1301, %1300 : vector<1x8x8xf32>
    %1303 = arith.divf %1301, %1302 : vector<1x8x8xf32>
    %1304 = arith.mulf %1296, %1303 : vector<1x8x8xf32>
    %1305 = vector.broadcast %1292 : f32 to vector<1x8x8xf32>
    %1306 = arith.mulf %1305, %1290 : vector<1x8x8xf32>
    %1307 = arith.addf %1304, %1306 : vector<1x8x8xf32>
    %1308 = tpu.concatenate %733, %815, %897, %979, %1061, %1143, %1225, %1307 in 0 : vector<1x8x8xf32>, vector<1x8x8xf32>, vector<1x8x8xf32>, vector<1x8x8xf32>, vector<1x8x8xf32>, vector<1x8x8xf32>, vector<1x8x8xf32>, vector<1x8x8xf32> -> vector<8x8x8xf32>
    %1309 = vector.extract_strided_slice %314 {offsets = [0, 0, 1], sizes = [8, 8, 7], strides = [1, 1, 1]} : vector<8x8x8xf32> to vector<8x8x7xf32>
    %1310 = vector.extract_strided_slice %314 {offsets = [0, 0, 0], sizes = [8, 8, 1], strides = [1, 1, 1]} : vector<8x8x8xf32> to vector<8x8x1xf32>
    %1311 = tpu.concatenate %1309, %1310 in 2 : vector<8x8x7xf32>, vector<8x8x1xf32> -> vector<8x8x8xf32>
    %1312 = arith.maximumf %314, %1311 : vector<8x8x8xf32>
    %1313 = vector.extract_strided_slice %1312 {offsets = [0, 1, 0], sizes = [8, 7, 8], strides = [1, 1, 1]} : vector<8x8x8xf32> to vector<8x7x8xf32>
    %1314 = vector.extract_strided_slice %1312 {offsets = [0, 0, 0], sizes = [8, 1, 8], strides = [1, 1, 1]} : vector<8x8x8xf32> to vector<8x1x8xf32>
    %1315 = tpu.concatenate %1313, %1314 in 1 : vector<8x7x8xf32>, vector<8x1x8xf32> -> vector<8x8x8xf32>
    %1316 = arith.maximumf %1312, %1315 : vector<8x8x8xf32>
    %1317 = tpu.iota {dimensions = array<i32: 0>} : vector<8x8xi32>
    %1318 = tpu.iota {dimensions = array<i32: 1>} : vector<8x8xi32>
    %c1_i32 = arith.constant 1 : i32
    %1319 = vector.broadcast %c1_i32 : i32 to vector<8x8xi32>
    %1320 = arith.andi %1317, %1319 : vector<8x8xi32>
    %c0_i32 = arith.constant 0 : i32
    %1321 = vector.broadcast %c0_i32 : i32 to vector<8x8xi32>
    %1322 = arith.cmpi eq, %1320, %1321 : vector<8x8xi32>
    %c1_i32_557 = arith.constant 1 : i32
    %1323 = vector.broadcast %c1_i32_557 : i32 to vector<8x8xi32>
    %1324 = arith.andi %1318, %1323 : vector<8x8xi32>
    %c0_i32_558 = arith.constant 0 : i32
    %1325 = vector.broadcast %c0_i32_558 : i32 to vector<8x8xi32>
    %1326 = arith.cmpi eq, %1324, %1325 : vector<8x8xi32>
    %1327 = vector.extract_strided_slice %1316 {offsets = [0, 0, 7], sizes = [8, 8, 1], strides = [1, 1, 1]} : vector<8x8x8xf32> to vector<8x8x1xf32>
    %1328 = vector.extract_strided_slice %1316 {offsets = [0, 0, 0], sizes = [8, 8, 7], strides = [1, 1, 1]} : vector<8x8x8xf32> to vector<8x8x7xf32>
    %1329 = tpu.concatenate %1327, %1328 in 2 : vector<8x8x1xf32>, vector<8x8x7xf32> -> vector<8x8x8xf32>
    %1330 = vector.shape_cast %1326 : vector<8x8xi1> to vector<1x8x8xi1>
    %1331 = vector.broadcast %1330 : vector<1x8x8xi1> to vector<8x8x8xi1>
    %1332 = arith.select %1331, %1316, %1329 : vector<8x8x8xi1>, vector<8x8x8xf32>
    %1333 = vector.extract_strided_slice %1332 {offsets = [0, 7, 0], sizes = [8, 1, 8], strides = [1, 1, 1]} : vector<8x8x8xf32> to vector<8x1x8xf32>
    %1334 = vector.extract_strided_slice %1332 {offsets = [0, 0, 0], sizes = [8, 7, 8], strides = [1, 1, 1]} : vector<8x8x8xf32> to vector<8x7x8xf32>
    %1335 = tpu.concatenate %1333, %1334 in 1 : vector<8x1x8xf32>, vector<8x7x8xf32> -> vector<8x8x8xf32>
    %1336 = vector.shape_cast %1322 : vector<8x8xi1> to vector<1x8x8xi1>
    %1337 = vector.broadcast %1336 : vector<1x8x8xi1> to vector<8x8x8xi1>
    %1338 = arith.select %1337, %1332, %1335 : vector<8x8x8xi1>, vector<8x8x8xf32>
    %c2_i32 = arith.constant 2 : i32
    %1339 = vector.broadcast %c2_i32 : i32 to vector<8x8xi32>
    %1340 = arith.cmpi sge, %1318, %1339 : vector<8x8xi32>
    %1341 = vector.extract_strided_slice %1338 {offsets = [0, 0, 6], sizes = [8, 8, 2], strides = [1, 1, 1]} : vector<8x8x8xf32> to vector<8x8x2xf32>
    %1342 = vector.extract_strided_slice %1338 {offsets = [0, 0, 0], sizes = [8, 8, 6], strides = [1, 1, 1]} : vector<8x8x8xf32> to vector<8x8x6xf32>
    %1343 = tpu.concatenate %1341, %1342 in 2 : vector<8x8x2xf32>, vector<8x8x6xf32> -> vector<8x8x8xf32>
    %1344 = vector.shape_cast %1340 : vector<8x8xi1> to vector<1x8x8xi1>
    %1345 = vector.broadcast %1344 : vector<1x8x8xi1> to vector<8x8x8xi1>
    %1346 = arith.select %1345, %1343, %1338 : vector<8x8x8xi1>, vector<8x8x8xf32>
    %c5_i32 = arith.constant 5 : i32
    %1347 = vector.broadcast %c5_i32 : i32 to vector<8x8xi32>
    %1348 = arith.cmpi sle, %1318, %1347 : vector<8x8xi32>
    %1349 = vector.extract_strided_slice %1338 {offsets = [0, 0, 2], sizes = [8, 8, 6], strides = [1, 1, 1]} : vector<8x8x8xf32> to vector<8x8x6xf32>
    %1350 = vector.extract_strided_slice %1338 {offsets = [0, 0, 0], sizes = [8, 8, 2], strides = [1, 1, 1]} : vector<8x8x8xf32> to vector<8x8x2xf32>
    %1351 = tpu.concatenate %1349, %1350 in 2 : vector<8x8x6xf32>, vector<8x8x2xf32> -> vector<8x8x8xf32>
    %1352 = vector.shape_cast %1348 : vector<8x8xi1> to vector<1x8x8xi1>
    %1353 = vector.broadcast %1352 : vector<1x8x8xi1> to vector<8x8x8xi1>
    %1354 = arith.select %1353, %1351, %1338 : vector<8x8x8xi1>, vector<8x8x8xf32>
    %cst_559 = arith.constant 2.500000e-01 : f32
    %1355 = vector.broadcast %cst_559 : f32 to vector<8x8x8xf32>
    %1356 = arith.mulf %1355, %1346 : vector<8x8x8xf32>
    %cst_560 = arith.constant 7.500000e-01 : f32
    %1357 = vector.broadcast %cst_560 : f32 to vector<8x8x8xf32>
    %1358 = arith.mulf %1357, %1338 : vector<8x8x8xf32>
    %1359 = arith.addf %1356, %1358 : vector<8x8x8xf32>
    %cst_561 = arith.constant 7.500000e-01 : f32
    %1360 = vector.broadcast %cst_561 : f32 to vector<8x8x8xf32>
    %1361 = arith.mulf %1360, %1338 : vector<8x8x8xf32>
    %cst_562 = arith.constant 2.500000e-01 : f32
    %1362 = vector.broadcast %cst_562 : f32 to vector<8x8x8xf32>
    %1363 = arith.mulf %1362, %1354 : vector<8x8x8xf32>
    %1364 = arith.addf %1361, %1363 : vector<8x8x8xf32>
    %1365 = vector.shape_cast %1326 : vector<8x8xi1> to vector<1x8x8xi1>
    %1366 = vector.broadcast %1365 : vector<1x8x8xi1> to vector<8x8x8xi1>
    %1367 = arith.select %1366, %1359, %1364 : vector<8x8x8xi1>, vector<8x8x8xf32>
    %c2_i32_563 = arith.constant 2 : i32
    %1368 = vector.broadcast %c2_i32_563 : i32 to vector<8x8xi32>
    %1369 = arith.cmpi sge, %1317, %1368 : vector<8x8xi32>
    %1370 = vector.extract_strided_slice %1367 {offsets = [0, 6, 0], sizes = [8, 2, 8], strides = [1, 1, 1]} : vector<8x8x8xf32> to vector<8x2x8xf32>
    %1371 = vector.extract_strided_slice %1367 {offsets = [0, 0, 0], sizes = [8, 6, 8], strides = [1, 1, 1]} : vector<8x8x8xf32> to vector<8x6x8xf32>
    %1372 = tpu.concatenate %1370, %1371 in 1 : vector<8x2x8xf32>, vector<8x6x8xf32> -> vector<8x8x8xf32>
    %1373 = vector.shape_cast %1369 : vector<8x8xi1> to vector<1x8x8xi1>
    %1374 = vector.broadcast %1373 : vector<1x8x8xi1> to vector<8x8x8xi1>
    %1375 = arith.select %1374, %1372, %1367 : vector<8x8x8xi1>, vector<8x8x8xf32>
    %c5_i32_564 = arith.constant 5 : i32
    %1376 = vector.broadcast %c5_i32_564 : i32 to vector<8x8xi32>
    %1377 = arith.cmpi sle, %1317, %1376 : vector<8x8xi32>
    %1378 = vector.extract_strided_slice %1367 {offsets = [0, 2, 0], sizes = [8, 6, 8], strides = [1, 1, 1]} : vector<8x8x8xf32> to vector<8x6x8xf32>
    %1379 = vector.extract_strided_slice %1367 {offsets = [0, 0, 0], sizes = [8, 2, 8], strides = [1, 1, 1]} : vector<8x8x8xf32> to vector<8x2x8xf32>
    %1380 = tpu.concatenate %1378, %1379 in 1 : vector<8x6x8xf32>, vector<8x2x8xf32> -> vector<8x8x8xf32>
    %1381 = vector.shape_cast %1377 : vector<8x8xi1> to vector<1x8x8xi1>
    %1382 = vector.broadcast %1381 : vector<1x8x8xi1> to vector<8x8x8xi1>
    %1383 = arith.select %1382, %1380, %1367 : vector<8x8x8xi1>, vector<8x8x8xf32>
    %cst_565 = arith.constant 2.500000e-01 : f32
    %1384 = vector.broadcast %cst_565 : f32 to vector<8x8x8xf32>
    %1385 = arith.mulf %1384, %1375 : vector<8x8x8xf32>
    %cst_566 = arith.constant 7.500000e-01 : f32
    %1386 = vector.broadcast %cst_566 : f32 to vector<8x8x8xf32>
    %1387 = arith.mulf %1386, %1367 : vector<8x8x8xf32>
    %1388 = arith.addf %1385, %1387 : vector<8x8x8xf32>
    %cst_567 = arith.constant 7.500000e-01 : f32
    %1389 = vector.broadcast %cst_567 : f32 to vector<8x8x8xf32>
    %1390 = arith.mulf %1389, %1367 : vector<8x8x8xf32>
    %cst_568 = arith.constant 2.500000e-01 : f32
    %1391 = vector.broadcast %cst_568 : f32 to vector<8x8x8xf32>
    %1392 = arith.mulf %1391, %1383 : vector<8x8x8xf32>
    %1393 = arith.addf %1390, %1392 : vector<8x8x8xf32>
    %1394 = vector.shape_cast %1322 : vector<8x8xi1> to vector<1x8x8xi1>
    %1395 = vector.broadcast %1394 : vector<1x8x8xi1> to vector<8x8x8xi1>
    %1396 = arith.select %1395, %1388, %1393 : vector<8x8x8xi1>, vector<8x8x8xf32>
    %c0_569 = arith.constant 0 : index
    %c0_570 = arith.constant 0 : index
    %1397 = memref.load %arg5[%c0_569, %c0_570] : memref<8x8xf32, #tpu.memory_space<smem>>
    %1398 = vector.extract_strided_slice %1308 {offsets = [0, 0, 0], sizes = [1, 8, 8], strides = [1, 1, 1]} : vector<8x8x8xf32> to vector<1x8x8xf32>
    %1399 = vector.broadcast %1397 : f32 to vector<1x8x8xf32>
    %1400 = arith.mulf %1399, %1398 : vector<1x8x8xf32>
    %c0_571 = arith.constant 0 : index
    %c1_572 = arith.constant 1 : index
    %1401 = memref.load %arg5[%c0_571, %c1_572] : memref<8x8xf32, #tpu.memory_space<smem>>
    %1402 = vector.extract_strided_slice %1308 {offsets = [1, 0, 0], sizes = [1, 8, 8], strides = [1, 1, 1]} : vector<8x8x8xf32> to vector<1x8x8xf32>
    %1403 = vector.broadcast %1401 : f32 to vector<1x8x8xf32>
    %1404 = arith.mulf %1403, %1402 : vector<1x8x8xf32>
    %1405 = arith.addf %1400, %1404 : vector<1x8x8xf32>
    %c0_573 = arith.constant 0 : index
    %c2_574 = arith.constant 2 : index
    %1406 = memref.load %arg5[%c0_573, %c2_574] : memref<8x8xf32, #tpu.memory_space<smem>>
    %1407 = vector.extract_strided_slice %1308 {offsets = [2, 0, 0], sizes = [1, 8, 8], strides = [1, 1, 1]} : vector<8x8x8xf32> to vector<1x8x8xf32>
    %1408 = vector.broadcast %1406 : f32 to vector<1x8x8xf32>
    %1409 = arith.mulf %1408, %1407 : vector<1x8x8xf32>
    %1410 = arith.addf %1405, %1409 : vector<1x8x8xf32>
    %c0_575 = arith.constant 0 : index
    %c3_576 = arith.constant 3 : index
    %1411 = memref.load %arg5[%c0_575, %c3_576] : memref<8x8xf32, #tpu.memory_space<smem>>
    %1412 = vector.extract_strided_slice %1308 {offsets = [3, 0, 0], sizes = [1, 8, 8], strides = [1, 1, 1]} : vector<8x8x8xf32> to vector<1x8x8xf32>
    %1413 = vector.broadcast %1411 : f32 to vector<1x8x8xf32>
    %1414 = arith.mulf %1413, %1412 : vector<1x8x8xf32>
    %1415 = arith.addf %1410, %1414 : vector<1x8x8xf32>
    %c0_577 = arith.constant 0 : index
    %c4_578 = arith.constant 4 : index
    %1416 = memref.load %arg5[%c0_577, %c4_578] : memref<8x8xf32, #tpu.memory_space<smem>>
    %1417 = vector.extract_strided_slice %1308 {offsets = [4, 0, 0], sizes = [1, 8, 8], strides = [1, 1, 1]} : vector<8x8x8xf32> to vector<1x8x8xf32>
    %1418 = vector.broadcast %1416 : f32 to vector<1x8x8xf32>
    %1419 = arith.mulf %1418, %1417 : vector<1x8x8xf32>
    %1420 = arith.addf %1415, %1419 : vector<1x8x8xf32>
    %c0_579 = arith.constant 0 : index
    %c5_580 = arith.constant 5 : index
    %1421 = memref.load %arg5[%c0_579, %c5_580] : memref<8x8xf32, #tpu.memory_space<smem>>
    %1422 = vector.extract_strided_slice %1308 {offsets = [5, 0, 0], sizes = [1, 8, 8], strides = [1, 1, 1]} : vector<8x8x8xf32> to vector<1x8x8xf32>
    %1423 = vector.broadcast %1421 : f32 to vector<1x8x8xf32>
    %1424 = arith.mulf %1423, %1422 : vector<1x8x8xf32>
    %1425 = arith.addf %1420, %1424 : vector<1x8x8xf32>
    %c0_581 = arith.constant 0 : index
    %c6_582 = arith.constant 6 : index
    %1426 = memref.load %arg5[%c0_581, %c6_582] : memref<8x8xf32, #tpu.memory_space<smem>>
    %1427 = vector.extract_strided_slice %1308 {offsets = [6, 0, 0], sizes = [1, 8, 8], strides = [1, 1, 1]} : vector<8x8x8xf32> to vector<1x8x8xf32>
    %1428 = vector.broadcast %1426 : f32 to vector<1x8x8xf32>
    %1429 = arith.mulf %1428, %1427 : vector<1x8x8xf32>
    %1430 = arith.addf %1425, %1429 : vector<1x8x8xf32>
    %c0_583 = arith.constant 0 : index
    %c7_584 = arith.constant 7 : index
    %1431 = memref.load %arg5[%c0_583, %c7_584] : memref<8x8xf32, #tpu.memory_space<smem>>
    %1432 = vector.extract_strided_slice %1308 {offsets = [7, 0, 0], sizes = [1, 8, 8], strides = [1, 1, 1]} : vector<8x8x8xf32> to vector<1x8x8xf32>
    %1433 = vector.broadcast %1431 : f32 to vector<1x8x8xf32>
    %1434 = arith.mulf %1433, %1432 : vector<1x8x8xf32>
    %1435 = arith.addf %1430, %1434 : vector<1x8x8xf32>
    %c0_585 = arith.constant 0 : index
    %c0_586 = arith.constant 0 : index
    %1436 = memref.load %arg6[%c0_585, %c0_586] : memref<8x8xf32, #tpu.memory_space<smem>>
    %1437 = vector.extract_strided_slice %1396 {offsets = [0, 0, 0], sizes = [1, 8, 8], strides = [1, 1, 1]} : vector<8x8x8xf32> to vector<1x8x8xf32>
    %1438 = vector.broadcast %1436 : f32 to vector<1x8x8xf32>
    %1439 = arith.mulf %1438, %1437 : vector<1x8x8xf32>
    %c0_587 = arith.constant 0 : index
    %c1_588 = arith.constant 1 : index
    %1440 = memref.load %arg6[%c0_587, %c1_588] : memref<8x8xf32, #tpu.memory_space<smem>>
    %1441 = vector.extract_strided_slice %1396 {offsets = [1, 0, 0], sizes = [1, 8, 8], strides = [1, 1, 1]} : vector<8x8x8xf32> to vector<1x8x8xf32>
    %1442 = vector.broadcast %1440 : f32 to vector<1x8x8xf32>
    %1443 = arith.mulf %1442, %1441 : vector<1x8x8xf32>
    %1444 = arith.addf %1439, %1443 : vector<1x8x8xf32>
    %c0_589 = arith.constant 0 : index
    %c2_590 = arith.constant 2 : index
    %1445 = memref.load %arg6[%c0_589, %c2_590] : memref<8x8xf32, #tpu.memory_space<smem>>
    %1446 = vector.extract_strided_slice %1396 {offsets = [2, 0, 0], sizes = [1, 8, 8], strides = [1, 1, 1]} : vector<8x8x8xf32> to vector<1x8x8xf32>
    %1447 = vector.broadcast %1445 : f32 to vector<1x8x8xf32>
    %1448 = arith.mulf %1447, %1446 : vector<1x8x8xf32>
    %1449 = arith.addf %1444, %1448 : vector<1x8x8xf32>
    %c0_591 = arith.constant 0 : index
    %c3_592 = arith.constant 3 : index
    %1450 = memref.load %arg6[%c0_591, %c3_592] : memref<8x8xf32, #tpu.memory_space<smem>>
    %1451 = vector.extract_strided_slice %1396 {offsets = [3, 0, 0], sizes = [1, 8, 8], strides = [1, 1, 1]} : vector<8x8x8xf32> to vector<1x8x8xf32>
    %1452 = vector.broadcast %1450 : f32 to vector<1x8x8xf32>
    %1453 = arith.mulf %1452, %1451 : vector<1x8x8xf32>
    %1454 = arith.addf %1449, %1453 : vector<1x8x8xf32>
    %c0_593 = arith.constant 0 : index
    %c4_594 = arith.constant 4 : index
    %1455 = memref.load %arg6[%c0_593, %c4_594] : memref<8x8xf32, #tpu.memory_space<smem>>
    %1456 = vector.extract_strided_slice %1396 {offsets = [4, 0, 0], sizes = [1, 8, 8], strides = [1, 1, 1]} : vector<8x8x8xf32> to vector<1x8x8xf32>
    %1457 = vector.broadcast %1455 : f32 to vector<1x8x8xf32>
    %1458 = arith.mulf %1457, %1456 : vector<1x8x8xf32>
    %1459 = arith.addf %1454, %1458 : vector<1x8x8xf32>
    %c0_595 = arith.constant 0 : index
    %c5_596 = arith.constant 5 : index
    %1460 = memref.load %arg6[%c0_595, %c5_596] : memref<8x8xf32, #tpu.memory_space<smem>>
    %1461 = vector.extract_strided_slice %1396 {offsets = [5, 0, 0], sizes = [1, 8, 8], strides = [1, 1, 1]} : vector<8x8x8xf32> to vector<1x8x8xf32>
    %1462 = vector.broadcast %1460 : f32 to vector<1x8x8xf32>
    %1463 = arith.mulf %1462, %1461 : vector<1x8x8xf32>
    %1464 = arith.addf %1459, %1463 : vector<1x8x8xf32>
    %c0_597 = arith.constant 0 : index
    %c6_598 = arith.constant 6 : index
    %1465 = memref.load %arg6[%c0_597, %c6_598] : memref<8x8xf32, #tpu.memory_space<smem>>
    %1466 = vector.extract_strided_slice %1396 {offsets = [6, 0, 0], sizes = [1, 8, 8], strides = [1, 1, 1]} : vector<8x8x8xf32> to vector<1x8x8xf32>
    %1467 = vector.broadcast %1465 : f32 to vector<1x8x8xf32>
    %1468 = arith.mulf %1467, %1466 : vector<1x8x8xf32>
    %1469 = arith.addf %1464, %1468 : vector<1x8x8xf32>
    %c0_599 = arith.constant 0 : index
    %c7_600 = arith.constant 7 : index
    %1470 = memref.load %arg6[%c0_599, %c7_600] : memref<8x8xf32, #tpu.memory_space<smem>>
    %1471 = vector.extract_strided_slice %1396 {offsets = [7, 0, 0], sizes = [1, 8, 8], strides = [1, 1, 1]} : vector<8x8x8xf32> to vector<1x8x8xf32>
    %1472 = vector.broadcast %1470 : f32 to vector<1x8x8xf32>
    %1473 = arith.mulf %1472, %1471 : vector<1x8x8xf32>
    %1474 = arith.addf %1469, %1473 : vector<1x8x8xf32>
    %1475 = arith.addf %1435, %1474 : vector<1x8x8xf32>
    %c0_601 = arith.constant 0 : index
    %c14 = arith.constant 14 : index
    %1476 = memref.load %arg7[%c0_601, %c14] : memref<8x15xf32, #tpu.memory_space<smem>>
    %1477 = vector.broadcast %1476 : f32 to vector<1x8x8xf32>
    %1478 = arith.addf %1475, %1477 : vector<1x8x8xf32>
    %c1_602 = arith.constant 1 : index
    %c0_603 = arith.constant 0 : index
    %1479 = memref.load %arg5[%c1_602, %c0_603] : memref<8x8xf32, #tpu.memory_space<smem>>
    %1480 = vector.extract_strided_slice %1308 {offsets = [0, 0, 0], sizes = [1, 8, 8], strides = [1, 1, 1]} : vector<8x8x8xf32> to vector<1x8x8xf32>
    %1481 = vector.broadcast %1479 : f32 to vector<1x8x8xf32>
    %1482 = arith.mulf %1481, %1480 : vector<1x8x8xf32>
    %c1_604 = arith.constant 1 : index
    %c1_605 = arith.constant 1 : index
    %1483 = memref.load %arg5[%c1_604, %c1_605] : memref<8x8xf32, #tpu.memory_space<smem>>
    %1484 = vector.extract_strided_slice %1308 {offsets = [1, 0, 0], sizes = [1, 8, 8], strides = [1, 1, 1]} : vector<8x8x8xf32> to vector<1x8x8xf32>
    %1485 = vector.broadcast %1483 : f32 to vector<1x8x8xf32>
    %1486 = arith.mulf %1485, %1484 : vector<1x8x8xf32>
    %1487 = arith.addf %1482, %1486 : vector<1x8x8xf32>
    %c1_606 = arith.constant 1 : index
    %c2_607 = arith.constant 2 : index
    %1488 = memref.load %arg5[%c1_606, %c2_607] : memref<8x8xf32, #tpu.memory_space<smem>>
    %1489 = vector.extract_strided_slice %1308 {offsets = [2, 0, 0], sizes = [1, 8, 8], strides = [1, 1, 1]} : vector<8x8x8xf32> to vector<1x8x8xf32>
    %1490 = vector.broadcast %1488 : f32 to vector<1x8x8xf32>
    %1491 = arith.mulf %1490, %1489 : vector<1x8x8xf32>
    %1492 = arith.addf %1487, %1491 : vector<1x8x8xf32>
    %c1_608 = arith.constant 1 : index
    %c3_609 = arith.constant 3 : index
    %1493 = memref.load %arg5[%c1_608, %c3_609] : memref<8x8xf32, #tpu.memory_space<smem>>
    %1494 = vector.extract_strided_slice %1308 {offsets = [3, 0, 0], sizes = [1, 8, 8], strides = [1, 1, 1]} : vector<8x8x8xf32> to vector<1x8x8xf32>
    %1495 = vector.broadcast %1493 : f32 to vector<1x8x8xf32>
    %1496 = arith.mulf %1495, %1494 : vector<1x8x8xf32>
    %1497 = arith.addf %1492, %1496 : vector<1x8x8xf32>
    %c1_610 = arith.constant 1 : index
    %c4_611 = arith.constant 4 : index
    %1498 = memref.load %arg5[%c1_610, %c4_611] : memref<8x8xf32, #tpu.memory_space<smem>>
    %1499 = vector.extract_strided_slice %1308 {offsets = [4, 0, 0], sizes = [1, 8, 8], strides = [1, 1, 1]} : vector<8x8x8xf32> to vector<1x8x8xf32>
    %1500 = vector.broadcast %1498 : f32 to vector<1x8x8xf32>
    %1501 = arith.mulf %1500, %1499 : vector<1x8x8xf32>
    %1502 = arith.addf %1497, %1501 : vector<1x8x8xf32>
    %c1_612 = arith.constant 1 : index
    %c5_613 = arith.constant 5 : index
    %1503 = memref.load %arg5[%c1_612, %c5_613] : memref<8x8xf32, #tpu.memory_space<smem>>
    %1504 = vector.extract_strided_slice %1308 {offsets = [5, 0, 0], sizes = [1, 8, 8], strides = [1, 1, 1]} : vector<8x8x8xf32> to vector<1x8x8xf32>
    %1505 = vector.broadcast %1503 : f32 to vector<1x8x8xf32>
    %1506 = arith.mulf %1505, %1504 : vector<1x8x8xf32>
    %1507 = arith.addf %1502, %1506 : vector<1x8x8xf32>
    %c1_614 = arith.constant 1 : index
    %c6_615 = arith.constant 6 : index
    %1508 = memref.load %arg5[%c1_614, %c6_615] : memref<8x8xf32, #tpu.memory_space<smem>>
    %1509 = vector.extract_strided_slice %1308 {offsets = [6, 0, 0], sizes = [1, 8, 8], strides = [1, 1, 1]} : vector<8x8x8xf32> to vector<1x8x8xf32>
    %1510 = vector.broadcast %1508 : f32 to vector<1x8x8xf32>
    %1511 = arith.mulf %1510, %1509 : vector<1x8x8xf32>
    %1512 = arith.addf %1507, %1511 : vector<1x8x8xf32>
    %c1_616 = arith.constant 1 : index
    %c7_617 = arith.constant 7 : index
    %1513 = memref.load %arg5[%c1_616, %c7_617] : memref<8x8xf32, #tpu.memory_space<smem>>
    %1514 = vector.extract_strided_slice %1308 {offsets = [7, 0, 0], sizes = [1, 8, 8], strides = [1, 1, 1]} : vector<8x8x8xf32> to vector<1x8x8xf32>
    %1515 = vector.broadcast %1513 : f32 to vector<1x8x8xf32>
    %1516 = arith.mulf %1515, %1514 : vector<1x8x8xf32>
    %1517 = arith.addf %1512, %1516 : vector<1x8x8xf32>
    %c1_618 = arith.constant 1 : index
    %c0_619 = arith.constant 0 : index
    %1518 = memref.load %arg6[%c1_618, %c0_619] : memref<8x8xf32, #tpu.memory_space<smem>>
    %1519 = vector.extract_strided_slice %1396 {offsets = [0, 0, 0], sizes = [1, 8, 8], strides = [1, 1, 1]} : vector<8x8x8xf32> to vector<1x8x8xf32>
    %1520 = vector.broadcast %1518 : f32 to vector<1x8x8xf32>
    %1521 = arith.mulf %1520, %1519 : vector<1x8x8xf32>
    %c1_620 = arith.constant 1 : index
    %c1_621 = arith.constant 1 : index
    %1522 = memref.load %arg6[%c1_620, %c1_621] : memref<8x8xf32, #tpu.memory_space<smem>>
    %1523 = vector.extract_strided_slice %1396 {offsets = [1, 0, 0], sizes = [1, 8, 8], strides = [1, 1, 1]} : vector<8x8x8xf32> to vector<1x8x8xf32>
    %1524 = vector.broadcast %1522 : f32 to vector<1x8x8xf32>
    %1525 = arith.mulf %1524, %1523 : vector<1x8x8xf32>
    %1526 = arith.addf %1521, %1525 : vector<1x8x8xf32>
    %c1_622 = arith.constant 1 : index
    %c2_623 = arith.constant 2 : index
    %1527 = memref.load %arg6[%c1_622, %c2_623] : memref<8x8xf32, #tpu.memory_space<smem>>
    %1528 = vector.extract_strided_slice %1396 {offsets = [2, 0, 0], sizes = [1, 8, 8], strides = [1, 1, 1]} : vector<8x8x8xf32> to vector<1x8x8xf32>
    %1529 = vector.broadcast %1527 : f32 to vector<1x8x8xf32>
    %1530 = arith.mulf %1529, %1528 : vector<1x8x8xf32>
    %1531 = arith.addf %1526, %1530 : vector<1x8x8xf32>
    %c1_624 = arith.constant 1 : index
    %c3_625 = arith.constant 3 : index
    %1532 = memref.load %arg6[%c1_624, %c3_625] : memref<8x8xf32, #tpu.memory_space<smem>>
    %1533 = vector.extract_strided_slice %1396 {offsets = [3, 0, 0], sizes = [1, 8, 8], strides = [1, 1, 1]} : vector<8x8x8xf32> to vector<1x8x8xf32>
    %1534 = vector.broadcast %1532 : f32 to vector<1x8x8xf32>
    %1535 = arith.mulf %1534, %1533 : vector<1x8x8xf32>
    %1536 = arith.addf %1531, %1535 : vector<1x8x8xf32>
    %c1_626 = arith.constant 1 : index
    %c4_627 = arith.constant 4 : index
    %1537 = memref.load %arg6[%c1_626, %c4_627] : memref<8x8xf32, #tpu.memory_space<smem>>
    %1538 = vector.extract_strided_slice %1396 {offsets = [4, 0, 0], sizes = [1, 8, 8], strides = [1, 1, 1]} : vector<8x8x8xf32> to vector<1x8x8xf32>
    %1539 = vector.broadcast %1537 : f32 to vector<1x8x8xf32>
    %1540 = arith.mulf %1539, %1538 : vector<1x8x8xf32>
    %1541 = arith.addf %1536, %1540 : vector<1x8x8xf32>
    %c1_628 = arith.constant 1 : index
    %c5_629 = arith.constant 5 : index
    %1542 = memref.load %arg6[%c1_628, %c5_629] : memref<8x8xf32, #tpu.memory_space<smem>>
    %1543 = vector.extract_strided_slice %1396 {offsets = [5, 0, 0], sizes = [1, 8, 8], strides = [1, 1, 1]} : vector<8x8x8xf32> to vector<1x8x8xf32>
    %1544 = vector.broadcast %1542 : f32 to vector<1x8x8xf32>
    %1545 = arith.mulf %1544, %1543 : vector<1x8x8xf32>
    %1546 = arith.addf %1541, %1545 : vector<1x8x8xf32>
    %c1_630 = arith.constant 1 : index
    %c6_631 = arith.constant 6 : index
    %1547 = memref.load %arg6[%c1_630, %c6_631] : memref<8x8xf32, #tpu.memory_space<smem>>
    %1548 = vector.extract_strided_slice %1396 {offsets = [6, 0, 0], sizes = [1, 8, 8], strides = [1, 1, 1]} : vector<8x8x8xf32> to vector<1x8x8xf32>
    %1549 = vector.broadcast %1547 : f32 to vector<1x8x8xf32>
    %1550 = arith.mulf %1549, %1548 : vector<1x8x8xf32>
    %1551 = arith.addf %1546, %1550 : vector<1x8x8xf32>
    %c1_632 = arith.constant 1 : index
    %c7_633 = arith.constant 7 : index
    %1552 = memref.load %arg6[%c1_632, %c7_633] : memref<8x8xf32, #tpu.memory_space<smem>>
    %1553 = vector.extract_strided_slice %1396 {offsets = [7, 0, 0], sizes = [1, 8, 8], strides = [1, 1, 1]} : vector<8x8x8xf32> to vector<1x8x8xf32>
    %1554 = vector.broadcast %1552 : f32 to vector<1x8x8xf32>
    %1555 = arith.mulf %1554, %1553 : vector<1x8x8xf32>
    %1556 = arith.addf %1551, %1555 : vector<1x8x8xf32>
    %1557 = arith.addf %1517, %1556 : vector<1x8x8xf32>
    %c1_634 = arith.constant 1 : index
    %c14_635 = arith.constant 14 : index
    %1558 = memref.load %arg7[%c1_634, %c14_635] : memref<8x15xf32, #tpu.memory_space<smem>>
    %1559 = vector.broadcast %1558 : f32 to vector<1x8x8xf32>
    %1560 = arith.addf %1557, %1559 : vector<1x8x8xf32>
    %c2_636 = arith.constant 2 : index
    %c0_637 = arith.constant 0 : index
    %1561 = memref.load %arg5[%c2_636, %c0_637] : memref<8x8xf32, #tpu.memory_space<smem>>
    %1562 = vector.extract_strided_slice %1308 {offsets = [0, 0, 0], sizes = [1, 8, 8], strides = [1, 1, 1]} : vector<8x8x8xf32> to vector<1x8x8xf32>
    %1563 = vector.broadcast %1561 : f32 to vector<1x8x8xf32>
    %1564 = arith.mulf %1563, %1562 : vector<1x8x8xf32>
    %c2_638 = arith.constant 2 : index
    %c1_639 = arith.constant 1 : index
    %1565 = memref.load %arg5[%c2_638, %c1_639] : memref<8x8xf32, #tpu.memory_space<smem>>
    %1566 = vector.extract_strided_slice %1308 {offsets = [1, 0, 0], sizes = [1, 8, 8], strides = [1, 1, 1]} : vector<8x8x8xf32> to vector<1x8x8xf32>
    %1567 = vector.broadcast %1565 : f32 to vector<1x8x8xf32>
    %1568 = arith.mulf %1567, %1566 : vector<1x8x8xf32>
    %1569 = arith.addf %1564, %1568 : vector<1x8x8xf32>
    %c2_640 = arith.constant 2 : index
    %c2_641 = arith.constant 2 : index
    %1570 = memref.load %arg5[%c2_640, %c2_641] : memref<8x8xf32, #tpu.memory_space<smem>>
    %1571 = vector.extract_strided_slice %1308 {offsets = [2, 0, 0], sizes = [1, 8, 8], strides = [1, 1, 1]} : vector<8x8x8xf32> to vector<1x8x8xf32>
    %1572 = vector.broadcast %1570 : f32 to vector<1x8x8xf32>
    %1573 = arith.mulf %1572, %1571 : vector<1x8x8xf32>
    %1574 = arith.addf %1569, %1573 : vector<1x8x8xf32>
    %c2_642 = arith.constant 2 : index
    %c3_643 = arith.constant 3 : index
    %1575 = memref.load %arg5[%c2_642, %c3_643] : memref<8x8xf32, #tpu.memory_space<smem>>
    %1576 = vector.extract_strided_slice %1308 {offsets = [3, 0, 0], sizes = [1, 8, 8], strides = [1, 1, 1]} : vector<8x8x8xf32> to vector<1x8x8xf32>
    %1577 = vector.broadcast %1575 : f32 to vector<1x8x8xf32>
    %1578 = arith.mulf %1577, %1576 : vector<1x8x8xf32>
    %1579 = arith.addf %1574, %1578 : vector<1x8x8xf32>
    %c2_644 = arith.constant 2 : index
    %c4_645 = arith.constant 4 : index
    %1580 = memref.load %arg5[%c2_644, %c4_645] : memref<8x8xf32, #tpu.memory_space<smem>>
    %1581 = vector.extract_strided_slice %1308 {offsets = [4, 0, 0], sizes = [1, 8, 8], strides = [1, 1, 1]} : vector<8x8x8xf32> to vector<1x8x8xf32>
    %1582 = vector.broadcast %1580 : f32 to vector<1x8x8xf32>
    %1583 = arith.mulf %1582, %1581 : vector<1x8x8xf32>
    %1584 = arith.addf %1579, %1583 : vector<1x8x8xf32>
    %c2_646 = arith.constant 2 : index
    %c5_647 = arith.constant 5 : index
    %1585 = memref.load %arg5[%c2_646, %c5_647] : memref<8x8xf32, #tpu.memory_space<smem>>
    %1586 = vector.extract_strided_slice %1308 {offsets = [5, 0, 0], sizes = [1, 8, 8], strides = [1, 1, 1]} : vector<8x8x8xf32> to vector<1x8x8xf32>
    %1587 = vector.broadcast %1585 : f32 to vector<1x8x8xf32>
    %1588 = arith.mulf %1587, %1586 : vector<1x8x8xf32>
    %1589 = arith.addf %1584, %1588 : vector<1x8x8xf32>
    %c2_648 = arith.constant 2 : index
    %c6_649 = arith.constant 6 : index
    %1590 = memref.load %arg5[%c2_648, %c6_649] : memref<8x8xf32, #tpu.memory_space<smem>>
    %1591 = vector.extract_strided_slice %1308 {offsets = [6, 0, 0], sizes = [1, 8, 8], strides = [1, 1, 1]} : vector<8x8x8xf32> to vector<1x8x8xf32>
    %1592 = vector.broadcast %1590 : f32 to vector<1x8x8xf32>
    %1593 = arith.mulf %1592, %1591 : vector<1x8x8xf32>
    %1594 = arith.addf %1589, %1593 : vector<1x8x8xf32>
    %c2_650 = arith.constant 2 : index
    %c7_651 = arith.constant 7 : index
    %1595 = memref.load %arg5[%c2_650, %c7_651] : memref<8x8xf32, #tpu.memory_space<smem>>
    %1596 = vector.extract_strided_slice %1308 {offsets = [7, 0, 0], sizes = [1, 8, 8], strides = [1, 1, 1]} : vector<8x8x8xf32> to vector<1x8x8xf32>
    %1597 = vector.broadcast %1595 : f32 to vector<1x8x8xf32>
    %1598 = arith.mulf %1597, %1596 : vector<1x8x8xf32>
    %1599 = arith.addf %1594, %1598 : vector<1x8x8xf32>
    %c2_652 = arith.constant 2 : index
    %c0_653 = arith.constant 0 : index
    %1600 = memref.load %arg6[%c2_652, %c0_653] : memref<8x8xf32, #tpu.memory_space<smem>>
    %1601 = vector.extract_strided_slice %1396 {offsets = [0, 0, 0], sizes = [1, 8, 8], strides = [1, 1, 1]} : vector<8x8x8xf32> to vector<1x8x8xf32>
    %1602 = vector.broadcast %1600 : f32 to vector<1x8x8xf32>
    %1603 = arith.mulf %1602, %1601 : vector<1x8x8xf32>
    %c2_654 = arith.constant 2 : index
    %c1_655 = arith.constant 1 : index
    %1604 = memref.load %arg6[%c2_654, %c1_655] : memref<8x8xf32, #tpu.memory_space<smem>>
    %1605 = vector.extract_strided_slice %1396 {offsets = [1, 0, 0], sizes = [1, 8, 8], strides = [1, 1, 1]} : vector<8x8x8xf32> to vector<1x8x8xf32>
    %1606 = vector.broadcast %1604 : f32 to vector<1x8x8xf32>
    %1607 = arith.mulf %1606, %1605 : vector<1x8x8xf32>
    %1608 = arith.addf %1603, %1607 : vector<1x8x8xf32>
    %c2_656 = arith.constant 2 : index
    %c2_657 = arith.constant 2 : index
    %1609 = memref.load %arg6[%c2_656, %c2_657] : memref<8x8xf32, #tpu.memory_space<smem>>
    %1610 = vector.extract_strided_slice %1396 {offsets = [2, 0, 0], sizes = [1, 8, 8], strides = [1, 1, 1]} : vector<8x8x8xf32> to vector<1x8x8xf32>
    %1611 = vector.broadcast %1609 : f32 to vector<1x8x8xf32>
    %1612 = arith.mulf %1611, %1610 : vector<1x8x8xf32>
    %1613 = arith.addf %1608, %1612 : vector<1x8x8xf32>
    %c2_658 = arith.constant 2 : index
    %c3_659 = arith.constant 3 : index
    %1614 = memref.load %arg6[%c2_658, %c3_659] : memref<8x8xf32, #tpu.memory_space<smem>>
    %1615 = vector.extract_strided_slice %1396 {offsets = [3, 0, 0], sizes = [1, 8, 8], strides = [1, 1, 1]} : vector<8x8x8xf32> to vector<1x8x8xf32>
    %1616 = vector.broadcast %1614 : f32 to vector<1x8x8xf32>
    %1617 = arith.mulf %1616, %1615 : vector<1x8x8xf32>
    %1618 = arith.addf %1613, %1617 : vector<1x8x8xf32>
    %c2_660 = arith.constant 2 : index
    %c4_661 = arith.constant 4 : index
    %1619 = memref.load %arg6[%c2_660, %c4_661] : memref<8x8xf32, #tpu.memory_space<smem>>
    %1620 = vector.extract_strided_slice %1396 {offsets = [4, 0, 0], sizes = [1, 8, 8], strides = [1, 1, 1]} : vector<8x8x8xf32> to vector<1x8x8xf32>
    %1621 = vector.broadcast %1619 : f32 to vector<1x8x8xf32>
    %1622 = arith.mulf %1621, %1620 : vector<1x8x8xf32>
    %1623 = arith.addf %1618, %1622 : vector<1x8x8xf32>
    %c2_662 = arith.constant 2 : index
    %c5_663 = arith.constant 5 : index
    %1624 = memref.load %arg6[%c2_662, %c5_663] : memref<8x8xf32, #tpu.memory_space<smem>>
    %1625 = vector.extract_strided_slice %1396 {offsets = [5, 0, 0], sizes = [1, 8, 8], strides = [1, 1, 1]} : vector<8x8x8xf32> to vector<1x8x8xf32>
    %1626 = vector.broadcast %1624 : f32 to vector<1x8x8xf32>
    %1627 = arith.mulf %1626, %1625 : vector<1x8x8xf32>
    %1628 = arith.addf %1623, %1627 : vector<1x8x8xf32>
    %c2_664 = arith.constant 2 : index
    %c6_665 = arith.constant 6 : index
    %1629 = memref.load %arg6[%c2_664, %c6_665] : memref<8x8xf32, #tpu.memory_space<smem>>
    %1630 = vector.extract_strided_slice %1396 {offsets = [6, 0, 0], sizes = [1, 8, 8], strides = [1, 1, 1]} : vector<8x8x8xf32> to vector<1x8x8xf32>
    %1631 = vector.broadcast %1629 : f32 to vector<1x8x8xf32>
    %1632 = arith.mulf %1631, %1630 : vector<1x8x8xf32>
    %1633 = arith.addf %1628, %1632 : vector<1x8x8xf32>
    %c2_666 = arith.constant 2 : index
    %c7_667 = arith.constant 7 : index
    %1634 = memref.load %arg6[%c2_666, %c7_667] : memref<8x8xf32, #tpu.memory_space<smem>>
    %1635 = vector.extract_strided_slice %1396 {offsets = [7, 0, 0], sizes = [1, 8, 8], strides = [1, 1, 1]} : vector<8x8x8xf32> to vector<1x8x8xf32>
    %1636 = vector.broadcast %1634 : f32 to vector<1x8x8xf32>
    %1637 = arith.mulf %1636, %1635 : vector<1x8x8xf32>
    %1638 = arith.addf %1633, %1637 : vector<1x8x8xf32>
    %1639 = arith.addf %1599, %1638 : vector<1x8x8xf32>
    %c2_668 = arith.constant 2 : index
    %c14_669 = arith.constant 14 : index
    %1640 = memref.load %arg7[%c2_668, %c14_669] : memref<8x15xf32, #tpu.memory_space<smem>>
    %1641 = vector.broadcast %1640 : f32 to vector<1x8x8xf32>
    %1642 = arith.addf %1639, %1641 : vector<1x8x8xf32>
    %c3_670 = arith.constant 3 : index
    %c0_671 = arith.constant 0 : index
    %1643 = memref.load %arg5[%c3_670, %c0_671] : memref<8x8xf32, #tpu.memory_space<smem>>
    %1644 = vector.extract_strided_slice %1308 {offsets = [0, 0, 0], sizes = [1, 8, 8], strides = [1, 1, 1]} : vector<8x8x8xf32> to vector<1x8x8xf32>
    %1645 = vector.broadcast %1643 : f32 to vector<1x8x8xf32>
    %1646 = arith.mulf %1645, %1644 : vector<1x8x8xf32>
    %c3_672 = arith.constant 3 : index
    %c1_673 = arith.constant 1 : index
    %1647 = memref.load %arg5[%c3_672, %c1_673] : memref<8x8xf32, #tpu.memory_space<smem>>
    %1648 = vector.extract_strided_slice %1308 {offsets = [1, 0, 0], sizes = [1, 8, 8], strides = [1, 1, 1]} : vector<8x8x8xf32> to vector<1x8x8xf32>
    %1649 = vector.broadcast %1647 : f32 to vector<1x8x8xf32>
    %1650 = arith.mulf %1649, %1648 : vector<1x8x8xf32>
    %1651 = arith.addf %1646, %1650 : vector<1x8x8xf32>
    %c3_674 = arith.constant 3 : index
    %c2_675 = arith.constant 2 : index
    %1652 = memref.load %arg5[%c3_674, %c2_675] : memref<8x8xf32, #tpu.memory_space<smem>>
    %1653 = vector.extract_strided_slice %1308 {offsets = [2, 0, 0], sizes = [1, 8, 8], strides = [1, 1, 1]} : vector<8x8x8xf32> to vector<1x8x8xf32>
    %1654 = vector.broadcast %1652 : f32 to vector<1x8x8xf32>
    %1655 = arith.mulf %1654, %1653 : vector<1x8x8xf32>
    %1656 = arith.addf %1651, %1655 : vector<1x8x8xf32>
    %c3_676 = arith.constant 3 : index
    %c3_677 = arith.constant 3 : index
    %1657 = memref.load %arg5[%c3_676, %c3_677] : memref<8x8xf32, #tpu.memory_space<smem>>
    %1658 = vector.extract_strided_slice %1308 {offsets = [3, 0, 0], sizes = [1, 8, 8], strides = [1, 1, 1]} : vector<8x8x8xf32> to vector<1x8x8xf32>
    %1659 = vector.broadcast %1657 : f32 to vector<1x8x8xf32>
    %1660 = arith.mulf %1659, %1658 : vector<1x8x8xf32>
    %1661 = arith.addf %1656, %1660 : vector<1x8x8xf32>
    %c3_678 = arith.constant 3 : index
    %c4_679 = arith.constant 4 : index
    %1662 = memref.load %arg5[%c3_678, %c4_679] : memref<8x8xf32, #tpu.memory_space<smem>>
    %1663 = vector.extract_strided_slice %1308 {offsets = [4, 0, 0], sizes = [1, 8, 8], strides = [1, 1, 1]} : vector<8x8x8xf32> to vector<1x8x8xf32>
    %1664 = vector.broadcast %1662 : f32 to vector<1x8x8xf32>
    %1665 = arith.mulf %1664, %1663 : vector<1x8x8xf32>
    %1666 = arith.addf %1661, %1665 : vector<1x8x8xf32>
    %c3_680 = arith.constant 3 : index
    %c5_681 = arith.constant 5 : index
    %1667 = memref.load %arg5[%c3_680, %c5_681] : memref<8x8xf32, #tpu.memory_space<smem>>
    %1668 = vector.extract_strided_slice %1308 {offsets = [5, 0, 0], sizes = [1, 8, 8], strides = [1, 1, 1]} : vector<8x8x8xf32> to vector<1x8x8xf32>
    %1669 = vector.broadcast %1667 : f32 to vector<1x8x8xf32>
    %1670 = arith.mulf %1669, %1668 : vector<1x8x8xf32>
    %1671 = arith.addf %1666, %1670 : vector<1x8x8xf32>
    %c3_682 = arith.constant 3 : index
    %c6_683 = arith.constant 6 : index
    %1672 = memref.load %arg5[%c3_682, %c6_683] : memref<8x8xf32, #tpu.memory_space<smem>>
    %1673 = vector.extract_strided_slice %1308 {offsets = [6, 0, 0], sizes = [1, 8, 8], strides = [1, 1, 1]} : vector<8x8x8xf32> to vector<1x8x8xf32>
    %1674 = vector.broadcast %1672 : f32 to vector<1x8x8xf32>
    %1675 = arith.mulf %1674, %1673 : vector<1x8x8xf32>
    %1676 = arith.addf %1671, %1675 : vector<1x8x8xf32>
    %c3_684 = arith.constant 3 : index
    %c7_685 = arith.constant 7 : index
    %1677 = memref.load %arg5[%c3_684, %c7_685] : memref<8x8xf32, #tpu.memory_space<smem>>
    %1678 = vector.extract_strided_slice %1308 {offsets = [7, 0, 0], sizes = [1, 8, 8], strides = [1, 1, 1]} : vector<8x8x8xf32> to vector<1x8x8xf32>
    %1679 = vector.broadcast %1677 : f32 to vector<1x8x8xf32>
    %1680 = arith.mulf %1679, %1678 : vector<1x8x8xf32>
    %1681 = arith.addf %1676, %1680 : vector<1x8x8xf32>
    %c3_686 = arith.constant 3 : index
    %c0_687 = arith.constant 0 : index
    %1682 = memref.load %arg6[%c3_686, %c0_687] : memref<8x8xf32, #tpu.memory_space<smem>>
    %1683 = vector.extract_strided_slice %1396 {offsets = [0, 0, 0], sizes = [1, 8, 8], strides = [1, 1, 1]} : vector<8x8x8xf32> to vector<1x8x8xf32>
    %1684 = vector.broadcast %1682 : f32 to vector<1x8x8xf32>
    %1685 = arith.mulf %1684, %1683 : vector<1x8x8xf32>
    %c3_688 = arith.constant 3 : index
    %c1_689 = arith.constant 1 : index
    %1686 = memref.load %arg6[%c3_688, %c1_689] : memref<8x8xf32, #tpu.memory_space<smem>>
    %1687 = vector.extract_strided_slice %1396 {offsets = [1, 0, 0], sizes = [1, 8, 8], strides = [1, 1, 1]} : vector<8x8x8xf32> to vector<1x8x8xf32>
    %1688 = vector.broadcast %1686 : f32 to vector<1x8x8xf32>
    %1689 = arith.mulf %1688, %1687 : vector<1x8x8xf32>
    %1690 = arith.addf %1685, %1689 : vector<1x8x8xf32>
    %c3_690 = arith.constant 3 : index
    %c2_691 = arith.constant 2 : index
    %1691 = memref.load %arg6[%c3_690, %c2_691] : memref<8x8xf32, #tpu.memory_space<smem>>
    %1692 = vector.extract_strided_slice %1396 {offsets = [2, 0, 0], sizes = [1, 8, 8], strides = [1, 1, 1]} : vector<8x8x8xf32> to vector<1x8x8xf32>
    %1693 = vector.broadcast %1691 : f32 to vector<1x8x8xf32>
    %1694 = arith.mulf %1693, %1692 : vector<1x8x8xf32>
    %1695 = arith.addf %1690, %1694 : vector<1x8x8xf32>
    %c3_692 = arith.constant 3 : index
    %c3_693 = arith.constant 3 : index
    %1696 = memref.load %arg6[%c3_692, %c3_693] : memref<8x8xf32, #tpu.memory_space<smem>>
    %1697 = vector.extract_strided_slice %1396 {offsets = [3, 0, 0], sizes = [1, 8, 8], strides = [1, 1, 1]} : vector<8x8x8xf32> to vector<1x8x8xf32>
    %1698 = vector.broadcast %1696 : f32 to vector<1x8x8xf32>
    %1699 = arith.mulf %1698, %1697 : vector<1x8x8xf32>
    %1700 = arith.addf %1695, %1699 : vector<1x8x8xf32>
    %c3_694 = arith.constant 3 : index
    %c4_695 = arith.constant 4 : index
    %1701 = memref.load %arg6[%c3_694, %c4_695] : memref<8x8xf32, #tpu.memory_space<smem>>
    %1702 = vector.extract_strided_slice %1396 {offsets = [4, 0, 0], sizes = [1, 8, 8], strides = [1, 1, 1]} : vector<8x8x8xf32> to vector<1x8x8xf32>
    %1703 = vector.broadcast %1701 : f32 to vector<1x8x8xf32>
    %1704 = arith.mulf %1703, %1702 : vector<1x8x8xf32>
    %1705 = arith.addf %1700, %1704 : vector<1x8x8xf32>
    %c3_696 = arith.constant 3 : index
    %c5_697 = arith.constant 5 : index
    %1706 = memref.load %arg6[%c3_696, %c5_697] : memref<8x8xf32, #tpu.memory_space<smem>>
    %1707 = vector.extract_strided_slice %1396 {offsets = [5, 0, 0], sizes = [1, 8, 8], strides = [1, 1, 1]} : vector<8x8x8xf32> to vector<1x8x8xf32>
    %1708 = vector.broadcast %1706 : f32 to vector<1x8x8xf32>
    %1709 = arith.mulf %1708, %1707 : vector<1x8x8xf32>
    %1710 = arith.addf %1705, %1709 : vector<1x8x8xf32>
    %c3_698 = arith.constant 3 : index
    %c6_699 = arith.constant 6 : index
    %1711 = memref.load %arg6[%c3_698, %c6_699] : memref<8x8xf32, #tpu.memory_space<smem>>
    %1712 = vector.extract_strided_slice %1396 {offsets = [6, 0, 0], sizes = [1, 8, 8], strides = [1, 1, 1]} : vector<8x8x8xf32> to vector<1x8x8xf32>
    %1713 = vector.broadcast %1711 : f32 to vector<1x8x8xf32>
    %1714 = arith.mulf %1713, %1712 : vector<1x8x8xf32>
    %1715 = arith.addf %1710, %1714 : vector<1x8x8xf32>
    %c3_700 = arith.constant 3 : index
    %c7_701 = arith.constant 7 : index
    %1716 = memref.load %arg6[%c3_700, %c7_701] : memref<8x8xf32, #tpu.memory_space<smem>>
    %1717 = vector.extract_strided_slice %1396 {offsets = [7, 0, 0], sizes = [1, 8, 8], strides = [1, 1, 1]} : vector<8x8x8xf32> to vector<1x8x8xf32>
    %1718 = vector.broadcast %1716 : f32 to vector<1x8x8xf32>
    %1719 = arith.mulf %1718, %1717 : vector<1x8x8xf32>
    %1720 = arith.addf %1715, %1719 : vector<1x8x8xf32>
    %1721 = arith.addf %1681, %1720 : vector<1x8x8xf32>
    %c3_702 = arith.constant 3 : index
    %c14_703 = arith.constant 14 : index
    %1722 = memref.load %arg7[%c3_702, %c14_703] : memref<8x15xf32, #tpu.memory_space<smem>>
    %1723 = vector.broadcast %1722 : f32 to vector<1x8x8xf32>
    %1724 = arith.addf %1721, %1723 : vector<1x8x8xf32>
    %c4_704 = arith.constant 4 : index
    %c0_705 = arith.constant 0 : index
    %1725 = memref.load %arg5[%c4_704, %c0_705] : memref<8x8xf32, #tpu.memory_space<smem>>
    %1726 = vector.extract_strided_slice %1308 {offsets = [0, 0, 0], sizes = [1, 8, 8], strides = [1, 1, 1]} : vector<8x8x8xf32> to vector<1x8x8xf32>
    %1727 = vector.broadcast %1725 : f32 to vector<1x8x8xf32>
    %1728 = arith.mulf %1727, %1726 : vector<1x8x8xf32>
    %c4_706 = arith.constant 4 : index
    %c1_707 = arith.constant 1 : index
    %1729 = memref.load %arg5[%c4_706, %c1_707] : memref<8x8xf32, #tpu.memory_space<smem>>
    %1730 = vector.extract_strided_slice %1308 {offsets = [1, 0, 0], sizes = [1, 8, 8], strides = [1, 1, 1]} : vector<8x8x8xf32> to vector<1x8x8xf32>
    %1731 = vector.broadcast %1729 : f32 to vector<1x8x8xf32>
    %1732 = arith.mulf %1731, %1730 : vector<1x8x8xf32>
    %1733 = arith.addf %1728, %1732 : vector<1x8x8xf32>
    %c4_708 = arith.constant 4 : index
    %c2_709 = arith.constant 2 : index
    %1734 = memref.load %arg5[%c4_708, %c2_709] : memref<8x8xf32, #tpu.memory_space<smem>>
    %1735 = vector.extract_strided_slice %1308 {offsets = [2, 0, 0], sizes = [1, 8, 8], strides = [1, 1, 1]} : vector<8x8x8xf32> to vector<1x8x8xf32>
    %1736 = vector.broadcast %1734 : f32 to vector<1x8x8xf32>
    %1737 = arith.mulf %1736, %1735 : vector<1x8x8xf32>
    %1738 = arith.addf %1733, %1737 : vector<1x8x8xf32>
    %c4_710 = arith.constant 4 : index
    %c3_711 = arith.constant 3 : index
    %1739 = memref.load %arg5[%c4_710, %c3_711] : memref<8x8xf32, #tpu.memory_space<smem>>
    %1740 = vector.extract_strided_slice %1308 {offsets = [3, 0, 0], sizes = [1, 8, 8], strides = [1, 1, 1]} : vector<8x8x8xf32> to vector<1x8x8xf32>
    %1741 = vector.broadcast %1739 : f32 to vector<1x8x8xf32>
    %1742 = arith.mulf %1741, %1740 : vector<1x8x8xf32>
    %1743 = arith.addf %1738, %1742 : vector<1x8x8xf32>
    %c4_712 = arith.constant 4 : index
    %c4_713 = arith.constant 4 : index
    %1744 = memref.load %arg5[%c4_712, %c4_713] : memref<8x8xf32, #tpu.memory_space<smem>>
    %1745 = vector.extract_strided_slice %1308 {offsets = [4, 0, 0], sizes = [1, 8, 8], strides = [1, 1, 1]} : vector<8x8x8xf32> to vector<1x8x8xf32>
    %1746 = vector.broadcast %1744 : f32 to vector<1x8x8xf32>
    %1747 = arith.mulf %1746, %1745 : vector<1x8x8xf32>
    %1748 = arith.addf %1743, %1747 : vector<1x8x8xf32>
    %c4_714 = arith.constant 4 : index
    %c5_715 = arith.constant 5 : index
    %1749 = memref.load %arg5[%c4_714, %c5_715] : memref<8x8xf32, #tpu.memory_space<smem>>
    %1750 = vector.extract_strided_slice %1308 {offsets = [5, 0, 0], sizes = [1, 8, 8], strides = [1, 1, 1]} : vector<8x8x8xf32> to vector<1x8x8xf32>
    %1751 = vector.broadcast %1749 : f32 to vector<1x8x8xf32>
    %1752 = arith.mulf %1751, %1750 : vector<1x8x8xf32>
    %1753 = arith.addf %1748, %1752 : vector<1x8x8xf32>
    %c4_716 = arith.constant 4 : index
    %c6_717 = arith.constant 6 : index
    %1754 = memref.load %arg5[%c4_716, %c6_717] : memref<8x8xf32, #tpu.memory_space<smem>>
    %1755 = vector.extract_strided_slice %1308 {offsets = [6, 0, 0], sizes = [1, 8, 8], strides = [1, 1, 1]} : vector<8x8x8xf32> to vector<1x8x8xf32>
    %1756 = vector.broadcast %1754 : f32 to vector<1x8x8xf32>
    %1757 = arith.mulf %1756, %1755 : vector<1x8x8xf32>
    %1758 = arith.addf %1753, %1757 : vector<1x8x8xf32>
    %c4_718 = arith.constant 4 : index
    %c7_719 = arith.constant 7 : index
    %1759 = memref.load %arg5[%c4_718, %c7_719] : memref<8x8xf32, #tpu.memory_space<smem>>
    %1760 = vector.extract_strided_slice %1308 {offsets = [7, 0, 0], sizes = [1, 8, 8], strides = [1, 1, 1]} : vector<8x8x8xf32> to vector<1x8x8xf32>
    %1761 = vector.broadcast %1759 : f32 to vector<1x8x8xf32>
    %1762 = arith.mulf %1761, %1760 : vector<1x8x8xf32>
    %1763 = arith.addf %1758, %1762 : vector<1x8x8xf32>
    %c4_720 = arith.constant 4 : index
    %c0_721 = arith.constant 0 : index
    %1764 = memref.load %arg6[%c4_720, %c0_721] : memref<8x8xf32, #tpu.memory_space<smem>>
    %1765 = vector.extract_strided_slice %1396 {offsets = [0, 0, 0], sizes = [1, 8, 8], strides = [1, 1, 1]} : vector<8x8x8xf32> to vector<1x8x8xf32>
    %1766 = vector.broadcast %1764 : f32 to vector<1x8x8xf32>
    %1767 = arith.mulf %1766, %1765 : vector<1x8x8xf32>
    %c4_722 = arith.constant 4 : index
    %c1_723 = arith.constant 1 : index
    %1768 = memref.load %arg6[%c4_722, %c1_723] : memref<8x8xf32, #tpu.memory_space<smem>>
    %1769 = vector.extract_strided_slice %1396 {offsets = [1, 0, 0], sizes = [1, 8, 8], strides = [1, 1, 1]} : vector<8x8x8xf32> to vector<1x8x8xf32>
    %1770 = vector.broadcast %1768 : f32 to vector<1x8x8xf32>
    %1771 = arith.mulf %1770, %1769 : vector<1x8x8xf32>
    %1772 = arith.addf %1767, %1771 : vector<1x8x8xf32>
    %c4_724 = arith.constant 4 : index
    %c2_725 = arith.constant 2 : index
    %1773 = memref.load %arg6[%c4_724, %c2_725] : memref<8x8xf32, #tpu.memory_space<smem>>
    %1774 = vector.extract_strided_slice %1396 {offsets = [2, 0, 0], sizes = [1, 8, 8], strides = [1, 1, 1]} : vector<8x8x8xf32> to vector<1x8x8xf32>
    %1775 = vector.broadcast %1773 : f32 to vector<1x8x8xf32>
    %1776 = arith.mulf %1775, %1774 : vector<1x8x8xf32>
    %1777 = arith.addf %1772, %1776 : vector<1x8x8xf32>
    %c4_726 = arith.constant 4 : index
    %c3_727 = arith.constant 3 : index
    %1778 = memref.load %arg6[%c4_726, %c3_727] : memref<8x8xf32, #tpu.memory_space<smem>>
    %1779 = vector.extract_strided_slice %1396 {offsets = [3, 0, 0], sizes = [1, 8, 8], strides = [1, 1, 1]} : vector<8x8x8xf32> to vector<1x8x8xf32>
    %1780 = vector.broadcast %1778 : f32 to vector<1x8x8xf32>
    %1781 = arith.mulf %1780, %1779 : vector<1x8x8xf32>
    %1782 = arith.addf %1777, %1781 : vector<1x8x8xf32>
    %c4_728 = arith.constant 4 : index
    %c4_729 = arith.constant 4 : index
    %1783 = memref.load %arg6[%c4_728, %c4_729] : memref<8x8xf32, #tpu.memory_space<smem>>
    %1784 = vector.extract_strided_slice %1396 {offsets = [4, 0, 0], sizes = [1, 8, 8], strides = [1, 1, 1]} : vector<8x8x8xf32> to vector<1x8x8xf32>
    %1785 = vector.broadcast %1783 : f32 to vector<1x8x8xf32>
    %1786 = arith.mulf %1785, %1784 : vector<1x8x8xf32>
    %1787 = arith.addf %1782, %1786 : vector<1x8x8xf32>
    %c4_730 = arith.constant 4 : index
    %c5_731 = arith.constant 5 : index
    %1788 = memref.load %arg6[%c4_730, %c5_731] : memref<8x8xf32, #tpu.memory_space<smem>>
    %1789 = vector.extract_strided_slice %1396 {offsets = [5, 0, 0], sizes = [1, 8, 8], strides = [1, 1, 1]} : vector<8x8x8xf32> to vector<1x8x8xf32>
    %1790 = vector.broadcast %1788 : f32 to vector<1x8x8xf32>
    %1791 = arith.mulf %1790, %1789 : vector<1x8x8xf32>
    %1792 = arith.addf %1787, %1791 : vector<1x8x8xf32>
    %c4_732 = arith.constant 4 : index
    %c6_733 = arith.constant 6 : index
    %1793 = memref.load %arg6[%c4_732, %c6_733] : memref<8x8xf32, #tpu.memory_space<smem>>
    %1794 = vector.extract_strided_slice %1396 {offsets = [6, 0, 0], sizes = [1, 8, 8], strides = [1, 1, 1]} : vector<8x8x8xf32> to vector<1x8x8xf32>
    %1795 = vector.broadcast %1793 : f32 to vector<1x8x8xf32>
    %1796 = arith.mulf %1795, %1794 : vector<1x8x8xf32>
    %1797 = arith.addf %1792, %1796 : vector<1x8x8xf32>
    %c4_734 = arith.constant 4 : index
    %c7_735 = arith.constant 7 : index
    %1798 = memref.load %arg6[%c4_734, %c7_735] : memref<8x8xf32, #tpu.memory_space<smem>>
    %1799 = vector.extract_strided_slice %1396 {offsets = [7, 0, 0], sizes = [1, 8, 8], strides = [1, 1, 1]} : vector<8x8x8xf32> to vector<1x8x8xf32>
    %1800 = vector.broadcast %1798 : f32 to vector<1x8x8xf32>
    %1801 = arith.mulf %1800, %1799 : vector<1x8x8xf32>
    %1802 = arith.addf %1797, %1801 : vector<1x8x8xf32>
    %1803 = arith.addf %1763, %1802 : vector<1x8x8xf32>
    %c4_736 = arith.constant 4 : index
    %c14_737 = arith.constant 14 : index
    %1804 = memref.load %arg7[%c4_736, %c14_737] : memref<8x15xf32, #tpu.memory_space<smem>>
    %1805 = vector.broadcast %1804 : f32 to vector<1x8x8xf32>
    %1806 = arith.addf %1803, %1805 : vector<1x8x8xf32>
    %c5_738 = arith.constant 5 : index
    %c0_739 = arith.constant 0 : index
    %1807 = memref.load %arg5[%c5_738, %c0_739] : memref<8x8xf32, #tpu.memory_space<smem>>
    %1808 = vector.extract_strided_slice %1308 {offsets = [0, 0, 0], sizes = [1, 8, 8], strides = [1, 1, 1]} : vector<8x8x8xf32> to vector<1x8x8xf32>
    %1809 = vector.broadcast %1807 : f32 to vector<1x8x8xf32>
    %1810 = arith.mulf %1809, %1808 : vector<1x8x8xf32>
    %c5_740 = arith.constant 5 : index
    %c1_741 = arith.constant 1 : index
    %1811 = memref.load %arg5[%c5_740, %c1_741] : memref<8x8xf32, #tpu.memory_space<smem>>
    %1812 = vector.extract_strided_slice %1308 {offsets = [1, 0, 0], sizes = [1, 8, 8], strides = [1, 1, 1]} : vector<8x8x8xf32> to vector<1x8x8xf32>
    %1813 = vector.broadcast %1811 : f32 to vector<1x8x8xf32>
    %1814 = arith.mulf %1813, %1812 : vector<1x8x8xf32>
    %1815 = arith.addf %1810, %1814 : vector<1x8x8xf32>
    %c5_742 = arith.constant 5 : index
    %c2_743 = arith.constant 2 : index
    %1816 = memref.load %arg5[%c5_742, %c2_743] : memref<8x8xf32, #tpu.memory_space<smem>>
    %1817 = vector.extract_strided_slice %1308 {offsets = [2, 0, 0], sizes = [1, 8, 8], strides = [1, 1, 1]} : vector<8x8x8xf32> to vector<1x8x8xf32>
    %1818 = vector.broadcast %1816 : f32 to vector<1x8x8xf32>
    %1819 = arith.mulf %1818, %1817 : vector<1x8x8xf32>
    %1820 = arith.addf %1815, %1819 : vector<1x8x8xf32>
    %c5_744 = arith.constant 5 : index
    %c3_745 = arith.constant 3 : index
    %1821 = memref.load %arg5[%c5_744, %c3_745] : memref<8x8xf32, #tpu.memory_space<smem>>
    %1822 = vector.extract_strided_slice %1308 {offsets = [3, 0, 0], sizes = [1, 8, 8], strides = [1, 1, 1]} : vector<8x8x8xf32> to vector<1x8x8xf32>
    %1823 = vector.broadcast %1821 : f32 to vector<1x8x8xf32>
    %1824 = arith.mulf %1823, %1822 : vector<1x8x8xf32>
    %1825 = arith.addf %1820, %1824 : vector<1x8x8xf32>
    %c5_746 = arith.constant 5 : index
    %c4_747 = arith.constant 4 : index
    %1826 = memref.load %arg5[%c5_746, %c4_747] : memref<8x8xf32, #tpu.memory_space<smem>>
    %1827 = vector.extract_strided_slice %1308 {offsets = [4, 0, 0], sizes = [1, 8, 8], strides = [1, 1, 1]} : vector<8x8x8xf32> to vector<1x8x8xf32>
    %1828 = vector.broadcast %1826 : f32 to vector<1x8x8xf32>
    %1829 = arith.mulf %1828, %1827 : vector<1x8x8xf32>
    %1830 = arith.addf %1825, %1829 : vector<1x8x8xf32>
    %c5_748 = arith.constant 5 : index
    %c5_749 = arith.constant 5 : index
    %1831 = memref.load %arg5[%c5_748, %c5_749] : memref<8x8xf32, #tpu.memory_space<smem>>
    %1832 = vector.extract_strided_slice %1308 {offsets = [5, 0, 0], sizes = [1, 8, 8], strides = [1, 1, 1]} : vector<8x8x8xf32> to vector<1x8x8xf32>
    %1833 = vector.broadcast %1831 : f32 to vector<1x8x8xf32>
    %1834 = arith.mulf %1833, %1832 : vector<1x8x8xf32>
    %1835 = arith.addf %1830, %1834 : vector<1x8x8xf32>
    %c5_750 = arith.constant 5 : index
    %c6_751 = arith.constant 6 : index
    %1836 = memref.load %arg5[%c5_750, %c6_751] : memref<8x8xf32, #tpu.memory_space<smem>>
    %1837 = vector.extract_strided_slice %1308 {offsets = [6, 0, 0], sizes = [1, 8, 8], strides = [1, 1, 1]} : vector<8x8x8xf32> to vector<1x8x8xf32>
    %1838 = vector.broadcast %1836 : f32 to vector<1x8x8xf32>
    %1839 = arith.mulf %1838, %1837 : vector<1x8x8xf32>
    %1840 = arith.addf %1835, %1839 : vector<1x8x8xf32>
    %c5_752 = arith.constant 5 : index
    %c7_753 = arith.constant 7 : index
    %1841 = memref.load %arg5[%c5_752, %c7_753] : memref<8x8xf32, #tpu.memory_space<smem>>
    %1842 = vector.extract_strided_slice %1308 {offsets = [7, 0, 0], sizes = [1, 8, 8], strides = [1, 1, 1]} : vector<8x8x8xf32> to vector<1x8x8xf32>
    %1843 = vector.broadcast %1841 : f32 to vector<1x8x8xf32>
    %1844 = arith.mulf %1843, %1842 : vector<1x8x8xf32>
    %1845 = arith.addf %1840, %1844 : vector<1x8x8xf32>
    %c5_754 = arith.constant 5 : index
    %c0_755 = arith.constant 0 : index
    %1846 = memref.load %arg6[%c5_754, %c0_755] : memref<8x8xf32, #tpu.memory_space<smem>>
    %1847 = vector.extract_strided_slice %1396 {offsets = [0, 0, 0], sizes = [1, 8, 8], strides = [1, 1, 1]} : vector<8x8x8xf32> to vector<1x8x8xf32>
    %1848 = vector.broadcast %1846 : f32 to vector<1x8x8xf32>
    %1849 = arith.mulf %1848, %1847 : vector<1x8x8xf32>
    %c5_756 = arith.constant 5 : index
    %c1_757 = arith.constant 1 : index
    %1850 = memref.load %arg6[%c5_756, %c1_757] : memref<8x8xf32, #tpu.memory_space<smem>>
    %1851 = vector.extract_strided_slice %1396 {offsets = [1, 0, 0], sizes = [1, 8, 8], strides = [1, 1, 1]} : vector<8x8x8xf32> to vector<1x8x8xf32>
    %1852 = vector.broadcast %1850 : f32 to vector<1x8x8xf32>
    %1853 = arith.mulf %1852, %1851 : vector<1x8x8xf32>
    %1854 = arith.addf %1849, %1853 : vector<1x8x8xf32>
    %c5_758 = arith.constant 5 : index
    %c2_759 = arith.constant 2 : index
    %1855 = memref.load %arg6[%c5_758, %c2_759] : memref<8x8xf32, #tpu.memory_space<smem>>
    %1856 = vector.extract_strided_slice %1396 {offsets = [2, 0, 0], sizes = [1, 8, 8], strides = [1, 1, 1]} : vector<8x8x8xf32> to vector<1x8x8xf32>
    %1857 = vector.broadcast %1855 : f32 to vector<1x8x8xf32>
    %1858 = arith.mulf %1857, %1856 : vector<1x8x8xf32>
    %1859 = arith.addf %1854, %1858 : vector<1x8x8xf32>
    %c5_760 = arith.constant 5 : index
    %c3_761 = arith.constant 3 : index
    %1860 = memref.load %arg6[%c5_760, %c3_761] : memref<8x8xf32, #tpu.memory_space<smem>>
    %1861 = vector.extract_strided_slice %1396 {offsets = [3, 0, 0], sizes = [1, 8, 8], strides = [1, 1, 1]} : vector<8x8x8xf32> to vector<1x8x8xf32>
    %1862 = vector.broadcast %1860 : f32 to vector<1x8x8xf32>
    %1863 = arith.mulf %1862, %1861 : vector<1x8x8xf32>
    %1864 = arith.addf %1859, %1863 : vector<1x8x8xf32>
    %c5_762 = arith.constant 5 : index
    %c4_763 = arith.constant 4 : index
    %1865 = memref.load %arg6[%c5_762, %c4_763] : memref<8x8xf32, #tpu.memory_space<smem>>
    %1866 = vector.extract_strided_slice %1396 {offsets = [4, 0, 0], sizes = [1, 8, 8], strides = [1, 1, 1]} : vector<8x8x8xf32> to vector<1x8x8xf32>
    %1867 = vector.broadcast %1865 : f32 to vector<1x8x8xf32>
    %1868 = arith.mulf %1867, %1866 : vector<1x8x8xf32>
    %1869 = arith.addf %1864, %1868 : vector<1x8x8xf32>
    %c5_764 = arith.constant 5 : index
    %c5_765 = arith.constant 5 : index
    %1870 = memref.load %arg6[%c5_764, %c5_765] : memref<8x8xf32, #tpu.memory_space<smem>>
    %1871 = vector.extract_strided_slice %1396 {offsets = [5, 0, 0], sizes = [1, 8, 8], strides = [1, 1, 1]} : vector<8x8x8xf32> to vector<1x8x8xf32>
    %1872 = vector.broadcast %1870 : f32 to vector<1x8x8xf32>
    %1873 = arith.mulf %1872, %1871 : vector<1x8x8xf32>
    %1874 = arith.addf %1869, %1873 : vector<1x8x8xf32>
    %c5_766 = arith.constant 5 : index
    %c6_767 = arith.constant 6 : index
    %1875 = memref.load %arg6[%c5_766, %c6_767] : memref<8x8xf32, #tpu.memory_space<smem>>
    %1876 = vector.extract_strided_slice %1396 {offsets = [6, 0, 0], sizes = [1, 8, 8], strides = [1, 1, 1]} : vector<8x8x8xf32> to vector<1x8x8xf32>
    %1877 = vector.broadcast %1875 : f32 to vector<1x8x8xf32>
    %1878 = arith.mulf %1877, %1876 : vector<1x8x8xf32>
    %1879 = arith.addf %1874, %1878 : vector<1x8x8xf32>
    %c5_768 = arith.constant 5 : index
    %c7_769 = arith.constant 7 : index
    %1880 = memref.load %arg6[%c5_768, %c7_769] : memref<8x8xf32, #tpu.memory_space<smem>>
    %1881 = vector.extract_strided_slice %1396 {offsets = [7, 0, 0], sizes = [1, 8, 8], strides = [1, 1, 1]} : vector<8x8x8xf32> to vector<1x8x8xf32>
    %1882 = vector.broadcast %1880 : f32 to vector<1x8x8xf32>
    %1883 = arith.mulf %1882, %1881 : vector<1x8x8xf32>
    %1884 = arith.addf %1879, %1883 : vector<1x8x8xf32>
    %1885 = arith.addf %1845, %1884 : vector<1x8x8xf32>
    %c5_770 = arith.constant 5 : index
    %c14_771 = arith.constant 14 : index
    %1886 = memref.load %arg7[%c5_770, %c14_771] : memref<8x15xf32, #tpu.memory_space<smem>>
    %1887 = vector.broadcast %1886 : f32 to vector<1x8x8xf32>
    %1888 = arith.addf %1885, %1887 : vector<1x8x8xf32>
    %c6_772 = arith.constant 6 : index
    %c0_773 = arith.constant 0 : index
    %1889 = memref.load %arg5[%c6_772, %c0_773] : memref<8x8xf32, #tpu.memory_space<smem>>
    %1890 = vector.extract_strided_slice %1308 {offsets = [0, 0, 0], sizes = [1, 8, 8], strides = [1, 1, 1]} : vector<8x8x8xf32> to vector<1x8x8xf32>
    %1891 = vector.broadcast %1889 : f32 to vector<1x8x8xf32>
    %1892 = arith.mulf %1891, %1890 : vector<1x8x8xf32>
    %c6_774 = arith.constant 6 : index
    %c1_775 = arith.constant 1 : index
    %1893 = memref.load %arg5[%c6_774, %c1_775] : memref<8x8xf32, #tpu.memory_space<smem>>
    %1894 = vector.extract_strided_slice %1308 {offsets = [1, 0, 0], sizes = [1, 8, 8], strides = [1, 1, 1]} : vector<8x8x8xf32> to vector<1x8x8xf32>
    %1895 = vector.broadcast %1893 : f32 to vector<1x8x8xf32>
    %1896 = arith.mulf %1895, %1894 : vector<1x8x8xf32>
    %1897 = arith.addf %1892, %1896 : vector<1x8x8xf32>
    %c6_776 = arith.constant 6 : index
    %c2_777 = arith.constant 2 : index
    %1898 = memref.load %arg5[%c6_776, %c2_777] : memref<8x8xf32, #tpu.memory_space<smem>>
    %1899 = vector.extract_strided_slice %1308 {offsets = [2, 0, 0], sizes = [1, 8, 8], strides = [1, 1, 1]} : vector<8x8x8xf32> to vector<1x8x8xf32>
    %1900 = vector.broadcast %1898 : f32 to vector<1x8x8xf32>
    %1901 = arith.mulf %1900, %1899 : vector<1x8x8xf32>
    %1902 = arith.addf %1897, %1901 : vector<1x8x8xf32>
    %c6_778 = arith.constant 6 : index
    %c3_779 = arith.constant 3 : index
    %1903 = memref.load %arg5[%c6_778, %c3_779] : memref<8x8xf32, #tpu.memory_space<smem>>
    %1904 = vector.extract_strided_slice %1308 {offsets = [3, 0, 0], sizes = [1, 8, 8], strides = [1, 1, 1]} : vector<8x8x8xf32> to vector<1x8x8xf32>
    %1905 = vector.broadcast %1903 : f32 to vector<1x8x8xf32>
    %1906 = arith.mulf %1905, %1904 : vector<1x8x8xf32>
    %1907 = arith.addf %1902, %1906 : vector<1x8x8xf32>
    %c6_780 = arith.constant 6 : index
    %c4_781 = arith.constant 4 : index
    %1908 = memref.load %arg5[%c6_780, %c4_781] : memref<8x8xf32, #tpu.memory_space<smem>>
    %1909 = vector.extract_strided_slice %1308 {offsets = [4, 0, 0], sizes = [1, 8, 8], strides = [1, 1, 1]} : vector<8x8x8xf32> to vector<1x8x8xf32>
    %1910 = vector.broadcast %1908 : f32 to vector<1x8x8xf32>
    %1911 = arith.mulf %1910, %1909 : vector<1x8x8xf32>
    %1912 = arith.addf %1907, %1911 : vector<1x8x8xf32>
    %c6_782 = arith.constant 6 : index
    %c5_783 = arith.constant 5 : index
    %1913 = memref.load %arg5[%c6_782, %c5_783] : memref<8x8xf32, #tpu.memory_space<smem>>
    %1914 = vector.extract_strided_slice %1308 {offsets = [5, 0, 0], sizes = [1, 8, 8], strides = [1, 1, 1]} : vector<8x8x8xf32> to vector<1x8x8xf32>
    %1915 = vector.broadcast %1913 : f32 to vector<1x8x8xf32>
    %1916 = arith.mulf %1915, %1914 : vector<1x8x8xf32>
    %1917 = arith.addf %1912, %1916 : vector<1x8x8xf32>
    %c6_784 = arith.constant 6 : index
    %c6_785 = arith.constant 6 : index
    %1918 = memref.load %arg5[%c6_784, %c6_785] : memref<8x8xf32, #tpu.memory_space<smem>>
    %1919 = vector.extract_strided_slice %1308 {offsets = [6, 0, 0], sizes = [1, 8, 8], strides = [1, 1, 1]} : vector<8x8x8xf32> to vector<1x8x8xf32>
    %1920 = vector.broadcast %1918 : f32 to vector<1x8x8xf32>
    %1921 = arith.mulf %1920, %1919 : vector<1x8x8xf32>
    %1922 = arith.addf %1917, %1921 : vector<1x8x8xf32>
    %c6_786 = arith.constant 6 : index
    %c7_787 = arith.constant 7 : index
    %1923 = memref.load %arg5[%c6_786, %c7_787] : memref<8x8xf32, #tpu.memory_space<smem>>
    %1924 = vector.extract_strided_slice %1308 {offsets = [7, 0, 0], sizes = [1, 8, 8], strides = [1, 1, 1]} : vector<8x8x8xf32> to vector<1x8x8xf32>
    %1925 = vector.broadcast %1923 : f32 to vector<1x8x8xf32>
    %1926 = arith.mulf %1925, %1924 : vector<1x8x8xf32>
    %1927 = arith.addf %1922, %1926 : vector<1x8x8xf32>
    %c6_788 = arith.constant 6 : index
    %c0_789 = arith.constant 0 : index
    %1928 = memref.load %arg6[%c6_788, %c0_789] : memref<8x8xf32, #tpu.memory_space<smem>>
    %1929 = vector.extract_strided_slice %1396 {offsets = [0, 0, 0], sizes = [1, 8, 8], strides = [1, 1, 1]} : vector<8x8x8xf32> to vector<1x8x8xf32>
    %1930 = vector.broadcast %1928 : f32 to vector<1x8x8xf32>
    %1931 = arith.mulf %1930, %1929 : vector<1x8x8xf32>
    %c6_790 = arith.constant 6 : index
    %c1_791 = arith.constant 1 : index
    %1932 = memref.load %arg6[%c6_790, %c1_791] : memref<8x8xf32, #tpu.memory_space<smem>>
    %1933 = vector.extract_strided_slice %1396 {offsets = [1, 0, 0], sizes = [1, 8, 8], strides = [1, 1, 1]} : vector<8x8x8xf32> to vector<1x8x8xf32>
    %1934 = vector.broadcast %1932 : f32 to vector<1x8x8xf32>
    %1935 = arith.mulf %1934, %1933 : vector<1x8x8xf32>
    %1936 = arith.addf %1931, %1935 : vector<1x8x8xf32>
    %c6_792 = arith.constant 6 : index
    %c2_793 = arith.constant 2 : index
    %1937 = memref.load %arg6[%c6_792, %c2_793] : memref<8x8xf32, #tpu.memory_space<smem>>
    %1938 = vector.extract_strided_slice %1396 {offsets = [2, 0, 0], sizes = [1, 8, 8], strides = [1, 1, 1]} : vector<8x8x8xf32> to vector<1x8x8xf32>
    %1939 = vector.broadcast %1937 : f32 to vector<1x8x8xf32>
    %1940 = arith.mulf %1939, %1938 : vector<1x8x8xf32>
    %1941 = arith.addf %1936, %1940 : vector<1x8x8xf32>
    %c6_794 = arith.constant 6 : index
    %c3_795 = arith.constant 3 : index
    %1942 = memref.load %arg6[%c6_794, %c3_795] : memref<8x8xf32, #tpu.memory_space<smem>>
    %1943 = vector.extract_strided_slice %1396 {offsets = [3, 0, 0], sizes = [1, 8, 8], strides = [1, 1, 1]} : vector<8x8x8xf32> to vector<1x8x8xf32>
    %1944 = vector.broadcast %1942 : f32 to vector<1x8x8xf32>
    %1945 = arith.mulf %1944, %1943 : vector<1x8x8xf32>
    %1946 = arith.addf %1941, %1945 : vector<1x8x8xf32>
    %c6_796 = arith.constant 6 : index
    %c4_797 = arith.constant 4 : index
    %1947 = memref.load %arg6[%c6_796, %c4_797] : memref<8x8xf32, #tpu.memory_space<smem>>
    %1948 = vector.extract_strided_slice %1396 {offsets = [4, 0, 0], sizes = [1, 8, 8], strides = [1, 1, 1]} : vector<8x8x8xf32> to vector<1x8x8xf32>
    %1949 = vector.broadcast %1947 : f32 to vector<1x8x8xf32>
    %1950 = arith.mulf %1949, %1948 : vector<1x8x8xf32>
    %1951 = arith.addf %1946, %1950 : vector<1x8x8xf32>
    %c6_798 = arith.constant 6 : index
    %c5_799 = arith.constant 5 : index
    %1952 = memref.load %arg6[%c6_798, %c5_799] : memref<8x8xf32, #tpu.memory_space<smem>>
    %1953 = vector.extract_strided_slice %1396 {offsets = [5, 0, 0], sizes = [1, 8, 8], strides = [1, 1, 1]} : vector<8x8x8xf32> to vector<1x8x8xf32>
    %1954 = vector.broadcast %1952 : f32 to vector<1x8x8xf32>
    %1955 = arith.mulf %1954, %1953 : vector<1x8x8xf32>
    %1956 = arith.addf %1951, %1955 : vector<1x8x8xf32>
    %c6_800 = arith.constant 6 : index
    %c6_801 = arith.constant 6 : index
    %1957 = memref.load %arg6[%c6_800, %c6_801] : memref<8x8xf32, #tpu.memory_space<smem>>
    %1958 = vector.extract_strided_slice %1396 {offsets = [6, 0, 0], sizes = [1, 8, 8], strides = [1, 1, 1]} : vector<8x8x8xf32> to vector<1x8x8xf32>
    %1959 = vector.broadcast %1957 : f32 to vector<1x8x8xf32>
    %1960 = arith.mulf %1959, %1958 : vector<1x8x8xf32>
    %1961 = arith.addf %1956, %1960 : vector<1x8x8xf32>
    %c6_802 = arith.constant 6 : index
    %c7_803 = arith.constant 7 : index
    %1962 = memref.load %arg6[%c6_802, %c7_803] : memref<8x8xf32, #tpu.memory_space<smem>>
    %1963 = vector.extract_strided_slice %1396 {offsets = [7, 0, 0], sizes = [1, 8, 8], strides = [1, 1, 1]} : vector<8x8x8xf32> to vector<1x8x8xf32>
    %1964 = vector.broadcast %1962 : f32 to vector<1x8x8xf32>
    %1965 = arith.mulf %1964, %1963 : vector<1x8x8xf32>
    %1966 = arith.addf %1961, %1965 : vector<1x8x8xf32>
    %1967 = arith.addf %1927, %1966 : vector<1x8x8xf32>
    %c6_804 = arith.constant 6 : index
    %c14_805 = arith.constant 14 : index
    %1968 = memref.load %arg7[%c6_804, %c14_805] : memref<8x15xf32, #tpu.memory_space<smem>>
    %1969 = vector.broadcast %1968 : f32 to vector<1x8x8xf32>
    %1970 = arith.addf %1967, %1969 : vector<1x8x8xf32>
    %c7_806 = arith.constant 7 : index
    %c0_807 = arith.constant 0 : index
    %1971 = memref.load %arg5[%c7_806, %c0_807] : memref<8x8xf32, #tpu.memory_space<smem>>
    %1972 = vector.extract_strided_slice %1308 {offsets = [0, 0, 0], sizes = [1, 8, 8], strides = [1, 1, 1]} : vector<8x8x8xf32> to vector<1x8x8xf32>
    %1973 = vector.broadcast %1971 : f32 to vector<1x8x8xf32>
    %1974 = arith.mulf %1973, %1972 : vector<1x8x8xf32>
    %c7_808 = arith.constant 7 : index
    %c1_809 = arith.constant 1 : index
    %1975 = memref.load %arg5[%c7_808, %c1_809] : memref<8x8xf32, #tpu.memory_space<smem>>
    %1976 = vector.extract_strided_slice %1308 {offsets = [1, 0, 0], sizes = [1, 8, 8], strides = [1, 1, 1]} : vector<8x8x8xf32> to vector<1x8x8xf32>
    %1977 = vector.broadcast %1975 : f32 to vector<1x8x8xf32>
    %1978 = arith.mulf %1977, %1976 : vector<1x8x8xf32>
    %1979 = arith.addf %1974, %1978 : vector<1x8x8xf32>
    %c7_810 = arith.constant 7 : index
    %c2_811 = arith.constant 2 : index
    %1980 = memref.load %arg5[%c7_810, %c2_811] : memref<8x8xf32, #tpu.memory_space<smem>>
    %1981 = vector.extract_strided_slice %1308 {offsets = [2, 0, 0], sizes = [1, 8, 8], strides = [1, 1, 1]} : vector<8x8x8xf32> to vector<1x8x8xf32>
    %1982 = vector.broadcast %1980 : f32 to vector<1x8x8xf32>
    %1983 = arith.mulf %1982, %1981 : vector<1x8x8xf32>
    %1984 = arith.addf %1979, %1983 : vector<1x8x8xf32>
    %c7_812 = arith.constant 7 : index
    %c3_813 = arith.constant 3 : index
    %1985 = memref.load %arg5[%c7_812, %c3_813] : memref<8x8xf32, #tpu.memory_space<smem>>
    %1986 = vector.extract_strided_slice %1308 {offsets = [3, 0, 0], sizes = [1, 8, 8], strides = [1, 1, 1]} : vector<8x8x8xf32> to vector<1x8x8xf32>
    %1987 = vector.broadcast %1985 : f32 to vector<1x8x8xf32>
    %1988 = arith.mulf %1987, %1986 : vector<1x8x8xf32>
    %1989 = arith.addf %1984, %1988 : vector<1x8x8xf32>
    %c7_814 = arith.constant 7 : index
    %c4_815 = arith.constant 4 : index
    %1990 = memref.load %arg5[%c7_814, %c4_815] : memref<8x8xf32, #tpu.memory_space<smem>>
    %1991 = vector.extract_strided_slice %1308 {offsets = [4, 0, 0], sizes = [1, 8, 8], strides = [1, 1, 1]} : vector<8x8x8xf32> to vector<1x8x8xf32>
    %1992 = vector.broadcast %1990 : f32 to vector<1x8x8xf32>
    %1993 = arith.mulf %1992, %1991 : vector<1x8x8xf32>
    %1994 = arith.addf %1989, %1993 : vector<1x8x8xf32>
    %c7_816 = arith.constant 7 : index
    %c5_817 = arith.constant 5 : index
    %1995 = memref.load %arg5[%c7_816, %c5_817] : memref<8x8xf32, #tpu.memory_space<smem>>
    %1996 = vector.extract_strided_slice %1308 {offsets = [5, 0, 0], sizes = [1, 8, 8], strides = [1, 1, 1]} : vector<8x8x8xf32> to vector<1x8x8xf32>
    %1997 = vector.broadcast %1995 : f32 to vector<1x8x8xf32>
    %1998 = arith.mulf %1997, %1996 : vector<1x8x8xf32>
    %1999 = arith.addf %1994, %1998 : vector<1x8x8xf32>
    %c7_818 = arith.constant 7 : index
    %c6_819 = arith.constant 6 : index
    %2000 = memref.load %arg5[%c7_818, %c6_819] : memref<8x8xf32, #tpu.memory_space<smem>>
    %2001 = vector.extract_strided_slice %1308 {offsets = [6, 0, 0], sizes = [1, 8, 8], strides = [1, 1, 1]} : vector<8x8x8xf32> to vector<1x8x8xf32>
    %2002 = vector.broadcast %2000 : f32 to vector<1x8x8xf32>
    %2003 = arith.mulf %2002, %2001 : vector<1x8x8xf32>
    %2004 = arith.addf %1999, %2003 : vector<1x8x8xf32>
    %c7_820 = arith.constant 7 : index
    %c7_821 = arith.constant 7 : index
    %2005 = memref.load %arg5[%c7_820, %c7_821] : memref<8x8xf32, #tpu.memory_space<smem>>
    %2006 = vector.extract_strided_slice %1308 {offsets = [7, 0, 0], sizes = [1, 8, 8], strides = [1, 1, 1]} : vector<8x8x8xf32> to vector<1x8x8xf32>
    %2007 = vector.broadcast %2005 : f32 to vector<1x8x8xf32>
    %2008 = arith.mulf %2007, %2006 : vector<1x8x8xf32>
    %2009 = arith.addf %2004, %2008 : vector<1x8x8xf32>
    %c7_822 = arith.constant 7 : index
    %c0_823 = arith.constant 0 : index
    %2010 = memref.load %arg6[%c7_822, %c0_823] : memref<8x8xf32, #tpu.memory_space<smem>>
    %2011 = vector.extract_strided_slice %1396 {offsets = [0, 0, 0], sizes = [1, 8, 8], strides = [1, 1, 1]} : vector<8x8x8xf32> to vector<1x8x8xf32>
    %2012 = vector.broadcast %2010 : f32 to vector<1x8x8xf32>
    %2013 = arith.mulf %2012, %2011 : vector<1x8x8xf32>
    %c7_824 = arith.constant 7 : index
    %c1_825 = arith.constant 1 : index
    %2014 = memref.load %arg6[%c7_824, %c1_825] : memref<8x8xf32, #tpu.memory_space<smem>>
    %2015 = vector.extract_strided_slice %1396 {offsets = [1, 0, 0], sizes = [1, 8, 8], strides = [1, 1, 1]} : vector<8x8x8xf32> to vector<1x8x8xf32>
    %2016 = vector.broadcast %2014 : f32 to vector<1x8x8xf32>
    %2017 = arith.mulf %2016, %2015 : vector<1x8x8xf32>
    %2018 = arith.addf %2013, %2017 : vector<1x8x8xf32>
    %c7_826 = arith.constant 7 : index
    %c2_827 = arith.constant 2 : index
    %2019 = memref.load %arg6[%c7_826, %c2_827] : memref<8x8xf32, #tpu.memory_space<smem>>
    %2020 = vector.extract_strided_slice %1396 {offsets = [2, 0, 0], sizes = [1, 8, 8], strides = [1, 1, 1]} : vector<8x8x8xf32> to vector<1x8x8xf32>
    %2021 = vector.broadcast %2019 : f32 to vector<1x8x8xf32>
    %2022 = arith.mulf %2021, %2020 : vector<1x8x8xf32>
    %2023 = arith.addf %2018, %2022 : vector<1x8x8xf32>
    %c7_828 = arith.constant 7 : index
    %c3_829 = arith.constant 3 : index
    %2024 = memref.load %arg6[%c7_828, %c3_829] : memref<8x8xf32, #tpu.memory_space<smem>>
    %2025 = vector.extract_strided_slice %1396 {offsets = [3, 0, 0], sizes = [1, 8, 8], strides = [1, 1, 1]} : vector<8x8x8xf32> to vector<1x8x8xf32>
    %2026 = vector.broadcast %2024 : f32 to vector<1x8x8xf32>
    %2027 = arith.mulf %2026, %2025 : vector<1x8x8xf32>
    %2028 = arith.addf %2023, %2027 : vector<1x8x8xf32>
    %c7_830 = arith.constant 7 : index
    %c4_831 = arith.constant 4 : index
    %2029 = memref.load %arg6[%c7_830, %c4_831] : memref<8x8xf32, #tpu.memory_space<smem>>
    %2030 = vector.extract_strided_slice %1396 {offsets = [4, 0, 0], sizes = [1, 8, 8], strides = [1, 1, 1]} : vector<8x8x8xf32> to vector<1x8x8xf32>
    %2031 = vector.broadcast %2029 : f32 to vector<1x8x8xf32>
    %2032 = arith.mulf %2031, %2030 : vector<1x8x8xf32>
    %2033 = arith.addf %2028, %2032 : vector<1x8x8xf32>
    %c7_832 = arith.constant 7 : index
    %c5_833 = arith.constant 5 : index
    %2034 = memref.load %arg6[%c7_832, %c5_833] : memref<8x8xf32, #tpu.memory_space<smem>>
    %2035 = vector.extract_strided_slice %1396 {offsets = [5, 0, 0], sizes = [1, 8, 8], strides = [1, 1, 1]} : vector<8x8x8xf32> to vector<1x8x8xf32>
    %2036 = vector.broadcast %2034 : f32 to vector<1x8x8xf32>
    %2037 = arith.mulf %2036, %2035 : vector<1x8x8xf32>
    %2038 = arith.addf %2033, %2037 : vector<1x8x8xf32>
    %c7_834 = arith.constant 7 : index
    %c6_835 = arith.constant 6 : index
    %2039 = memref.load %arg6[%c7_834, %c6_835] : memref<8x8xf32, #tpu.memory_space<smem>>
    %2040 = vector.extract_strided_slice %1396 {offsets = [6, 0, 0], sizes = [1, 8, 8], strides = [1, 1, 1]} : vector<8x8x8xf32> to vector<1x8x8xf32>
    %2041 = vector.broadcast %2039 : f32 to vector<1x8x8xf32>
    %2042 = arith.mulf %2041, %2040 : vector<1x8x8xf32>
    %2043 = arith.addf %2038, %2042 : vector<1x8x8xf32>
    %c7_836 = arith.constant 7 : index
    %c7_837 = arith.constant 7 : index
    %2044 = memref.load %arg6[%c7_836, %c7_837] : memref<8x8xf32, #tpu.memory_space<smem>>
    %2045 = vector.extract_strided_slice %1396 {offsets = [7, 0, 0], sizes = [1, 8, 8], strides = [1, 1, 1]} : vector<8x8x8xf32> to vector<1x8x8xf32>
    %2046 = vector.broadcast %2044 : f32 to vector<1x8x8xf32>
    %2047 = arith.mulf %2046, %2045 : vector<1x8x8xf32>
    %2048 = arith.addf %2043, %2047 : vector<1x8x8xf32>
    %2049 = arith.addf %2009, %2048 : vector<1x8x8xf32>
    %c7_838 = arith.constant 7 : index
    %c14_839 = arith.constant 14 : index
    %2050 = memref.load %arg7[%c7_838, %c14_839] : memref<8x15xf32, #tpu.memory_space<smem>>
    %2051 = vector.broadcast %2050 : f32 to vector<1x8x8xf32>
    %2052 = arith.addf %2049, %2051 : vector<1x8x8xf32>
    %2053 = tpu.concatenate %1478, %1560, %1642, %1724, %1806, %1888, %1970, %2052 in 0 : vector<1x8x8xf32>, vector<1x8x8xf32>, vector<1x8x8xf32>, vector<1x8x8xf32>, vector<1x8x8xf32>, vector<1x8x8xf32>, vector<1x8x8xf32>, vector<1x8x8xf32> -> vector<8x8x8xf32>
    %c0_840 = arith.constant 0 : index
    %c0_841 = arith.constant 0 : index
    %c0_842 = arith.constant 0 : index
    %c0_843 = arith.constant 0 : index
    %2054 = vector.load %arg8[%c0_840, %c0_841, %c0_842, %c0_843] : memref<1x8x8x8xf32, #tpu.memory_space<vmem>>, vector<1x8x8x8xf32>
    %2055 = vector.shape_cast %2054 : vector<1x8x8x8xf32> to vector<8x8x8xf32>
    %2056 = vector.shape_cast %2053 : vector<8x8x8xf32> to vector<1x8x8x8xf32>
    tpu.vector_store %arg8[%c0_840, %c0_841, %c0_842, %c0_843], %2056 {strides = array<i32>} : memref<1x8x8x8xf32, #tpu.memory_space<vmem>>, vector<1x8x8x8xf32>,
    return
  }
  func.func @transform_0(%arg0: i32) -> (i32, i32, i32, i32) {
    %c0_i32 = arith.constant 0 : i32
    %c0_i32_0 = arith.constant 0 : i32
    %c0_i32_1 = arith.constant 0 : i32
    %c0_i32_2 = arith.constant 0 : i32
    return %arg0, %c0_i32, %c0_i32_0, %c0_i32_1 : i32, i32, i32, i32
  }
  func.func @transform_1(%arg0: i32) -> (i32, i32) {
    %c0_i32 = arith.constant 0 : i32
    %c0_i32_0 = arith.constant 0 : i32
    %c0_i32_1 = arith.constant 0 : i32
    return %c0_i32, %c0_i32_0 : i32, i32
  }
  func.func @transform_2(%arg0: i32) -> (i32, i32) {
    %c0_i32 = arith.constant 0 : i32
    %c0_i32_0 = arith.constant 0 : i32
    %c0_i32_1 = arith.constant 0 : i32
    return %c0_i32, %c0_i32_0 : i32, i32
  }
  func.func @transform_3(%arg0: i32) -> (i32, i32) {
    %c0_i32 = arith.constant 0 : i32
    %c0_i32_0 = arith.constant 0 : i32
    %c0_i32_1 = arith.constant 0 : i32
    return %c0_i32, %c0_i32_0 : i32, i32
  }
  func.func @transform_4(%arg0: i32) -> (i32, i32) {
    %c0_i32 = arith.constant 0 : i32
    %c0_i32_0 = arith.constant 0 : i32
    %c0_i32_1 = arith.constant 0 : i32
    return %c0_i32, %c0_i32_0 : i32, i32
  }
  func.func @transform_5(%arg0: i32) -> (i32, i32) {
    %c0_i32 = arith.constant 0 : i32
    %c0_i32_0 = arith.constant 0 : i32
    %c0_i32_1 = arith.constant 0 : i32
    return %c0_i32, %c0_i32_0 : i32, i32
  }
  func.func @transform_6(%arg0: i32) -> (i32, i32) {
    %c0_i32 = arith.constant 0 : i32
    %c0_i32_0 = arith.constant 0 : i32
    %c0_i32_1 = arith.constant 0 : i32
    return %c0_i32, %c0_i32_0 : i32, i32
  }
  func.func @transform_7(%arg0: i32) -> (i32, i32, i32, i32) {
    %c0_i32 = arith.constant 0 : i32
    %c0_i32_0 = arith.constant 0 : i32
    %c0_i32_1 = arith.constant 0 : i32
    %c0_i32_2 = arith.constant 0 : i32
    return %arg0, %c0_i32, %c0_i32_0, %c0_i32_1 : i32, i32, i32, i32
  }
}

</mosaic_0001>

<llo_original>
// kernel: tpu_custom_call.1
$region0: #{tpu_custom_call.1}
  #allocation0 [shape = 'u32[]', space=smem, size = 0x4, offset = 0x4, fixed_abs, tag = 'smem constant byte address 0x4 - core index']
  #allocation1 [shape = 'u32[144,128]{1,0:T(1,128)}', space=vmem, size = 0x12000, scoped, tag = 'internal scratch']
  %s0 = inlined_call_operand.hbm [shape: f32[2,4,8,8], index: 0, kind: input, shape index: {}]
  %s1 = inlined_call_operand.vmem [shape: f32[8,4], index: 1, kind: input, shape index: {}]
  %s2 = inlined_call_operand.vmem [shape: f32[8,8], index: 2, kind: input, shape index: {}]
  %s3 = inlined_call_operand.vmem [shape: f32[8,8], index: 3, kind: input, shape index: {}]
  %s4 = inlined_call_operand.hbm [shape: f32[8,8], index: 4, kind: input, shape index: {}]
  %s5 = inlined_call_operand.hbm [shape: f32[8,8], index: 5, kind: input, shape index: {}]
  %s6 = inlined_call_operand.hbm [shape: f32[8,15], index: 6, kind: input, shape index: {}]
  %s7 = inlined_call_operand.hbm [shape: f32[2,8,8,8], index: 7, kind: output, shape index: {}]
  %s8 = sld [smem:[#allocation0]]
  $region89: #{tpu_custom_call.1} parent=0
    _
  %s10 = ssub.s32 1, %s8
  %s11 = scalar_select 0, %s10, %s8
  $region1: #{tpu_custom_call.1} parent=0
    #allocation2 [shape = 'u8[32768]{0}', space=vmem, size = 0x8000, scoped, tag = 'input window, operand 0']
    #allocation3 [shape = 's32[2]{0}', space=sflag, size = 0x8, scoped, tag = 'scoped memory for tpu_custom_call.1']
    #allocation4 [shape = 's32[2]{0}', space=sflag, size = 0x8, scoped, tag = 'scoped memory for tpu_custom_call.1']
    #allocation5 [shape = 's32[2]{0}', space=sflag, size = 0x8, scoped, tag = 'scoped memory for tpu_custom_call.1']
    #allocation6 [shape = 's32[2]{0}', space=sflag, size = 0x8, scoped, tag = 'scoped memory for tpu_custom_call.1']
    #allocation7 [shape = 'u8[4096]{0}', space=smem, size = 0x1000, scoped, tag = 'input window, operand 1, single buffered']
    #allocation8 [shape = 'u8[4096]{0}', space=smem, size = 0x1000, scoped, tag = 'input window, operand 2, single buffered']
    #allocation9 [shape = 's32[1]{0}', space=sflag, size = 0x4, scoped, tag = 'scoped memory for tpu_custom_call.1']
    #allocation10 [shape = 'u8[4096]{0}', space=smem, size = 0x1000, scoped, tag = 'input window, operand 3, single buffered']
    #allocation11 [shape = 'u8[4096]{0}', space=smem, size = 0x1000, scoped, tag = 'input window, operand 4, single buffered']
    #allocation12 [shape = 'u8[4096]{0}', space=smem, size = 0x1000, scoped, tag = 'input window, operand 5, single buffered']
    #allocation13 [shape = 's32[1]{0}', space=sflag, size = 0x4, scoped, tag = 'scoped memory for tpu_custom_call.1']
    #allocation14 [shape = 'u8[4096]{0}', space=smem, size = 0x1000, scoped, tag = 'input window, operand 6, single buffered']
    #allocation15 [shape = 'u8[65536]{0}', space=vmem, size = 0x10000, scoped, tag = 'output window, operand 0']
    %12 = vsyncpa [#allocation3], 0
    %s13 = scalar_lea.sflag [#allocation3], 1
    %14 = vsyncpa %s13, 0
    %15 = vsyncpa [#allocation6], 0
    %16 = vsyncpa [#allocation9], 0
    %17 = vsyncpa [#allocation5], 0
    %18 = vsyncpa [#allocation13], 0
    %19 = vsyncpa [#allocation4], 0
    %s20 = scalar_lea.sflag [#allocation4], 1
    %21 = vsyncpa %s20, 0
    loop: start=0, step=1, limit=4
    $region2: #{tpu_custom_call.1} parent=1 // loop_pre_header
      _
    $region3: #{tpu_custom_call.1} parent=1 // loop_header
      %s23 = sphi 0, %s27
      %p24 = scmp.ge.s32.totalorder %s23, 4
      %s33 = sphi 0, %s35
      %s36 = sphi 0, %s33
      %s37 = sphi 0, %s36
      %s53 = sphi 0, %s37
      %s57 = sphi 0, %s57
      %s59 = sphi 0, %s57
      %s60 = sphi 0, %s59
      %s74 = sphi 0, %s60
      %s78 = sphi 0, %s78
      %s80 = sphi 0, %s78
      %s81 = sphi 0, %s80
      %s95 = sphi 0, %s81
      %s99 = sphi 0, %s99
      %s101 = sphi 0, %s99
      %s102 = sphi 0, %s101
      %s116 = sphi 0, %s102
      %s120 = sphi 0, %s120
      %s122 = sphi 0, %s120
      %s123 = sphi 0, %s122
      %s137 = sphi 0, %s123
      %s141 = sphi 0, %s141
      %s143 = sphi 0, %s141
      %s144 = sphi 0, %s143
      %s158 = sphi 0, %s144
      %s162 = sphi 0, %s162
      %s164 = sphi 0, %s162
      %s165 = sphi 0, %s164
      %s179 = sphi 0, %s165
      %s185 = sphi 0, %s187
      %s188 = sphi 0, %s185
      %s189 = sphi 0, %s188
      %s205 = sphi 0, %s189
    $region4: #{tpu_custom_call.1} parent=1 // loop_header_branch
      %26 = sbr.rel (%p24) target = $region8
    $region5: #{tpu_custom_call.1} parent=1 // loop_body
      %s28 = ssub.s32 %s23, 1
      %s29 = ssub.s32 %s23, 2
      %s30 = sadd.s32 %s23, 1
      %s31 = ssub.s32 %s23, %s30
      %p32 = scmp.eq.s32.totalorder %s31, 0
      %s34 = sadd.s32 %s33, 1
      %s35 = scalar_select %p32, %s33, %s34
      %p38 = pneg %p32
      %p39 = scmp.eq.s32.totalorder %s23, 1
      %p40 = por %p38, %p39
      %p41 = scmp.ne.s32.totalorder %s33, %s36
      %p42 = scmp.eq.s32.totalorder %s23, 0
      %p43 = por %p41, %p42
      %p44 = scmp.ne.s32.totalorder %s33, %s36
      %p45 = scmp.eq.s32.totalorder %s28, 1
      %p46 = por %p44, %p45
      %p47 = scmp.ne.s32.totalorder %s36, %s37
      %p48 = scmp.eq.s32.totalorder %s28, 0
      %p49 = por %p47, %p48
      %p50 = scmp.ne.s32.totalorder %s36, %s37
      %p51 = scmp.eq.s32.totalorder %s29, 1
      %p52 = por %p50, %p51
      %p54 = scmp.ne.s32.totalorder %s37, %s53
      %p55 = scmp.eq.s32.totalorder %s29, 0
      %p56 = por %p54, %p55
      %s58 = sadd.s32 %s57, 1
      %p61 = scmp.eq.s32.totalorder %s23, 1
      %p62 = scmp.ne.s32.totalorder %s57, %s59
      %p63 = scmp.eq.s32.totalorder %s23, 0
      %p64 = por %p62, %p63
      %p65 = scmp.ne.s32.totalorder %s57, %s59
      %p66 = scmp.eq.s32.totalorder %s28, 1
      %p67 = por %p65, %p66
      %p68 = scmp.ne.s32.totalorder %s59, %s60
      %p69 = scmp.eq.s32.totalorder %s28, 0
      %p70 = por %p68, %p69
      %p71 = scmp.ne.s32.totalorder %s59, %s60
      %p72 = scmp.eq.s32.totalorder %s29, 1
      %p73 = por %p71, %p72
      %p75 = scmp.ne.s32.totalorder %s60, %s74
      %p76 = scmp.eq.s32.totalorder %s29, 0
      %p77 = por %p75, %p76
      %s79 = sadd.s32 %s78, 1
      %p82 = scmp.eq.s32.totalorder %s23, 1
      %p83 = scmp.ne.s32.totalorder %s78, %s80
      %p84 = scmp.eq.s32.totalorder %s23, 0
      %p85 = por %p83, %p84
      %p86 = scmp.ne.s32.totalorder %s78, %s80
      %p87 = scmp.eq.s32.totalorder %s28, 1
      %p88 = por %p86, %p87
      %p89 = scmp.ne.s32.totalorder %s80, %s81
      %p90 = scmp.eq.s32.totalorder %s28, 0
      %p91 = por %p89, %p90
      %p92 = scmp.ne.s32.totalorder %s80, %s81
      %p93 = scmp.eq.s32.totalorder %s29, 1
      %p94 = por %p92, %p93
      %p96 = scmp.ne.s32.totalorder %s81, %s95
      %p97 = scmp.eq.s32.totalorder %s29, 0
      %p98 = por %p96, %p97
      %s100 = sadd.s32 %s99, 1
      %p103 = scmp.eq.s32.totalorder %s23, 1
      %p104 = scmp.ne.s32.totalorder %s99, %s101
      %p105 = scmp.eq.s32.totalorder %s23, 0
      %p106 = por %p104, %p105
      %p107 = scmp.ne.s32.totalorder %s99, %s101
      %p108 = scmp.eq.s32.totalorder %s28, 1
      %p109 = por %p107, %p108
      %p110 = scmp.ne.s32.totalorder %s101, %s102
      %p111 = scmp.eq.s32.totalorder %s28, 0
      %p112 = por %p110, %p111
      %p113 = scmp.ne.s32.totalorder %s101, %s102
      %p114 = scmp.eq.s32.totalorder %s29, 1
      %p115 = por %p113, %p114
      %p117 = scmp.ne.s32.totalorder %s102, %s116
      %p118 = scmp.eq.s32.totalorder %s29, 0
      %p119 = por %p117, %p118
      %s121 = sadd.s32 %s120, 1
      %p124 = scmp.eq.s32.totalorder %s23, 1
      %p125 = scmp.ne.s32.totalorder %s120, %s122
      %p126 = scmp.eq.s32.totalorder %s23, 0
      %p127 = por %p125, %p126
      %p128 = scmp.ne.s32.totalorder %s120, %s122
      %p129 = scmp.eq.s32.totalorder %s28, 1
      %p130 = por %p128, %p129
      %p131 = scmp.ne.s32.totalorder %s122, %s123
      %p132 = scmp.eq.s32.totalorder %s28, 0
      %p133 = por %p131, %p132
      %p134 = scmp.ne.s32.totalorder %s122, %s123
      %p135 = scmp.eq.s32.totalorder %s29, 1
      %p136 = por %p134, %p135
      %p138 = scmp.ne.s32.totalorder %s123, %s137
      %p139 = scmp.eq.s32.totalorder %s29, 0
      %p140 = por %p138, %p139
      %s142 = sadd.s32 %s141, 1
      %p145 = scmp.eq.s32.totalorder %s23, 1
      %p146 = scmp.ne.s32.totalorder %s141, %s143
      %p147 = scmp.eq.s32.totalorder %s23, 0
      %p148 = por %p146, %p147
      %p149 = scmp.ne.s32.totalorder %s141, %s143
      %p150 = scmp.eq.s32.totalorder %s28, 1
      %p151 = por %p149, %p150
      %p152 = scmp.ne.s32.totalorder %s143, %s144
      %p153 = scmp.eq.s32.totalorder %s28, 0
      %p154 = por %p152, %p153
      %p155 = scmp.ne.s32.totalorder %s143, %s144
      %p156 = scmp.eq.s32.totalorder %s29, 1
      %p157 = por %p155, %p156
      %p159 = scmp.ne.s32.totalorder %s144, %s158
      %p160 = scmp.eq.s32.totalorder %s29, 0
      %p161 = por %p159, %p160
      %s163 = sadd.s32 %s162, 1
      %p166 = scmp.eq.s32.totalorder %s23, 1
      %p167 = scmp.ne.s32.totalorder %s162, %s164
      %p168 = scmp.eq.s32.totalorder %s23, 0
      %p169 = por %p167, %p168
      %p170 = scmp.ne.s32.totalorder %s162, %s164
      %p171 = scmp.eq.s32.totalorder %s28, 1
      %p172 = por %p170, %p171
      %p173 = scmp.ne.s32.totalorder %s164, %s165
      %p174 = scmp.eq.s32.totalorder %s28, 0
      %p175 = por %p173, %p174
      %p176 = scmp.ne.s32.totalorder %s164, %s165
      %p177 = scmp.eq.s32.totalorder %s29, 1
      %p178 = por %p176, %p177
      %p180 = scmp.ne.s32.totalorder %s165, %s179
      %p181 = scmp.eq.s32.totalorder %s29, 0
      %p182 = por %p180, %p181
      %s183 = ssub.s32 %s23, %s30
      %p184 = scmp.eq.s32.totalorder %s183, 0
      %s186 = sadd.s32 %s185, 1
      %s187 = scalar_select %p184, %s185, %s186
      %p190 = pneg %p184
      %p191 = scmp.eq.s32.totalorder %s23, 1
      %p192 = por %p190, %p191
      %p193 = scmp.ne.s32.totalorder %s185, %s188
      %p194 = scmp.eq.s32.totalorder %s23, 0
      %p195 = por %p193, %p194
      %p196 = scmp.ne.s32.totalorder %s185, %s188
      %p197 = scmp.eq.s32.totalorder %s28, 1
      %p198 = por %p196, %p197
      %p199 = scmp.ne.s32.totalorder %s188, %s189
      %p200 = scmp.eq.s32.totalorder %s28, 0
      %p201 = por %p199, %p200
      %p202 = scmp.ne.s32.totalorder %s188, %s189
      %p203 = scmp.eq.s32.totalorder %s29, 1
      %p204 = por %p202, %p203
      %p206 = scmp.ne.s32.totalorder %s189, %s205
      %p207 = scmp.eq.s32.totalorder %s29, 0
      %p208 = por %p206, %p207
      %p209 = scmp.le.s32.totalorder 1, %s23
      %p210 = scmp.lt.s32.totalorder %s23, 3
      %p211 = pnand %p209, %p210
      %p212 = pneg %p211
      // Predicated region
      $region9: #{tpu_custom_call.1} parent=5 // pred_check
        _
      $region10: #{tpu_custom_call.1} parent=5 // pred_check_branch
        %214 = sbr.rel (%p211) target = $region12
      $region11: #{tpu_custom_call.1} parent=5 // pred_region
        %s215 = ssub.s32 %s23, 1
        // Predicated region
        $region13: #{tpu_custom_call.1} parent=11 // pred_check
          %p216 = pneg %p70
        $region14: #{tpu_custom_call.1} parent=11 // pred_check_branch
          %218 = sbr.rel (%p216) target = $region16
        $region15: #{tpu_custom_call.1} parent=11 // pred_region
          %s220 = ssub.s32 128, 128
          %221 = vsyncadd [#allocation6], %s220
          %s223 = sshll.u32 %s1, 4
          %s224 = int_to_ptr.vmem [resolvable:$true] %s223
          %226 = dma.vmem_to_smem %s224, 128, [#allocation7], [#allocation6]
        $region16: #{tpu_custom_call.1} parent=11 // pred_fallthru
          _
        // Predicated region
        $region17: #{tpu_custom_call.1} parent=11 // pred_check
          %p227 = pneg %p91
        $region18: #{tpu_custom_call.1} parent=11 // pred_check_branch
          %229 = sbr.rel (%p227) target = $region20
        $region19: #{tpu_custom_call.1} parent=11 // pred_region
          %s231 = ssub.s32 128, 128
          %232 = vsyncadd [#allocation9], %s231
          %s234 = sshll.u32 %s2, 4
          %s235 = int_to_ptr.vmem [resolvable:$true] %s234
          %237 = dma.vmem_to_smem %s235, 128, [#allocation8], [#allocation9]
        $region20: #{tpu_custom_call.1} parent=11 // pred_fallthru
          _
        // Predicated region
        $region21: #{tpu_custom_call.1} parent=11 // pred_check
          %p238 = pneg %p112
        $region22: #{tpu_custom_call.1} parent=11 // pred_check_branch
          %240 = sbr.rel (%p238) target = $region24
        $region23: #{tpu_custom_call.1} parent=11 // pred_region
          %s242 = ssub.s32 128, 128
          %243 = vsyncadd [#allocation9], %s242
          %s245 = sshll.u32 %s3, 4
          %s246 = int_to_ptr.vmem [resolvable:$true] %s245
          %248 = dma.vmem_to_smem %s246, 128, [#allocation10], [#allocation9]
        $region24: #{tpu_custom_call.1} parent=11 // pred_fallthru
          _
        // Predicated region
        $region25: #{tpu_custom_call.1} parent=11 // pred_check
          %p249 = pneg %p133
        $region26: #{tpu_custom_call.1} parent=11 // pred_check_branch
          %251 = sbr.rel (%p249) target = $region28
        $region27: #{tpu_custom_call.1} parent=11 // pred_region
          %s253 = ssub.s32 128, 128
          %254 = vsyncadd [#allocation5], %s253
          %257 = dma.hbm_to_smem %s4, 128, [#allocation11], [#allocation5]
        $region28: #{tpu_custom_call.1} parent=11 // pred_fallthru
          _
        // Predicated region
        $region29: #{tpu_custom_call.1} parent=11 // pred_check
          %p258 = pneg %p154
        $region30: #{tpu_custom_call.1} parent=11 // pred_check_branch
          %260 = sbr.rel (%p258) target = $region32
        $region31: #{tpu_custom_call.1} parent=11 // pred_region
          %s262 = ssub.s32 128, 128
          %263 = vsyncadd [#allocation13], %s262
          %266 = dma.hbm_to_smem %s5, 128, [#allocation12], [#allocation13]
        $region32: #{tpu_custom_call.1} parent=11 // pred_fallthru
          _
        // Predicated region
        $region33: #{tpu_custom_call.1} parent=11 // pred_check
          %p267 = pneg %p175
        $region34: #{tpu_custom_call.1} parent=11 // pred_check_branch
          %269 = sbr.rel (%p267) target = $region36
        $region35: #{tpu_custom_call.1} parent=11 // pred_region
          %s271 = ssub.s32 128, 128
          %272 = vsyncadd [#allocation13], %s271
          %275 = dma.hbm_to_smem %s6, 128, [#allocation14], [#allocation13]
        $region36: #{tpu_custom_call.1} parent=11 // pred_fallthru
          _
      $region12: #{tpu_custom_call.1} parent=5 // pred_fallthru
        _
      %p276 = scmp.lt.s32.totalorder %s23, 2
      // Predicated region
      $region37: #{tpu_custom_call.1} parent=5 // pred_check
        %p277 = pneg %p276
      $region38: #{tpu_custom_call.1} parent=5 // pred_check_branch
        %279 = sbr.rel (%p277) target = $region40
      $region39: #{tpu_custom_call.1} parent=5 // pred_region
        // Predicated region
        $region41: #{tpu_custom_call.1} parent=39 // pred_check
          %p280 = pneg %p43
        $region42: #{tpu_custom_call.1} parent=39 // pred_check_branch
          %282 = sbr.rel (%p280) target = $region44
        $region43: #{tpu_custom_call.1} parent=39 // pred_region
          %s283 = sand.u32 %s33, 1
          %s284 = scalar_lea.sflag [#allocation3], %s283
          %s285 = sand.u32 %s33, 1
          %s286 = smul.addr %s285, 32
          %s287 = scalar_lea.vmem [#allocation2], %s286
          %s289 = ssub.s32 512, 512
          %290 = vsyncadd %s284, %s289
          %s291 = smul.addr %s23, 4
          %s292 = smul.addr %s291, 128
          %s293 = scalar_lea.hbm %s0, %s292
          %s294 = sshll.u32 %s287, 4
          %s295 = int_to_ptr.vmem [resolvable:$true] %s294
          %300 = dma.hbm_to_vmem [thread:$0]  %s293, 512, %s295, %s284, 128, 128, 8
        $region44: #{tpu_custom_call.1} parent=39 // pred_fallthru
          _
      $region40: #{tpu_custom_call.1} parent=5 // pred_fallthru
        _
      %p301 = scmp.le.s32.totalorder 1, %s23
      %p302 = scmp.lt.s32.totalorder %s23, 3
      %p303 = pnand %p301, %p302
      %p304 = pneg %p303
      // Predicated region
      $region45: #{tpu_custom_call.1} parent=5 // pred_check
        _
      $region46: #{tpu_custom_call.1} parent=5 // pred_check_branch
        %306 = sbr.rel (%p303) target = $region48
      $region47: #{tpu_custom_call.1} parent=5 // pred_region
        %s307 = ssub.s32 %s23, 1
        %s308 = sand.u32 %s36, 1
        %s309 = scalar_lea.sflag [#allocation3], %s308
        %s310 = sand.u32 %s36, 1
        %s311 = smul.addr %s310, 32
        %s312 = scalar_lea.vmem [#allocation2], %s311
        // Predicated region
        $region49: #{tpu_custom_call.1} parent=47 // pred_check
          %p313 = pneg %p49
        $region50: #{tpu_custom_call.1} parent=47 // pred_check_branch
          %315 = sbr.rel (%p313) target = $region52
        $region51: #{tpu_custom_call.1} parent=47 // pred_region
          %316 = dma.done %s309, 512
        $region52: #{tpu_custom_call.1} parent=47 // pred_fallthru
          _
        // Predicated region
        $region53: #{tpu_custom_call.1} parent=47 // pred_check
          %p317 = pneg %p70
        $region54: #{tpu_custom_call.1} parent=47 // pred_check_branch
          %319 = sbr.rel (%p317) target = $region56
        $region55: #{tpu_custom_call.1} parent=47 // pred_region
          %320 = dma.done [#allocation6], 128
        $region56: #{tpu_custom_call.1} parent=47 // pred_fallthru
          _
        // Predicated region
        $region57: #{tpu_custom_call.1} parent=47 // pred_check
          %p321 = pneg %p91
        $region58: #{tpu_custom_call.1} parent=47 // pred_check_branch
          %323 = sbr.rel (%p321) target = $region60
        $region59: #{tpu_custom_call.1} parent=47 // pred_region
          %324 = dma.done [#allocation9], 128
        $region60: #{tpu_custom_call.1} parent=47 // pred_fallthru
          _
        // Predicated region
        $region61: #{tpu_custom_call.1} parent=47 // pred_check
          %p325 = pneg %p112
        $region62: #{tpu_custom_call.1} parent=47 // pred_check_branch
          %327 = sbr.rel (%p325) target = $region64
        $region63: #{tpu_custom_call.1} parent=47 // pred_region
          %328 = dma.done [#allocation9], 128
        $region64: #{tpu_custom_call.1} parent=47 // pred_fallthru
          _
        // Predicated region
        $region65: #{tpu_custom_call.1} parent=47 // pred_check
          %p329 = pneg %p133
        $region66: #{tpu_custom_call.1} parent=47 // pred_check_branch
          %331 = sbr.rel (%p329) target = $region68
        $region67: #{tpu_custom_call.1} parent=47 // pred_region
          %332 = dma.done [#allocation5], 128
        $region68: #{tpu_custom_call.1} parent=47 // pred_fallthru
          _
        // Predicated region
        $region69: #{tpu_custom_call.1} parent=47 // pred_check
          %p333 = pneg %p154
        $region70: #{tpu_custom_call.1} parent=47 // pred_check_branch
          %335 = sbr.rel (%p333) target = $region72
        $region71: #{tpu_custom_call.1} parent=47 // pred_region
          %336 = dma.done [#allocation13], 128
        $region72: #{tpu_custom_call.1} parent=47 // pred_fallthru
          _
        // Predicated region
        $region73: #{tpu_custom_call.1} parent=47 // pred_check
          %p337 = pneg %p175
        $region74: #{tpu_custom_call.1} parent=47 // pred_check_branch
          %339 = sbr.rel (%p337) target = $region76
        $region75: #{tpu_custom_call.1} parent=47 // pred_region
          %340 = dma.done [#allocation13], 128
        $region76: #{tpu_custom_call.1} parent=47 // pred_fallthru
          _
        %341 = sfence
        %s342 = sand.u32 %s36, 1
        %s343 = scalar_lea.sflag [#allocation3], %s342
        %s344 = sand.u32 %s36, 1
        %s345 = smul.addr %s344, 32
        %s346 = scalar_lea.vmem [#allocation2], %s345
        %p347 = pneg %p49
        %p348 = pneg %p46
        %p349 = pneg %p70
        %p350 = pneg %p67
        %p351 = pneg %p91
        %p352 = pneg %p88
        %p353 = pneg %p112
        %p354 = pneg %p109
        %p355 = pneg %p133
        %p356 = pneg %p130
        %p357 = pneg %p154
        %p358 = pneg %p151
        %p359 = pneg %p175
        %p360 = pneg %p172
        %p361 = pneg %p201
        %p362 = pneg %p198
        %s363 = sand.u32 %s188, 1
        %s364 = scalar_lea.sflag [#allocation4], %s363
        %s365 = sand.u32 %s188, 1
        %s366 = smul.addr %s365, 64
        %s367 = scalar_lea.vmem [#allocation15], %s366
        %v368 = vld [vmem:[%s312] sm:$0xff]
        %v369 = vld [vmem:[%s312 + $0x8] sm:$0xff]
        %v370 = vld [vmem:[%s312 + $0x10] sm:$0xff]
        %v371 = vld [vmem:[%s312 + $0x18] sm:$0xff]
        %s372 = sld [smem:[#allocation7]]
        %v373 = vstv %s372
        %v374 = vmul.f32 %v373, %v368
        %s375 = sld [smem:[#allocation7 + $0x1]]
        %v376 = vstv %s375
        %v377 = vmul.f32 %v376, %v369
        %v378 = vadd.f32 %v374, %v377
        %s379 = sld [smem:[#allocation7 + $0x2]]
        %v380 = vstv %s379
        %v381 = vmul.f32 %v380, %v370
        %v382 = vadd.f32 %v378, %v381
        %s383 = sld [smem:[#allocation7 + $0x3]]
        %v384 = vstv %s383
        %v385 = vmul.f32 %v384, %v371
        %v386 = vadd.f32 %v382, %v385
        %s387 = sld [smem:[#allocation14]]
        %v388 = vstv %s387
        %v389 = vadd.f32 %v386, %v388
        %s390 = sld [smem:[#allocation14 + $0x1]]
        %s391 = sld [smem:[#allocation14 + $0x2]]
        %s392 = sld [smem:[#allocation14 + $0x3]]
        %s393 = ssub.f32 %s390, %s391
        %v394 = vstv %s393
        %v395 = vmul.f32 %v394, %v389
        %v396 = vstv %s392
        %v397 = vmul.f32 %v396, %v395
        %v398 = vxor.u32 %v397, 2147483648
        %v399 = vmul.f32 %v398, 1.442695
        %v400 = vpow.pop %v399
        %v401 = vadd.f32 %v400, 1.0
        %v402 = vrcp.pop %v401
        %v403 = vmul.f32 1.0, %v402
        %v404 = vmul.f32 %v395, %v403
        %v405 = vstv %s391
        %v406 = vmul.f32 %v405, %v389
        %v407 = vadd.f32 %v404, %v406
        %s408 = sld [smem:[#allocation7 + $0x80]]
        %v409 = vstv %s408
        %v410 = vmul.f32 %v409, %v368
        %s411 = sld [smem:[#allocation7 + $0x81]]
        %v412 = vstv %s411
        %v413 = vmul.f32 %v412, %v369
        %v414 = vadd.f32 %v410, %v413
        %s415 = sld [smem:[#allocation7 + $0x82]]
        %v416 = vstv %s415
        %v417 = vmul.f32 %v416, %v370
        %v418 = vadd.f32 %v414, %v417
        %s419 = sld [smem:[#allocation7 + $0x83]]
        %v420 = vstv %s419
        %v421 = vmul.f32 %v420, %v371
        %v422 = vadd.f32 %v418, %v421
        %s423 = sld [smem:[#allocation14 + $0x80]]
        %v424 = vstv %s423
        %v425 = vadd.f32 %v422, %v424
        %s426 = sld [smem:[#allocation14 + $0x81]]
        %s427 = sld [smem:[#allocation14 + $0x82]]
        %s428 = sld [smem:[#allocation14 + $0x83]]
        %s429 = ssub.f32 %s426, %s427
        %v430 = vstv %s429
        %v431 = vmul.f32 %v430, %v425
        %v432 = vstv %s428
        %v433 = vmul.f32 %v432, %v431
        %v434 = vxor.u32 %v433, 2147483648
        %v435 = vmul.f32 %v434, 1.442695
        %v436 = vpow.pop %v435
        %v437 = vadd.f32 %v436, 1.0
        %v438 = vrcp.pop %v437
        %v439 = vmul.f32 1.0, %v438
        %v440 = vmul.f32 %v431, %v439
        %v441 = vstv %s427
        %v442 = vmul.f32 %v441, %v425
        %v443 = vadd.f32 %v440, %v442
        %s444 = sld [smem:[#allocation7 + $0x100]]
        %v445 = vstv %s444
        %v446 = vmul.f32 %v445, %v368
        %s447 = sld [smem:[#allocation7 + $0x101]]
        %v448 = vstv %s447
        %v449 = vmul.f32 %v448, %v369
        %v450 = vadd.f32 %v446, %v449
        %s451 = sld [smem:[#allocation7 + $0x102]]
        %v452 = vstv %s451
        %v453 = vmul.f32 %v452, %v370
        %v454 = vadd.f32 %v450, %v453
        %s455 = sld [smem:[#allocation7 + $0x103]]
        %v456 = vstv %s455
        %v457 = vmul.f32 %v456, %v371
        %v458 = vadd.f32 %v454, %v457
        %s459 = sld [smem:[#allocation14 + $0x100]]
        %v460 = vstv %s459
        %v461 = vadd.f32 %v458, %v460
        %s462 = sld [smem:[#allocation14 + $0x101]]
        %s463 = sld [smem:[#allocation14 + $0x102]]
        %s464 = sld [smem:[#allocation14 + $0x103]]
        %s465 = ssub.f32 %s462, %s463
        %v466 = vstv %s465
        %v467 = vmul.f32 %v466, %v461
        %v468 = vstv %s464
        %v469 = vmul.f32 %v468, %v467
        %v470 = vxor.u32 %v469, 2147483648
        %v471 = vmul.f32 %v470, 1.442695
        %v472 = vpow.pop %v471
        %v473 = vadd.f32 %v472, 1.0
        %v474 = vrcp.pop %v473
        %v475 = vmul.f32 1.0, %v474
        %v476 = vmul.f32 %v467, %v475
        %v477 = vstv %s463
        %v478 = vmul.f32 %v477, %v461
        %v479 = vadd.f32 %v476, %v478
        %s480 = sld [smem:[#allocation7 + $0x180]]
        %v481 = vstv %s480
        %v482 = vmul.f32 %v481, %v368
        %s483 = sld [smem:[#allocation7 + $0x181]]
        %v484 = vstv %s483
        %v485 = vmul.f32 %v484, %v369
        %v486 = vadd.f32 %v482, %v485
        %s487 = sld [smem:[#allocation7 + $0x182]]
        %v488 = vstv %s487
        %v489 = vmul.f32 %v488, %v370
        %v490 = vadd.f32 %v486, %v489
        %s491 = sld [smem:[#allocation7 + $0x183]]
        %v492 = vstv %s491
        %v493 = vmul.f32 %v492, %v371
        %v494 = vadd.f32 %v490, %v493
        %s495 = sld [smem:[#allocation14 + $0x180]]
        %v496 = vstv %s495
        %v497 = vadd.f32 %v494, %v496
        %s498 = sld [smem:[#allocation14 + $0x181]]
        %s499 = sld [smem:[#allocation14 + $0x182]]
        %s500 = sld [smem:[#allocation14 + $0x183]]
        %s501 = ssub.f32 %s498, %s499
        %v502 = vstv %s501
        %v503 = vmul.f32 %v502, %v497
        %v504 = vstv %s500
        %v505 = vmul.f32 %v504, %v503
        %v506 = vxor.u32 %v505, 2147483648
        %v507 = vmul.f32 %v506, 1.442695
        %v508 = vpow.pop %v507
        %v509 = vadd.f32 %v508, 1.0
        %v510 = vrcp.pop %v509
        %v511 = vmul.f32 1.0, %v510
        %v512 = vmul.f32 %v503, %v511
        %v513 = vstv %s499
        %v514 = vmul.f32 %v513, %v497
        %v515 = vadd.f32 %v512, %v514
        %s516 = sld [smem:[#allocation7 + $0x200]]
        %v517 = vstv %s516
        %v518 = vmul.f32 %v517, %v368
        %s519 = sld [smem:[#allocation7 + $0x201]]
        %v520 = vstv %s519
        %v521 = vmul.f32 %v520, %v369
        %v522 = vadd.f32 %v518, %v521
        %s523 = sld [smem:[#allocation7 + $0x202]]
        %v524 = vstv %s523
        %v525 = vmul.f32 %v524, %v370
        %v526 = vadd.f32 %v522, %v525
        %s527 = sld [smem:[#allocation7 + $0x203]]
        %v528 = vstv %s527
        %v529 = vmul.f32 %v528, %v371
        %v530 = vadd.f32 %v526, %v529
        %s531 = sld [smem:[#allocation14 + $0x200]]
        %v532 = vstv %s531
        %v533 = vadd.f32 %v530, %v532
        %s534 = sld [smem:[#allocation14 + $0x201]]
        %s535 = sld [smem:[#allocation14 + $0x202]]
        %s536 = sld [smem:[#allocation14 + $0x203]]
        %s537 = ssub.f32 %s534, %s535
        %v538 = vstv %s537
        %v539 = vmul.f32 %v538, %v533
        %v540 = vstv %s536
        %v541 = vmul.f32 %v540, %v539
        %v542 = vxor.u32 %v541, 2147483648
        %v543 = vmul.f32 %v542, 1.442695
        %v544 = vpow.pop %v543
        %v545 = vadd.f32 %v544, 1.0
        %v546 = vrcp.pop %v545
        %v547 = vmul.f32 1.0, %v546
        %v548 = vmul.f32 %v539, %v547
        %v549 = vstv %s535
        %v550 = vmul.f32 %v549, %v533
        %v551 = vadd.f32 %v548, %v550
        %s552 = sld [smem:[#allocation7 + $0x280]]
        %v553 = vstv %s552
        %v554 = vmul.f32 %v553, %v368
        %s555 = sld [smem:[#allocation7 + $0x281]]
        %v556 = vstv %s555
        %v557 = vmul.f32 %v556, %v369
        %v558 = vadd.f32 %v554, %v557
        %s559 = sld [smem:[#allocation7 + $0x282]]
        %v560 = vstv %s559
        %v561 = vmul.f32 %v560, %v370
        %v562 = vadd.f32 %v558, %v561
        %s563 = sld [smem:[#allocation7 + $0x283]]
        %v564 = vstv %s563
        %v565 = vmul.f32 %v564, %v371
        %v566 = vadd.f32 %v562, %v565
        %s567 = sld [smem:[#allocation14 + $0x280]]
        %v568 = vstv %s567
        %v569 = vadd.f32 %v566, %v568
        %s570 = sld [smem:[#allocation14 + $0x281]]
        %s571 = sld [smem:[#allocation14 + $0x282]]
        %s572 = sld [smem:[#allocation14 + $0x283]]
        %s573 = ssub.f32 %s570, %s571
        %v574 = vstv %s573
        %v575 = vmul.f32 %v574, %v569
        %v576 = vstv %s572
        %v577 = vmul.f32 %v576, %v575
        %v578 = vxor.u32 %v577, 2147483648
        %v579 = vmul.f32 %v578, 1.442695
        %v580 = vpow.pop %v579
        %v581 = vadd.f32 %v580, 1.0
        %v582 = vrcp.pop %v581
        %v583 = vmul.f32 1.0, %v582
        %v584 = vmul.f32 %v575, %v583
        %v585 = vstv %s571
        %v586 = vmul.f32 %v585, %v569
        %v587 = vadd.f32 %v584, %v586
        %s588 = sld [smem:[#allocation7 + $0x300]]
        %v589 = vstv %s588
        %v590 = vmul.f32 %v589, %v368
        %s591 = sld [smem:[#allocation7 + $0x301]]
        %v592 = vstv %s591
        %v593 = vmul.f32 %v592, %v369
        %v594 = vadd.f32 %v590, %v593
        %s595 = sld [smem:[#allocation7 + $0x302]]
        %v596 = vstv %s595
        %v597 = vmul.f32 %v596, %v370
        %v598 = vadd.f32 %v594, %v597
        %s599 = sld [smem:[#allocation7 + $0x303]]
        %v600 = vstv %s599
        %v601 = vmul.f32 %v600, %v371
        %v602 = vadd.f32 %v598, %v601
        %s603 = sld [smem:[#allocation14 + $0x300]]
        %v604 = vstv %s603
        %v605 = vadd.f32 %v602, %v604
        %s606 = sld [smem:[#allocation14 + $0x301]]
        %s607 = sld [smem:[#allocation14 + $0x302]]
        %s608 = sld [smem:[#allocation14 + $0x303]]
        %s609 = ssub.f32 %s606, %s607
        %v610 = vstv %s609
        %v611 = vmul.f32 %v610, %v605
        %v612 = vstv %s608
        %v613 = vmul.f32 %v612, %v611
        %v614 = vxor.u32 %v613, 2147483648
        %v615 = vmul.f32 %v614, 1.442695
        %v616 = vpow.pop %v615
        %v617 = vadd.f32 %v616, 1.0
        %v618 = vrcp.pop %v617
        %v619 = vmul.f32 1.0, %v618
        %v620 = vmul.f32 %v611, %v619
        %v621 = vstv %s607
        %v622 = vmul.f32 %v621, %v605
        %v623 = vadd.f32 %v620, %v622
        %s624 = sld [smem:[#allocation7 + $0x380]]
        %v625 = vstv %s624
        %v626 = vmul.f32 %v625, %v368
        %s627 = sld [smem:[#allocation7 + $0x381]]
        %v628 = vstv %s627
        %v629 = vmul.f32 %v628, %v369
        %v630 = vadd.f32 %v626, %v629
        %s631 = sld [smem:[#allocation7 + $0x382]]
        %v632 = vstv %s631
        %v633 = vmul.f32 %v632, %v370
        %v634 = vadd.f32 %v630, %v633
        %s635 = sld [smem:[#allocation7 + $0x383]]
        %v636 = vstv %s635
        %v637 = vmul.f32 %v636, %v371
        %v638 = vadd.f32 %v634, %v637
        %s639 = sld [smem:[#allocation14 + $0x380]]
        %v640 = vstv %s639
        %v641 = vadd.f32 %v638, %v640
        %s642 = sld [smem:[#allocation14 + $0x381]]
        %s643 = sld [smem:[#allocation14 + $0x382]]
        %s644 = sld [smem:[#allocation14 + $0x383]]
        %s645 = ssub.f32 %s642, %s643
        %v646 = vstv %s645
        %v647 = vmul.f32 %v646, %v641
        %v648 = vstv %s644
        %v649 = vmul.f32 %v648, %v647
        %v650 = vxor.u32 %v649, 2147483648
        %v651 = vmul.f32 %v650, 1.442695
        %v652 = vpow.pop %v651
        %v653 = vadd.f32 %v652, 1.0
        %v654 = vrcp.pop %v653
        %v655 = vmul.f32 1.0, %v654
        %v656 = vmul.f32 %v647, %v655
        %v657 = vstv %s643
        %v658 = vmul.f32 %v657, %v641
        %v659 = vadd.f32 %v656, %v658
        %s660 = sld [smem:[#allocation8]]
        %v661 = vstv %s660
        %v662 = vmul.f32 %v661, %v407
        %s663 = sld [smem:[#allocation8 + $0x1]]
        %v664 = vstv %s663
        %v665 = vmul.f32 %v664, %v443
        %v666 = vadd.f32 %v662, %v665
        %s667 = sld [smem:[#allocation8 + $0x2]]
        %v668 = vstv %s667
        %v669 = vmul.f32 %v668, %v479
        %v670 = vadd.f32 %v666, %v669
        %s671 = sld [smem:[#allocation8 + $0x3]]
        %v672 = vstv %s671
        %v673 = vmul.f32 %v672, %v515
        %v674 = vadd.f32 %v670, %v673
        %s675 = sld [smem:[#allocation8 + $0x4]]
        %v676 = vstv %s675
        %v677 = vmul.f32 %v676, %v551
        %v678 = vadd.f32 %v674, %v677
        %s679 = sld [smem:[#allocation8 + $0x5]]
        %v680 = vstv %s679
        %v681 = vmul.f32 %v680, %v587
        %v682 = vadd.f32 %v678, %v681
        %s683 = sld [smem:[#allocation8 + $0x6]]
        %v684 = vstv %s683
        %v685 = vmul.f32 %v684, %v623
        %v686 = vadd.f32 %v682, %v685
        %s687 = sld [smem:[#allocation8 + $0x7]]
        %v688 = vstv %s687
        %v689 = vmul.f32 %v688, %v659
        %v690 = vadd.f32 %v686, %v689
        %s691 = sld [smem:[#allocation14 + $0x4]]
        %v692 = vstv %s691
        %v693 = vadd.f32 %v690, %v692
        %s694 = sld [smem:[#allocation8 + $0x80]]
        %v695 = vstv %s694
        %v696 = vmul.f32 %v695, %v407
        %s697 = sld [smem:[#allocation8 + $0x81]]
        %v698 = vstv %s697
        %v699 = vmul.f32 %v698, %v443
        %v700 = vadd.f32 %v696, %v699
        %s701 = sld [smem:[#allocation8 + $0x82]]
        %v702 = vstv %s701
        %v703 = vmul.f32 %v702, %v479
        %v704 = vadd.f32 %v700, %v703
        %s705 = sld [smem:[#allocation8 + $0x83]]
        %v706 = vstv %s705
        %v707 = vmul.f32 %v706, %v515
        %v708 = vadd.f32 %v704, %v707
        %s709 = sld [smem:[#allocation8 + $0x84]]
        %v710 = vstv %s709
        %v711 = vmul.f32 %v710, %v551
        %v712 = vadd.f32 %v708, %v711
        %s713 = sld [smem:[#allocation8 + $0x85]]
        %v714 = vstv %s713
        %v715 = vmul.f32 %v714, %v587
        %v716 = vadd.f32 %v712, %v715
        %s717 = sld [smem:[#allocation8 + $0x86]]
        %v718 = vstv %s717
        %v719 = vmul.f32 %v718, %v623
        %v720 = vadd.f32 %v716, %v719
        %s721 = sld [smem:[#allocation8 + $0x87]]
        %v722 = vstv %s721
        %v723 = vmul.f32 %v722, %v659
        %v724 = vadd.f32 %v720, %v723
        %s725 = sld [smem:[#allocation14 + $0x84]]
        %v726 = vstv %s725
        %v727 = vadd.f32 %v724, %v726
        %s728 = sld [smem:[#allocation8 + $0x100]]
        %v729 = vstv %s728
        %v730 = vmul.f32 %v729, %v407
        %s731 = sld [smem:[#allocation8 + $0x101]]
        %v732 = vstv %s731
        %v733 = vmul.f32 %v732, %v443
        %v734 = vadd.f32 %v730, %v733
        %s735 = sld [smem:[#allocation8 + $0x102]]
        %v736 = vstv %s735
        %v737 = vmul.f32 %v736, %v479
        %v738 = vadd.f32 %v734, %v737
        %s739 = sld [smem:[#allocation8 + $0x103]]
        %v740 = vstv %s739
        %v741 = vmul.f32 %v740, %v515
        %v742 = vadd.f32 %v738, %v741
        %s743 = sld [smem:[#allocation8 + $0x104]]
        %v744 = vstv %s743
        %v745 = vmul.f32 %v744, %v551
        %v746 = vadd.f32 %v742, %v745
        %s747 = sld [smem:[#allocation8 + $0x105]]
        %v748 = vstv %s747
        %v749 = vmul.f32 %v748, %v587
        %v750 = vadd.f32 %v746, %v749
        %s751 = sld [smem:[#allocation8 + $0x106]]
        %v752 = vstv %s751
        %v753 = vmul.f32 %v752, %v623
        %v754 = vadd.f32 %v750, %v753
        %s755 = sld [smem:[#allocation8 + $0x107]]
        %v756 = vstv %s755
        %v757 = vmul.f32 %v756, %v659
        %v758 = vadd.f32 %v754, %v757
        %s759 = sld [smem:[#allocation14 + $0x104]]
        %v760 = vstv %s759
        %v761 = vadd.f32 %v758, %v760
        %s762 = sld [smem:[#allocation8 + $0x180]]
        %v763 = vstv %s762
        %v764 = vmul.f32 %v763, %v407
        %s765 = sld [smem:[#allocation8 + $0x181]]
        %v766 = vstv %s765
        %v767 = vmul.f32 %v766, %v443
        %v768 = vadd.f32 %v764, %v767
        %s769 = sld [smem:[#allocation8 + $0x182]]
        %v770 = vstv %s769
        %v771 = vmul.f32 %v770, %v479
        %v772 = vadd.f32 %v768, %v771
        %s773 = sld [smem:[#allocation8 + $0x183]]
        %v774 = vstv %s773
        %v775 = vmul.f32 %v774, %v515
        %v776 = vadd.f32 %v772, %v775
        %s777 = sld [smem:[#allocation8 + $0x184]]
        %v778 = vstv %s777
        %v779 = vmul.f32 %v778, %v551
        %v780 = vadd.f32 %v776, %v779
        %s781 = sld [smem:[#allocation8 + $0x185]]
        %v782 = vstv %s781
        %v783 = vmul.f32 %v782, %v587
        %v784 = vadd.f32 %v780, %v783
        %s785 = sld [smem:[#allocation8 + $0x186]]
        %v786 = vstv %s785
        %v787 = vmul.f32 %v786, %v623
        %v788 = vadd.f32 %v784, %v787
        %s789 = sld [smem:[#allocation8 + $0x187]]
        %v790 = vstv %s789
        %v791 = vmul.f32 %v790, %v659
        %v792 = vadd.f32 %v788, %v791
        %s793 = sld [smem:[#allocation14 + $0x184]]
        %v794 = vstv %s793
        %v795 = vadd.f32 %v792, %v794
        %s796 = sld [smem:[#allocation8 + $0x200]]
        %v797 = vstv %s796
        %v798 = vmul.f32 %v797, %v407
        %s799 = sld [smem:[#allocation8 + $0x201]]
        %v800 = vstv %s799
        %v801 = vmul.f32 %v800, %v443
        %v802 = vadd.f32 %v798, %v801
        %s803 = sld [smem:[#allocation8 + $0x202]]
        %v804 = vstv %s803
        %v805 = vmul.f32 %v804, %v479
        %v806 = vadd.f32 %v802, %v805
        %s807 = sld [smem:[#allocation8 + $0x203]]
        %v808 = vstv %s807
        %v809 = vmul.f32 %v808, %v515
        %v810 = vadd.f32 %v806, %v809
        %s811 = sld [smem:[#allocation8 + $0x204]]
        %v812 = vstv %s811
        %v813 = vmul.f32 %v812, %v551
        %v814 = vadd.f32 %v810, %v813
        %s815 = sld [smem:[#allocation8 + $0x205]]
        %v816 = vstv %s815
        %v817 = vmul.f32 %v816, %v587
        %v818 = vadd.f32 %v814, %v817
        %s819 = sld [smem:[#allocation8 + $0x206]]
        %v820 = vstv %s819
        %v821 = vmul.f32 %v820, %v623
        %v822 = vadd.f32 %v818, %v821
        %s823 = sld [smem:[#allocation8 + $0x207]]
        %v824 = vstv %s823
        %v825 = vmul.f32 %v824, %v659
        %v826 = vadd.f32 %v822, %v825
        %s827 = sld [smem:[#allocation14 + $0x204]]
        %v828 = vstv %s827
        %v829 = vadd.f32 %v826, %v828
        %s830 = sld [smem:[#allocation8 + $0x280]]
        %v831 = vstv %s830
        %v832 = vmul.f32 %v831, %v407
        %s833 = sld [smem:[#allocation8 + $0x281]]
        %v834 = vstv %s833
        %v835 = vmul.f32 %v834, %v443
        %v836 = vadd.f32 %v832, %v835
        %s837 = sld [smem:[#allocation8 + $0x282]]
        %v838 = vstv %s837
        %v839 = vmul.f32 %v838, %v479
        %v840 = vadd.f32 %v836, %v839
        %s841 = sld [smem:[#allocation8 + $0x283]]
        %v842 = vstv %s841
        %v843 = vmul.f32 %v842, %v515
        %v844 = vadd.f32 %v840, %v843
        %s845 = sld [smem:[#allocation8 + $0x284]]
        %v846 = vstv %s845
        %v847 = vmul.f32 %v846, %v551
        %v848 = vadd.f32 %v844, %v847
        %s849 = sld [smem:[#allocation8 + $0x285]]
        %v850 = vstv %s849
        %v851 = vmul.f32 %v850, %v587
        %v852 = vadd.f32 %v848, %v851
        %s853 = sld [smem:[#allocation8 + $0x286]]
        %v854 = vstv %s853
        %v855 = vmul.f32 %v854, %v623
        %v856 = vadd.f32 %v852, %v855
        %s857 = sld [smem:[#allocation8 + $0x287]]
        %v858 = vstv %s857
        %v859 = vmul.f32 %v858, %v659
        %v860 = vadd.f32 %v856, %v859
        %s861 = sld [smem:[#allocation14 + $0x284]]
        %v862 = vstv %s861
        %v863 = vadd.f32 %v860, %v862
        %s864 = sld [smem:[#allocation8 + $0x300]]
        %v865 = vstv %s864
        %v866 = vmul.f32 %v865, %v407
        %s867 = sld [smem:[#allocation8 + $0x301]]
        %v868 = vstv %s867
        %v869 = vmul.f32 %v868, %v443
        %v870 = vadd.f32 %v866, %v869
        %s871 = sld [smem:[#allocation8 + $0x302]]
        %v872 = vstv %s871
        %v873 = vmul.f32 %v872, %v479
        %v874 = vadd.f32 %v870, %v873
        %s875 = sld [smem:[#allocation8 + $0x303]]
        %v876 = vstv %s875
        %v877 = vmul.f32 %v876, %v515
        %v878 = vadd.f32 %v874, %v877
        %s879 = sld [smem:[#allocation8 + $0x304]]
        %v880 = vstv %s879
        %v881 = vmul.f32 %v880, %v551
        %v882 = vadd.f32 %v878, %v881
        %s883 = sld [smem:[#allocation8 + $0x305]]
        %v884 = vstv %s883
        %v885 = vmul.f32 %v884, %v587
        %v886 = vadd.f32 %v882, %v885
        %s887 = sld [smem:[#allocation8 + $0x306]]
        %v888 = vstv %s887
        %v889 = vmul.f32 %v888, %v623
        %v890 = vadd.f32 %v886, %v889
        %s891 = sld [smem:[#allocation8 + $0x307]]
        %v892 = vstv %s891
        %v893 = vmul.f32 %v892, %v659
        %v894 = vadd.f32 %v890, %v893
        %s895 = sld [smem:[#allocation14 + $0x304]]
        %v896 = vstv %s895
        %v897 = vadd.f32 %v894, %v896
        %s898 = sld [smem:[#allocation8 + $0x380]]
        %v899 = vstv %s898
        %v900 = vmul.f32 %v899, %v407
        %s901 = sld [smem:[#allocation8 + $0x381]]
        %v902 = vstv %s901
        %v903 = vmul.f32 %v902, %v443
        %v904 = vadd.f32 %v900, %v903
        %s905 = sld [smem:[#allocation8 + $0x382]]
        %v906 = vstv %s905
        %v907 = vmul.f32 %v906, %v479
        %v908 = vadd.f32 %v904, %v907
        %s909 = sld [smem:[#allocation8 + $0x383]]
        %v910 = vstv %s909
        %v911 = vmul.f32 %v910, %v515
        %v912 = vadd.f32 %v908, %v911
        %s913 = sld [smem:[#allocation8 + $0x384]]
        %v914 = vstv %s913
        %v915 = vmul.f32 %v914, %v551
        %v916 = vadd.f32 %v912, %v915
        %s917 = sld [smem:[#allocation8 + $0x385]]
        %v918 = vstv %s917
        %v919 = vmul.f32 %v918, %v587
        %v920 = vadd.f32 %v916, %v919
        %s921 = sld [smem:[#allocation8 + $0x386]]
        %v922 = vstv %s921
        %v923 = vmul.f32 %v922, %v623
        %v924 = vadd.f32 %v920, %v923
        %s925 = sld [smem:[#allocation8 + $0x387]]
        %v926 = vstv %s925
        %v927 = vmul.f32 %v926, %v659
        %v928 = vadd.f32 %v924, %v927
        %s929 = sld [smem:[#allocation14 + $0x384]]
        %v930 = vstv %s929
        %v931 = vadd.f32 %v928, %v930
        %s932 = sld [smem:[#allocation10]]
        %v933 = vstv %s932
        %v934 = vmul.f32 %v933, %v693
        %s935 = sld [smem:[#allocation10 + $0x1]]
        %v936 = vstv %s935
        %v937 = vmul.f32 %v936, %v727
        %v938 = vadd.f32 %v934, %v937
        %s939 = sld [smem:[#allocation10 + $0x2]]
        %v940 = vstv %s939
        %v941 = vmul.f32 %v940, %v761
        %v942 = vadd.f32 %v938, %v941
        %s943 = sld [smem:[#allocation10 + $0x3]]
        %v944 = vstv %s943
        %v945 = vmul.f32 %v944, %v795
        %v946 = vadd.f32 %v942, %v945
        %s947 = sld [smem:[#allocation10 + $0x4]]
        %v948 = vstv %s947
        %v949 = vmul.f32 %v948, %v829
        %v950 = vadd.f32 %v946, %v949
        %s951 = sld [smem:[#allocation10 + $0x5]]
        %v952 = vstv %s951
        %v953 = vmul.f32 %v952, %v863
        %v954 = vadd.f32 %v950, %v953
        %s955 = sld [smem:[#allocation10 + $0x6]]
        %v956 = vstv %s955
        %v957 = vmul.f32 %v956, %v897
        %v958 = vadd.f32 %v954, %v957
        %s959 = sld [smem:[#allocation10 + $0x7]]
        %v960 = vstv %s959
        %v961 = vmul.f32 %v960, %v931
        %v962 = vadd.f32 %v958, %v961
        %s963 = sld [smem:[#allocation14 + $0x5]]
        %v964 = vstv %s963
        %v965 = vadd.f32 %v962, %v964
        %s966 = sld [smem:[#allocation14 + $0x6]]
        %s967 = sld [smem:[#allocation14 + $0x7]]
        %s968 = sld [smem:[#allocation14 + $0x8]]
        %s969 = ssub.f32 %s966, %s967
        %v970 = vstv %s969
        %v971 = vmul.f32 %v970, %v965
        %v972 = vstv %s968
        %v973 = vmul.f32 %v972, %v971
        %v974 = vxor.u32 %v973, 2147483648
        %v975 = vmul.f32 %v974, 1.442695
        %v976 = vpow.pop %v975
        %v977 = vadd.f32 %v976, 1.0
        %v978 = vrcp.pop %v977
        %v979 = vmul.f32 1.0, %v978
        %v980 = vmul.f32 %v971, %v979
        %v981 = vstv %s967
        %v982 = vmul.f32 %v981, %v965
        %v983 = vadd.f32 %v980, %v982
        %s984 = sld [smem:[#allocation14 + $0x9]]
        %v985 = vstv %s984
        %v986 = vmul.f32 %v983, %v985
        %s987 = sld [smem:[#allocation14 + $0xa]]
        %v988 = vstv %s987
        %v989 = vadd.f32 %v986, %v988
        %s990 = sld [smem:[#allocation14 + $0xb]]
        %s991 = sld [smem:[#allocation14 + $0xc]]
        %s992 = sld [smem:[#allocation14 + $0xd]]
        %s993 = ssub.f32 %s990, %s991
        %v994 = vstv %s993
        %v995 = vmul.f32 %v994, %v989
        %v996 = vstv %s992
        %v997 = vmul.f32 %v996, %v995
        %v998 = vxor.u32 %v997, 2147483648
        %v999 = vmul.f32 %v998, 1.442695
        %v1000 = vpow.pop %v999
        %v1001 = vadd.f32 %v1000, 1.0
        %v1002 = vrcp.pop %v1001
        %v1003 = vmul.f32 1.0, %v1002
        %v1004 = vmul.f32 %v995, %v1003
        %v1005 = vstv %s991
        %v1006 = vmul.f32 %v1005, %v989
        %v1007 = vadd.f32 %v1004, %v1006
        %s1008 = sld [smem:[#allocation10 + $0x80]]
        %v1009 = vstv %s1008
        %v1010 = vmul.f32 %v1009, %v693
        %s1011 = sld [smem:[#allocation10 + $0x81]]
        %v1012 = vstv %s1011
        %v1013 = vmul.f32 %v1012, %v727
        %v1014 = vadd.f32 %v1010, %v1013
        %s1015 = sld [smem:[#allocation10 + $0x82]]
        %v1016 = vstv %s1015
        %v1017 = vmul.f32 %v1016, %v761
        %v1018 = vadd.f32 %v1014, %v1017
        %s1019 = sld [smem:[#allocation10 + $0x83]]
        %v1020 = vstv %s1019
        %v1021 = vmul.f32 %v1020, %v795
        %v1022 = vadd.f32 %v1018, %v1021
        %s1023 = sld [smem:[#allocation10 + $0x84]]
        %v1024 = vstv %s1023
        %v1025 = vmul.f32 %v1024, %v829
        %v1026 = vadd.f32 %v1022, %v1025
        %s1027 = sld [smem:[#allocation10 + $0x85]]
        %v1028 = vstv %s1027
        %v1029 = vmul.f32 %v1028, %v863
        %v1030 = vadd.f32 %v1026, %v1029
        %s1031 = sld [smem:[#allocation10 + $0x86]]
        %v1032 = vstv %s1031
        %v1033 = vmul.f32 %v1032, %v897
        %v1034 = vadd.f32 %v1030, %v1033
        %s1035 = sld [smem:[#allocation10 + $0x87]]
        %v1036 = vstv %s1035
        %v1037 = vmul.f32 %v1036, %v931
        %v1038 = vadd.f32 %v1034, %v1037
        %s1039 = sld [smem:[#allocation14 + $0x85]]
        %v1040 = vstv %s1039
        %v1041 = vadd.f32 %v1038, %v1040
        %s1042 = sld [smem:[#allocation14 + $0x86]]
        %s1043 = sld [smem:[#allocation14 + $0x87]]
        %s1044 = sld [smem:[#allocation14 + $0x88]]
        %s1045 = ssub.f32 %s1042, %s1043
        %v1046 = vstv %s1045
        %v1047 = vmul.f32 %v1046, %v1041
        %v1048 = vstv %s1044
        %v1049 = vmul.f32 %v1048, %v1047
        %v1050 = vxor.u32 %v1049, 2147483648
        %v1051 = vmul.f32 %v1050, 1.442695
        %v1052 = vpow.pop %v1051
        %v1053 = vadd.f32 %v1052, 1.0
        %v1054 = vrcp.pop %v1053
        %v1055 = vmul.f32 1.0, %v1054
        %v1056 = vmul.f32 %v1047, %v1055
        %v1057 = vstv %s1043
        %v1058 = vmul.f32 %v1057, %v1041
        %v1059 = vadd.f32 %v1056, %v1058
        %s1060 = sld [smem:[#allocation14 + $0x89]]
        %v1061 = vstv %s1060
        %v1062 = vmul.f32 %v1059, %v1061
        %s1063 = sld [smem:[#allocation14 + $0x8a]]
        %v1064 = vstv %s1063
        %v1065 = vadd.f32 %v1062, %v1064
        %s1066 = sld [smem:[#allocation14 + $0x8b]]
        %s1067 = sld [smem:[#allocation14 + $0x8c]]
        %s1068 = sld [smem:[#allocation14 + $0x8d]]
        %s1069 = ssub.f32 %s1066, %s1067
        %v1070 = vstv %s1069
        %v1071 = vmul.f32 %v1070, %v1065
        %v1072 = vstv %s1068
        %v1073 = vmul.f32 %v1072, %v1071
        %v1074 = vxor.u32 %v1073, 2147483648
        %v1075 = vmul.f32 %v1074, 1.442695
        %v1076 = vpow.pop %v1075
        %v1077 = vadd.f32 %v1076, 1.0
        %v1078 = vrcp.pop %v1077
        %v1079 = vmul.f32 1.0, %v1078
        %v1080 = vmul.f32 %v1071, %v1079
        %v1081 = vstv %s1067
        %v1082 = vmul.f32 %v1081, %v1065
        %v1083 = vadd.f32 %v1080, %v1082
        %s1084 = sld [smem:[#allocation10 + $0x100]]
        %v1085 = vstv %s1084
        %v1086 = vmul.f32 %v1085, %v693
        %s1087 = sld [smem:[#allocation10 + $0x101]]
        %v1088 = vstv %s1087
        %v1089 = vmul.f32 %v1088, %v727
        %v1090 = vadd.f32 %v1086, %v1089
        %s1091 = sld [smem:[#allocation10 + $0x102]]
        %v1092 = vstv %s1091
        %v1093 = vmul.f32 %v1092, %v761
        %v1094 = vadd.f32 %v1090, %v1093
        %s1095 = sld [smem:[#allocation10 + $0x103]]
        %v1096 = vstv %s1095
        %v1097 = vmul.f32 %v1096, %v795
        %v1098 = vadd.f32 %v1094, %v1097
        %s1099 = sld [smem:[#allocation10 + $0x104]]
        %v1100 = vstv %s1099
        %v1101 = vmul.f32 %v1100, %v829
        %v1102 = vadd.f32 %v1098, %v1101
        %s1103 = sld [smem:[#allocation10 + $0x105]]
        %v1104 = vstv %s1103
        %v1105 = vmul.f32 %v1104, %v863
        %v1106 = vadd.f32 %v1102, %v1105
        %s1107 = sld [smem:[#allocation10 + $0x106]]
        %v1108 = vstv %s1107
        %v1109 = vmul.f32 %v1108, %v897
        %v1110 = vadd.f32 %v1106, %v1109
        %s1111 = sld [smem:[#allocation10 + $0x107]]
        %v1112 = vstv %s1111
        %v1113 = vmul.f32 %v1112, %v931
        %v1114 = vadd.f32 %v1110, %v1113
        %s1115 = sld [smem:[#allocation14 + $0x105]]
        %v1116 = vstv %s1115
        %v1117 = vadd.f32 %v1114, %v1116
        %s1118 = sld [smem:[#allocation14 + $0x106]]
        %s1119 = sld [smem:[#allocation14 + $0x107]]
        %s1120 = sld [smem:[#allocation14 + $0x108]]
        %s1121 = ssub.f32 %s1118, %s1119
        %v1122 = vstv %s1121
        %v1123 = vmul.f32 %v1122, %v1117
        %v1124 = vstv %s1120
        %v1125 = vmul.f32 %v1124, %v1123
        %v1126 = vxor.u32 %v1125, 2147483648
        %v1127 = vmul.f32 %v1126, 1.442695
        %v1128 = vpow.pop %v1127
        %v1129 = vadd.f32 %v1128, 1.0
        %v1130 = vrcp.pop %v1129
        %v1131 = vmul.f32 1.0, %v1130
        %v1132 = vmul.f32 %v1123, %v1131
        %v1133 = vstv %s1119
        %v1134 = vmul.f32 %v1133, %v1117
        %v1135 = vadd.f32 %v1132, %v1134
        %s1136 = sld [smem:[#allocation14 + $0x109]]
        %v1137 = vstv %s1136
        %v1138 = vmul.f32 %v1135, %v1137
        %s1139 = sld [smem:[#allocation14 + $0x10a]]
        %v1140 = vstv %s1139
        %v1141 = vadd.f32 %v1138, %v1140
        %s1142 = sld [smem:[#allocation14 + $0x10b]]
        %s1143 = sld [smem:[#allocation14 + $0x10c]]
        %s1144 = sld [smem:[#allocation14 + $0x10d]]
        %s1145 = ssub.f32 %s1142, %s1143
        %v1146 = vstv %s1145
        %v1147 = vmul.f32 %v1146, %v1141
        %v1148 = vstv %s1144
        %v1149 = vmul.f32 %v1148, %v1147
        %v1150 = vxor.u32 %v1149, 2147483648
        %v1151 = vmul.f32 %v1150, 1.442695
        %v1152 = vpow.pop %v1151
        %v1153 = vadd.f32 %v1152, 1.0
        %v1154 = vrcp.pop %v1153
        %v1155 = vmul.f32 1.0, %v1154
        %v1156 = vmul.f32 %v1147, %v1155
        %v1157 = vstv %s1143
        %v1158 = vmul.f32 %v1157, %v1141
        %v1159 = vadd.f32 %v1156, %v1158
        %s1160 = sld [smem:[#allocation10 + $0x180]]
        %v1161 = vstv %s1160
        %v1162 = vmul.f32 %v1161, %v693
        %s1163 = sld [smem:[#allocation10 + $0x181]]
        %v1164 = vstv %s1163
        %v1165 = vmul.f32 %v1164, %v727
        %v1166 = vadd.f32 %v1162, %v1165
        %s1167 = sld [smem:[#allocation10 + $0x182]]
        %v1168 = vstv %s1167
        %v1169 = vmul.f32 %v1168, %v761
        %v1170 = vadd.f32 %v1166, %v1169
        %s1171 = sld [smem:[#allocation10 + $0x183]]
        %v1172 = vstv %s1171
        %v1173 = vmul.f32 %v1172, %v795
        %v1174 = vadd.f32 %v1170, %v1173
        %s1175 = sld [smem:[#allocation10 + $0x184]]
        %v1176 = vstv %s1175
        %v1177 = vmul.f32 %v1176, %v829
        %v1178 = vadd.f32 %v1174, %v1177
        %s1179 = sld [smem:[#allocation10 + $0x185]]
        %v1180 = vstv %s1179
        %v1181 = vmul.f32 %v1180, %v863
        %v1182 = vadd.f32 %v1178, %v1181
        %s1183 = sld [smem:[#allocation10 + $0x186]]
        %v1184 = vstv %s1183
        %v1185 = vmul.f32 %v1184, %v897
        %v1186 = vadd.f32 %v1182, %v1185
        %s1187 = sld [smem:[#allocation10 + $0x187]]
        %v1188 = vstv %s1187
        %v1189 = vmul.f32 %v1188, %v931
        %v1190 = vadd.f32 %v1186, %v1189
        %s1191 = sld [smem:[#allocation14 + $0x185]]
        %v1192 = vstv %s1191
        %v1193 = vadd.f32 %v1190, %v1192
        %s1194 = sld [smem:[#allocation14 + $0x186]]
        %s1195 = sld [smem:[#allocation14 + $0x187]]
        %s1196 = sld [smem:[#allocation14 + $0x188]]
        %s1197 = ssub.f32 %s1194, %s1195
        %v1198 = vstv %s1197
        %v1199 = vmul.f32 %v1198, %v1193
        %v1200 = vstv %s1196
        %v1201 = vmul.f32 %v1200, %v1199
        %v1202 = vxor.u32 %v1201, 2147483648
        %v1203 = vmul.f32 %v1202, 1.442695
        %v1204 = vpow.pop %v1203
        %v1205 = vadd.f32 %v1204, 1.0
        %v1206 = vrcp.pop %v1205
        %v1207 = vmul.f32 1.0, %v1206
        %v1208 = vmul.f32 %v1199, %v1207
        %v1209 = vstv %s1195
        %v1210 = vmul.f32 %v1209, %v1193
        %v1211 = vadd.f32 %v1208, %v1210
        %s1212 = sld [smem:[#allocation14 + $0x189]]
        %v1213 = vstv %s1212
        %v1214 = vmul.f32 %v1211, %v1213
        %s1215 = sld [smem:[#allocation14 + $0x18a]]
        %v1216 = vstv %s1215
        %v1217 = vadd.f32 %v1214, %v1216
        %s1218 = sld [smem:[#allocation14 + $0x18b]]
        %s1219 = sld [smem:[#allocation14 + $0x18c]]
        %s1220 = sld [smem:[#allocation14 + $0x18d]]
        %s1221 = ssub.f32 %s1218, %s1219
        %v1222 = vstv %s1221
        %v1223 = vmul.f32 %v1222, %v1217
        %v1224 = vstv %s1220
        %v1225 = vmul.f32 %v1224, %v1223
        %v1226 = vxor.u32 %v1225, 2147483648
        %v1227 = vmul.f32 %v1226, 1.442695
        %v1228 = vpow.pop %v1227
        %v1229 = vadd.f32 %v1228, 1.0
        %v1230 = vrcp.pop %v1229
        %v1231 = vmul.f32 1.0, %v1230
        %v1232 = vmul.f32 %v1223, %v1231
        %v1233 = vstv %s1219
        %v1234 = vmul.f32 %v1233, %v1217
        %v1235 = vadd.f32 %v1232, %v1234
        %s1236 = sld [smem:[#allocation10 + $0x200]]
        %v1237 = vstv %s1236
        %v1238 = vmul.f32 %v1237, %v693
        %s1239 = sld [smem:[#allocation10 + $0x201]]
        %v1240 = vstv %s1239
        %v1241 = vmul.f32 %v1240, %v727
        %v1242 = vadd.f32 %v1238, %v1241
        %s1243 = sld [smem:[#allocation10 + $0x202]]
        %v1244 = vstv %s1243
        %v1245 = vmul.f32 %v1244, %v761
        %v1246 = vadd.f32 %v1242, %v1245
        %s1247 = sld [smem:[#allocation10 + $0x203]]
        %v1248 = vstv %s1247
        %v1249 = vmul.f32 %v1248, %v795
        %v1250 = vadd.f32 %v1246, %v1249
        %s1251 = sld [smem:[#allocation10 + $0x204]]
        %v1252 = vstv %s1251
        %v1253 = vmul.f32 %v1252, %v829
        %v1254 = vadd.f32 %v1250, %v1253
        %s1255 = sld [smem:[#allocation10 + $0x205]]
        %v1256 = vstv %s1255
        %v1257 = vmul.f32 %v1256, %v863
        %v1258 = vadd.f32 %v1254, %v1257
        %s1259 = sld [smem:[#allocation10 + $0x206]]
        %v1260 = vstv %s1259
        %v1261 = vmul.f32 %v1260, %v897
        %v1262 = vadd.f32 %v1258, %v1261
        %s1263 = sld [smem:[#allocation10 + $0x207]]
        %v1264 = vstv %s1263
        %v1265 = vmul.f32 %v1264, %v931
        %v1266 = vadd.f32 %v1262, %v1265
        %s1267 = sld [smem:[#allocation14 + $0x205]]
        %v1268 = vstv %s1267
        %v1269 = vadd.f32 %v1266, %v1268
        %s1270 = sld [smem:[#allocation14 + $0x206]]
        %s1271 = sld [smem:[#allocation14 + $0x207]]
        %s1272 = sld [smem:[#allocation14 + $0x208]]
        %s1273 = ssub.f32 %s1270, %s1271
        %v1274 = vstv %s1273
        %v1275 = vmul.f32 %v1274, %v1269
        %v1276 = vstv %s1272
        %v1277 = vmul.f32 %v1276, %v1275
        %v1278 = vxor.u32 %v1277, 2147483648
        %v1279 = vmul.f32 %v1278, 1.442695
        %v1280 = vpow.pop %v1279
        %v1281 = vadd.f32 %v1280, 1.0
        %v1282 = vrcp.pop %v1281
        %v1283 = vmul.f32 1.0, %v1282
        %v1284 = vmul.f32 %v1275, %v1283
        %v1285 = vstv %s1271
        %v1286 = vmul.f32 %v1285, %v1269
        %v1287 = vadd.f32 %v1284, %v1286
        %s1288 = sld [smem:[#allocation14 + $0x209]]
        %v1289 = vstv %s1288
        %v1290 = vmul.f32 %v1287, %v1289
        %s1291 = sld [smem:[#allocation14 + $0x20a]]
        %v1292 = vstv %s1291
        %v1293 = vadd.f32 %v1290, %v1292
        %s1294 = sld [smem:[#allocation14 + $0x20b]]
        %s1295 = sld [smem:[#allocation14 + $0x20c]]
        %s1296 = sld [smem:[#allocation14 + $0x20d]]
        %s1297 = ssub.f32 %s1294, %s1295
        %v1298 = vstv %s1297
        %v1299 = vmul.f32 %v1298, %v1293
        %v1300 = vstv %s1296
        %v1301 = vmul.f32 %v1300, %v1299
        %v1302 = vxor.u32 %v1301, 2147483648
        %v1303 = vmul.f32 %v1302, 1.442695
        %v1304 = vpow.pop %v1303
        %v1305 = vadd.f32 %v1304, 1.0
        %v1306 = vrcp.pop %v1305
        %v1307 = vmul.f32 1.0, %v1306
        %v1308 = vmul.f32 %v1299, %v1307
        %v1309 = vstv %s1295
        %v1310 = vmul.f32 %v1309, %v1293
        %v1311 = vadd.f32 %v1308, %v1310
        %s1312 = sld [smem:[#allocation10 + $0x280]]
        %v1313 = vstv %s1312
        %v1314 = vmul.f32 %v1313, %v693
        %s1315 = sld [smem:[#allocation10 + $0x281]]
        %v1316 = vstv %s1315
        %v1317 = vmul.f32 %v1316, %v727
        %v1318 = vadd.f32 %v1314, %v1317
        %s1319 = sld [smem:[#allocation10 + $0x282]]
        %v1320 = vstv %s1319
        %v1321 = vmul.f32 %v1320, %v761
        %v1322 = vadd.f32 %v1318, %v1321
        %s1323 = sld [smem:[#allocation10 + $0x283]]
        %v1324 = vstv %s1323
        %v1325 = vmul.f32 %v1324, %v795
        %v1326 = vadd.f32 %v1322, %v1325
        %s1327 = sld [smem:[#allocation10 + $0x284]]
        %v1328 = vstv %s1327
        %v1329 = vmul.f32 %v1328, %v829
        %v1330 = vadd.f32 %v1326, %v1329
        %s1331 = sld [smem:[#allocation10 + $0x285]]
        %v1332 = vstv %s1331
        %v1333 = vmul.f32 %v1332, %v863
        %v1334 = vadd.f32 %v1330, %v1333
        %s1335 = sld [smem:[#allocation10 + $0x286]]
        %v1336 = vstv %s1335
        %v1337 = vmul.f32 %v1336, %v897
        %v1338 = vadd.f32 %v1334, %v1337
        %s1339 = sld [smem:[#allocation10 + $0x287]]
        %v1340 = vstv %s1339
        %v1341 = vmul.f32 %v1340, %v931
        %v1342 = vadd.f32 %v1338, %v1341
        %s1343 = sld [smem:[#allocation14 + $0x285]]
        %v1344 = vstv %s1343
        %v1345 = vadd.f32 %v1342, %v1344
        %s1346 = sld [smem:[#allocation14 + $0x286]]
        %s1347 = sld [smem:[#allocation14 + $0x287]]
        %s1348 = sld [smem:[#allocation14 + $0x288]]
        %s1349 = ssub.f32 %s1346, %s1347
        %v1350 = vstv %s1349
        %v1351 = vmul.f32 %v1350, %v1345
        %v1352 = vstv %s1348
        %v1353 = vmul.f32 %v1352, %v1351
        %v1354 = vxor.u32 %v1353, 2147483648
        %v1355 = vmul.f32 %v1354, 1.442695
        %v1356 = vpow.pop %v1355
        %v1357 = vadd.f32 %v1356, 1.0
        %v1358 = vrcp.pop %v1357
        %v1359 = vmul.f32 1.0, %v1358
        %v1360 = vmul.f32 %v1351, %v1359
        %v1361 = vstv %s1347
        %v1362 = vmul.f32 %v1361, %v1345
        %v1363 = vadd.f32 %v1360, %v1362
        %s1364 = sld [smem:[#allocation14 + $0x289]]
        %v1365 = vstv %s1364
        %v1366 = vmul.f32 %v1363, %v1365
        %s1367 = sld [smem:[#allocation14 + $0x28a]]
        %v1368 = vstv %s1367
        %v1369 = vadd.f32 %v1366, %v1368
        %s1370 = sld [smem:[#allocation14 + $0x28b]]
        %s1371 = sld [smem:[#allocation14 + $0x28c]]
        %s1372 = sld [smem:[#allocation14 + $0x28d]]
        %s1373 = ssub.f32 %s1370, %s1371
        %v1374 = vstv %s1373
        %v1375 = vmul.f32 %v1374, %v1369
        %v1376 = vstv %s1372
        %v1377 = vmul.f32 %v1376, %v1375
        %v1378 = vxor.u32 %v1377, 2147483648
        %v1379 = vmul.f32 %v1378, 1.442695
        %v1380 = vpow.pop %v1379
        %v1381 = vadd.f32 %v1380, 1.0
        %v1382 = vrcp.pop %v1381
        %v1383 = vmul.f32 1.0, %v1382
        %v1384 = vmul.f32 %v1375, %v1383
        %v1385 = vstv %s1371
        %v1386 = vmul.f32 %v1385, %v1369
        %v1387 = vadd.f32 %v1384, %v1386
        %s1388 = sld [smem:[#allocation10 + $0x300]]
        %v1389 = vstv %s1388
        %v1390 = vmul.f32 %v1389, %v693
        %s1391 = sld [smem:[#allocation10 + $0x301]]
        %v1392 = vstv %s1391
        %v1393 = vmul.f32 %v1392, %v727
        %v1394 = vadd.f32 %v1390, %v1393
        %s1395 = sld [smem:[#allocation10 + $0x302]]
        %v1396 = vstv %s1395
        %v1397 = vmul.f32 %v1396, %v761
        %v1398 = vadd.f32 %v1394, %v1397
        %s1399 = sld [smem:[#allocation10 + $0x303]]
        %v1400 = vstv %s1399
        %v1401 = vmul.f32 %v1400, %v795
        %v1402 = vadd.f32 %v1398, %v1401
        %s1403 = sld [smem:[#allocation10 + $0x304]]
        %v1404 = vstv %s1403
        %v1405 = vmul.f32 %v1404, %v829
        %v1406 = vadd.f32 %v1402, %v1405
        %s1407 = sld [smem:[#allocation10 + $0x305]]
        %v1408 = vstv %s1407
        %v1409 = vmul.f32 %v1408, %v863
        %v1410 = vadd.f32 %v1406, %v1409
        %s1411 = sld [smem:[#allocation10 + $0x306]]
        %v1412 = vstv %s1411
        %v1413 = vmul.f32 %v1412, %v897
        %v1414 = vadd.f32 %v1410, %v1413
        %s1415 = sld [smem:[#allocation10 + $0x307]]
        %v1416 = vstv %s1415
        %v1417 = vmul.f32 %v1416, %v931
        %v1418 = vadd.f32 %v1414, %v1417
        %s1419 = sld [smem:[#allocation14 + $0x305]]
        %v1420 = vstv %s1419
        %v1421 = vadd.f32 %v1418, %v1420
        %s1422 = sld [smem:[#allocation14 + $0x306]]
        %s1423 = sld [smem:[#allocation14 + $0x307]]
        %s1424 = sld [smem:[#allocation14 + $0x308]]
        %s1425 = ssub.f32 %s1422, %s1423
        %v1426 = vstv %s1425
        %v1427 = vmul.f32 %v1426, %v1421
        %v1428 = vstv %s1424
        %v1429 = vmul.f32 %v1428, %v1427
        %v1430 = vxor.u32 %v1429, 2147483648
        %v1431 = vmul.f32 %v1430, 1.442695
        %v1432 = vpow.pop %v1431
        %v1433 = vadd.f32 %v1432, 1.0
        %v1434 = vrcp.pop %v1433
        %v1435 = vmul.f32 1.0, %v1434
        %v1436 = vmul.f32 %v1427, %v1435
        %v1437 = vstv %s1423
        %v1438 = vmul.f32 %v1437, %v1421
        %v1439 = vadd.f32 %v1436, %v1438
        %s1440 = sld [smem:[#allocation14 + $0x309]]
        %v1441 = vstv %s1440
        %v1442 = vmul.f32 %v1439, %v1441
        %s1443 = sld [smem:[#allocation14 + $0x30a]]
        %v1444 = vstv %s1443
        %v1445 = vadd.f32 %v1442, %v1444
        %s1446 = sld [smem:[#allocation14 + $0x30b]]
        %s1447 = sld [smem:[#allocation14 + $0x30c]]
        %s1448 = sld [smem:[#allocation14 + $0x30d]]
        %s1449 = ssub.f32 %s1446, %s1447
        %v1450 = vstv %s1449
        %v1451 = vmul.f32 %v1450, %v1445
        %v1452 = vstv %s1448
        %v1453 = vmul.f32 %v1452, %v1451
        %v1454 = vxor.u32 %v1453, 2147483648
        %v1455 = vmul.f32 %v1454, 1.442695
        %v1456 = vpow.pop %v1455
        %v1457 = vadd.f32 %v1456, 1.0
        %v1458 = vrcp.pop %v1457
        %v1459 = vmul.f32 1.0, %v1458
        %v1460 = vmul.f32 %v1451, %v1459
        %v1461 = vstv %s1447
        %v1462 = vmul.f32 %v1461, %v1445
        %v1463 = vadd.f32 %v1460, %v1462
        %s1464 = sld [smem:[#allocation10 + $0x380]]
        %v1465 = vstv %s1464
        %v1466 = vmul.f32 %v1465, %v693
        %s1467 = sld [smem:[#allocation10 + $0x381]]
        %v1468 = vstv %s1467
        %v1469 = vmul.f32 %v1468, %v727
        %v1470 = vadd.f32 %v1466, %v1469
        %s1471 = sld [smem:[#allocation10 + $0x382]]
        %v1472 = vstv %s1471
        %v1473 = vmul.f32 %v1472, %v761
        %v1474 = vadd.f32 %v1470, %v1473
        %s1475 = sld [smem:[#allocation10 + $0x383]]
        %v1476 = vstv %s1475
        %v1477 = vmul.f32 %v1476, %v795
        %v1478 = vadd.f32 %v1474, %v1477
        %s1479 = sld [smem:[#allocation10 + $0x384]]
        %v1480 = vstv %s1479
        %v1481 = vmul.f32 %v1480, %v829
        %v1482 = vadd.f32 %v1478, %v1481
        %s1483 = sld [smem:[#allocation10 + $0x385]]
        %v1484 = vstv %s1483
        %v1485 = vmul.f32 %v1484, %v863
        %v1486 = vadd.f32 %v1482, %v1485
        %s1487 = sld [smem:[#allocation10 + $0x386]]
        %v1488 = vstv %s1487
        %v1489 = vmul.f32 %v1488, %v897
        %v1490 = vadd.f32 %v1486, %v1489
        %s1491 = sld [smem:[#allocation10 + $0x387]]
        %v1492 = vstv %s1491
        %v1493 = vmul.f32 %v1492, %v931
        %v1494 = vadd.f32 %v1490, %v1493
        %s1495 = sld [smem:[#allocation14 + $0x385]]
        %v1496 = vstv %s1495
        %v1497 = vadd.f32 %v1494, %v1496
        %s1498 = sld [smem:[#allocation14 + $0x386]]
        %s1499 = sld [smem:[#allocation14 + $0x387]]
        %s1500 = sld [smem:[#allocation14 + $0x388]]
        %s1501 = ssub.f32 %s1498, %s1499
        %v1502 = vstv %s1501
        %v1503 = vmul.f32 %v1502, %v1497
        %v1504 = vstv %s1500
        %v1505 = vmul.f32 %v1504, %v1503
        %v1506 = vxor.u32 %v1505, 2147483648
        %v1507 = vmul.f32 %v1506, 1.442695
        %v1508 = vpow.pop %v1507
        %v1509 = vadd.f32 %v1508, 1.0
        %v1510 = vrcp.pop %v1509
        %v1511 = vmul.f32 1.0, %v1510
        %v1512 = vmul.f32 %v1503, %v1511
        %v1513 = vstv %s1499
        %v1514 = vmul.f32 %v1513, %v1497
        %v1515 = vadd.f32 %v1512, %v1514
        %s1516 = sld [smem:[#allocation14 + $0x389]]
        %v1517 = vstv %s1516
        %v1518 = vmul.f32 %v1515, %v1517
        %s1519 = sld [smem:[#allocation14 + $0x38a]]
        %v1520 = vstv %s1519
        %v1521 = vadd.f32 %v1518, %v1520
        %s1522 = sld [smem:[#allocation14 + $0x38b]]
        %s1523 = sld [smem:[#allocation14 + $0x38c]]
        %s1524 = sld [smem:[#allocation14 + $0x38d]]
        %s1525 = ssub.f32 %s1522, %s1523
        %v1526 = vstv %s1525
        %v1527 = vmul.f32 %v1526, %v1521
        %v1528 = vstv %s1524
        %v1529 = vmul.f32 %v1528, %v1527
        %v1530 = vxor.u32 %v1529, 2147483648
        %v1531 = vmul.f32 %v1530, 1.442695
        %v1532 = vpow.pop %v1531
        %v1533 = vadd.f32 %v1532, 1.0
        %v1534 = vrcp.pop %v1533
        %v1535 = vmul.f32 1.0, %v1534
        %v1536 = vmul.f32 %v1527, %v1535
        %v1537 = vstv %s1523
        %v1538 = vmul.f32 %v1537, %v1521
        %v1539 = vadd.f32 %v1536, %v1538
        %1548 = vrot.lane.b32.xlu0 %v407, 127
        %v1549 = vpop.permute.xlu0 %1548
        %1550 = vrot.lane.b32.xlu0 %v443, 127
        %v1551 = vpop.permute.xlu0 %1550
        %1552 = vrot.lane.b32.xlu0 %v479, 127
        %v1553 = vpop.permute.xlu0 %1552
        %1554 = vrot.lane.b32.xlu0 %v515, 127
        %v1555 = vpop.permute.xlu0 %1554
        %1556 = vrot.lane.b32.xlu0 %v551, 127
        %v1557 = vpop.permute.xlu0 %1556
        %1558 = vrot.lane.b32.xlu0 %v587, 127
        %v1559 = vpop.permute.xlu0 %1558
        %1560 = vrot.lane.b32.xlu0 %v623, 127
        %v1561 = vpop.permute.xlu0 %1560
        %1562 = vrot.lane.b32.xlu0 %v659, 127
        %v1563 = vpop.permute.xlu0 %1562
        %1572 = vrot.lane.b32.xlu0 %v407, 7
        %v1573 = vpop.permute.xlu0 %1572
        %1574 = vrot.lane.b32.xlu0 %v443, 7
        %v1575 = vpop.permute.xlu0 %1574
        %1576 = vrot.lane.b32.xlu0 %v479, 7
        %v1577 = vpop.permute.xlu0 %1576
        %1578 = vrot.lane.b32.xlu0 %v515, 7
        %v1579 = vpop.permute.xlu0 %1578
        %1580 = vrot.lane.b32.xlu0 %v551, 7
        %v1581 = vpop.permute.xlu0 %1580
        %1582 = vrot.lane.b32.xlu0 %v587, 7
        %v1583 = vpop.permute.xlu0 %1582
        %1584 = vrot.lane.b32.xlu0 %v623, 7
        %v1585 = vpop.permute.xlu0 %1584
        %1586 = vrot.lane.b32.xlu0 %v659, 7
        %v1587 = vpop.permute.xlu0 %1586
        %vm1596 = vcmask 56320
        %v1597 = vsel %vm1596, %v1549, %v1573
        %v1598 = vsel %vm1596, %v1551, %v1575
        %v1599 = vsel %vm1596, %v1553, %v1577
        %v1600 = vsel %vm1596, %v1555, %v1579
        %v1601 = vsel %vm1596, %v1557, %v1581
        %v1602 = vsel %vm1596, %v1559, %v1583
        %v1603 = vsel %vm1596, %v1561, %v1585
        %v1604 = vsel %vm1596, %v1563, %v1587
        %v1605 = vmax.f32 %v407, %v1597
        %v1606 = vmax.f32 %v443, %v1598
        %v1607 = vmax.f32 %v479, %v1599
        %v1608 = vmax.f32 %v515, %v1600
        %v1609 = vmax.f32 %v551, %v1601
        %v1610 = vmax.f32 %v587, %v1602
        %v1611 = vmax.f32 %v623, %v1603
        %v1612 = vmax.f32 %v659, %v1604
        %v1621 = vrot.slane %v1605, 1
        %v1622 = vrot.slane %v1606, 1
        %v1623 = vrot.slane %v1607, 1
        %v1624 = vrot.slane %v1608, 1
        %v1625 = vrot.slane %v1609, 1
        %v1626 = vrot.slane %v1610, 1
        %v1627 = vrot.slane %v1611, 1
        %v1628 = vrot.slane %v1612, 1
        %vm1637 = vcmask 1046528
        %v1638 = vsel %vm1637, %v1621, %v1621
        %v1639 = vsel %vm1637, %v1622, %v1622
        %v1640 = vsel %vm1637, %v1623, %v1623
        %v1641 = vsel %vm1637, %v1624, %v1624
        %v1642 = vsel %vm1637, %v1625, %v1625
        %v1643 = vsel %vm1637, %v1626, %v1626
        %v1644 = vsel %vm1637, %v1627, %v1627
        %v1645 = vsel %vm1637, %v1628, %v1628
        %v1646 = vmax.f32 %v1605, %v1638
        %v1647 = vmax.f32 %v1606, %v1639
        %v1648 = vmax.f32 %v1607, %v1640
        %v1649 = vmax.f32 %v1608, %v1641
        %v1650 = vmax.f32 %v1609, %v1642
        %v1651 = vmax.f32 %v1610, %v1643
        %v1652 = vmax.f32 %v1611, %v1644
        %v1653 = vmax.f32 %v1612, %v1645
        %v1654 = vlaneseq
        %v1655 = vshrl.u32 %v1654, 7
        %v1656 = vlaneseq
        %v1657 = vand.u32 %v1656, 127
        %v1658 = vand.u32 %v1655, 1
        %vm1659 = vcmp.eq.s32.totalorder %v1658, 0
        %v1660 = vand.u32 %v1657, 1
        %vm1661 = vcmp.eq.s32.totalorder %v1660, 0
        %1670 = vrot.lane.b32.xlu0 %v1646, 121
        %v1671 = vpop.permute.xlu0 %1670
        %1672 = vrot.lane.b32.xlu0 %v1647, 121
        %v1673 = vpop.permute.xlu0 %1672
        %1674 = vrot.lane.b32.xlu0 %v1648, 121
        %v1675 = vpop.permute.xlu0 %1674
        %1676 = vrot.lane.b32.xlu0 %v1649, 121
        %v1677 = vpop.permute.xlu0 %1676
        %1678 = vrot.lane.b32.xlu0 %v1650, 121
        %v1679 = vpop.permute.xlu0 %1678
        %1680 = vrot.lane.b32.xlu0 %v1651, 121
        %v1681 = vpop.permute.xlu0 %1680
        %1682 = vrot.lane.b32.xlu0 %v1652, 121
        %v1683 = vpop.permute.xlu0 %1682
        %1684 = vrot.lane.b32.xlu0 %v1653, 121
        %v1685 = vpop.permute.xlu0 %1684
        %1694 = vrot.lane.b32.xlu0 %v1646, 1
        %v1695 = vpop.permute.xlu0 %1694
        %1696 = vrot.lane.b32.xlu0 %v1647, 1
        %v1697 = vpop.permute.xlu0 %1696
        %1698 = vrot.lane.b32.xlu0 %v1648, 1
        %v1699 = vpop.permute.xlu0 %1698
        %1700 = vrot.lane.b32.xlu0 %v1649, 1
        %v1701 = vpop.permute.xlu0 %1700
        %1702 = vrot.lane.b32.xlu0 %v1650, 1
        %v1703 = vpop.permute.xlu0 %1702
        %1704 = vrot.lane.b32.xlu0 %v1651, 1
        %v1705 = vpop.permute.xlu0 %1704
        %1706 = vrot.lane.b32.xlu0 %v1652, 1
        %v1707 = vpop.permute.xlu0 %1706
        %1708 = vrot.lane.b32.xlu0 %v1653, 1
        %v1709 = vpop.permute.xlu0 %1708
        %vm1718 = vcmask 7168
        %v1719 = vsel %vm1718, %v1671, %v1695
        %v1720 = vsel %vm1718, %v1673, %v1697
        %v1721 = vsel %vm1718, %v1675, %v1699
        %v1722 = vsel %vm1718, %v1677, %v1701
        %v1723 = vsel %vm1718, %v1679, %v1703
        %v1724 = vsel %vm1718, %v1681, %v1705
        %v1725 = vsel %vm1718, %v1683, %v1707
        %v1726 = vsel %vm1718, %v1685, %v1709
        %v1727 = vsel %vm1661, 1, 0
        %vm1728 = vcmp.eq.s32.totalorder %v1727, 1
        %v1729 = vsel %vm1728, %v1646, %v1719
        %v1730 = vsel %vm1728, %v1647, %v1720
        %v1731 = vsel %vm1728, %v1648, %v1721
        %v1732 = vsel %vm1728, %v1649, %v1722
        %v1733 = vsel %vm1728, %v1650, %v1723
        %v1734 = vsel %vm1728, %v1651, %v1724
        %v1735 = vsel %vm1728, %v1652, %v1725
        %v1736 = vsel %vm1728, %v1653, %v1726
        %v1745 = vrot.slane %v1729, 7
        %v1746 = vrot.slane %v1730, 7
        %v1747 = vrot.slane %v1731, 7
        %v1748 = vrot.slane %v1732, 7
        %v1749 = vrot.slane %v1733, 7
        %v1750 = vrot.slane %v1734, 7
        %v1751 = vrot.slane %v1735, 7
        %v1752 = vrot.slane %v1736, 7
        %vm1761 = vcmask 1040384
        %v1762 = vsel %vm1761, %v1745, %v1745
        %v1763 = vsel %vm1761, %v1746, %v1746
        %v1764 = vsel %vm1761, %v1747, %v1747
        %v1765 = vsel %vm1761, %v1748, %v1748
        %v1766 = vsel %vm1761, %v1749, %v1749
        %v1767 = vsel %vm1761, %v1750, %v1750
        %v1768 = vsel %vm1761, %v1751, %v1751
        %v1769 = vsel %vm1761, %v1752, %v1752
        %v1770 = vsel %vm1659, 1, 0
        %vm1771 = vcmp.eq.s32.totalorder %v1770, 1
        %v1772 = vsel %vm1771, %v1729, %v1762
        %v1773 = vsel %vm1771, %v1730, %v1763
        %v1774 = vsel %vm1771, %v1731, %v1764
        %v1775 = vsel %vm1771, %v1732, %v1765
        %v1776 = vsel %vm1771, %v1733, %v1766
        %v1777 = vsel %vm1771, %v1734, %v1767
        %v1778 = vsel %vm1771, %v1735, %v1768
        %v1779 = vsel %vm1771, %v1736, %v1769
        %vm1780 = vcmp.ge.s32.totalorder %v1657, 2
        %1789 = vrot.lane.b32.xlu0 %v1772, 122
        %v1790 = vpop.permute.xlu0 %1789
        %1791 = vrot.lane.b32.xlu0 %v1773, 122
        %v1792 = vpop.permute.xlu0 %1791
        %1793 = vrot.lane.b32.xlu0 %v1774, 122
        %v1794 = vpop.permute.xlu0 %1793
        %1795 = vrot.lane.b32.xlu0 %v1775, 122
        %v1796 = vpop.permute.xlu0 %1795
        %1797 = vrot.lane.b32.xlu0 %v1776, 122
        %v1798 = vpop.permute.xlu0 %1797
        %1799 = vrot.lane.b32.xlu0 %v1777, 122
        %v1800 = vpop.permute.xlu0 %1799
        %1801 = vrot.lane.b32.xlu0 %v1778, 122
        %v1802 = vpop.permute.xlu0 %1801
        %1803 = vrot.lane.b32.xlu0 %v1779, 122
        %v1804 = vpop.permute.xlu0 %1803
        %1813 = vrot.lane.b32.xlu0 %v1772, 2
        %v1814 = vpop.permute.xlu0 %1813
        %1815 = vrot.lane.b32.xlu0 %v1773, 2
        %v1816 = vpop.permute.xlu0 %1815
        %1817 = vrot.lane.b32.xlu0 %v1774, 2
        %v1818 = vpop.permute.xlu0 %1817
        %1819 = vrot.lane.b32.xlu0 %v1775, 2
        %v1820 = vpop.permute.xlu0 %1819
        %1821 = vrot.lane.b32.xlu0 %v1776, 2
        %v1822 = vpop.permute.xlu0 %1821
        %1823 = vrot.lane.b32.xlu0 %v1777, 2
        %v1824 = vpop.permute.xlu0 %1823
        %1825 = vrot.lane.b32.xlu0 %v1778, 2
        %v1826 = vpop.permute.xlu0 %1825
        %1827 = vrot.lane.b32.xlu0 %v1779, 2
        %v1828 = vpop.permute.xlu0 %1827
        %vm1837 = vcmask 15360
        %v1838 = vsel %vm1837, %v1790, %v1814
        %v1839 = vsel %vm1837, %v1792, %v1816
        %v1840 = vsel %vm1837, %v1794, %v1818
        %v1841 = vsel %vm1837, %v1796, %v1820
        %v1842 = vsel %vm1837, %v1798, %v1822
        %v1843 = vsel %vm1837, %v1800, %v1824
        %v1844 = vsel %vm1837, %v1802, %v1826
        %v1845 = vsel %vm1837, %v1804, %v1828
        %v1846 = vsel %vm1780, 1, 0
        %vm1847 = vcmp.eq.s32.totalorder %v1846, 1
        %v1848 = vsel %vm1847, %v1838, %v1772
        %v1849 = vsel %vm1847, %v1839, %v1773
        %v1850 = vsel %vm1847, %v1840, %v1774
        %v1851 = vsel %vm1847, %v1841, %v1775
        %v1852 = vsel %vm1847, %v1842, %v1776
        %v1853 = vsel %vm1847, %v1843, %v1777
        %v1854 = vsel %vm1847, %v1844, %v1778
        %v1855 = vsel %vm1847, %v1845, %v1779
        %vm1856 = vcmp.le.s32.totalorder %v1657, 5
        %1857 = vrot.lane.b32.xlu0 %v1772, 126
        %v1858 = vpop.permute.xlu0 %1857
        %1859 = vrot.lane.b32.xlu0 %v1773, 126
        %v1860 = vpop.permute.xlu0 %1859
        %1861 = vrot.lane.b32.xlu0 %v1774, 126
        %v1862 = vpop.permute.xlu0 %1861
        %1863 = vrot.lane.b32.xlu0 %v1775, 126
        %v1864 = vpop.permute.xlu0 %1863
        %1865 = vrot.lane.b32.xlu0 %v1776, 126
        %v1866 = vpop.permute.xlu0 %1865
        %1867 = vrot.lane.b32.xlu0 %v1777, 126
        %v1868 = vpop.permute.xlu0 %1867
        %1869 = vrot.lane.b32.xlu0 %v1778, 126
        %v1870 = vpop.permute.xlu0 %1869
        %1871 = vrot.lane.b32.xlu0 %v1779, 126
        %v1872 = vpop.permute.xlu0 %1871
        %1881 = vrot.lane.b32.xlu0 %v1772, 6
        %v1882 = vpop.permute.xlu0 %1881
        %1883 = vrot.lane.b32.xlu0 %v1773, 6
        %v1884 = vpop.permute.xlu0 %1883
        %1885 = vrot.lane.b32.xlu0 %v1774, 6
        %v1886 = vpop.permute.xlu0 %1885
        %1887 = vrot.lane.b32.xlu0 %v1775, 6
        %v1888 = vpop.permute.xlu0 %1887
        %1889 = vrot.lane.b32.xlu0 %v1776, 6
        %v1890 = vpop.permute.xlu0 %1889
        %1891 = vrot.lane.b32.xlu0 %v1777, 6
        %v1892 = vpop.permute.xlu0 %1891
        %1893 = vrot.lane.b32.xlu0 %v1778, 6
        %v1894 = vpop.permute.xlu0 %1893
        %1895 = vrot.lane.b32.xlu0 %v1779, 6
        %v1896 = vpop.permute.xlu0 %1895
        %vm1905 = vcmask 48128
        %v1906 = vsel %vm1905, %v1858, %v1882
        %v1907 = vsel %vm1905, %v1860, %v1884
        %v1908 = vsel %vm1905, %v1862, %v1886
        %v1909 = vsel %vm1905, %v1864, %v1888
        %v1910 = vsel %vm1905, %v1866, %v1890
        %v1911 = vsel %vm1905, %v1868, %v1892
        %v1912 = vsel %vm1905, %v1870, %v1894
        %v1913 = vsel %vm1905, %v1872, %v1896
        %v1914 = vsel %vm1856, 1, 0
        %vm1915 = vcmp.eq.s32.totalorder %v1914, 1
        %v1916 = vsel %vm1915, %v1906, %v1772
        %v1917 = vsel %vm1915, %v1907, %v1773
        %v1918 = vsel %vm1915, %v1908, %v1774
        %v1919 = vsel %vm1915, %v1909, %v1775
        %v1920 = vsel %vm1915, %v1910, %v1776
        %v1921 = vsel %vm1915, %v1911, %v1777
        %v1922 = vsel %vm1915, %v1912, %v1778
        %v1923 = vsel %vm1915, %v1913, %v1779
        %v1924 = vmul.f32 %v1848, 0.25
        %v1925 = vmul.f32 %v1849, 0.25
        %v1926 = vmul.f32 %v1850, 0.25
        %v1927 = vmul.f32 %v1851, 0.25
        %v1928 = vmul.f32 %v1852, 0.25
        %v1929 = vmul.f32 %v1853, 0.25
        %v1930 = vmul.f32 %v1854, 0.25
        %v1931 = vmul.f32 %v1855, 0.25
        %v1932 = vmul.f32 %v1772, 0.75
        %v1933 = vmul.f32 %v1773, 0.75
        %v1934 = vmul.f32 %v1774, 0.75
        %v1935 = vmul.f32 %v1775, 0.75
        %v1936 = vmul.f32 %v1776, 0.75
        %v1937 = vmul.f32 %v1777, 0.75
        %v1938 = vmul.f32 %v1778, 0.75
        %v1939 = vmul.f32 %v1779, 0.75
        %v1940 = vadd.f32 %v1924, %v1932
        %v1941 = vadd.f32 %v1925, %v1933
        %v1942 = vadd.f32 %v1926, %v1934
        %v1943 = vadd.f32 %v1927, %v1935
        %v1944 = vadd.f32 %v1928, %v1936
        %v1945 = vadd.f32 %v1929, %v1937
        %v1946 = vadd.f32 %v1930, %v1938
        %v1947 = vadd.f32 %v1931, %v1939
        %v1948 = vmul.f32 %v1916, 0.25
        %v1949 = vmul.f32 %v1917, 0.25
        %v1950 = vmul.f32 %v1918, 0.25
        %v1951 = vmul.f32 %v1919, 0.25
        %v1952 = vmul.f32 %v1920, 0.25
        %v1953 = vmul.f32 %v1921, 0.25
        %v1954 = vmul.f32 %v1922, 0.25
        %v1955 = vmul.f32 %v1923, 0.25
        %v1956 = vadd.f32 %v1932, %v1948
        %v1957 = vadd.f32 %v1933, %v1949
        %v1958 = vadd.f32 %v1934, %v1950
        %v1959 = vadd.f32 %v1935, %v1951
        %v1960 = vadd.f32 %v1936, %v1952
        %v1961 = vadd.f32 %v1937, %v1953
        %v1962 = vadd.f32 %v1938, %v1954
        %v1963 = vadd.f32 %v1939, %v1955
        %v1964 = vsel %vm1728, %v1940, %v1956
        %v1965 = vsel %vm1728, %v1941, %v1957
        %v1966 = vsel %vm1728, %v1942, %v1958
        %v1967 = vsel %vm1728, %v1943, %v1959
        %v1968 = vsel %vm1728, %v1944, %v1960
        %v1969 = vsel %vm1728, %v1945, %v1961
        %v1970 = vsel %vm1728, %v1946, %v1962
        %v1971 = vsel %vm1728, %v1947, %v1963
        %vm1972 = vcmp.ge.s32.totalorder %v1655, 2
        %v1981 = vrot.slane %v1964, 6
        %v1982 = vrot.slane %v1965, 6
        %v1983 = vrot.slane %v1966, 6
        %v1984 = vrot.slane %v1967, 6
        %v1985 = vrot.slane %v1968, 6
        %v1986 = vrot.slane %v1969, 6
        %v1987 = vrot.slane %v1970, 6
        %v1988 = vrot.slane %v1971, 6
        %vm1997 = vcmask 1041408
        %v1998 = vsel %vm1997, %v1981, %v1981
        %v1999 = vsel %vm1997, %v1982, %v1982
        %v2000 = vsel %vm1997, %v1983, %v1983
        %v2001 = vsel %vm1997, %v1984, %v1984
        %v2002 = vsel %vm1997, %v1985, %v1985
        %v2003 = vsel %vm1997, %v1986, %v1986
        %v2004 = vsel %vm1997, %v1987, %v1987
        %v2005 = vsel %vm1997, %v1988, %v1988
        %v2006 = vsel %vm1972, 1, 0
        %vm2007 = vcmp.eq.s32.totalorder %v2006, 1
        %v2008 = vsel %vm2007, %v1998, %v1964
        %v2009 = vsel %vm2007, %v1999, %v1965
        %v2010 = vsel %vm2007, %v2000, %v1966
        %v2011 = vsel %vm2007, %v2001, %v1967
        %v2012 = vsel %vm2007, %v2002, %v1968
        %v2013 = vsel %vm2007, %v2003, %v1969
        %v2014 = vsel %vm2007, %v2004, %v1970
        %v2015 = vsel %vm2007, %v2005, %v1971
        %vm2016 = vcmp.le.s32.totalorder %v1655, 5
        %v2017 = vrot.slane %v1964, 2
        %v2018 = vrot.slane %v1965, 2
        %v2019 = vrot.slane %v1966, 2
        %v2020 = vrot.slane %v1967, 2
        %v2021 = vrot.slane %v1968, 2
        %v2022 = vrot.slane %v1969, 2
        %v2023 = vrot.slane %v1970, 2
        %v2024 = vrot.slane %v1971, 2
        %vm2033 = vcmask 1045504
        %v2034 = vsel %vm2033, %v2017, %v2017
        %v2035 = vsel %vm2033, %v2018, %v2018
        %v2036 = vsel %vm2033, %v2019, %v2019
        %v2037 = vsel %vm2033, %v2020, %v2020
        %v2038 = vsel %vm2033, %v2021, %v2021
        %v2039 = vsel %vm2033, %v2022, %v2022
        %v2040 = vsel %vm2033, %v2023, %v2023
        %v2041 = vsel %vm2033, %v2024, %v2024
        %v2042 = vsel %vm2016, 1, 0
        %vm2043 = vcmp.eq.s32.totalorder %v2042, 1
        %v2044 = vsel %vm2043, %v2034, %v1964
        %v2045 = vsel %vm2043, %v2035, %v1965
        %v2046 = vsel %vm2043, %v2036, %v1966
        %v2047 = vsel %vm2043, %v2037, %v1967
        %v2048 = vsel %vm2043, %v2038, %v1968
        %v2049 = vsel %vm2043, %v2039, %v1969
        %v2050 = vsel %vm2043, %v2040, %v1970
        %v2051 = vsel %vm2043, %v2041, %v1971
        %v2052 = vmul.f32 %v2008, 0.25
        %v2053 = vmul.f32 %v2009, 0.25
        %v2054 = vmul.f32 %v2010, 0.25
        %v2055 = vmul.f32 %v2011, 0.25
        %v2056 = vmul.f32 %v2012, 0.25
        %v2057 = vmul.f32 %v2013, 0.25
        %v2058 = vmul.f32 %v2014, 0.25
        %v2059 = vmul.f32 %v2015, 0.25
        %v2060 = vmul.f32 %v1964, 0.75
        %v2061 = vmul.f32 %v1965, 0.75
        %v2062 = vmul.f32 %v1966, 0.75
        %v2063 = vmul.f32 %v1967, 0.75
        %v2064 = vmul.f32 %v1968, 0.75
        %v2065 = vmul.f32 %v1969, 0.75
        %v2066 = vmul.f32 %v1970, 0.75
        %v2067 = vmul.f32 %v1971, 0.75
        %v2068 = vadd.f32 %v2052, %v2060
        %v2069 = vadd.f32 %v2053, %v2061
        %v2070 = vadd.f32 %v2054, %v2062
        %v2071 = vadd.f32 %v2055, %v2063
        %v2072 = vadd.f32 %v2056, %v2064
        %v2073 = vadd.f32 %v2057, %v2065
        %v2074 = vadd.f32 %v2058, %v2066
        %v2075 = vadd.f32 %v2059, %v2067
        %v2076 = vmul.f32 %v2044, 0.25
        %v2077 = vmul.f32 %v2045, 0.25
        %v2078 = vmul.f32 %v2046, 0.25
        %v2079 = vmul.f32 %v2047, 0.25
        %v2080 = vmul.f32 %v2048, 0.25
        %v2081 = vmul.f32 %v2049, 0.25
        %v2082 = vmul.f32 %v2050, 0.25
        %v2083 = vmul.f32 %v2051, 0.25
        %v2084 = vadd.f32 %v2060, %v2076
        %v2085 = vadd.f32 %v2061, %v2077
        %v2086 = vadd.f32 %v2062, %v2078
        %v2087 = vadd.f32 %v2063, %v2079
        %v2088 = vadd.f32 %v2064, %v2080
        %v2089 = vadd.f32 %v2065, %v2081
        %v2090 = vadd.f32 %v2066, %v2082
        %v2091 = vadd.f32 %v2067, %v2083
        %v2092 = vsel %vm1771, %v2068, %v2084
        %v2093 = vsel %vm1771, %v2069, %v2085
        %v2094 = vsel %vm1771, %v2070, %v2086
        %v2095 = vsel %vm1771, %v2071, %v2087
        %v2096 = vsel %vm1771, %v2072, %v2088
        %v2097 = vsel %vm1771, %v2073, %v2089
        %v2098 = vsel %vm1771, %v2074, %v2090
        %v2099 = vsel %vm1771, %v2075, %v2091
        %s2100 = sld [smem:[#allocation11]]
        %v2101 = vstv %s2100
        %v2102 = vmul.f32 %v2101, %v1007
        %s2103 = sld [smem:[#allocation11 + $0x1]]
        %v2104 = vstv %s2103
        %v2105 = vmul.f32 %v2104, %v1083
        %v2106 = vadd.f32 %v2102, %v2105
        %s2107 = sld [smem:[#allocation11 + $0x2]]
        %v2108 = vstv %s2107
        %v2109 = vmul.f32 %v2108, %v1159
        %v2110 = vadd.f32 %v2106, %v2109
        %s2111 = sld [smem:[#allocation11 + $0x3]]
        %v2112 = vstv %s2111
        %v2113 = vmul.f32 %v2112, %v1235
        %v2114 = vadd.f32 %v2110, %v2113
        %s2115 = sld [smem:[#allocation11 + $0x4]]
        %v2116 = vstv %s2115
        %v2117 = vmul.f32 %v2116, %v1311
        %v2118 = vadd.f32 %v2114, %v2117
        %s2119 = sld [smem:[#allocation11 + $0x5]]
        %v2120 = vstv %s2119
        %v2121 = vmul.f32 %v2120, %v1387
        %v2122 = vadd.f32 %v2118, %v2121
        %s2123 = sld [smem:[#allocation11 + $0x6]]
        %v2124 = vstv %s2123
        %v2125 = vmul.f32 %v2124, %v1463
        %v2126 = vadd.f32 %v2122, %v2125
        %s2127 = sld [smem:[#allocation11 + $0x7]]
        %v2128 = vstv %s2127
        %v2129 = vmul.f32 %v2128, %v1539
        %v2130 = vadd.f32 %v2126, %v2129
        %s2131 = sld [smem:[#allocation12]]
        %v2132 = vstv %s2131
        %v2133 = vmul.f32 %v2132, %v2092
        %s2134 = sld [smem:[#allocation12 + $0x1]]
        %v2135 = vstv %s2134
        %v2136 = vmul.f32 %v2135, %v2093
        %v2137 = vadd.f32 %v2133, %v2136
        %s2138 = sld [smem:[#allocation12 + $0x2]]
        %v2139 = vstv %s2138
        %v2140 = vmul.f32 %v2139, %v2094
        %v2141 = vadd.f32 %v2137, %v2140
        %s2142 = sld [smem:[#allocation12 + $0x3]]
        %v2143 = vstv %s2142
        %v2144 = vmul.f32 %v2143, %v2095
        %v2145 = vadd.f32 %v2141, %v2144
        %s2146 = sld [smem:[#allocation12 + $0x4]]
        %v2147 = vstv %s2146
        %v2148 = vmul.f32 %v2147, %v2096
        %v2149 = vadd.f32 %v2145, %v2148
        %s2150 = sld [smem:[#allocation12 + $0x5]]
        %v2151 = vstv %s2150
        %v2152 = vmul.f32 %v2151, %v2097
        %v2153 = vadd.f32 %v2149, %v2152
        %s2154 = sld [smem:[#allocation12 + $0x6]]
        %v2155 = vstv %s2154
        %v2156 = vmul.f32 %v2155, %v2098
        %v2157 = vadd.f32 %v2153, %v2156
        %s2158 = sld [smem:[#allocation12 + $0x7]]
        %v2159 = vstv %s2158
        %v2160 = vmul.f32 %v2159, %v2099
        %v2161 = vadd.f32 %v2157, %v2160
        %v2162 = vadd.f32 %v2130, %v2161
        %s2163 = sld [smem:[#allocation14 + $0xe]]
        %v2164 = vstv %s2163
        %v2165 = vadd.f32 %v2162, %v2164
        %s2166 = sld [smem:[#allocation11 + $0x80]]
        %v2167 = vstv %s2166
        %v2168 = vmul.f32 %v2167, %v1007
        %s2169 = sld [smem:[#allocation11 + $0x81]]
        %v2170 = vstv %s2169
        %v2171 = vmul.f32 %v2170, %v1083
        %v2172 = vadd.f32 %v2168, %v2171
        %s2173 = sld [smem:[#allocation11 + $0x82]]
        %v2174 = vstv %s2173
        %v2175 = vmul.f32 %v2174, %v1159
        %v2176 = vadd.f32 %v2172, %v2175
        %s2177 = sld [smem:[#allocation11 + $0x83]]
        %v2178 = vstv %s2177
        %v2179 = vmul.f32 %v2178, %v1235
        %v2180 = vadd.f32 %v2176, %v2179
        %s2181 = sld [smem:[#allocation11 + $0x84]]
        %v2182 = vstv %s2181
        %v2183 = vmul.f32 %v2182, %v1311
        %v2184 = vadd.f32 %v2180, %v2183
        %s2185 = sld [smem:[#allocation11 + $0x85]]
        %v2186 = vstv %s2185
        %v2187 = vmul.f32 %v2186, %v1387
        %v2188 = vadd.f32 %v2184, %v2187
        %s2189 = sld [smem:[#allocation11 + $0x86]]
        %v2190 = vstv %s2189
        %v2191 = vmul.f32 %v2190, %v1463
        %v2192 = vadd.f32 %v2188, %v2191
        %s2193 = sld [smem:[#allocation11 + $0x87]]
        %v2194 = vstv %s2193
        %v2195 = vmul.f32 %v2194, %v1539
        %v2196 = vadd.f32 %v2192, %v2195
        %s2197 = sld [smem:[#allocation12 + $0x80]]
        %v2198 = vstv %s2197
        %v2199 = vmul.f32 %v2198, %v2092
        %s2200 = sld [smem:[#allocation12 + $0x81]]
        %v2201 = vstv %s2200
        %v2202 = vmul.f32 %v2201, %v2093
        %v2203 = vadd.f32 %v2199, %v2202
        %s2204 = sld [smem:[#allocation12 + $0x82]]
        %v2205 = vstv %s2204
        %v2206 = vmul.f32 %v2205, %v2094
        %v2207 = vadd.f32 %v2203, %v2206
        %s2208 = sld [smem:[#allocation12 + $0x83]]
        %v2209 = vstv %s2208
        %v2210 = vmul.f32 %v2209, %v2095
        %v2211 = vadd.f32 %v2207, %v2210
        %s2212 = sld [smem:[#allocation12 + $0x84]]
        %v2213 = vstv %s2212
        %v2214 = vmul.f32 %v2213, %v2096
        %v2215 = vadd.f32 %v2211, %v2214
        %s2216 = sld [smem:[#allocation12 + $0x85]]
        %v2217 = vstv %s2216
        %v2218 = vmul.f32 %v2217, %v2097
        %v2219 = vadd.f32 %v2215, %v2218
        %s2220 = sld [smem:[#allocation12 + $0x86]]
        %v2221 = vstv %s2220
        %v2222 = vmul.f32 %v2221, %v2098
        %v2223 = vadd.f32 %v2219, %v2222
        %s2224 = sld [smem:[#allocation12 + $0x87]]
        %v2225 = vstv %s2224
        %v2226 = vmul.f32 %v2225, %v2099
        %v2227 = vadd.f32 %v2223, %v2226
        %v2228 = vadd.f32 %v2196, %v2227
        %s2229 = sld [smem:[#allocation14 + $0x8e]]
        %v2230 = vstv %s2229
        %v2231 = vadd.f32 %v2228, %v2230
        %s2232 = sld [smem:[#allocation11 + $0x100]]
        %v2233 = vstv %s2232
        %v2234 = vmul.f32 %v2233, %v1007
        %s2235 = sld [smem:[#allocation11 + $0x101]]
        %v2236 = vstv %s2235
        %v2237 = vmul.f32 %v2236, %v1083
        %v2238 = vadd.f32 %v2234, %v2237
        %s2239 = sld [smem:[#allocation11 + $0x102]]
        %v2240 = vstv %s2239
        %v2241 = vmul.f32 %v2240, %v1159
        %v2242 = vadd.f32 %v2238, %v2241
        %s2243 = sld [smem:[#allocation11 + $0x103]]
        %v2244 = vstv %s2243
        %v2245 = vmul.f32 %v2244, %v1235
        %v2246 = vadd.f32 %v2242, %v2245
        %s2247 = sld [smem:[#allocation11 + $0x104]]
        %v2248 = vstv %s2247
        %v2249 = vmul.f32 %v2248, %v1311
        %v2250 = vadd.f32 %v2246, %v2249
        %s2251 = sld [smem:[#allocation11 + $0x105]]
        %v2252 = vstv %s2251
        %v2253 = vmul.f32 %v2252, %v1387
        %v2254 = vadd.f32 %v2250, %v2253
        %s2255 = sld [smem:[#allocation11 + $0x106]]
        %v2256 = vstv %s2255
        %v2257 = vmul.f32 %v2256, %v1463
        %v2258 = vadd.f32 %v2254, %v2257
        %s2259 = sld [smem:[#allocation11 + $0x107]]
        %v2260 = vstv %s2259
        %v2261 = vmul.f32 %v2260, %v1539
        %v2262 = vadd.f32 %v2258, %v2261
        %s2263 = sld [smem:[#allocation12 + $0x100]]
        %v2264 = vstv %s2263
        %v2265 = vmul.f32 %v2264, %v2092
        %s2266 = sld [smem:[#allocation12 + $0x101]]
        %v2267 = vstv %s2266
        %v2268 = vmul.f32 %v2267, %v2093
        %v2269 = vadd.f32 %v2265, %v2268
        %s2270 = sld [smem:[#allocation12 + $0x102]]
        %v2271 = vstv %s2270
        %v2272 = vmul.f32 %v2271, %v2094
        %v2273 = vadd.f32 %v2269, %v2272
        %s2274 = sld [smem:[#allocation12 + $0x103]]
        %v2275 = vstv %s2274
        %v2276 = vmul.f32 %v2275, %v2095
        %v2277 = vadd.f32 %v2273, %v2276
        %s2278 = sld [smem:[#allocation12 + $0x104]]
        %v2279 = vstv %s2278
        %v2280 = vmul.f32 %v2279, %v2096
        %v2281 = vadd.f32 %v2277, %v2280
        %s2282 = sld [smem:[#allocation12 + $0x105]]
        %v2283 = vstv %s2282
        %v2284 = vmul.f32 %v2283, %v2097
        %v2285 = vadd.f32 %v2281, %v2284
        %s2286 = sld [smem:[#allocation12 + $0x106]]
        %v2287 = vstv %s2286
        %v2288 = vmul.f32 %v2287, %v2098
        %v2289 = vadd.f32 %v2285, %v2288
        %s2290 = sld [smem:[#allocation12 + $0x107]]
        %v2291 = vstv %s2290
        %v2292 = vmul.f32 %v2291, %v2099
        %v2293 = vadd.f32 %v2289, %v2292
        %v2294 = vadd.f32 %v2262, %v2293
        %s2295 = sld [smem:[#allocation14 + $0x10e]]
        %v2296 = vstv %s2295
        %v2297 = vadd.f32 %v2294, %v2296
        %s2298 = sld [smem:[#allocation11 + $0x180]]
        %v2299 = vstv %s2298
        %v2300 = vmul.f32 %v2299, %v1007
        %s2301 = sld [smem:[#allocation11 + $0x181]]
        %v2302 = vstv %s2301
        %v2303 = vmul.f32 %v2302, %v1083
        %v2304 = vadd.f32 %v2300, %v2303
        %s2305 = sld [smem:[#allocation11 + $0x182]]
        %v2306 = vstv %s2305
        %v2307 = vmul.f32 %v2306, %v1159
        %v2308 = vadd.f32 %v2304, %v2307
        %s2309 = sld [smem:[#allocation11 + $0x183]]
        %v2310 = vstv %s2309
        %v2311 = vmul.f32 %v2310, %v1235
        %v2312 = vadd.f32 %v2308, %v2311
        %s2313 = sld [smem:[#allocation11 + $0x184]]
        %v2314 = vstv %s2313
        %v2315 = vmul.f32 %v2314, %v1311
        %v2316 = vadd.f32 %v2312, %v2315
        %s2317 = sld [smem:[#allocation11 + $0x185]]
        %v2318 = vstv %s2317
        %v2319 = vmul.f32 %v2318, %v1387
        %v2320 = vadd.f32 %v2316, %v2319
        %s2321 = sld [smem:[#allocation11 + $0x186]]
        %v2322 = vstv %s2321
        %v2323 = vmul.f32 %v2322, %v1463
        %v2324 = vadd.f32 %v2320, %v2323
        %s2325 = sld [smem:[#allocation11 + $0x187]]
        %v2326 = vstv %s2325
        %v2327 = vmul.f32 %v2326, %v1539
        %v2328 = vadd.f32 %v2324, %v2327
        %s2329 = sld [smem:[#allocation12 + $0x180]]
        %v2330 = vstv %s2329
        %v2331 = vmul.f32 %v2330, %v2092
        %s2332 = sld [smem:[#allocation12 + $0x181]]
        %v2333 = vstv %s2332
        %v2334 = vmul.f32 %v2333, %v2093
        %v2335 = vadd.f32 %v2331, %v2334
        %s2336 = sld [smem:[#allocation12 + $0x182]]
        %v2337 = vstv %s2336
        %v2338 = vmul.f32 %v2337, %v2094
        %v2339 = vadd.f32 %v2335, %v2338
        %s2340 = sld [smem:[#allocation12 + $0x183]]
        %v2341 = vstv %s2340
        %v2342 = vmul.f32 %v2341, %v2095
        %v2343 = vadd.f32 %v2339, %v2342
        %s2344 = sld [smem:[#allocation12 + $0x184]]
        %v2345 = vstv %s2344
        %v2346 = vmul.f32 %v2345, %v2096
        %v2347 = vadd.f32 %v2343, %v2346
        %s2348 = sld [smem:[#allocation12 + $0x185]]
        %v2349 = vstv %s2348
        %v2350 = vmul.f32 %v2349, %v2097
        %v2351 = vadd.f32 %v2347, %v2350
        %s2352 = sld [smem:[#allocation12 + $0x186]]
        %v2353 = vstv %s2352
        %v2354 = vmul.f32 %v2353, %v2098
        %v2355 = vadd.f32 %v2351, %v2354
        %s2356 = sld [smem:[#allocation12 + $0x187]]
        %v2357 = vstv %s2356
        %v2358 = vmul.f32 %v2357, %v2099
        %v2359 = vadd.f32 %v2355, %v2358
        %v2360 = vadd.f32 %v2328, %v2359
        %s2361 = sld [smem:[#allocation14 + $0x18e]]
        %v2362 = vstv %s2361
        %v2363 = vadd.f32 %v2360, %v2362
        %s2364 = sld [smem:[#allocation11 + $0x200]]
        %v2365 = vstv %s2364
        %v2366 = vmul.f32 %v2365, %v1007
        %s2367 = sld [smem:[#allocation11 + $0x201]]
        %v2368 = vstv %s2367
        %v2369 = vmul.f32 %v2368, %v1083
        %v2370 = vadd.f32 %v2366, %v2369
        %s2371 = sld [smem:[#allocation11 + $0x202]]
        %v2372 = vstv %s2371
        %v2373 = vmul.f32 %v2372, %v1159
        %v2374 = vadd.f32 %v2370, %v2373
        %s2375 = sld [smem:[#allocation11 + $0x203]]
        %v2376 = vstv %s2375
        %v2377 = vmul.f32 %v2376, %v1235
        %v2378 = vadd.f32 %v2374, %v2377
        %s2379 = sld [smem:[#allocation11 + $0x204]]
        %v2380 = vstv %s2379
        %v2381 = vmul.f32 %v2380, %v1311
        %v2382 = vadd.f32 %v2378, %v2381
        %s2383 = sld [smem:[#allocation11 + $0x205]]
        %v2384 = vstv %s2383
        %v2385 = vmul.f32 %v2384, %v1387
        %v2386 = vadd.f32 %v2382, %v2385
        %s2387 = sld [smem:[#allocation11 + $0x206]]
        %v2388 = vstv %s2387
        %v2389 = vmul.f32 %v2388, %v1463
        %v2390 = vadd.f32 %v2386, %v2389
        %s2391 = sld [smem:[#allocation11 + $0x207]]
        %v2392 = vstv %s2391
        %v2393 = vmul.f32 %v2392, %v1539
        %v2394 = vadd.f32 %v2390, %v2393
        %s2395 = sld [smem:[#allocation12 + $0x200]]
        %v2396 = vstv %s2395
        %v2397 = vmul.f32 %v2396, %v2092
        %s2398 = sld [smem:[#allocation12 + $0x201]]
        %v2399 = vstv %s2398
        %v2400 = vmul.f32 %v2399, %v2093
        %v2401 = vadd.f32 %v2397, %v2400
        %s2402 = sld [smem:[#allocation12 + $0x202]]
        %v2403 = vstv %s2402
        %v2404 = vmul.f32 %v2403, %v2094
        %v2405 = vadd.f32 %v2401, %v2404
        %s2406 = sld [smem:[#allocation12 + $0x203]]
        %v2407 = vstv %s2406
        %v2408 = vmul.f32 %v2407, %v2095
        %v2409 = vadd.f32 %v2405, %v2408
        %s2410 = sld [smem:[#allocation12 + $0x204]]
        %v2411 = vstv %s2410
        %v2412 = vmul.f32 %v2411, %v2096
        %v2413 = vadd.f32 %v2409, %v2412
        %s2414 = sld [smem:[#allocation12 + $0x205]]
        %v2415 = vstv %s2414
        %v2416 = vmul.f32 %v2415, %v2097
        %v2417 = vadd.f32 %v2413, %v2416
        %s2418 = sld [smem:[#allocation12 + $0x206]]
        %v2419 = vstv %s2418
        %v2420 = vmul.f32 %v2419, %v2098
        %v2421 = vadd.f32 %v2417, %v2420
        %s2422 = sld [smem:[#allocation12 + $0x207]]
        %v2423 = vstv %s2422
        %v2424 = vmul.f32 %v2423, %v2099
        %v2425 = vadd.f32 %v2421, %v2424
        %v2426 = vadd.f32 %v2394, %v2425
        %s2427 = sld [smem:[#allocation14 + $0x20e]]
        %v2428 = vstv %s2427
        %v2429 = vadd.f32 %v2426, %v2428
        %s2430 = sld [smem:[#allocation11 + $0x280]]
        %v2431 = vstv %s2430
        %v2432 = vmul.f32 %v2431, %v1007
        %s2433 = sld [smem:[#allocation11 + $0x281]]
        %v2434 = vstv %s2433
        %v2435 = vmul.f32 %v2434, %v1083
        %v2436 = vadd.f32 %v2432, %v2435
        %s2437 = sld [smem:[#allocation11 + $0x282]]
        %v2438 = vstv %s2437
        %v2439 = vmul.f32 %v2438, %v1159
        %v2440 = vadd.f32 %v2436, %v2439
        %s2441 = sld [smem:[#allocation11 + $0x283]]
        %v2442 = vstv %s2441
        %v2443 = vmul.f32 %v2442, %v1235
        %v2444 = vadd.f32 %v2440, %v2443
        %s2445 = sld [smem:[#allocation11 + $0x284]]
        %v2446 = vstv %s2445
        %v2447 = vmul.f32 %v2446, %v1311
        %v2448 = vadd.f32 %v2444, %v2447
        %s2449 = sld [smem:[#allocation11 + $0x285]]
        %v2450 = vstv %s2449
        %v2451 = vmul.f32 %v2450, %v1387
        %v2452 = vadd.f32 %v2448, %v2451
        %s2453 = sld [smem:[#allocation11 + $0x286]]
        %v2454 = vstv %s2453
        %v2455 = vmul.f32 %v2454, %v1463
        %v2456 = vadd.f32 %v2452, %v2455
        %s2457 = sld [smem:[#allocation11 + $0x287]]
        %v2458 = vstv %s2457
        %v2459 = vmul.f32 %v2458, %v1539
        %v2460 = vadd.f32 %v2456, %v2459
        %s2461 = sld [smem:[#allocation12 + $0x280]]
        %v2462 = vstv %s2461
        %v2463 = vmul.f32 %v2462, %v2092
        %s2464 = sld [smem:[#allocation12 + $0x281]]
        %v2465 = vstv %s2464
        %v2466 = vmul.f32 %v2465, %v2093
        %v2467 = vadd.f32 %v2463, %v2466
        %s2468 = sld [smem:[#allocation12 + $0x282]]
        %v2469 = vstv %s2468
        %v2470 = vmul.f32 %v2469, %v2094
        %v2471 = vadd.f32 %v2467, %v2470
        %s2472 = sld [smem:[#allocation12 + $0x283]]
        %v2473 = vstv %s2472
        %v2474 = vmul.f32 %v2473, %v2095
        %v2475 = vadd.f32 %v2471, %v2474
        %s2476 = sld [smem:[#allocation12 + $0x284]]
        %v2477 = vstv %s2476
        %v2478 = vmul.f32 %v2477, %v2096
        %v2479 = vadd.f32 %v2475, %v2478
        %s2480 = sld [smem:[#allocation12 + $0x285]]
        %v2481 = vstv %s2480
        %v2482 = vmul.f32 %v2481, %v2097
        %v2483 = vadd.f32 %v2479, %v2482
        %s2484 = sld [smem:[#allocation12 + $0x286]]
        %v2485 = vstv %s2484
        %v2486 = vmul.f32 %v2485, %v2098
        %v2487 = vadd.f32 %v2483, %v2486
        %s2488 = sld [smem:[#allocation12 + $0x287]]
        %v2489 = vstv %s2488
        %v2490 = vmul.f32 %v2489, %v2099
        %v2491 = vadd.f32 %v2487, %v2490
        %v2492 = vadd.f32 %v2460, %v2491
        %s2493 = sld [smem:[#allocation14 + $0x28e]]
        %v2494 = vstv %s2493
        %v2495 = vadd.f32 %v2492, %v2494
        %s2496 = sld [smem:[#allocation11 + $0x300]]
        %v2497 = vstv %s2496
        %v2498 = vmul.f32 %v2497, %v1007
        %s2499 = sld [smem:[#allocation11 + $0x301]]
        %v2500 = vstv %s2499
        %v2501 = vmul.f32 %v2500, %v1083
        %v2502 = vadd.f32 %v2498, %v2501
        %s2503 = sld [smem:[#allocation11 + $0x302]]
        %v2504 = vstv %s2503
        %v2505 = vmul.f32 %v2504, %v1159
        %v2506 = vadd.f32 %v2502, %v2505
        %s2507 = sld [smem:[#allocation11 + $0x303]]
        %v2508 = vstv %s2507
        %v2509 = vmul.f32 %v2508, %v1235
        %v2510 = vadd.f32 %v2506, %v2509
        %s2511 = sld [smem:[#allocation11 + $0x304]]
        %v2512 = vstv %s2511
        %v2513 = vmul.f32 %v2512, %v1311
        %v2514 = vadd.f32 %v2510, %v2513
        %s2515 = sld [smem:[#allocation11 + $0x305]]
        %v2516 = vstv %s2515
        %v2517 = vmul.f32 %v2516, %v1387
        %v2518 = vadd.f32 %v2514, %v2517
        %s2519 = sld [smem:[#allocation11 + $0x306]]
        %v2520 = vstv %s2519
        %v2521 = vmul.f32 %v2520, %v1463
        %v2522 = vadd.f32 %v2518, %v2521
        %s2523 = sld [smem:[#allocation11 + $0x307]]
        %v2524 = vstv %s2523
        %v2525 = vmul.f32 %v2524, %v1539
        %v2526 = vadd.f32 %v2522, %v2525
        %s2527 = sld [smem:[#allocation12 + $0x300]]
        %v2528 = vstv %s2527
        %v2529 = vmul.f32 %v2528, %v2092
        %s2530 = sld [smem:[#allocation12 + $0x301]]
        %v2531 = vstv %s2530
        %v2532 = vmul.f32 %v2531, %v2093
        %v2533 = vadd.f32 %v2529, %v2532
        %s2534 = sld [smem:[#allocation12 + $0x302]]
        %v2535 = vstv %s2534
        %v2536 = vmul.f32 %v2535, %v2094
        %v2537 = vadd.f32 %v2533, %v2536
        %s2538 = sld [smem:[#allocation12 + $0x303]]
        %v2539 = vstv %s2538
        %v2540 = vmul.f32 %v2539, %v2095
        %v2541 = vadd.f32 %v2537, %v2540
        %s2542 = sld [smem:[#allocation12 + $0x304]]
        %v2543 = vstv %s2542
        %v2544 = vmul.f32 %v2543, %v2096
        %v2545 = vadd.f32 %v2541, %v2544
        %s2546 = sld [smem:[#allocation12 + $0x305]]
        %v2547 = vstv %s2546
        %v2548 = vmul.f32 %v2547, %v2097
        %v2549 = vadd.f32 %v2545, %v2548
        %s2550 = sld [smem:[#allocation12 + $0x306]]
        %v2551 = vstv %s2550
        %v2552 = vmul.f32 %v2551, %v2098
        %v2553 = vadd.f32 %v2549, %v2552
        %s2554 = sld [smem:[#allocation12 + $0x307]]
        %v2555 = vstv %s2554
        %v2556 = vmul.f32 %v2555, %v2099
        %v2557 = vadd.f32 %v2553, %v2556
        %v2558 = vadd.f32 %v2526, %v2557
        %s2559 = sld [smem:[#allocation14 + $0x30e]]
        %v2560 = vstv %s2559
        %v2561 = vadd.f32 %v2558, %v2560
        %s2562 = sld [smem:[#allocation11 + $0x380]]
        %v2563 = vstv %s2562
        %v2564 = vmul.f32 %v2563, %v1007
        %s2565 = sld [smem:[#allocation11 + $0x381]]
        %v2566 = vstv %s2565
        %v2567 = vmul.f32 %v2566, %v1083
        %v2568 = vadd.f32 %v2564, %v2567
        %s2569 = sld [smem:[#allocation11 + $0x382]]
        %v2570 = vstv %s2569
        %v2571 = vmul.f32 %v2570, %v1159
        %v2572 = vadd.f32 %v2568, %v2571
        %s2573 = sld [smem:[#allocation11 + $0x383]]
        %v2574 = vstv %s2573
        %v2575 = vmul.f32 %v2574, %v1235
        %v2576 = vadd.f32 %v2572, %v2575
        %s2577 = sld [smem:[#allocation11 + $0x384]]
        %v2578 = vstv %s2577
        %v2579 = vmul.f32 %v2578, %v1311
        %v2580 = vadd.f32 %v2576, %v2579
        %s2581 = sld [smem:[#allocation11 + $0x385]]
        %v2582 = vstv %s2581
        %v2583 = vmul.f32 %v2582, %v1387
        %v2584 = vadd.f32 %v2580, %v2583
        %s2585 = sld [smem:[#allocation11 + $0x386]]
        %v2586 = vstv %s2585
        %v2587 = vmul.f32 %v2586, %v1463
        %v2588 = vadd.f32 %v2584, %v2587
        %s2589 = sld [smem:[#allocation11 + $0x387]]
        %v2590 = vstv %s2589
        %v2591 = vmul.f32 %v2590, %v1539
        %v2592 = vadd.f32 %v2588, %v2591
        %s2593 = sld [smem:[#allocation12 + $0x380]]
        %v2594 = vstv %s2593
        %v2595 = vmul.f32 %v2594, %v2092
        %s2596 = sld [smem:[#allocation12 + $0x381]]
        %v2597 = vstv %s2596
        %v2598 = vmul.f32 %v2597, %v2093
        %v2599 = vadd.f32 %v2595, %v2598
        %s2600 = sld [smem:[#allocation12 + $0x382]]
        %v2601 = vstv %s2600
        %v2602 = vmul.f32 %v2601, %v2094
        %v2603 = vadd.f32 %v2599, %v2602
        %s2604 = sld [smem:[#allocation12 + $0x383]]
        %v2605 = vstv %s2604
        %v2606 = vmul.f32 %v2605, %v2095
        %v2607 = vadd.f32 %v2603, %v2606
        %s2608 = sld [smem:[#allocation12 + $0x384]]
        %v2609 = vstv %s2608
        %v2610 = vmul.f32 %v2609, %v2096
        %v2611 = vadd.f32 %v2607, %v2610
        %s2612 = sld [smem:[#allocation12 + $0x385]]
        %v2613 = vstv %s2612
        %v2614 = vmul.f32 %v2613, %v2097
        %v2615 = vadd.f32 %v2611, %v2614
        %s2616 = sld [smem:[#allocation12 + $0x386]]
        %v2617 = vstv %s2616
        %v2618 = vmul.f32 %v2617, %v2098
        %v2619 = vadd.f32 %v2615, %v2618
        %s2620 = sld [smem:[#allocation12 + $0x387]]
        %v2621 = vstv %s2620
        %v2622 = vmul.f32 %v2621, %v2099
        %v2623 = vadd.f32 %v2619, %v2622
        %v2624 = vadd.f32 %v2592, %v2623
        %s2625 = sld [smem:[#allocation14 + $0x38e]]
        %v2626 = vstv %s2625
        %v2627 = vadd.f32 %v2624, %v2626
        %vm2628 = vcmask 64512
        %2629 = vst.msk [vmem:[%s367] sm:$0xff] %vm2628, %v2165
        %2630 = vst.msk [vmem:[%s367 + $0x8] sm:$0xff] %vm2628, %v2231
        %2631 = vst.msk [vmem:[%s367 + $0x10] sm:$0xff] %vm2628, %v2297
        %2632 = vst.msk [vmem:[%s367 + $0x18] sm:$0xff] %vm2628, %v2363
        %2633 = vst.msk [vmem:[%s367 + $0x20] sm:$0xff] %vm2628, %v2429
        %2634 = vst.msk [vmem:[%s367 + $0x28] sm:$0xff] %vm2628, %v2495
        %2635 = vst.msk [vmem:[%s367 + $0x30] sm:$0xff] %vm2628, %v2561
        %2636 = vst.msk [vmem:[%s367 + $0x38] sm:$0xff] %vm2628, %v2627
        %s2637 = sand.u32 %s188, 1
        %s2638 = scalar_lea.sflag [#allocation4], %s2637
        %s2639 = sand.u32 %s188, 1
        %s2640 = smul.addr %s2639, 64
        %s2641 = scalar_lea.vmem [#allocation15], %s2640
        // Predicated region
        $region77: #{tpu_custom_call.1} parent=47 // pred_check
          %p2642 = pneg %p198
        $region78: #{tpu_custom_call.1} parent=47 // pred_check_branch
          %2644 = sbr.rel (%p2642) target = $region80
        $region79: #{tpu_custom_call.1} parent=47 // pred_region
          %s2646 = ssub.s32 1024, 1024
          %2647 = vsyncadd %s2638, %s2646
          %s2648 = smul.addr %s28, 8
          %s2649 = smul.addr %s2648, 128
          %s2650 = scalar_lea.hbm %s7, %s2649
          %s2651 = sshll.u32 %s2641, 4
          %s2652 = int_to_ptr.vmem [resolvable:$true] %s2651
          %2657 = dma.vmem_to_hbm [thread:$0]  %s2652, 1024, %s2650, %s2638, 128, 128, 8
        $region80: #{tpu_custom_call.1} parent=47 // pred_fallthru
          _
      $region48: #{tpu_custom_call.1} parent=5 // pred_fallthru
        _
      %p2658 = scmp.le.s32.totalorder 2, %s23
      // Predicated region
      $region81: #{tpu_custom_call.1} parent=5 // pred_check
        %p2659 = pneg %p2658
      $region82: #{tpu_custom_call.1} parent=5 // pred_check_branch
        %2661 = sbr.rel (%p2659) target = $region84
      $region83: #{tpu_custom_call.1} parent=5 // pred_region
        %s2662 = ssub.s32 %s23, 2
        // Predicated region
        $region85: #{tpu_custom_call.1} parent=83 // pred_check
          %p2663 = pneg %p204
        $region86: #{tpu_custom_call.1} parent=83 // pred_check_branch
          %2665 = sbr.rel (%p2663) target = $region88
        $region87: #{tpu_custom_call.1} parent=83 // pred_region
          %s2666 = sand.u32 %s189, 1
          %s2667 = scalar_lea.sflag [#allocation4], %s2666
          %s2668 = sand.u32 %s189, 1
          %s2669 = smul.addr %s2668, 64
          %s2670 = scalar_lea.vmem [#allocation15], %s2669
          %2671 = dma.done %s2667, 1024
        $region88: #{tpu_custom_call.1} parent=83 // pred_fallthru
          _
      $region84: #{tpu_custom_call.1} parent=5 // pred_fallthru
        _
    $region6: #{tpu_custom_call.1} parent=1 // loop_footer
      %s27 = sadd.s32 1, %s23
    $region7: #{tpu_custom_call.1} parent=1 // loop_footer_branch
      %22 = sbr.rel target = $region3
    $region8: #{tpu_custom_call.1} parent=1 // loop_exit
      _
    %2672 = vsyncpa [#allocation3], 1
    %s2673 = scalar_lea.sflag [#allocation3], 1
    %2674 = vsyncpa %s2673, 1
    %2675 = vsyncpa [#allocation4], 1
    %s2676 = scalar_lea.sflag [#allocation4], 1
    %2677 = vsyncpa %s2676, 1
    %2678 = vsyncpa [#allocation5], 1
    %s2679 = scalar_lea.sflag [#allocation5], 1
    %2680 = vsyncpa %s2679, 1
    %2681 = vsyncpa [#allocation13], 1
    %2682 = vsyncpa [#allocation6], 1
    %s2683 = scalar_lea.sflag [#allocation6], 1
    %2684 = vsyncpa %s2683, 1
    %2685 = vsyncpa [#allocation9], 1

</llo_original>
